<compile_context>
chip_gen: v7x
topology: tpu7x:2x2x1
jax: 0.10.0
libtpu: 0.0.40
codegen_flags: <defaults>
</compile_context>

<pallas_src>
import jax
import jax.numpy as jnp
from jax import lax
from jax.experimental import pallas as pl
from jax.experimental.pallas import tpu as pltpu


def _rnn_fc_kernel(x_ref, h0_ref, wih0_ref, b0_ref, whh0_ref,
                   wih_ref, whh_ref, b_ref, wfc_ref, bfc_ref,
                   out_ref, hT_ref,
                   xproj_scr, top_scr, h_scr):
    """Whole sequence in one invocation: stacked tanh RNN + fused fc.

    x_ref      : (S*B, E)   time-major flattened embedded input
    h0_ref     : (L, B, H)  initial hidden
    wih0_ref   : (E, H)     layer-0 input weight, pre-transposed
    b0_ref     : (1, H)     layer-0 bias (b_ih + b_hh pre-summed)
    whh0_ref   : (H, H)     layer-0 recurrent weight, pre-transposed
    wih_ref    : (L-1, H, H) layers>=1 input weights, pre-transposed
    whh_ref    : (L-1, H, H) layers>=1 recurrent weights, pre-transposed
    b_ref      : (L-1, 1, H) layers>=1 biases (pre-summed)
    wfc_ref    : (H, O)     fc weight, pre-transposed
    bfc_ref    : (1, O)     fc bias
    out_ref    : (S*B, O)   fc output (time-major row order)
    hT_ref     : (L, B, H)  final hidden
    """
    num_layers, batch, _ = h_scr.shape
    seq_len = xproj_scr.shape[0] // batch

    # Carried hidden state lives in VMEM scratch.
    h_scr[...] = h0_ref[...]

    # Layer-0 input projection for ALL timesteps at once (no recurrent dependence):
    # one big MXU call instead of S tiny ones on the serial chain.
    xproj_scr[...] = (
        jnp.dot(x_ref[...], wih0_ref[...], preferred_element_type=jnp.float32)
        + b0_ref[...])

    def step(t, carry):
        rows = pl.ds(t * batch, batch)

        # layer 0: only the recurrent matmul remains on the serial path
        h_new = jnp.tanh(
            xproj_scr[rows, :]
            + jnp.dot(h_scr[0], whh0_ref[...], preferred_element_type=jnp.float32))
        h_scr[0] = h_new
        inp = h_new

        # layers 1..L-1: pre-transposed weights, pre-summed biases
        for layer in range(1, num_layers):
            g = (jnp.dot(inp, wih_ref[layer - 1],
                         preferred_element_type=jnp.float32)
                 + jnp.dot(h_scr[layer], whh_ref[layer - 1],
                           preferred_element_type=jnp.float32)
                 + b_ref[layer - 1])
            h_new = jnp.tanh(g)
            h_scr[layer] = h_new
            inp = h_new

        # stash top-layer output; fc is hoisted out of the recurrence
        top_scr[rows, :] = inp
        return carry

    lax.fori_loop(0, seq_len, step, 0, unroll=True)

    # Fused Linear (fc) over the whole sequence: one (S*B, H) x (H, O) matmul and
    # one dense output store / writeback DMA.
    out_ref[...] = (
        jnp.dot(top_scr[...], wfc_ref[...], preferred_element_type=jnp.float32)
        + bfc_ref[...])
    hT_ref[...] = h_scr[...]


def simple_rnn_forward(tokens, hidden, params):
    """tokens: (B, S) int32, hidden: (L, B, H) f32.

    Returns (out (B*S, O), h_T (L, B, H)) matching
    nn.Embedding -> nn.RNN(tanh, batch_first=True) -> nn.Linear -> view(-1, O).
    """
    B, S = tokens.shape
    L, _, H = params["w_hh"].shape
    O = params["w_fc"].shape[0]
    E = params["embedding"].shape[1]
    assert E == H  # stacked weights stored as (L, H, E) require emb == hidden for l>0

    emb = params["embedding"][tokens]                       # (B, S, E) gather (glue)
    x2d = jnp.transpose(emb, (1, 0, 2)).reshape(S * B, E)   # time-major, flat rows

    # ---- one-time weight prep (wrapper side, outside the hot path) ----
    w_ih0_t = params["w_ih"][0].T                           # (E, H)
    w_hh0_t = params["w_hh"][0].T                           # (H, H)
    b0 = params["b_ih"][0] + params["b_hh"][0]              # (1, H)
    if L > 1:
        w_ih_rest = jnp.transpose(params["w_ih"][1:], (0, 2, 1))   # (L-1, H, H)
        w_hh_rest = jnp.transpose(params["w_hh"][1:], (0, 2, 1))   # (L-1, H, H)
        b_rest = params["b_ih"][1:] + params["b_hh"][1:]           # (L-1, 1, H)
    else:  # dummy (never read when L == 1; keeps shapes non-empty)
        w_ih_rest = jnp.zeros((1, H, H), jnp.float32)
        w_hh_rest = jnp.zeros((1, H, H), jnp.float32)
        b_rest = jnp.zeros((1, 1, H), jnp.float32)
    w_fc_t = params["w_fc"].T                               # (H, O)
    b_fc = params["b_fc"]                                   # (1, O)

    vmem = lambda: pl.BlockSpec(memory_space=pltpu.MemorySpace.VMEM)
    out_flat, h_T = pl.pallas_call(
        _rnn_fc_kernel,
        out_shape=(jax.ShapeDtypeStruct((S * B, O), jnp.float32),
                   jax.ShapeDtypeStruct((L, B, H), jnp.float32)),
        in_specs=[vmem() for _ in range(10)],
        out_specs=(vmem(), vmem()),
        scratch_shapes=[
            pltpu.VMEM((S * B, H), jnp.float32),   # layer-0 input projection
            pltpu.VMEM((S * B, H), jnp.float32),   # top-layer outputs
            pltpu.VMEM((L, B, H), jnp.float32),    # carried hidden state
        ],
    )(x2d, hidden, w_ih0_t, b0, w_hh0_t,
      w_ih_rest, w_hh_rest, b_rest, w_fc_t, b_fc)

    # time-major flat (S*B, O) -> batch-first (B*S, O) == output.view(-1, output_size)
    out = jnp.transpose(out_flat.reshape(S, B, O), (1, 0, 2)).reshape(B * S, O)
    return out, h_T


def ref_forward(tokens, hidden, params):
    """Pure-JAX reference matching nn.Embedding -> nn.RNN(tanh, batch_first) -> nn.Linear."""
    emb = params["embedding"][tokens]
    x = jnp.transpose(emb, (1, 0, 2))
    S = x.shape[0]
    L = params["w_hh"].shape[0]
    h = hidden
    outs = []
    for t in range(S):
        inp = x[t]
        new_h = []
        for layer in range(L):
            hl = jnp.tanh(inp @ params["w_ih"][layer].T + params["b_ih"][layer, 0]
                          + h[layer] @ params["w_hh"][layer].T + params["b_hh"][layer, 0])
            new_h.append(hl)
            inp = hl
        h = jnp.stack(new_h)
        outs.append(inp)
    out = jnp.stack(outs)                          # (S, B, H)
    y = out @ params["w_fc"].T + params["b_fc"][0]
    y = jnp.transpose(y, (1, 0, 2)).reshape(-1, params["w_fc"].shape[0])
    return y, h


def init_params(key, word_num, embedding_size, hidden_size, output_size, num_layers):
    ks = jax.random.split(key, 7)
    scale = 0.1
    return {
        "embedding": jax.random.normal(ks[0], (word_num, embedding_size), jnp.float32),
        "w_ih": scale * jax.random.normal(ks[1], (num_layers, hidden_size, embedding_size), jnp.float32),
        "b_ih": scale * jax.random.normal(ks[2], (num_layers, 1, hidden_size), jnp.float32),
        "w_hh": scale * jax.random.normal(ks[3], (num_layers, hidden_size, hidden_size), jnp.float32),
        "b_hh": scale * jax.random.normal(ks[4], (num_layers, 1, hidden_size), jnp.float32),
        "w_fc": scale * jax.random.normal(ks[5], (output_size, hidden_size), jnp.float32),
        "b_fc": scale * jax.random.normal(ks[6], (1, output_size), jnp.float32),
    }


if __name__ == "__main__":
    # small shapes consistent with the module
    batch, seq = 2, 8
    word_num = 50
    embedding_size = 32
    hidden_size = 32          # emb == hidden so stacked W_ih is uniform (L, H, H)
    output_size = 16
    num_layers = 5

    key = jax.random.PRNGKey(0)
    kp, kx = jax.random.split(key)
    params = init_params(kp, word_num, embedding_size, hidden_size, output_size, num_layers)

    tokens = jax.random.randint(kx, (batch, seq), 0, word_num, dtype=jnp.int32)
    hidden0 = jnp.zeros((num_layers, batch, hidden_size), jnp.float32)   # initHidden

    out, h_T = simple_rnn_forward(tokens, hidden0, params)
    out = jax.block_until_ready(out)
    h_T = jax.block_until_ready(h_T)

    out_ref, h_ref = ref_forward(tokens, hidden0, params)
    assert out.shape == (batch * seq, output_size)
    assert h_T.shape == (num_layers, batch, hidden_size)
    if not (jnp.allclose(out, out_ref, atol=1e-5, rtol=1e-5)
            and jnp.allclose(h_T, h_ref, atol=1e-5, rtol=1e-5)):
        raise AssertionError("Pallas kernel output mismatch vs reference")

    print("KERNEL_OK")
</pallas_src>

<mosaic_0001>
module attributes {stable_mosaic.version = 11 : i64} {
  func.func @_rnn_fc_kernel(%arg0: memref<16x32xf32, #tpu.memory_space<vmem>>, %arg1: memref<5x2x32xf32, #tpu.memory_space<vmem>>, %arg2: memref<32x32xf32, #tpu.memory_space<vmem>>, %arg3: memref<1x32xf32, #tpu.memory_space<vmem>>, %arg4: memref<32x32xf32, #tpu.memory_space<vmem>>, %arg5: memref<4x32x32xf32, #tpu.memory_space<vmem>>, %arg6: memref<4x32x32xf32, #tpu.memory_space<vmem>>, %arg7: memref<4x1x32xf32, #tpu.memory_space<vmem>>, %arg8: memref<32x16xf32, #tpu.memory_space<vmem>>, %arg9: memref<1x16xf32, #tpu.memory_space<vmem>>, %arg10: memref<16x16xf32, #tpu.memory_space<vmem>>, %arg11: memref<5x2x32xf32, #tpu.memory_space<vmem>>, %arg12: memref<16x32xf32, #tpu.memory_space<vmem>>, %arg13: memref<16x32xf32, #tpu.memory_space<vmem>>, %arg14: memref<5x2x32xf32, #tpu.memory_space<vmem>>) attributes {dimension_semantics = [], scalar_prefetch = 0 : i64, scratch_operands = 3 : i64, tpu.core_type = #tpu.core_type<tc>} {
    %c0 = arith.constant 0 : index
    %c0_0 = arith.constant 0 : index
    %c0_1 = arith.constant 0 : index
    %0 = vector.load %arg1[%c0, %c0_0, %c0_1] : memref<5x2x32xf32, #tpu.memory_space<vmem>>, vector<5x2x32xf32>
    %c0_2 = arith.constant 0 : index
    %c0_3 = arith.constant 0 : index
    %c0_4 = arith.constant 0 : index
    %1 = vector.load %arg14[%c0_2, %c0_3, %c0_4] : memref<5x2x32xf32, #tpu.memory_space<vmem>>, vector<5x2x32xf32>
    tpu.vector_store %arg14[%c0_2, %c0_3, %c0_4], %0 {strides = array<i32>} : memref<5x2x32xf32, #tpu.memory_space<vmem>>, vector<5x2x32xf32>,
    %c0_5 = arith.constant 0 : index
    %c0_6 = arith.constant 0 : index
    %2 = vector.load %arg0[%c0_5, %c0_6] : memref<16x32xf32, #tpu.memory_space<vmem>>, vector<16x32xf32>
    %c0_7 = arith.constant 0 : index
    %c0_8 = arith.constant 0 : index
    %3 = vector.load %arg2[%c0_7, %c0_8] : memref<32x32xf32, #tpu.memory_space<vmem>>, vector<32x32xf32>
    %cst = arith.constant dense<0.000000e+00> : vector<16x32xf32>
    %4 = tpu.matmul %2, %3, %cst {dimension_numbers = #tpu.dot_dimension_numbers<[1], [0], [0], [1], [0, 0, 1, 1], [], []>} : vector<16x32xf32>, vector<32x32xf32>, vector<16x32xf32> -> vector<16x32xf32>
    %c0_9 = arith.constant 0 : index
    %c0_10 = arith.constant 0 : index
    %5 = vector.load %arg3[%c0_9, %c0_10] : memref<1x32xf32, #tpu.memory_space<vmem>>, vector<1x32xf32>
    %6 = vector.broadcast %5 : vector<1x32xf32> to vector<16x32xf32>
    %7 = arith.addf %4, %6 : vector<16x32xf32>
    %c0_11 = arith.constant 0 : index
    %c0_12 = arith.constant 0 : index
    %8 = vector.load %arg12[%c0_11, %c0_12] : memref<16x32xf32, #tpu.memory_space<vmem>>, vector<16x32xf32>
    tpu.vector_store %arg12[%c0_11, %c0_12], %7 {strides = array<i32>} : memref<16x32xf32, #tpu.memory_space<vmem>>, vector<16x32xf32>,
    %c0_i32 = arith.constant 0 : i32
    %c2_i32 = arith.constant 2 : i32
    %9 = arith.muli %c0_i32, %c2_i32 : i32
    %10 = arith.index_cast %9 : i32 to index
    %c0_13 = arith.constant 0 : index
    %11 = vector.load %arg12[%10, %c0_13] : memref<16x32xf32, #tpu.memory_space<vmem>>, vector<2x32xf32>
    %c0_14 = arith.constant 0 : index
    %c0_15 = arith.constant 0 : index
    %c0_16 = arith.constant 0 : index
    %12 = vector.load %arg14[%c0_14, %c0_15, %c0_16] : memref<5x2x32xf32, #tpu.memory_space<vmem>>, vector<1x2x32xf32>
    %13 = vector.shape_cast %12 : vector<1x2x32xf32> to vector<2x32xf32>
    %c0_17 = arith.constant 0 : index
    %c0_18 = arith.constant 0 : index
    %14 = vector.load %arg4[%c0_17, %c0_18] : memref<32x32xf32, #tpu.memory_space<vmem>>, vector<32x32xf32>
    %cst_19 = arith.constant dense<0.000000e+00> : vector<2x32xf32>
    %15 = tpu.matmul %13, %14, %cst_19 {dimension_numbers = #tpu.dot_dimension_numbers<[1], [0], [0], [1], [0, 0, 1, 1], [], []>} : vector<2x32xf32>, vector<32x32xf32>, vector<2x32xf32> -> vector<2x32xf32>
    %16 = arith.addf %11, %15 : vector<2x32xf32>
    %17 = math.tanh %16 : vector<2x32xf32>
    %c0_20 = arith.constant 0 : index
    %c0_21 = arith.constant 0 : index
    %c0_22 = arith.constant 0 : index
    %18 = vector.load %arg14[%c0_20, %c0_21, %c0_22] : memref<5x2x32xf32, #tpu.memory_space<vmem>>, vector<1x2x32xf32>
    %19 = vector.shape_cast %18 : vector<1x2x32xf32> to vector<2x32xf32>
    %20 = vector.shape_cast %17 : vector<2x32xf32> to vector<1x2x32xf32>
    tpu.vector_store %arg14[%c0_20, %c0_21, %c0_22], %20 {strides = array<i32>} : memref<5x2x32xf32, #tpu.memory_space<vmem>>, vector<1x2x32xf32>,
    %c0_23 = arith.constant 0 : index
    %c0_24 = arith.constant 0 : index
    %c0_25 = arith.constant 0 : index
    %21 = vector.load %arg5[%c0_23, %c0_24, %c0_25] : memref<4x32x32xf32, #tpu.memory_space<vmem>>, vector<1x32x32xf32>
    %22 = vector.shape_cast %21 : vector<1x32x32xf32> to vector<32x32xf32>
    %cst_26 = arith.constant dense<0.000000e+00> : vector<2x32xf32>
    %23 = tpu.matmul %17, %22, %cst_26 {dimension_numbers = #tpu.dot_dimension_numbers<[1], [0], [0], [1], [0, 0, 1, 1], [], []>} : vector<2x32xf32>, vector<32x32xf32>, vector<2x32xf32> -> vector<2x32xf32>
    %c1 = arith.constant 1 : index
    %c0_27 = arith.constant 0 : index
    %c0_28 = arith.constant 0 : index
    %24 = vector.load %arg14[%c1, %c0_27, %c0_28] : memref<5x2x32xf32, #tpu.memory_space<vmem>>, vector<1x2x32xf32>
    %25 = vector.shape_cast %24 : vector<1x2x32xf32> to vector<2x32xf32>
    %c0_29 = arith.constant 0 : index
    %c0_30 = arith.constant 0 : index
    %c0_31 = arith.constant 0 : index
    %26 = vector.load %arg6[%c0_29, %c0_30, %c0_31] : memref<4x32x32xf32, #tpu.memory_space<vmem>>, vector<1x32x32xf32>
    %27 = vector.shape_cast %26 : vector<1x32x32xf32> to vector<32x32xf32>
    %cst_32 = arith.constant dense<0.000000e+00> : vector<2x32xf32>
    %28 = tpu.matmul %25, %27, %cst_32 {dimension_numbers = #tpu.dot_dimension_numbers<[1], [0], [0], [1], [0, 0, 1, 1], [], []>} : vector<2x32xf32>, vector<32x32xf32>, vector<2x32xf32> -> vector<2x32xf32>
    %29 = arith.addf %23, %28 : vector<2x32xf32>
    %c0_33 = arith.constant 0 : index
    %c0_34 = arith.constant 0 : index
    %c0_35 = arith.constant 0 : index
    %30 = vector.load %arg7[%c0_33, %c0_34, %c0_35] : memref<4x1x32xf32, #tpu.memory_space<vmem>>, vector<1x1x32xf32>
    %31 = vector.shape_cast %30 : vector<1x1x32xf32> to vector<1x32xf32>
    %32 = vector.broadcast %31 : vector<1x32xf32> to vector<2x32xf32>
    %33 = arith.addf %29, %32 : vector<2x32xf32>
    %34 = math.tanh %33 : vector<2x32xf32>
    %c1_36 = arith.constant 1 : index
    %c0_37 = arith.constant 0 : index
    %c0_38 = arith.constant 0 : index
    %35 = vector.load %arg14[%c1_36, %c0_37, %c0_38] : memref<5x2x32xf32, #tpu.memory_space<vmem>>, vector<1x2x32xf32>
    %36 = vector.shape_cast %35 : vector<1x2x32xf32> to vector<2x32xf32>
    %37 = vector.shape_cast %34 : vector<2x32xf32> to vector<1x2x32xf32>
    tpu.vector_store %arg14[%c1_36, %c0_37, %c0_38], %37 {strides = array<i32>} : memref<5x2x32xf32, #tpu.memory_space<vmem>>, vector<1x2x32xf32>,
    %c1_39 = arith.constant 1 : index
    %c0_40 = arith.constant 0 : index
    %c0_41 = arith.constant 0 : index
    %38 = vector.load %arg5[%c1_39, %c0_40, %c0_41] : memref<4x32x32xf32, #tpu.memory_space<vmem>>, vector<1x32x32xf32>
    %39 = vector.shape_cast %38 : vector<1x32x32xf32> to vector<32x32xf32>
    %cst_42 = arith.constant dense<0.000000e+00> : vector<2x32xf32>
    %40 = tpu.matmul %34, %39, %cst_42 {dimension_numbers = #tpu.dot_dimension_numbers<[1], [0], [0], [1], [0, 0, 1, 1], [], []>} : vector<2x32xf32>, vector<32x32xf32>, vector<2x32xf32> -> vector<2x32xf32>
    %c2 = arith.constant 2 : index
    %c0_43 = arith.constant 0 : index
    %c0_44 = arith.constant 0 : index
    %41 = vector.load %arg14[%c2, %c0_43, %c0_44] : memref<5x2x32xf32, #tpu.memory_space<vmem>>, vector<1x2x32xf32>
    %42 = vector.shape_cast %41 : vector<1x2x32xf32> to vector<2x32xf32>
    %c1_45 = arith.constant 1 : index
    %c0_46 = arith.constant 0 : index
    %c0_47 = arith.constant 0 : index
    %43 = vector.load %arg6[%c1_45, %c0_46, %c0_47] : memref<4x32x32xf32, #tpu.memory_space<vmem>>, vector<1x32x32xf32>
    %44 = vector.shape_cast %43 : vector<1x32x32xf32> to vector<32x32xf32>
    %cst_48 = arith.constant dense<0.000000e+00> : vector<2x32xf32>
    %45 = tpu.matmul %42, %44, %cst_48 {dimension_numbers = #tpu.dot_dimension_numbers<[1], [0], [0], [1], [0, 0, 1, 1], [], []>} : vector<2x32xf32>, vector<32x32xf32>, vector<2x32xf32> -> vector<2x32xf32>
    %46 = arith.addf %40, %45 : vector<2x32xf32>
    %c1_49 = arith.constant 1 : index
    %c0_50 = arith.constant 0 : index
    %c0_51 = arith.constant 0 : index
    %47 = vector.load %arg7[%c1_49, %c0_50, %c0_51] : memref<4x1x32xf32, #tpu.memory_space<vmem>>, vector<1x1x32xf32>
    %48 = vector.shape_cast %47 : vector<1x1x32xf32> to vector<1x32xf32>
    %49 = vector.broadcast %48 : vector<1x32xf32> to vector<2x32xf32>
    %50 = arith.addf %46, %49 : vector<2x32xf32>
    %51 = math.tanh %50 : vector<2x32xf32>
    %c2_52 = arith.constant 2 : index
    %c0_53 = arith.constant 0 : index
    %c0_54 = arith.constant 0 : index
    %52 = vector.load %arg14[%c2_52, %c0_53, %c0_54] : memref<5x2x32xf32, #tpu.memory_space<vmem>>, vector<1x2x32xf32>
    %53 = vector.shape_cast %52 : vector<1x2x32xf32> to vector<2x32xf32>
    %54 = vector.shape_cast %51 : vector<2x32xf32> to vector<1x2x32xf32>
    tpu.vector_store %arg14[%c2_52, %c0_53, %c0_54], %54 {strides = array<i32>} : memref<5x2x32xf32, #tpu.memory_space<vmem>>, vector<1x2x32xf32>,
    %c2_55 = arith.constant 2 : index
    %c0_56 = arith.constant 0 : index
    %c0_57 = arith.constant 0 : index
    %55 = vector.load %arg5[%c2_55, %c0_56, %c0_57] : memref<4x32x32xf32, #tpu.memory_space<vmem>>, vector<1x32x32xf32>
    %56 = vector.shape_cast %55 : vector<1x32x32xf32> to vector<32x32xf32>
    %cst_58 = arith.constant dense<0.000000e+00> : vector<2x32xf32>
    %57 = tpu.matmul %51, %56, %cst_58 {dimension_numbers = #tpu.dot_dimension_numbers<[1], [0], [0], [1], [0, 0, 1, 1], [], []>} : vector<2x32xf32>, vector<32x32xf32>, vector<2x32xf32> -> vector<2x32xf32>
    %c3 = arith.constant 3 : index
    %c0_59 = arith.constant 0 : index
    %c0_60 = arith.constant 0 : index
    %58 = vector.load %arg14[%c3, %c0_59, %c0_60] : memref<5x2x32xf32, #tpu.memory_space<vmem>>, vector<1x2x32xf32>
    %59 = vector.shape_cast %58 : vector<1x2x32xf32> to vector<2x32xf32>
    %c2_61 = arith.constant 2 : index
    %c0_62 = arith.constant 0 : index
    %c0_63 = arith.constant 0 : index
    %60 = vector.load %arg6[%c2_61, %c0_62, %c0_63] : memref<4x32x32xf32, #tpu.memory_space<vmem>>, vector<1x32x32xf32>
    %61 = vector.shape_cast %60 : vector<1x32x32xf32> to vector<32x32xf32>
    %cst_64 = arith.constant dense<0.000000e+00> : vector<2x32xf32>
    %62 = tpu.matmul %59, %61, %cst_64 {dimension_numbers = #tpu.dot_dimension_numbers<[1], [0], [0], [1], [0, 0, 1, 1], [], []>} : vector<2x32xf32>, vector<32x32xf32>, vector<2x32xf32> -> vector<2x32xf32>
    %63 = arith.addf %57, %62 : vector<2x32xf32>
    %c2_65 = arith.constant 2 : index
    %c0_66 = arith.constant 0 : index
    %c0_67 = arith.constant 0 : index
    %64 = vector.load %arg7[%c2_65, %c0_66, %c0_67] : memref<4x1x32xf32, #tpu.memory_space<vmem>>, vector<1x1x32xf32>
    %65 = vector.shape_cast %64 : vector<1x1x32xf32> to vector<1x32xf32>
    %66 = vector.broadcast %65 : vector<1x32xf32> to vector<2x32xf32>
    %67 = arith.addf %63, %66 : vector<2x32xf32>
    %68 = math.tanh %67 : vector<2x32xf32>
    %c3_68 = arith.constant 3 : index
    %c0_69 = arith.constant 0 : index
    %c0_70 = arith.constant 0 : index
    %69 = vector.load %arg14[%c3_68, %c0_69, %c0_70] : memref<5x2x32xf32, #tpu.memory_space<vmem>>, vector<1x2x32xf32>
    %70 = vector.shape_cast %69 : vector<1x2x32xf32> to vector<2x32xf32>
    %71 = vector.shape_cast %68 : vector<2x32xf32> to vector<1x2x32xf32>
    tpu.vector_store %arg14[%c3_68, %c0_69, %c0_70], %71 {strides = array<i32>} : memref<5x2x32xf32, #tpu.memory_space<vmem>>, vector<1x2x32xf32>,
    %c3_71 = arith.constant 3 : index
    %c0_72 = arith.constant 0 : index
    %c0_73 = arith.constant 0 : index
    %72 = vector.load %arg5[%c3_71, %c0_72, %c0_73] : memref<4x32x32xf32, #tpu.memory_space<vmem>>, vector<1x32x32xf32>
    %73 = vector.shape_cast %72 : vector<1x32x32xf32> to vector<32x32xf32>
    %cst_74 = arith.constant dense<0.000000e+00> : vector<2x32xf32>
    %74 = tpu.matmul %68, %73, %cst_74 {dimension_numbers = #tpu.dot_dimension_numbers<[1], [0], [0], [1], [0, 0, 1, 1], [], []>} : vector<2x32xf32>, vector<32x32xf32>, vector<2x32xf32> -> vector<2x32xf32>
    %c4 = arith.constant 4 : index
    %c0_75 = arith.constant 0 : index
    %c0_76 = arith.constant 0 : index
    %75 = vector.load %arg14[%c4, %c0_75, %c0_76] : memref<5x2x32xf32, #tpu.memory_space<vmem>>, vector<1x2x32xf32>
    %76 = vector.shape_cast %75 : vector<1x2x32xf32> to vector<2x32xf32>
    %c3_77 = arith.constant 3 : index
    %c0_78 = arith.constant 0 : index
    %c0_79 = arith.constant 0 : index
    %77 = vector.load %arg6[%c3_77, %c0_78, %c0_79] : memref<4x32x32xf32, #tpu.memory_space<vmem>>, vector<1x32x32xf32>
    %78 = vector.shape_cast %77 : vector<1x32x32xf32> to vector<32x32xf32>
    %cst_80 = arith.constant dense<0.000000e+00> : vector<2x32xf32>
    %79 = tpu.matmul %76, %78, %cst_80 {dimension_numbers = #tpu.dot_dimension_numbers<[1], [0], [0], [1], [0, 0, 1, 1], [], []>} : vector<2x32xf32>, vector<32x32xf32>, vector<2x32xf32> -> vector<2x32xf32>
    %80 = arith.addf %74, %79 : vector<2x32xf32>
    %c3_81 = arith.constant 3 : index
    %c0_82 = arith.constant 0 : index
    %c0_83 = arith.constant 0 : index
    %81 = vector.load %arg7[%c3_81, %c0_82, %c0_83] : memref<4x1x32xf32, #tpu.memory_space<vmem>>, vector<1x1x32xf32>
    %82 = vector.shape_cast %81 : vector<1x1x32xf32> to vector<1x32xf32>
    %83 = vector.broadcast %82 : vector<1x32xf32> to vector<2x32xf32>
    %84 = arith.addf %80, %83 : vector<2x32xf32>
    %85 = math.tanh %84 : vector<2x32xf32>
    %c4_84 = arith.constant 4 : index
    %c0_85 = arith.constant 0 : index
    %c0_86 = arith.constant 0 : index
    %86 = vector.load %arg14[%c4_84, %c0_85, %c0_86] : memref<5x2x32xf32, #tpu.memory_space<vmem>>, vector<1x2x32xf32>
    %87 = vector.shape_cast %86 : vector<1x2x32xf32> to vector<2x32xf32>
    %88 = vector.shape_cast %85 : vector<2x32xf32> to vector<1x2x32xf32>
    tpu.vector_store %arg14[%c4_84, %c0_85, %c0_86], %88 {strides = array<i32>} : memref<5x2x32xf32, #tpu.memory_space<vmem>>, vector<1x2x32xf32>,
    %89 = arith.index_cast %9 : i32 to index
    %c0_87 = arith.constant 0 : index
    %90 = vector.load %arg13[%89, %c0_87] : memref<16x32xf32, #tpu.memory_space<vmem>>, vector<2x32xf32>
    tpu.vector_store %arg13[%89, %c0_87], %85 {strides = array<i32>} : memref<16x32xf32, #tpu.memory_space<vmem>>, vector<2x32xf32>,
    %c1_i32 = arith.constant 1 : i32
    %c2_i32_88 = arith.constant 2 : i32
    %91 = arith.muli %c1_i32, %c2_i32_88 : i32
    %92 = arith.index_cast %91 : i32 to index
    %c0_89 = arith.constant 0 : index
    %93 = vector.load %arg12[%92, %c0_89] : memref<16x32xf32, #tpu.memory_space<vmem>>, vector<2x32xf32>
    %c0_90 = arith.constant 0 : index
    %c0_91 = arith.constant 0 : index
    %c0_92 = arith.constant 0 : index
    %94 = vector.load %arg14[%c0_90, %c0_91, %c0_92] : memref<5x2x32xf32, #tpu.memory_space<vmem>>, vector<1x2x32xf32>
    %95 = vector.shape_cast %94 : vector<1x2x32xf32> to vector<2x32xf32>
    %c0_93 = arith.constant 0 : index
    %c0_94 = arith.constant 0 : index
    %96 = vector.load %arg4[%c0_93, %c0_94] : memref<32x32xf32, #tpu.memory_space<vmem>>, vector<32x32xf32>
    %cst_95 = arith.constant dense<0.000000e+00> : vector<2x32xf32>
    %97 = tpu.matmul %95, %96, %cst_95 {dimension_numbers = #tpu.dot_dimension_numbers<[1], [0], [0], [1], [0, 0, 1, 1], [], []>} : vector<2x32xf32>, vector<32x32xf32>, vector<2x32xf32> -> vector<2x32xf32>
    %98 = arith.addf %93, %97 : vector<2x32xf32>
    %99 = math.tanh %98 : vector<2x32xf32>
    %c0_96 = arith.constant 0 : index
    %c0_97 = arith.constant 0 : index
    %c0_98 = arith.constant 0 : index
    %100 = vector.load %arg14[%c0_96, %c0_97, %c0_98] : memref<5x2x32xf32, #tpu.memory_space<vmem>>, vector<1x2x32xf32>
    %101 = vector.shape_cast %100 : vector<1x2x32xf32> to vector<2x32xf32>
    %102 = vector.shape_cast %99 : vector<2x32xf32> to vector<1x2x32xf32>
    tpu.vector_store %arg14[%c0_96, %c0_97, %c0_98], %102 {strides = array<i32>} : memref<5x2x32xf32, #tpu.memory_space<vmem>>, vector<1x2x32xf32>,
    %c0_99 = arith.constant 0 : index
    %c0_100 = arith.constant 0 : index
    %c0_101 = arith.constant 0 : index
    %103 = vector.load %arg5[%c0_99, %c0_100, %c0_101] : memref<4x32x32xf32, #tpu.memory_space<vmem>>, vector<1x32x32xf32>
    %104 = vector.shape_cast %103 : vector<1x32x32xf32> to vector<32x32xf32>
    %cst_102 = arith.constant dense<0.000000e+00> : vector<2x32xf32>
    %105 = tpu.matmul %99, %104, %cst_102 {dimension_numbers = #tpu.dot_dimension_numbers<[1], [0], [0], [1], [0, 0, 1, 1], [], []>} : vector<2x32xf32>, vector<32x32xf32>, vector<2x32xf32> -> vector<2x32xf32>
    %c1_103 = arith.constant 1 : index
    %c0_104 = arith.constant 0 : index
    %c0_105 = arith.constant 0 : index
    %106 = vector.load %arg14[%c1_103, %c0_104, %c0_105] : memref<5x2x32xf32, #tpu.memory_space<vmem>>, vector<1x2x32xf32>
    %107 = vector.shape_cast %106 : vector<1x2x32xf32> to vector<2x32xf32>
    %c0_106 = arith.constant 0 : index
    %c0_107 = arith.constant 0 : index
    %c0_108 = arith.constant 0 : index
    %108 = vector.load %arg6[%c0_106, %c0_107, %c0_108] : memref<4x32x32xf32, #tpu.memory_space<vmem>>, vector<1x32x32xf32>
    %109 = vector.shape_cast %108 : vector<1x32x32xf32> to vector<32x32xf32>
    %cst_109 = arith.constant dense<0.000000e+00> : vector<2x32xf32>
    %110 = tpu.matmul %107, %109, %cst_109 {dimension_numbers = #tpu.dot_dimension_numbers<[1], [0], [0], [1], [0, 0, 1, 1], [], []>} : vector<2x32xf32>, vector<32x32xf32>, vector<2x32xf32> -> vector<2x32xf32>
    %111 = arith.addf %105, %110 : vector<2x32xf32>
    %c0_110 = arith.constant 0 : index
    %c0_111 = arith.constant 0 : index
    %c0_112 = arith.constant 0 : index
    %112 = vector.load %arg7[%c0_110, %c0_111, %c0_112] : memref<4x1x32xf32, #tpu.memory_space<vmem>>, vector<1x1x32xf32>
    %113 = vector.shape_cast %112 : vector<1x1x32xf32> to vector<1x32xf32>
    %114 = vector.broadcast %113 : vector<1x32xf32> to vector<2x32xf32>
    %115 = arith.addf %111, %114 : vector<2x32xf32>
    %116 = math.tanh %115 : vector<2x32xf32>
    %c1_113 = arith.constant 1 : index
    %c0_114 = arith.constant 0 : index
    %c0_115 = arith.constant 0 : index
    %117 = vector.load %arg14[%c1_113, %c0_114, %c0_115] : memref<5x2x32xf32, #tpu.memory_space<vmem>>, vector<1x2x32xf32>
    %118 = vector.shape_cast %117 : vector<1x2x32xf32> to vector<2x32xf32>
    %119 = vector.shape_cast %116 : vector<2x32xf32> to vector<1x2x32xf32>
    tpu.vector_store %arg14[%c1_113, %c0_114, %c0_115], %119 {strides = array<i32>} : memref<5x2x32xf32, #tpu.memory_space<vmem>>, vector<1x2x32xf32>,
    %c1_116 = arith.constant 1 : index
    %c0_117 = arith.constant 0 : index
    %c0_118 = arith.constant 0 : index
    %120 = vector.load %arg5[%c1_116, %c0_117, %c0_118] : memref<4x32x32xf32, #tpu.memory_space<vmem>>, vector<1x32x32xf32>
    %121 = vector.shape_cast %120 : vector<1x32x32xf32> to vector<32x32xf32>
    %cst_119 = arith.constant dense<0.000000e+00> : vector<2x32xf32>
    %122 = tpu.matmul %116, %121, %cst_119 {dimension_numbers = #tpu.dot_dimension_numbers<[1], [0], [0], [1], [0, 0, 1, 1], [], []>} : vector<2x32xf32>, vector<32x32xf32>, vector<2x32xf32> -> vector<2x32xf32>
    %c2_120 = arith.constant 2 : index
    %c0_121 = arith.constant 0 : index
    %c0_122 = arith.constant 0 : index
    %123 = vector.load %arg14[%c2_120, %c0_121, %c0_122] : memref<5x2x32xf32, #tpu.memory_space<vmem>>, vector<1x2x32xf32>
    %124 = vector.shape_cast %123 : vector<1x2x32xf32> to vector<2x32xf32>
    %c1_123 = arith.constant 1 : index
    %c0_124 = arith.constant 0 : index
    %c0_125 = arith.constant 0 : index
    %125 = vector.load %arg6[%c1_123, %c0_124, %c0_125] : memref<4x32x32xf32, #tpu.memory_space<vmem>>, vector<1x32x32xf32>
    %126 = vector.shape_cast %125 : vector<1x32x32xf32> to vector<32x32xf32>
    %cst_126 = arith.constant dense<0.000000e+00> : vector<2x32xf32>
    %127 = tpu.matmul %124, %126, %cst_126 {dimension_numbers = #tpu.dot_dimension_numbers<[1], [0], [0], [1], [0, 0, 1, 1], [], []>} : vector<2x32xf32>, vector<32x32xf32>, vector<2x32xf32> -> vector<2x32xf32>
    %128 = arith.addf %122, %127 : vector<2x32xf32>
    %c1_127 = arith.constant 1 : index
    %c0_128 = arith.constant 0 : index
    %c0_129 = arith.constant 0 : index
    %129 = vector.load %arg7[%c1_127, %c0_128, %c0_129] : memref<4x1x32xf32, #tpu.memory_space<vmem>>, vector<1x1x32xf32>
    %130 = vector.shape_cast %129 : vector<1x1x32xf32> to vector<1x32xf32>
    %131 = vector.broadcast %130 : vector<1x32xf32> to vector<2x32xf32>
    %132 = arith.addf %128, %131 : vector<2x32xf32>
    %133 = math.tanh %132 : vector<2x32xf32>
    %c2_130 = arith.constant 2 : index
    %c0_131 = arith.constant 0 : index
    %c0_132 = arith.constant 0 : index
    %134 = vector.load %arg14[%c2_130, %c0_131, %c0_132] : memref<5x2x32xf32, #tpu.memory_space<vmem>>, vector<1x2x32xf32>
    %135 = vector.shape_cast %134 : vector<1x2x32xf32> to vector<2x32xf32>
    %136 = vector.shape_cast %133 : vector<2x32xf32> to vector<1x2x32xf32>
    tpu.vector_store %arg14[%c2_130, %c0_131, %c0_132], %136 {strides = array<i32>} : memref<5x2x32xf32, #tpu.memory_space<vmem>>, vector<1x2x32xf32>,
    %c2_133 = arith.constant 2 : index
    %c0_134 = arith.constant 0 : index
    %c0_135 = arith.constant 0 : index
    %137 = vector.load %arg5[%c2_133, %c0_134, %c0_135] : memref<4x32x32xf32, #tpu.memory_space<vmem>>, vector<1x32x32xf32>
    %138 = vector.shape_cast %137 : vector<1x32x32xf32> to vector<32x32xf32>
    %cst_136 = arith.constant dense<0.000000e+00> : vector<2x32xf32>
    %139 = tpu.matmul %133, %138, %cst_136 {dimension_numbers = #tpu.dot_dimension_numbers<[1], [0], [0], [1], [0, 0, 1, 1], [], []>} : vector<2x32xf32>, vector<32x32xf32>, vector<2x32xf32> -> vector<2x32xf32>
    %c3_137 = arith.constant 3 : index
    %c0_138 = arith.constant 0 : index
    %c0_139 = arith.constant 0 : index
    %140 = vector.load %arg14[%c3_137, %c0_138, %c0_139] : memref<5x2x32xf32, #tpu.memory_space<vmem>>, vector<1x2x32xf32>
    %141 = vector.shape_cast %140 : vector<1x2x32xf32> to vector<2x32xf32>
    %c2_140 = arith.constant 2 : index
    %c0_141 = arith.constant 0 : index
    %c0_142 = arith.constant 0 : index
    %142 = vector.load %arg6[%c2_140, %c0_141, %c0_142] : memref<4x32x32xf32, #tpu.memory_space<vmem>>, vector<1x32x32xf32>
    %143 = vector.shape_cast %142 : vector<1x32x32xf32> to vector<32x32xf32>
    %cst_143 = arith.constant dense<0.000000e+00> : vector<2x32xf32>
    %144 = tpu.matmul %141, %143, %cst_143 {dimension_numbers = #tpu.dot_dimension_numbers<[1], [0], [0], [1], [0, 0, 1, 1], [], []>} : vector<2x32xf32>, vector<32x32xf32>, vector<2x32xf32> -> vector<2x32xf32>
    %145 = arith.addf %139, %144 : vector<2x32xf32>
    %c2_144 = arith.constant 2 : index
    %c0_145 = arith.constant 0 : index
    %c0_146 = arith.constant 0 : index
    %146 = vector.load %arg7[%c2_144, %c0_145, %c0_146] : memref<4x1x32xf32, #tpu.memory_space<vmem>>, vector<1x1x32xf32>
    %147 = vector.shape_cast %146 : vector<1x1x32xf32> to vector<1x32xf32>
    %148 = vector.broadcast %147 : vector<1x32xf32> to vector<2x32xf32>
    %149 = arith.addf %145, %148 : vector<2x32xf32>
    %150 = math.tanh %149 : vector<2x32xf32>
    %c3_147 = arith.constant 3 : index
    %c0_148 = arith.constant 0 : index
    %c0_149 = arith.constant 0 : index
    %151 = vector.load %arg14[%c3_147, %c0_148, %c0_149] : memref<5x2x32xf32, #tpu.memory_space<vmem>>, vector<1x2x32xf32>
    %152 = vector.shape_cast %151 : vector<1x2x32xf32> to vector<2x32xf32>
    %153 = vector.shape_cast %150 : vector<2x32xf32> to vector<1x2x32xf32>
    tpu.vector_store %arg14[%c3_147, %c0_148, %c0_149], %153 {strides = array<i32>} : memref<5x2x32xf32, #tpu.memory_space<vmem>>, vector<1x2x32xf32>,
    %c3_150 = arith.constant 3 : index
    %c0_151 = arith.constant 0 : index
    %c0_152 = arith.constant 0 : index
    %154 = vector.load %arg5[%c3_150, %c0_151, %c0_152] : memref<4x32x32xf32, #tpu.memory_space<vmem>>, vector<1x32x32xf32>
    %155 = vector.shape_cast %154 : vector<1x32x32xf32> to vector<32x32xf32>
    %cst_153 = arith.constant dense<0.000000e+00> : vector<2x32xf32>
    %156 = tpu.matmul %150, %155, %cst_153 {dimension_numbers = #tpu.dot_dimension_numbers<[1], [0], [0], [1], [0, 0, 1, 1], [], []>} : vector<2x32xf32>, vector<32x32xf32>, vector<2x32xf32> -> vector<2x32xf32>
    %c4_154 = arith.constant 4 : index
    %c0_155 = arith.constant 0 : index
    %c0_156 = arith.constant 0 : index
    %157 = vector.load %arg14[%c4_154, %c0_155, %c0_156] : memref<5x2x32xf32, #tpu.memory_space<vmem>>, vector<1x2x32xf32>
    %158 = vector.shape_cast %157 : vector<1x2x32xf32> to vector<2x32xf32>
    %c3_157 = arith.constant 3 : index
    %c0_158 = arith.constant 0 : index
    %c0_159 = arith.constant 0 : index
    %159 = vector.load %arg6[%c3_157, %c0_158, %c0_159] : memref<4x32x32xf32, #tpu.memory_space<vmem>>, vector<1x32x32xf32>
    %160 = vector.shape_cast %159 : vector<1x32x32xf32> to vector<32x32xf32>
    %cst_160 = arith.constant dense<0.000000e+00> : vector<2x32xf32>
    %161 = tpu.matmul %158, %160, %cst_160 {dimension_numbers = #tpu.dot_dimension_numbers<[1], [0], [0], [1], [0, 0, 1, 1], [], []>} : vector<2x32xf32>, vector<32x32xf32>, vector<2x32xf32> -> vector<2x32xf32>
    %162 = arith.addf %156, %161 : vector<2x32xf32>
    %c3_161 = arith.constant 3 : index
    %c0_162 = arith.constant 0 : index
    %c0_163 = arith.constant 0 : index
    %163 = vector.load %arg7[%c3_161, %c0_162, %c0_163] : memref<4x1x32xf32, #tpu.memory_space<vmem>>, vector<1x1x32xf32>
    %164 = vector.shape_cast %163 : vector<1x1x32xf32> to vector<1x32xf32>
    %165 = vector.broadcast %164 : vector<1x32xf32> to vector<2x32xf32>
    %166 = arith.addf %162, %165 : vector<2x32xf32>
    %167 = math.tanh %166 : vector<2x32xf32>
    %c4_164 = arith.constant 4 : index
    %c0_165 = arith.constant 0 : index
    %c0_166 = arith.constant 0 : index
    %168 = vector.load %arg14[%c4_164, %c0_165, %c0_166] : memref<5x2x32xf32, #tpu.memory_space<vmem>>, vector<1x2x32xf32>
    %169 = vector.shape_cast %168 : vector<1x2x32xf32> to vector<2x32xf32>
    %170 = vector.shape_cast %167 : vector<2x32xf32> to vector<1x2x32xf32>
    tpu.vector_store %arg14[%c4_164, %c0_165, %c0_166], %170 {strides = array<i32>} : memref<5x2x32xf32, #tpu.memory_space<vmem>>, vector<1x2x32xf32>,
    %171 = arith.index_cast %91 : i32 to index
    %c0_167 = arith.constant 0 : index
    %172 = vector.load %arg13[%171, %c0_167] : memref<16x32xf32, #tpu.memory_space<vmem>>, vector<2x32xf32>
    tpu.vector_store %arg13[%171, %c0_167], %167 {strides = array<i32>} : memref<16x32xf32, #tpu.memory_space<vmem>>, vector<2x32xf32>,
    %c2_i32_168 = arith.constant 2 : i32
    %c2_i32_169 = arith.constant 2 : i32
    %173 = arith.muli %c2_i32_168, %c2_i32_169 : i32
    %174 = arith.index_cast %173 : i32 to index
    %c0_170 = arith.constant 0 : index
    %175 = vector.load %arg12[%174, %c0_170] : memref<16x32xf32, #tpu.memory_space<vmem>>, vector<2x32xf32>
    %c0_171 = arith.constant 0 : index
    %c0_172 = arith.constant 0 : index
    %c0_173 = arith.constant 0 : index
    %176 = vector.load %arg14[%c0_171, %c0_172, %c0_173] : memref<5x2x32xf32, #tpu.memory_space<vmem>>, vector<1x2x32xf32>
    %177 = vector.shape_cast %176 : vector<1x2x32xf32> to vector<2x32xf32>
    %c0_174 = arith.constant 0 : index
    %c0_175 = arith.constant 0 : index
    %178 = vector.load %arg4[%c0_174, %c0_175] : memref<32x32xf32, #tpu.memory_space<vmem>>, vector<32x32xf32>
    %cst_176 = arith.constant dense<0.000000e+00> : vector<2x32xf32>
    %179 = tpu.matmul %177, %178, %cst_176 {dimension_numbers = #tpu.dot_dimension_numbers<[1], [0], [0], [1], [0, 0, 1, 1], [], []>} : vector<2x32xf32>, vector<32x32xf32>, vector<2x32xf32> -> vector<2x32xf32>
    %180 = arith.addf %175, %179 : vector<2x32xf32>
    %181 = math.tanh %180 : vector<2x32xf32>
    %c0_177 = arith.constant 0 : index
    %c0_178 = arith.constant 0 : index
    %c0_179 = arith.constant 0 : index
    %182 = vector.load %arg14[%c0_177, %c0_178, %c0_179] : memref<5x2x32xf32, #tpu.memory_space<vmem>>, vector<1x2x32xf32>
    %183 = vector.shape_cast %182 : vector<1x2x32xf32> to vector<2x32xf32>
    %184 = vector.shape_cast %181 : vector<2x32xf32> to vector<1x2x32xf32>
    tpu.vector_store %arg14[%c0_177, %c0_178, %c0_179], %184 {strides = array<i32>} : memref<5x2x32xf32, #tpu.memory_space<vmem>>, vector<1x2x32xf32>,
    %c0_180 = arith.constant 0 : index
    %c0_181 = arith.constant 0 : index
    %c0_182 = arith.constant 0 : index
    %185 = vector.load %arg5[%c0_180, %c0_181, %c0_182] : memref<4x32x32xf32, #tpu.memory_space<vmem>>, vector<1x32x32xf32>
    %186 = vector.shape_cast %185 : vector<1x32x32xf32> to vector<32x32xf32>
    %cst_183 = arith.constant dense<0.000000e+00> : vector<2x32xf32>
    %187 = tpu.matmul %181, %186, %cst_183 {dimension_numbers = #tpu.dot_dimension_numbers<[1], [0], [0], [1], [0, 0, 1, 1], [], []>} : vector<2x32xf32>, vector<32x32xf32>, vector<2x32xf32> -> vector<2x32xf32>
    %c1_184 = arith.constant 1 : index
    %c0_185 = arith.constant 0 : index
    %c0_186 = arith.constant 0 : index
    %188 = vector.load %arg14[%c1_184, %c0_185, %c0_186] : memref<5x2x32xf32, #tpu.memory_space<vmem>>, vector<1x2x32xf32>
    %189 = vector.shape_cast %188 : vector<1x2x32xf32> to vector<2x32xf32>
    %c0_187 = arith.constant 0 : index
    %c0_188 = arith.constant 0 : index
    %c0_189 = arith.constant 0 : index
    %190 = vector.load %arg6[%c0_187, %c0_188, %c0_189] : memref<4x32x32xf32, #tpu.memory_space<vmem>>, vector<1x32x32xf32>
    %191 = vector.shape_cast %190 : vector<1x32x32xf32> to vector<32x32xf32>
    %cst_190 = arith.constant dense<0.000000e+00> : vector<2x32xf32>
    %192 = tpu.matmul %189, %191, %cst_190 {dimension_numbers = #tpu.dot_dimension_numbers<[1], [0], [0], [1], [0, 0, 1, 1], [], []>} : vector<2x32xf32>, vector<32x32xf32>, vector<2x32xf32> -> vector<2x32xf32>
    %193 = arith.addf %187, %192 : vector<2x32xf32>
    %c0_191 = arith.constant 0 : index
    %c0_192 = arith.constant 0 : index
    %c0_193 = arith.constant 0 : index
    %194 = vector.load %arg7[%c0_191, %c0_192, %c0_193] : memref<4x1x32xf32, #tpu.memory_space<vmem>>, vector<1x1x32xf32>
    %195 = vector.shape_cast %194 : vector<1x1x32xf32> to vector<1x32xf32>
    %196 = vector.broadcast %195 : vector<1x32xf32> to vector<2x32xf32>
    %197 = arith.addf %193, %196 : vector<2x32xf32>
    %198 = math.tanh %197 : vector<2x32xf32>
    %c1_194 = arith.constant 1 : index
    %c0_195 = arith.constant 0 : index
    %c0_196 = arith.constant 0 : index
    %199 = vector.load %arg14[%c1_194, %c0_195, %c0_196] : memref<5x2x32xf32, #tpu.memory_space<vmem>>, vector<1x2x32xf32>
    %200 = vector.shape_cast %199 : vector<1x2x32xf32> to vector<2x32xf32>
    %201 = vector.shape_cast %198 : vector<2x32xf32> to vector<1x2x32xf32>
    tpu.vector_store %arg14[%c1_194, %c0_195, %c0_196], %201 {strides = array<i32>} : memref<5x2x32xf32, #tpu.memory_space<vmem>>, vector<1x2x32xf32>,
    %c1_197 = arith.constant 1 : index
    %c0_198 = arith.constant 0 : index
    %c0_199 = arith.constant 0 : index
    %202 = vector.load %arg5[%c1_197, %c0_198, %c0_199] : memref<4x32x32xf32, #tpu.memory_space<vmem>>, vector<1x32x32xf32>
    %203 = vector.shape_cast %202 : vector<1x32x32xf32> to vector<32x32xf32>
    %cst_200 = arith.constant dense<0.000000e+00> : vector<2x32xf32>
    %204 = tpu.matmul %198, %203, %cst_200 {dimension_numbers = #tpu.dot_dimension_numbers<[1], [0], [0], [1], [0, 0, 1, 1], [], []>} : vector<2x32xf32>, vector<32x32xf32>, vector<2x32xf32> -> vector<2x32xf32>
    %c2_201 = arith.constant 2 : index
    %c0_202 = arith.constant 0 : index
    %c0_203 = arith.constant 0 : index
    %205 = vector.load %arg14[%c2_201, %c0_202, %c0_203] : memref<5x2x32xf32, #tpu.memory_space<vmem>>, vector<1x2x32xf32>
    %206 = vector.shape_cast %205 : vector<1x2x32xf32> to vector<2x32xf32>
    %c1_204 = arith.constant 1 : index
    %c0_205 = arith.constant 0 : index
    %c0_206 = arith.constant 0 : index
    %207 = vector.load %arg6[%c1_204, %c0_205, %c0_206] : memref<4x32x32xf32, #tpu.memory_space<vmem>>, vector<1x32x32xf32>
    %208 = vector.shape_cast %207 : vector<1x32x32xf32> to vector<32x32xf32>
    %cst_207 = arith.constant dense<0.000000e+00> : vector<2x32xf32>
    %209 = tpu.matmul %206, %208, %cst_207 {dimension_numbers = #tpu.dot_dimension_numbers<[1], [0], [0], [1], [0, 0, 1, 1], [], []>} : vector<2x32xf32>, vector<32x32xf32>, vector<2x32xf32> -> vector<2x32xf32>
    %210 = arith.addf %204, %209 : vector<2x32xf32>
    %c1_208 = arith.constant 1 : index
    %c0_209 = arith.constant 0 : index
    %c0_210 = arith.constant 0 : index
    %211 = vector.load %arg7[%c1_208, %c0_209, %c0_210] : memref<4x1x32xf32, #tpu.memory_space<vmem>>, vector<1x1x32xf32>
    %212 = vector.shape_cast %211 : vector<1x1x32xf32> to vector<1x32xf32>
    %213 = vector.broadcast %212 : vector<1x32xf32> to vector<2x32xf32>
    %214 = arith.addf %210, %213 : vector<2x32xf32>
    %215 = math.tanh %214 : vector<2x32xf32>
    %c2_211 = arith.constant 2 : index
    %c0_212 = arith.constant 0 : index
    %c0_213 = arith.constant 0 : index
    %216 = vector.load %arg14[%c2_211, %c0_212, %c0_213] : memref<5x2x32xf32, #tpu.memory_space<vmem>>, vector<1x2x32xf32>
    %217 = vector.shape_cast %216 : vector<1x2x32xf32> to vector<2x32xf32>
    %218 = vector.shape_cast %215 : vector<2x32xf32> to vector<1x2x32xf32>
    tpu.vector_store %arg14[%c2_211, %c0_212, %c0_213], %218 {strides = array<i32>} : memref<5x2x32xf32, #tpu.memory_space<vmem>>, vector<1x2x32xf32>,
    %c2_214 = arith.constant 2 : index
    %c0_215 = arith.constant 0 : index
    %c0_216 = arith.constant 0 : index
    %219 = vector.load %arg5[%c2_214, %c0_215, %c0_216] : memref<4x32x32xf32, #tpu.memory_space<vmem>>, vector<1x32x32xf32>
    %220 = vector.shape_cast %219 : vector<1x32x32xf32> to vector<32x32xf32>
    %cst_217 = arith.constant dense<0.000000e+00> : vector<2x32xf32>
    %221 = tpu.matmul %215, %220, %cst_217 {dimension_numbers = #tpu.dot_dimension_numbers<[1], [0], [0], [1], [0, 0, 1, 1], [], []>} : vector<2x32xf32>, vector<32x32xf32>, vector<2x32xf32> -> vector<2x32xf32>
    %c3_218 = arith.constant 3 : index
    %c0_219 = arith.constant 0 : index
    %c0_220 = arith.constant 0 : index
    %222 = vector.load %arg14[%c3_218, %c0_219, %c0_220] : memref<5x2x32xf32, #tpu.memory_space<vmem>>, vector<1x2x32xf32>
    %223 = vector.shape_cast %222 : vector<1x2x32xf32> to vector<2x32xf32>
    %c2_221 = arith.constant 2 : index
    %c0_222 = arith.constant 0 : index
    %c0_223 = arith.constant 0 : index
    %224 = vector.load %arg6[%c2_221, %c0_222, %c0_223] : memref<4x32x32xf32, #tpu.memory_space<vmem>>, vector<1x32x32xf32>
    %225 = vector.shape_cast %224 : vector<1x32x32xf32> to vector<32x32xf32>
    %cst_224 = arith.constant dense<0.000000e+00> : vector<2x32xf32>
    %226 = tpu.matmul %223, %225, %cst_224 {dimension_numbers = #tpu.dot_dimension_numbers<[1], [0], [0], [1], [0, 0, 1, 1], [], []>} : vector<2x32xf32>, vector<32x32xf32>, vector<2x32xf32> -> vector<2x32xf32>
    %227 = arith.addf %221, %226 : vector<2x32xf32>
    %c2_225 = arith.constant 2 : index
    %c0_226 = arith.constant 0 : index
    %c0_227 = arith.constant 0 : index
    %228 = vector.load %arg7[%c2_225, %c0_226, %c0_227] : memref<4x1x32xf32, #tpu.memory_space<vmem>>, vector<1x1x32xf32>
    %229 = vector.shape_cast %228 : vector<1x1x32xf32> to vector<1x32xf32>
    %230 = vector.broadcast %229 : vector<1x32xf32> to vector<2x32xf32>
    %231 = arith.addf %227, %230 : vector<2x32xf32>
    %232 = math.tanh %231 : vector<2x32xf32>
    %c3_228 = arith.constant 3 : index
    %c0_229 = arith.constant 0 : index
    %c0_230 = arith.constant 0 : index
    %233 = vector.load %arg14[%c3_228, %c0_229, %c0_230] : memref<5x2x32xf32, #tpu.memory_space<vmem>>, vector<1x2x32xf32>
    %234 = vector.shape_cast %233 : vector<1x2x32xf32> to vector<2x32xf32>
    %235 = vector.shape_cast %232 : vector<2x32xf32> to vector<1x2x32xf32>
    tpu.vector_store %arg14[%c3_228, %c0_229, %c0_230], %235 {strides = array<i32>} : memref<5x2x32xf32, #tpu.memory_space<vmem>>, vector<1x2x32xf32>,
    %c3_231 = arith.constant 3 : index
    %c0_232 = arith.constant 0 : index
    %c0_233 = arith.constant 0 : index
    %236 = vector.load %arg5[%c3_231, %c0_232, %c0_233] : memref<4x32x32xf32, #tpu.memory_space<vmem>>, vector<1x32x32xf32>
    %237 = vector.shape_cast %236 : vector<1x32x32xf32> to vector<32x32xf32>
    %cst_234 = arith.constant dense<0.000000e+00> : vector<2x32xf32>
    %238 = tpu.matmul %232, %237, %cst_234 {dimension_numbers = #tpu.dot_dimension_numbers<[1], [0], [0], [1], [0, 0, 1, 1], [], []>} : vector<2x32xf32>, vector<32x32xf32>, vector<2x32xf32> -> vector<2x32xf32>
    %c4_235 = arith.constant 4 : index
    %c0_236 = arith.constant 0 : index
    %c0_237 = arith.constant 0 : index
    %239 = vector.load %arg14[%c4_235, %c0_236, %c0_237] : memref<5x2x32xf32, #tpu.memory_space<vmem>>, vector<1x2x32xf32>
    %240 = vector.shape_cast %239 : vector<1x2x32xf32> to vector<2x32xf32>
    %c3_238 = arith.constant 3 : index
    %c0_239 = arith.constant 0 : index
    %c0_240 = arith.constant 0 : index
    %241 = vector.load %arg6[%c3_238, %c0_239, %c0_240] : memref<4x32x32xf32, #tpu.memory_space<vmem>>, vector<1x32x32xf32>
    %242 = vector.shape_cast %241 : vector<1x32x32xf32> to vector<32x32xf32>
    %cst_241 = arith.constant dense<0.000000e+00> : vector<2x32xf32>
    %243 = tpu.matmul %240, %242, %cst_241 {dimension_numbers = #tpu.dot_dimension_numbers<[1], [0], [0], [1], [0, 0, 1, 1], [], []>} : vector<2x32xf32>, vector<32x32xf32>, vector<2x32xf32> -> vector<2x32xf32>
    %244 = arith.addf %238, %243 : vector<2x32xf32>
    %c3_242 = arith.constant 3 : index
    %c0_243 = arith.constant 0 : index
    %c0_244 = arith.constant 0 : index
    %245 = vector.load %arg7[%c3_242, %c0_243, %c0_244] : memref<4x1x32xf32, #tpu.memory_space<vmem>>, vector<1x1x32xf32>
    %246 = vector.shape_cast %245 : vector<1x1x32xf32> to vector<1x32xf32>
    %247 = vector.broadcast %246 : vector<1x32xf32> to vector<2x32xf32>
    %248 = arith.addf %244, %247 : vector<2x32xf32>
    %249 = math.tanh %248 : vector<2x32xf32>
    %c4_245 = arith.constant 4 : index
    %c0_246 = arith.constant 0 : index
    %c0_247 = arith.constant 0 : index
    %250 = vector.load %arg14[%c4_245, %c0_246, %c0_247] : memref<5x2x32xf32, #tpu.memory_space<vmem>>, vector<1x2x32xf32>
    %251 = vector.shape_cast %250 : vector<1x2x32xf32> to vector<2x32xf32>
    %252 = vector.shape_cast %249 : vector<2x32xf32> to vector<1x2x32xf32>
    tpu.vector_store %arg14[%c4_245, %c0_246, %c0_247], %252 {strides = array<i32>} : memref<5x2x32xf32, #tpu.memory_space<vmem>>, vector<1x2x32xf32>,
    %253 = arith.index_cast %173 : i32 to index
    %c0_248 = arith.constant 0 : index
    %254 = vector.load %arg13[%253, %c0_248] : memref<16x32xf32, #tpu.memory_space<vmem>>, vector<2x32xf32>
    tpu.vector_store %arg13[%253, %c0_248], %249 {strides = array<i32>} : memref<16x32xf32, #tpu.memory_space<vmem>>, vector<2x32xf32>,
    %c3_i32 = arith.constant 3 : i32
    %c2_i32_249 = arith.constant 2 : i32
    %255 = arith.muli %c3_i32, %c2_i32_249 : i32
    %256 = arith.index_cast %255 : i32 to index
    %c0_250 = arith.constant 0 : index
    %257 = vector.load %arg12[%256, %c0_250] : memref<16x32xf32, #tpu.memory_space<vmem>>, vector<2x32xf32>
    %c0_251 = arith.constant 0 : index
    %c0_252 = arith.constant 0 : index
    %c0_253 = arith.constant 0 : index
    %258 = vector.load %arg14[%c0_251, %c0_252, %c0_253] : memref<5x2x32xf32, #tpu.memory_space<vmem>>, vector<1x2x32xf32>
    %259 = vector.shape_cast %258 : vector<1x2x32xf32> to vector<2x32xf32>
    %c0_254 = arith.constant 0 : index
    %c0_255 = arith.constant 0 : index
    %260 = vector.load %arg4[%c0_254, %c0_255] : memref<32x32xf32, #tpu.memory_space<vmem>>, vector<32x32xf32>
    %cst_256 = arith.constant dense<0.000000e+00> : vector<2x32xf32>
    %261 = tpu.matmul %259, %260, %cst_256 {dimension_numbers = #tpu.dot_dimension_numbers<[1], [0], [0], [1], [0, 0, 1, 1], [], []>} : vector<2x32xf32>, vector<32x32xf32>, vector<2x32xf32> -> vector<2x32xf32>
    %262 = arith.addf %257, %261 : vector<2x32xf32>
    %263 = math.tanh %262 : vector<2x32xf32>
    %c0_257 = arith.constant 0 : index
    %c0_258 = arith.constant 0 : index
    %c0_259 = arith.constant 0 : index
    %264 = vector.load %arg14[%c0_257, %c0_258, %c0_259] : memref<5x2x32xf32, #tpu.memory_space<vmem>>, vector<1x2x32xf32>
    %265 = vector.shape_cast %264 : vector<1x2x32xf32> to vector<2x32xf32>
    %266 = vector.shape_cast %263 : vector<2x32xf32> to vector<1x2x32xf32>
    tpu.vector_store %arg14[%c0_257, %c0_258, %c0_259], %266 {strides = array<i32>} : memref<5x2x32xf32, #tpu.memory_space<vmem>>, vector<1x2x32xf32>,
    %c0_260 = arith.constant 0 : index
    %c0_261 = arith.constant 0 : index
    %c0_262 = arith.constant 0 : index
    %267 = vector.load %arg5[%c0_260, %c0_261, %c0_262] : memref<4x32x32xf32, #tpu.memory_space<vmem>>, vector<1x32x32xf32>
    %268 = vector.shape_cast %267 : vector<1x32x32xf32> to vector<32x32xf32>
    %cst_263 = arith.constant dense<0.000000e+00> : vector<2x32xf32>
    %269 = tpu.matmul %263, %268, %cst_263 {dimension_numbers = #tpu.dot_dimension_numbers<[1], [0], [0], [1], [0, 0, 1, 1], [], []>} : vector<2x32xf32>, vector<32x32xf32>, vector<2x32xf32> -> vector<2x32xf32>
    %c1_264 = arith.constant 1 : index
    %c0_265 = arith.constant 0 : index
    %c0_266 = arith.constant 0 : index
    %270 = vector.load %arg14[%c1_264, %c0_265, %c0_266] : memref<5x2x32xf32, #tpu.memory_space<vmem>>, vector<1x2x32xf32>
    %271 = vector.shape_cast %270 : vector<1x2x32xf32> to vector<2x32xf32>
    %c0_267 = arith.constant 0 : index
    %c0_268 = arith.constant 0 : index
    %c0_269 = arith.constant 0 : index
    %272 = vector.load %arg6[%c0_267, %c0_268, %c0_269] : memref<4x32x32xf32, #tpu.memory_space<vmem>>, vector<1x32x32xf32>
    %273 = vector.shape_cast %272 : vector<1x32x32xf32> to vector<32x32xf32>
    %cst_270 = arith.constant dense<0.000000e+00> : vector<2x32xf32>
    %274 = tpu.matmul %271, %273, %cst_270 {dimension_numbers = #tpu.dot_dimension_numbers<[1], [0], [0], [1], [0, 0, 1, 1], [], []>} : vector<2x32xf32>, vector<32x32xf32>, vector<2x32xf32> -> vector<2x32xf32>
    %275 = arith.addf %269, %274 : vector<2x32xf32>
    %c0_271 = arith.constant 0 : index
    %c0_272 = arith.constant 0 : index
    %c0_273 = arith.constant 0 : index
    %276 = vector.load %arg7[%c0_271, %c0_272, %c0_273] : memref<4x1x32xf32, #tpu.memory_space<vmem>>, vector<1x1x32xf32>
    %277 = vector.shape_cast %276 : vector<1x1x32xf32> to vector<1x32xf32>
    %278 = vector.broadcast %277 : vector<1x32xf32> to vector<2x32xf32>
    %279 = arith.addf %275, %278 : vector<2x32xf32>
    %280 = math.tanh %279 : vector<2x32xf32>
    %c1_274 = arith.constant 1 : index
    %c0_275 = arith.constant 0 : index
    %c0_276 = arith.constant 0 : index
    %281 = vector.load %arg14[%c1_274, %c0_275, %c0_276] : memref<5x2x32xf32, #tpu.memory_space<vmem>>, vector<1x2x32xf32>
    %282 = vector.shape_cast %281 : vector<1x2x32xf32> to vector<2x32xf32>
    %283 = vector.shape_cast %280 : vector<2x32xf32> to vector<1x2x32xf32>
    tpu.vector_store %arg14[%c1_274, %c0_275, %c0_276], %283 {strides = array<i32>} : memref<5x2x32xf32, #tpu.memory_space<vmem>>, vector<1x2x32xf32>,
    %c1_277 = arith.constant 1 : index
    %c0_278 = arith.constant 0 : index
    %c0_279 = arith.constant 0 : index
    %284 = vector.load %arg5[%c1_277, %c0_278, %c0_279] : memref<4x32x32xf32, #tpu.memory_space<vmem>>, vector<1x32x32xf32>
    %285 = vector.shape_cast %284 : vector<1x32x32xf32> to vector<32x32xf32>
    %cst_280 = arith.constant dense<0.000000e+00> : vector<2x32xf32>
    %286 = tpu.matmul %280, %285, %cst_280 {dimension_numbers = #tpu.dot_dimension_numbers<[1], [0], [0], [1], [0, 0, 1, 1], [], []>} : vector<2x32xf32>, vector<32x32xf32>, vector<2x32xf32> -> vector<2x32xf32>
    %c2_281 = arith.constant 2 : index
    %c0_282 = arith.constant 0 : index
    %c0_283 = arith.constant 0 : index
    %287 = vector.load %arg14[%c2_281, %c0_282, %c0_283] : memref<5x2x32xf32, #tpu.memory_space<vmem>>, vector<1x2x32xf32>
    %288 = vector.shape_cast %287 : vector<1x2x32xf32> to vector<2x32xf32>
    %c1_284 = arith.constant 1 : index
    %c0_285 = arith.constant 0 : index
    %c0_286 = arith.constant 0 : index
    %289 = vector.load %arg6[%c1_284, %c0_285, %c0_286] : memref<4x32x32xf32, #tpu.memory_space<vmem>>, vector<1x32x32xf32>
    %290 = vector.shape_cast %289 : vector<1x32x32xf32> to vector<32x32xf32>
    %cst_287 = arith.constant dense<0.000000e+00> : vector<2x32xf32>
    %291 = tpu.matmul %288, %290, %cst_287 {dimension_numbers = #tpu.dot_dimension_numbers<[1], [0], [0], [1], [0, 0, 1, 1], [], []>} : vector<2x32xf32>, vector<32x32xf32>, vector<2x32xf32> -> vector<2x32xf32>
    %292 = arith.addf %286, %291 : vector<2x32xf32>
    %c1_288 = arith.constant 1 : index
    %c0_289 = arith.constant 0 : index
    %c0_290 = arith.constant 0 : index
    %293 = vector.load %arg7[%c1_288, %c0_289, %c0_290] : memref<4x1x32xf32, #tpu.memory_space<vmem>>, vector<1x1x32xf32>
    %294 = vector.shape_cast %293 : vector<1x1x32xf32> to vector<1x32xf32>
    %295 = vector.broadcast %294 : vector<1x32xf32> to vector<2x32xf32>
    %296 = arith.addf %292, %295 : vector<2x32xf32>
    %297 = math.tanh %296 : vector<2x32xf32>
    %c2_291 = arith.constant 2 : index
    %c0_292 = arith.constant 0 : index
    %c0_293 = arith.constant 0 : index
    %298 = vector.load %arg14[%c2_291, %c0_292, %c0_293] : memref<5x2x32xf32, #tpu.memory_space<vmem>>, vector<1x2x32xf32>
    %299 = vector.shape_cast %298 : vector<1x2x32xf32> to vector<2x32xf32>
    %300 = vector.shape_cast %297 : vector<2x32xf32> to vector<1x2x32xf32>
    tpu.vector_store %arg14[%c2_291, %c0_292, %c0_293], %300 {strides = array<i32>} : memref<5x2x32xf32, #tpu.memory_space<vmem>>, vector<1x2x32xf32>,
    %c2_294 = arith.constant 2 : index
    %c0_295 = arith.constant 0 : index
    %c0_296 = arith.constant 0 : index
    %301 = vector.load %arg5[%c2_294, %c0_295, %c0_296] : memref<4x32x32xf32, #tpu.memory_space<vmem>>, vector<1x32x32xf32>
    %302 = vector.shape_cast %301 : vector<1x32x32xf32> to vector<32x32xf32>
    %cst_297 = arith.constant dense<0.000000e+00> : vector<2x32xf32>
    %303 = tpu.matmul %297, %302, %cst_297 {dimension_numbers = #tpu.dot_dimension_numbers<[1], [0], [0], [1], [0, 0, 1, 1], [], []>} : vector<2x32xf32>, vector<32x32xf32>, vector<2x32xf32> -> vector<2x32xf32>
    %c3_298 = arith.constant 3 : index
    %c0_299 = arith.constant 0 : index
    %c0_300 = arith.constant 0 : index
    %304 = vector.load %arg14[%c3_298, %c0_299, %c0_300] : memref<5x2x32xf32, #tpu.memory_space<vmem>>, vector<1x2x32xf32>
    %305 = vector.shape_cast %304 : vector<1x2x32xf32> to vector<2x32xf32>
    %c2_301 = arith.constant 2 : index
    %c0_302 = arith.constant 0 : index
    %c0_303 = arith.constant 0 : index
    %306 = vector.load %arg6[%c2_301, %c0_302, %c0_303] : memref<4x32x32xf32, #tpu.memory_space<vmem>>, vector<1x32x32xf32>
    %307 = vector.shape_cast %306 : vector<1x32x32xf32> to vector<32x32xf32>
    %cst_304 = arith.constant dense<0.000000e+00> : vector<2x32xf32>
    %308 = tpu.matmul %305, %307, %cst_304 {dimension_numbers = #tpu.dot_dimension_numbers<[1], [0], [0], [1], [0, 0, 1, 1], [], []>} : vector<2x32xf32>, vector<32x32xf32>, vector<2x32xf32> -> vector<2x32xf32>
    %309 = arith.addf %303, %308 : vector<2x32xf32>
    %c2_305 = arith.constant 2 : index
    %c0_306 = arith.constant 0 : index
    %c0_307 = arith.constant 0 : index
    %310 = vector.load %arg7[%c2_305, %c0_306, %c0_307] : memref<4x1x32xf32, #tpu.memory_space<vmem>>, vector<1x1x32xf32>
    %311 = vector.shape_cast %310 : vector<1x1x32xf32> to vector<1x32xf32>
    %312 = vector.broadcast %311 : vector<1x32xf32> to vector<2x32xf32>
    %313 = arith.addf %309, %312 : vector<2x32xf32>
    %314 = math.tanh %313 : vector<2x32xf32>
    %c3_308 = arith.constant 3 : index
    %c0_309 = arith.constant 0 : index
    %c0_310 = arith.constant 0 : index
    %315 = vector.load %arg14[%c3_308, %c0_309, %c0_310] : memref<5x2x32xf32, #tpu.memory_space<vmem>>, vector<1x2x32xf32>
    %316 = vector.shape_cast %315 : vector<1x2x32xf32> to vector<2x32xf32>
    %317 = vector.shape_cast %314 : vector<2x32xf32> to vector<1x2x32xf32>
    tpu.vector_store %arg14[%c3_308, %c0_309, %c0_310], %317 {strides = array<i32>} : memref<5x2x32xf32, #tpu.memory_space<vmem>>, vector<1x2x32xf32>,
    %c3_311 = arith.constant 3 : index
    %c0_312 = arith.constant 0 : index
    %c0_313 = arith.constant 0 : index
    %318 = vector.load %arg5[%c3_311, %c0_312, %c0_313] : memref<4x32x32xf32, #tpu.memory_space<vmem>>, vector<1x32x32xf32>
    %319 = vector.shape_cast %318 : vector<1x32x32xf32> to vector<32x32xf32>
    %cst_314 = arith.constant dense<0.000000e+00> : vector<2x32xf32>
    %320 = tpu.matmul %314, %319, %cst_314 {dimension_numbers = #tpu.dot_dimension_numbers<[1], [0], [0], [1], [0, 0, 1, 1], [], []>} : vector<2x32xf32>, vector<32x32xf32>, vector<2x32xf32> -> vector<2x32xf32>
    %c4_315 = arith.constant 4 : index
    %c0_316 = arith.constant 0 : index
    %c0_317 = arith.constant 0 : index
    %321 = vector.load %arg14[%c4_315, %c0_316, %c0_317] : memref<5x2x32xf32, #tpu.memory_space<vmem>>, vector<1x2x32xf32>
    %322 = vector.shape_cast %321 : vector<1x2x32xf32> to vector<2x32xf32>
    %c3_318 = arith.constant 3 : index
    %c0_319 = arith.constant 0 : index
    %c0_320 = arith.constant 0 : index
    %323 = vector.load %arg6[%c3_318, %c0_319, %c0_320] : memref<4x32x32xf32, #tpu.memory_space<vmem>>, vector<1x32x32xf32>
    %324 = vector.shape_cast %323 : vector<1x32x32xf32> to vector<32x32xf32>
    %cst_321 = arith.constant dense<0.000000e+00> : vector<2x32xf32>
    %325 = tpu.matmul %322, %324, %cst_321 {dimension_numbers = #tpu.dot_dimension_numbers<[1], [0], [0], [1], [0, 0, 1, 1], [], []>} : vector<2x32xf32>, vector<32x32xf32>, vector<2x32xf32> -> vector<2x32xf32>
    %326 = arith.addf %320, %325 : vector<2x32xf32>
    %c3_322 = arith.constant 3 : index
    %c0_323 = arith.constant 0 : index
    %c0_324 = arith.constant 0 : index
    %327 = vector.load %arg7[%c3_322, %c0_323, %c0_324] : memref<4x1x32xf32, #tpu.memory_space<vmem>>, vector<1x1x32xf32>
    %328 = vector.shape_cast %327 : vector<1x1x32xf32> to vector<1x32xf32>
    %329 = vector.broadcast %328 : vector<1x32xf32> to vector<2x32xf32>
    %330 = arith.addf %326, %329 : vector<2x32xf32>
    %331 = math.tanh %330 : vector<2x32xf32>
    %c4_325 = arith.constant 4 : index
    %c0_326 = arith.constant 0 : index
    %c0_327 = arith.constant 0 : index
    %332 = vector.load %arg14[%c4_325, %c0_326, %c0_327] : memref<5x2x32xf32, #tpu.memory_space<vmem>>, vector<1x2x32xf32>
    %333 = vector.shape_cast %332 : vector<1x2x32xf32> to vector<2x32xf32>
    %334 = vector.shape_cast %331 : vector<2x32xf32> to vector<1x2x32xf32>
    tpu.vector_store %arg14[%c4_325, %c0_326, %c0_327], %334 {strides = array<i32>} : memref<5x2x32xf32, #tpu.memory_space<vmem>>, vector<1x2x32xf32>,
    %335 = arith.index_cast %255 : i32 to index
    %c0_328 = arith.constant 0 : index
    %336 = vector.load %arg13[%335, %c0_328] : memref<16x32xf32, #tpu.memory_space<vmem>>, vector<2x32xf32>
    tpu.vector_store %arg13[%335, %c0_328], %331 {strides = array<i32>} : memref<16x32xf32, #tpu.memory_space<vmem>>, vector<2x32xf32>,
    %c4_i32 = arith.constant 4 : i32
    %c2_i32_329 = arith.constant 2 : i32
    %337 = arith.muli %c4_i32, %c2_i32_329 : i32
    %338 = arith.index_cast %337 : i32 to index
    %c0_330 = arith.constant 0 : index
    %339 = vector.load %arg12[%338, %c0_330] : memref<16x32xf32, #tpu.memory_space<vmem>>, vector<2x32xf32>
    %c0_331 = arith.constant 0 : index
    %c0_332 = arith.constant 0 : index
    %c0_333 = arith.constant 0 : index
    %340 = vector.load %arg14[%c0_331, %c0_332, %c0_333] : memref<5x2x32xf32, #tpu.memory_space<vmem>>, vector<1x2x32xf32>
    %341 = vector.shape_cast %340 : vector<1x2x32xf32> to vector<2x32xf32>
    %c0_334 = arith.constant 0 : index
    %c0_335 = arith.constant 0 : index
    %342 = vector.load %arg4[%c0_334, %c0_335] : memref<32x32xf32, #tpu.memory_space<vmem>>, vector<32x32xf32>
    %cst_336 = arith.constant dense<0.000000e+00> : vector<2x32xf32>
    %343 = tpu.matmul %341, %342, %cst_336 {dimension_numbers = #tpu.dot_dimension_numbers<[1], [0], [0], [1], [0, 0, 1, 1], [], []>} : vector<2x32xf32>, vector<32x32xf32>, vector<2x32xf32> -> vector<2x32xf32>
    %344 = arith.addf %339, %343 : vector<2x32xf32>
    %345 = math.tanh %344 : vector<2x32xf32>
    %c0_337 = arith.constant 0 : index
    %c0_338 = arith.constant 0 : index
    %c0_339 = arith.constant 0 : index
    %346 = vector.load %arg14[%c0_337, %c0_338, %c0_339] : memref<5x2x32xf32, #tpu.memory_space<vmem>>, vector<1x2x32xf32>
    %347 = vector.shape_cast %346 : vector<1x2x32xf32> to vector<2x32xf32>
    %348 = vector.shape_cast %345 : vector<2x32xf32> to vector<1x2x32xf32>
    tpu.vector_store %arg14[%c0_337, %c0_338, %c0_339], %348 {strides = array<i32>} : memref<5x2x32xf32, #tpu.memory_space<vmem>>, vector<1x2x32xf32>,
    %c0_340 = arith.constant 0 : index
    %c0_341 = arith.constant 0 : index
    %c0_342 = arith.constant 0 : index
    %349 = vector.load %arg5[%c0_340, %c0_341, %c0_342] : memref<4x32x32xf32, #tpu.memory_space<vmem>>, vector<1x32x32xf32>
    %350 = vector.shape_cast %349 : vector<1x32x32xf32> to vector<32x32xf32>
    %cst_343 = arith.constant dense<0.000000e+00> : vector<2x32xf32>
    %351 = tpu.matmul %345, %350, %cst_343 {dimension_numbers = #tpu.dot_dimension_numbers<[1], [0], [0], [1], [0, 0, 1, 1], [], []>} : vector<2x32xf32>, vector<32x32xf32>, vector<2x32xf32> -> vector<2x32xf32>
    %c1_344 = arith.constant 1 : index
    %c0_345 = arith.constant 0 : index
    %c0_346 = arith.constant 0 : index
    %352 = vector.load %arg14[%c1_344, %c0_345, %c0_346] : memref<5x2x32xf32, #tpu.memory_space<vmem>>, vector<1x2x32xf32>
    %353 = vector.shape_cast %352 : vector<1x2x32xf32> to vector<2x32xf32>
    %c0_347 = arith.constant 0 : index
    %c0_348 = arith.constant 0 : index
    %c0_349 = arith.constant 0 : index
    %354 = vector.load %arg6[%c0_347, %c0_348, %c0_349] : memref<4x32x32xf32, #tpu.memory_space<vmem>>, vector<1x32x32xf32>
    %355 = vector.shape_cast %354 : vector<1x32x32xf32> to vector<32x32xf32>
    %cst_350 = arith.constant dense<0.000000e+00> : vector<2x32xf32>
    %356 = tpu.matmul %353, %355, %cst_350 {dimension_numbers = #tpu.dot_dimension_numbers<[1], [0], [0], [1], [0, 0, 1, 1], [], []>} : vector<2x32xf32>, vector<32x32xf32>, vector<2x32xf32> -> vector<2x32xf32>
    %357 = arith.addf %351, %356 : vector<2x32xf32>
    %c0_351 = arith.constant 0 : index
    %c0_352 = arith.constant 0 : index
    %c0_353 = arith.constant 0 : index
    %358 = vector.load %arg7[%c0_351, %c0_352, %c0_353] : memref<4x1x32xf32, #tpu.memory_space<vmem>>, vector<1x1x32xf32>
    %359 = vector.shape_cast %358 : vector<1x1x32xf32> to vector<1x32xf32>
    %360 = vector.broadcast %359 : vector<1x32xf32> to vector<2x32xf32>
    %361 = arith.addf %357, %360 : vector<2x32xf32>
    %362 = math.tanh %361 : vector<2x32xf32>
    %c1_354 = arith.constant 1 : index
    %c0_355 = arith.constant 0 : index
    %c0_356 = arith.constant 0 : index
    %363 = vector.load %arg14[%c1_354, %c0_355, %c0_356] : memref<5x2x32xf32, #tpu.memory_space<vmem>>, vector<1x2x32xf32>
    %364 = vector.shape_cast %363 : vector<1x2x32xf32> to vector<2x32xf32>
    %365 = vector.shape_cast %362 : vector<2x32xf32> to vector<1x2x32xf32>
    tpu.vector_store %arg14[%c1_354, %c0_355, %c0_356], %365 {strides = array<i32>} : memref<5x2x32xf32, #tpu.memory_space<vmem>>, vector<1x2x32xf32>,
    %c1_357 = arith.constant 1 : index
    %c0_358 = arith.constant 0 : index
    %c0_359 = arith.constant 0 : index
    %366 = vector.load %arg5[%c1_357, %c0_358, %c0_359] : memref<4x32x32xf32, #tpu.memory_space<vmem>>, vector<1x32x32xf32>
    %367 = vector.shape_cast %366 : vector<1x32x32xf32> to vector<32x32xf32>
    %cst_360 = arith.constant dense<0.000000e+00> : vector<2x32xf32>
    %368 = tpu.matmul %362, %367, %cst_360 {dimension_numbers = #tpu.dot_dimension_numbers<[1], [0], [0], [1], [0, 0, 1, 1], [], []>} : vector<2x32xf32>, vector<32x32xf32>, vector<2x32xf32> -> vector<2x32xf32>
    %c2_361 = arith.constant 2 : index
    %c0_362 = arith.constant 0 : index
    %c0_363 = arith.constant 0 : index
    %369 = vector.load %arg14[%c2_361, %c0_362, %c0_363] : memref<5x2x32xf32, #tpu.memory_space<vmem>>, vector<1x2x32xf32>
    %370 = vector.shape_cast %369 : vector<1x2x32xf32> to vector<2x32xf32>
    %c1_364 = arith.constant 1 : index
    %c0_365 = arith.constant 0 : index
    %c0_366 = arith.constant 0 : index
    %371 = vector.load %arg6[%c1_364, %c0_365, %c0_366] : memref<4x32x32xf32, #tpu.memory_space<vmem>>, vector<1x32x32xf32>
    %372 = vector.shape_cast %371 : vector<1x32x32xf32> to vector<32x32xf32>
    %cst_367 = arith.constant dense<0.000000e+00> : vector<2x32xf32>
    %373 = tpu.matmul %370, %372, %cst_367 {dimension_numbers = #tpu.dot_dimension_numbers<[1], [0], [0], [1], [0, 0, 1, 1], [], []>} : vector<2x32xf32>, vector<32x32xf32>, vector<2x32xf32> -> vector<2x32xf32>
    %374 = arith.addf %368, %373 : vector<2x32xf32>
    %c1_368 = arith.constant 1 : index
    %c0_369 = arith.constant 0 : index
    %c0_370 = arith.constant 0 : index
    %375 = vector.load %arg7[%c1_368, %c0_369, %c0_370] : memref<4x1x32xf32, #tpu.memory_space<vmem>>, vector<1x1x32xf32>
    %376 = vector.shape_cast %375 : vector<1x1x32xf32> to vector<1x32xf32>
    %377 = vector.broadcast %376 : vector<1x32xf32> to vector<2x32xf32>
    %378 = arith.addf %374, %377 : vector<2x32xf32>
    %379 = math.tanh %378 : vector<2x32xf32>
    %c2_371 = arith.constant 2 : index
    %c0_372 = arith.constant 0 : index
    %c0_373 = arith.constant 0 : index
    %380 = vector.load %arg14[%c2_371, %c0_372, %c0_373] : memref<5x2x32xf32, #tpu.memory_space<vmem>>, vector<1x2x32xf32>
    %381 = vector.shape_cast %380 : vector<1x2x32xf32> to vector<2x32xf32>
    %382 = vector.shape_cast %379 : vector<2x32xf32> to vector<1x2x32xf32>
    tpu.vector_store %arg14[%c2_371, %c0_372, %c0_373], %382 {strides = array<i32>} : memref<5x2x32xf32, #tpu.memory_space<vmem>>, vector<1x2x32xf32>,
    %c2_374 = arith.constant 2 : index
    %c0_375 = arith.constant 0 : index
    %c0_376 = arith.constant 0 : index
    %383 = vector.load %arg5[%c2_374, %c0_375, %c0_376] : memref<4x32x32xf32, #tpu.memory_space<vmem>>, vector<1x32x32xf32>
    %384 = vector.shape_cast %383 : vector<1x32x32xf32> to vector<32x32xf32>
    %cst_377 = arith.constant dense<0.000000e+00> : vector<2x32xf32>
    %385 = tpu.matmul %379, %384, %cst_377 {dimension_numbers = #tpu.dot_dimension_numbers<[1], [0], [0], [1], [0, 0, 1, 1], [], []>} : vector<2x32xf32>, vector<32x32xf32>, vector<2x32xf32> -> vector<2x32xf32>
    %c3_378 = arith.constant 3 : index
    %c0_379 = arith.constant 0 : index
    %c0_380 = arith.constant 0 : index
    %386 = vector.load %arg14[%c3_378, %c0_379, %c0_380] : memref<5x2x32xf32, #tpu.memory_space<vmem>>, vector<1x2x32xf32>
    %387 = vector.shape_cast %386 : vector<1x2x32xf32> to vector<2x32xf32>
    %c2_381 = arith.constant 2 : index
    %c0_382 = arith.constant 0 : index
    %c0_383 = arith.constant 0 : index
    %388 = vector.load %arg6[%c2_381, %c0_382, %c0_383] : memref<4x32x32xf32, #tpu.memory_space<vmem>>, vector<1x32x32xf32>
    %389 = vector.shape_cast %388 : vector<1x32x32xf32> to vector<32x32xf32>
    %cst_384 = arith.constant dense<0.000000e+00> : vector<2x32xf32>
    %390 = tpu.matmul %387, %389, %cst_384 {dimension_numbers = #tpu.dot_dimension_numbers<[1], [0], [0], [1], [0, 0, 1, 1], [], []>} : vector<2x32xf32>, vector<32x32xf32>, vector<2x32xf32> -> vector<2x32xf32>
    %391 = arith.addf %385, %390 : vector<2x32xf32>
    %c2_385 = arith.constant 2 : index
    %c0_386 = arith.constant 0 : index
    %c0_387 = arith.constant 0 : index
    %392 = vector.load %arg7[%c2_385, %c0_386, %c0_387] : memref<4x1x32xf32, #tpu.memory_space<vmem>>, vector<1x1x32xf32>
    %393 = vector.shape_cast %392 : vector<1x1x32xf32> to vector<1x32xf32>
    %394 = vector.broadcast %393 : vector<1x32xf32> to vector<2x32xf32>
    %395 = arith.addf %391, %394 : vector<2x32xf32>
    %396 = math.tanh %395 : vector<2x32xf32>
    %c3_388 = arith.constant 3 : index
    %c0_389 = arith.constant 0 : index
    %c0_390 = arith.constant 0 : index
    %397 = vector.load %arg14[%c3_388, %c0_389, %c0_390] : memref<5x2x32xf32, #tpu.memory_space<vmem>>, vector<1x2x32xf32>
    %398 = vector.shape_cast %397 : vector<1x2x32xf32> to vector<2x32xf32>
    %399 = vector.shape_cast %396 : vector<2x32xf32> to vector<1x2x32xf32>
    tpu.vector_store %arg14[%c3_388, %c0_389, %c0_390], %399 {strides = array<i32>} : memref<5x2x32xf32, #tpu.memory_space<vmem>>, vector<1x2x32xf32>,
    %c3_391 = arith.constant 3 : index
    %c0_392 = arith.constant 0 : index
    %c0_393 = arith.constant 0 : index
    %400 = vector.load %arg5[%c3_391, %c0_392, %c0_393] : memref<4x32x32xf32, #tpu.memory_space<vmem>>, vector<1x32x32xf32>
    %401 = vector.shape_cast %400 : vector<1x32x32xf32> to vector<32x32xf32>
    %cst_394 = arith.constant dense<0.000000e+00> : vector<2x32xf32>
    %402 = tpu.matmul %396, %401, %cst_394 {dimension_numbers = #tpu.dot_dimension_numbers<[1], [0], [0], [1], [0, 0, 1, 1], [], []>} : vector<2x32xf32>, vector<32x32xf32>, vector<2x32xf32> -> vector<2x32xf32>
    %c4_395 = arith.constant 4 : index
    %c0_396 = arith.constant 0 : index
    %c0_397 = arith.constant 0 : index
    %403 = vector.load %arg14[%c4_395, %c0_396, %c0_397] : memref<5x2x32xf32, #tpu.memory_space<vmem>>, vector<1x2x32xf32>
    %404 = vector.shape_cast %403 : vector<1x2x32xf32> to vector<2x32xf32>
    %c3_398 = arith.constant 3 : index
    %c0_399 = arith.constant 0 : index
    %c0_400 = arith.constant 0 : index
    %405 = vector.load %arg6[%c3_398, %c0_399, %c0_400] : memref<4x32x32xf32, #tpu.memory_space<vmem>>, vector<1x32x32xf32>
    %406 = vector.shape_cast %405 : vector<1x32x32xf32> to vector<32x32xf32>
    %cst_401 = arith.constant dense<0.000000e+00> : vector<2x32xf32>
    %407 = tpu.matmul %404, %406, %cst_401 {dimension_numbers = #tpu.dot_dimension_numbers<[1], [0], [0], [1], [0, 0, 1, 1], [], []>} : vector<2x32xf32>, vector<32x32xf32>, vector<2x32xf32> -> vector<2x32xf32>
    %408 = arith.addf %402, %407 : vector<2x32xf32>
    %c3_402 = arith.constant 3 : index
    %c0_403 = arith.constant 0 : index
    %c0_404 = arith.constant 0 : index
    %409 = vector.load %arg7[%c3_402, %c0_403, %c0_404] : memref<4x1x32xf32, #tpu.memory_space<vmem>>, vector<1x1x32xf32>
    %410 = vector.shape_cast %409 : vector<1x1x32xf32> to vector<1x32xf32>
    %411 = vector.broadcast %410 : vector<1x32xf32> to vector<2x32xf32>
    %412 = arith.addf %408, %411 : vector<2x32xf32>
    %413 = math.tanh %412 : vector<2x32xf32>
    %c4_405 = arith.constant 4 : index
    %c0_406 = arith.constant 0 : index
    %c0_407 = arith.constant 0 : index
    %414 = vector.load %arg14[%c4_405, %c0_406, %c0_407] : memref<5x2x32xf32, #tpu.memory_space<vmem>>, vector<1x2x32xf32>
    %415 = vector.shape_cast %414 : vector<1x2x32xf32> to vector<2x32xf32>
    %416 = vector.shape_cast %413 : vector<2x32xf32> to vector<1x2x32xf32>
    tpu.vector_store %arg14[%c4_405, %c0_406, %c0_407], %416 {strides = array<i32>} : memref<5x2x32xf32, #tpu.memory_space<vmem>>, vector<1x2x32xf32>,
    %417 = arith.index_cast %337 : i32 to index
    %c0_408 = arith.constant 0 : index
    %418 = vector.load %arg13[%417, %c0_408] : memref<16x32xf32, #tpu.memory_space<vmem>>, vector<2x32xf32>
    tpu.vector_store %arg13[%417, %c0_408], %413 {strides = array<i32>} : memref<16x32xf32, #tpu.memory_space<vmem>>, vector<2x32xf32>,
    %c5_i32 = arith.constant 5 : i32
    %c2_i32_409 = arith.constant 2 : i32
    %419 = arith.muli %c5_i32, %c2_i32_409 : i32
    %420 = arith.index_cast %419 : i32 to index
    %c0_410 = arith.constant 0 : index
    %421 = vector.load %arg12[%420, %c0_410] : memref<16x32xf32, #tpu.memory_space<vmem>>, vector<2x32xf32>
    %c0_411 = arith.constant 0 : index
    %c0_412 = arith.constant 0 : index
    %c0_413 = arith.constant 0 : index
    %422 = vector.load %arg14[%c0_411, %c0_412, %c0_413] : memref<5x2x32xf32, #tpu.memory_space<vmem>>, vector<1x2x32xf32>
    %423 = vector.shape_cast %422 : vector<1x2x32xf32> to vector<2x32xf32>
    %c0_414 = arith.constant 0 : index
    %c0_415 = arith.constant 0 : index
    %424 = vector.load %arg4[%c0_414, %c0_415] : memref<32x32xf32, #tpu.memory_space<vmem>>, vector<32x32xf32>
    %cst_416 = arith.constant dense<0.000000e+00> : vector<2x32xf32>
    %425 = tpu.matmul %423, %424, %cst_416 {dimension_numbers = #tpu.dot_dimension_numbers<[1], [0], [0], [1], [0, 0, 1, 1], [], []>} : vector<2x32xf32>, vector<32x32xf32>, vector<2x32xf32> -> vector<2x32xf32>
    %426 = arith.addf %421, %425 : vector<2x32xf32>
    %427 = math.tanh %426 : vector<2x32xf32>
    %c0_417 = arith.constant 0 : index
    %c0_418 = arith.constant 0 : index
    %c0_419 = arith.constant 0 : index
    %428 = vector.load %arg14[%c0_417, %c0_418, %c0_419] : memref<5x2x32xf32, #tpu.memory_space<vmem>>, vector<1x2x32xf32>
    %429 = vector.shape_cast %428 : vector<1x2x32xf32> to vector<2x32xf32>
    %430 = vector.shape_cast %427 : vector<2x32xf32> to vector<1x2x32xf32>
    tpu.vector_store %arg14[%c0_417, %c0_418, %c0_419], %430 {strides = array<i32>} : memref<5x2x32xf32, #tpu.memory_space<vmem>>, vector<1x2x32xf32>,
    %c0_420 = arith.constant 0 : index
    %c0_421 = arith.constant 0 : index
    %c0_422 = arith.constant 0 : index
    %431 = vector.load %arg5[%c0_420, %c0_421, %c0_422] : memref<4x32x32xf32, #tpu.memory_space<vmem>>, vector<1x32x32xf32>
    %432 = vector.shape_cast %431 : vector<1x32x32xf32> to vector<32x32xf32>
    %cst_423 = arith.constant dense<0.000000e+00> : vector<2x32xf32>
    %433 = tpu.matmul %427, %432, %cst_423 {dimension_numbers = #tpu.dot_dimension_numbers<[1], [0], [0], [1], [0, 0, 1, 1], [], []>} : vector<2x32xf32>, vector<32x32xf32>, vector<2x32xf32> -> vector<2x32xf32>
    %c1_424 = arith.constant 1 : index
    %c0_425 = arith.constant 0 : index
    %c0_426 = arith.constant 0 : index
    %434 = vector.load %arg14[%c1_424, %c0_425, %c0_426] : memref<5x2x32xf32, #tpu.memory_space<vmem>>, vector<1x2x32xf32>
    %435 = vector.shape_cast %434 : vector<1x2x32xf32> to vector<2x32xf32>
    %c0_427 = arith.constant 0 : index
    %c0_428 = arith.constant 0 : index
    %c0_429 = arith.constant 0 : index
    %436 = vector.load %arg6[%c0_427, %c0_428, %c0_429] : memref<4x32x32xf32, #tpu.memory_space<vmem>>, vector<1x32x32xf32>
    %437 = vector.shape_cast %436 : vector<1x32x32xf32> to vector<32x32xf32>
    %cst_430 = arith.constant dense<0.000000e+00> : vector<2x32xf32>
    %438 = tpu.matmul %435, %437, %cst_430 {dimension_numbers = #tpu.dot_dimension_numbers<[1], [0], [0], [1], [0, 0, 1, 1], [], []>} : vector<2x32xf32>, vector<32x32xf32>, vector<2x32xf32> -> vector<2x32xf32>
    %439 = arith.addf %433, %438 : vector<2x32xf32>
    %c0_431 = arith.constant 0 : index
    %c0_432 = arith.constant 0 : index
    %c0_433 = arith.constant 0 : index
    %440 = vector.load %arg7[%c0_431, %c0_432, %c0_433] : memref<4x1x32xf32, #tpu.memory_space<vmem>>, vector<1x1x32xf32>
    %441 = vector.shape_cast %440 : vector<1x1x32xf32> to vector<1x32xf32>
    %442 = vector.broadcast %441 : vector<1x32xf32> to vector<2x32xf32>
    %443 = arith.addf %439, %442 : vector<2x32xf32>
    %444 = math.tanh %443 : vector<2x32xf32>
    %c1_434 = arith.constant 1 : index
    %c0_435 = arith.constant 0 : index
    %c0_436 = arith.constant 0 : index
    %445 = vector.load %arg14[%c1_434, %c0_435, %c0_436] : memref<5x2x32xf32, #tpu.memory_space<vmem>>, vector<1x2x32xf32>
    %446 = vector.shape_cast %445 : vector<1x2x32xf32> to vector<2x32xf32>
    %447 = vector.shape_cast %444 : vector<2x32xf32> to vector<1x2x32xf32>
    tpu.vector_store %arg14[%c1_434, %c0_435, %c0_436], %447 {strides = array<i32>} : memref<5x2x32xf32, #tpu.memory_space<vmem>>, vector<1x2x32xf32>,
    %c1_437 = arith.constant 1 : index
    %c0_438 = arith.constant 0 : index
    %c0_439 = arith.constant 0 : index
    %448 = vector.load %arg5[%c1_437, %c0_438, %c0_439] : memref<4x32x32xf32, #tpu.memory_space<vmem>>, vector<1x32x32xf32>
    %449 = vector.shape_cast %448 : vector<1x32x32xf32> to vector<32x32xf32>
    %cst_440 = arith.constant dense<0.000000e+00> : vector<2x32xf32>
    %450 = tpu.matmul %444, %449, %cst_440 {dimension_numbers = #tpu.dot_dimension_numbers<[1], [0], [0], [1], [0, 0, 1, 1], [], []>} : vector<2x32xf32>, vector<32x32xf32>, vector<2x32xf32> -> vector<2x32xf32>
    %c2_441 = arith.constant 2 : index
    %c0_442 = arith.constant 0 : index
    %c0_443 = arith.constant 0 : index
    %451 = vector.load %arg14[%c2_441, %c0_442, %c0_443] : memref<5x2x32xf32, #tpu.memory_space<vmem>>, vector<1x2x32xf32>
    %452 = vector.shape_cast %451 : vector<1x2x32xf32> to vector<2x32xf32>
    %c1_444 = arith.constant 1 : index
    %c0_445 = arith.constant 0 : index
    %c0_446 = arith.constant 0 : index
    %453 = vector.load %arg6[%c1_444, %c0_445, %c0_446] : memref<4x32x32xf32, #tpu.memory_space<vmem>>, vector<1x32x32xf32>
    %454 = vector.shape_cast %453 : vector<1x32x32xf32> to vector<32x32xf32>
    %cst_447 = arith.constant dense<0.000000e+00> : vector<2x32xf32>
    %455 = tpu.matmul %452, %454, %cst_447 {dimension_numbers = #tpu.dot_dimension_numbers<[1], [0], [0], [1], [0, 0, 1, 1], [], []>} : vector<2x32xf32>, vector<32x32xf32>, vector<2x32xf32> -> vector<2x32xf32>
    %456 = arith.addf %450, %455 : vector<2x32xf32>
    %c1_448 = arith.constant 1 : index
    %c0_449 = arith.constant 0 : index
    %c0_450 = arith.constant 0 : index
    %457 = vector.load %arg7[%c1_448, %c0_449, %c0_450] : memref<4x1x32xf32, #tpu.memory_space<vmem>>, vector<1x1x32xf32>
    %458 = vector.shape_cast %457 : vector<1x1x32xf32> to vector<1x32xf32>
    %459 = vector.broadcast %458 : vector<1x32xf32> to vector<2x32xf32>
    %460 = arith.addf %456, %459 : vector<2x32xf32>
    %461 = math.tanh %460 : vector<2x32xf32>
    %c2_451 = arith.constant 2 : index
    %c0_452 = arith.constant 0 : index
    %c0_453 = arith.constant 0 : index
    %462 = vector.load %arg14[%c2_451, %c0_452, %c0_453] : memref<5x2x32xf32, #tpu.memory_space<vmem>>, vector<1x2x32xf32>
    %463 = vector.shape_cast %462 : vector<1x2x32xf32> to vector<2x32xf32>
    %464 = vector.shape_cast %461 : vector<2x32xf32> to vector<1x2x32xf32>
    tpu.vector_store %arg14[%c2_451, %c0_452, %c0_453], %464 {strides = array<i32>} : memref<5x2x32xf32, #tpu.memory_space<vmem>>, vector<1x2x32xf32>,
    %c2_454 = arith.constant 2 : index
    %c0_455 = arith.constant 0 : index
    %c0_456 = arith.constant 0 : index
    %465 = vector.load %arg5[%c2_454, %c0_455, %c0_456] : memref<4x32x32xf32, #tpu.memory_space<vmem>>, vector<1x32x32xf32>
    %466 = vector.shape_cast %465 : vector<1x32x32xf32> to vector<32x32xf32>
    %cst_457 = arith.constant dense<0.000000e+00> : vector<2x32xf32>
    %467 = tpu.matmul %461, %466, %cst_457 {dimension_numbers = #tpu.dot_dimension_numbers<[1], [0], [0], [1], [0, 0, 1, 1], [], []>} : vector<2x32xf32>, vector<32x32xf32>, vector<2x32xf32> -> vector<2x32xf32>
    %c3_458 = arith.constant 3 : index
    %c0_459 = arith.constant 0 : index
    %c0_460 = arith.constant 0 : index
    %468 = vector.load %arg14[%c3_458, %c0_459, %c0_460] : memref<5x2x32xf32, #tpu.memory_space<vmem>>, vector<1x2x32xf32>
    %469 = vector.shape_cast %468 : vector<1x2x32xf32> to vector<2x32xf32>
    %c2_461 = arith.constant 2 : index
    %c0_462 = arith.constant 0 : index
    %c0_463 = arith.constant 0 : index
    %470 = vector.load %arg6[%c2_461, %c0_462, %c0_463] : memref<4x32x32xf32, #tpu.memory_space<vmem>>, vector<1x32x32xf32>
    %471 = vector.shape_cast %470 : vector<1x32x32xf32> to vector<32x32xf32>
    %cst_464 = arith.constant dense<0.000000e+00> : vector<2x32xf32>
    %472 = tpu.matmul %469, %471, %cst_464 {dimension_numbers = #tpu.dot_dimension_numbers<[1], [0], [0], [1], [0, 0, 1, 1], [], []>} : vector<2x32xf32>, vector<32x32xf32>, vector<2x32xf32> -> vector<2x32xf32>
    %473 = arith.addf %467, %472 : vector<2x32xf32>
    %c2_465 = arith.constant 2 : index
    %c0_466 = arith.constant 0 : index
    %c0_467 = arith.constant 0 : index
    %474 = vector.load %arg7[%c2_465, %c0_466, %c0_467] : memref<4x1x32xf32, #tpu.memory_space<vmem>>, vector<1x1x32xf32>
    %475 = vector.shape_cast %474 : vector<1x1x32xf32> to vector<1x32xf32>
    %476 = vector.broadcast %475 : vector<1x32xf32> to vector<2x32xf32>
    %477 = arith.addf %473, %476 : vector<2x32xf32>
    %478 = math.tanh %477 : vector<2x32xf32>
    %c3_468 = arith.constant 3 : index
    %c0_469 = arith.constant 0 : index
    %c0_470 = arith.constant 0 : index
    %479 = vector.load %arg14[%c3_468, %c0_469, %c0_470] : memref<5x2x32xf32, #tpu.memory_space<vmem>>, vector<1x2x32xf32>
    %480 = vector.shape_cast %479 : vector<1x2x32xf32> to vector<2x32xf32>
    %481 = vector.shape_cast %478 : vector<2x32xf32> to vector<1x2x32xf32>
    tpu.vector_store %arg14[%c3_468, %c0_469, %c0_470], %481 {strides = array<i32>} : memref<5x2x32xf32, #tpu.memory_space<vmem>>, vector<1x2x32xf32>,
    %c3_471 = arith.constant 3 : index
    %c0_472 = arith.constant 0 : index
    %c0_473 = arith.constant 0 : index
    %482 = vector.load %arg5[%c3_471, %c0_472, %c0_473] : memref<4x32x32xf32, #tpu.memory_space<vmem>>, vector<1x32x32xf32>
    %483 = vector.shape_cast %482 : vector<1x32x32xf32> to vector<32x32xf32>
    %cst_474 = arith.constant dense<0.000000e+00> : vector<2x32xf32>
    %484 = tpu.matmul %478, %483, %cst_474 {dimension_numbers = #tpu.dot_dimension_numbers<[1], [0], [0], [1], [0, 0, 1, 1], [], []>} : vector<2x32xf32>, vector<32x32xf32>, vector<2x32xf32> -> vector<2x32xf32>
    %c4_475 = arith.constant 4 : index
    %c0_476 = arith.constant 0 : index
    %c0_477 = arith.constant 0 : index
    %485 = vector.load %arg14[%c4_475, %c0_476, %c0_477] : memref<5x2x32xf32, #tpu.memory_space<vmem>>, vector<1x2x32xf32>
    %486 = vector.shape_cast %485 : vector<1x2x32xf32> to vector<2x32xf32>
    %c3_478 = arith.constant 3 : index
    %c0_479 = arith.constant 0 : index
    %c0_480 = arith.constant 0 : index
    %487 = vector.load %arg6[%c3_478, %c0_479, %c0_480] : memref<4x32x32xf32, #tpu.memory_space<vmem>>, vector<1x32x32xf32>
    %488 = vector.shape_cast %487 : vector<1x32x32xf32> to vector<32x32xf32>
    %cst_481 = arith.constant dense<0.000000e+00> : vector<2x32xf32>
    %489 = tpu.matmul %486, %488, %cst_481 {dimension_numbers = #tpu.dot_dimension_numbers<[1], [0], [0], [1], [0, 0, 1, 1], [], []>} : vector<2x32xf32>, vector<32x32xf32>, vector<2x32xf32> -> vector<2x32xf32>
    %490 = arith.addf %484, %489 : vector<2x32xf32>
    %c3_482 = arith.constant 3 : index
    %c0_483 = arith.constant 0 : index
    %c0_484 = arith.constant 0 : index
    %491 = vector.load %arg7[%c3_482, %c0_483, %c0_484] : memref<4x1x32xf32, #tpu.memory_space<vmem>>, vector<1x1x32xf32>
    %492 = vector.shape_cast %491 : vector<1x1x32xf32> to vector<1x32xf32>
    %493 = vector.broadcast %492 : vector<1x32xf32> to vector<2x32xf32>
    %494 = arith.addf %490, %493 : vector<2x32xf32>
    %495 = math.tanh %494 : vector<2x32xf32>
    %c4_485 = arith.constant 4 : index
    %c0_486 = arith.constant 0 : index
    %c0_487 = arith.constant 0 : index
    %496 = vector.load %arg14[%c4_485, %c0_486, %c0_487] : memref<5x2x32xf32, #tpu.memory_space<vmem>>, vector<1x2x32xf32>
    %497 = vector.shape_cast %496 : vector<1x2x32xf32> to vector<2x32xf32>
    %498 = vector.shape_cast %495 : vector<2x32xf32> to vector<1x2x32xf32>
    tpu.vector_store %arg14[%c4_485, %c0_486, %c0_487], %498 {strides = array<i32>} : memref<5x2x32xf32, #tpu.memory_space<vmem>>, vector<1x2x32xf32>,
    %499 = arith.index_cast %419 : i32 to index
    %c0_488 = arith.constant 0 : index
    %500 = vector.load %arg13[%499, %c0_488] : memref<16x32xf32, #tpu.memory_space<vmem>>, vector<2x32xf32>
    tpu.vector_store %arg13[%499, %c0_488], %495 {strides = array<i32>} : memref<16x32xf32, #tpu.memory_space<vmem>>, vector<2x32xf32>,
    %c6_i32 = arith.constant 6 : i32
    %c2_i32_489 = arith.constant 2 : i32
    %501 = arith.muli %c6_i32, %c2_i32_489 : i32
    %502 = arith.index_cast %501 : i32 to index
    %c0_490 = arith.constant 0 : index
    %503 = vector.load %arg12[%502, %c0_490] : memref<16x32xf32, #tpu.memory_space<vmem>>, vector<2x32xf32>
    %c0_491 = arith.constant 0 : index
    %c0_492 = arith.constant 0 : index
    %c0_493 = arith.constant 0 : index
    %504 = vector.load %arg14[%c0_491, %c0_492, %c0_493] : memref<5x2x32xf32, #tpu.memory_space<vmem>>, vector<1x2x32xf32>
    %505 = vector.shape_cast %504 : vector<1x2x32xf32> to vector<2x32xf32>
    %c0_494 = arith.constant 0 : index
    %c0_495 = arith.constant 0 : index
    %506 = vector.load %arg4[%c0_494, %c0_495] : memref<32x32xf32, #tpu.memory_space<vmem>>, vector<32x32xf32>
    %cst_496 = arith.constant dense<0.000000e+00> : vector<2x32xf32>
    %507 = tpu.matmul %505, %506, %cst_496 {dimension_numbers = #tpu.dot_dimension_numbers<[1], [0], [0], [1], [0, 0, 1, 1], [], []>} : vector<2x32xf32>, vector<32x32xf32>, vector<2x32xf32> -> vector<2x32xf32>
    %508 = arith.addf %503, %507 : vector<2x32xf32>
    %509 = math.tanh %508 : vector<2x32xf32>
    %c0_497 = arith.constant 0 : index
    %c0_498 = arith.constant 0 : index
    %c0_499 = arith.constant 0 : index
    %510 = vector.load %arg14[%c0_497, %c0_498, %c0_499] : memref<5x2x32xf32, #tpu.memory_space<vmem>>, vector<1x2x32xf32>
    %511 = vector.shape_cast %510 : vector<1x2x32xf32> to vector<2x32xf32>
    %512 = vector.shape_cast %509 : vector<2x32xf32> to vector<1x2x32xf32>
    tpu.vector_store %arg14[%c0_497, %c0_498, %c0_499], %512 {strides = array<i32>} : memref<5x2x32xf32, #tpu.memory_space<vmem>>, vector<1x2x32xf32>,
    %c0_500 = arith.constant 0 : index
    %c0_501 = arith.constant 0 : index
    %c0_502 = arith.constant 0 : index
    %513 = vector.load %arg5[%c0_500, %c0_501, %c0_502] : memref<4x32x32xf32, #tpu.memory_space<vmem>>, vector<1x32x32xf32>
    %514 = vector.shape_cast %513 : vector<1x32x32xf32> to vector<32x32xf32>
    %cst_503 = arith.constant dense<0.000000e+00> : vector<2x32xf32>
    %515 = tpu.matmul %509, %514, %cst_503 {dimension_numbers = #tpu.dot_dimension_numbers<[1], [0], [0], [1], [0, 0, 1, 1], [], []>} : vector<2x32xf32>, vector<32x32xf32>, vector<2x32xf32> -> vector<2x32xf32>
    %c1_504 = arith.constant 1 : index
    %c0_505 = arith.constant 0 : index
    %c0_506 = arith.constant 0 : index
    %516 = vector.load %arg14[%c1_504, %c0_505, %c0_506] : memref<5x2x32xf32, #tpu.memory_space<vmem>>, vector<1x2x32xf32>
    %517 = vector.shape_cast %516 : vector<1x2x32xf32> to vector<2x32xf32>
    %c0_507 = arith.constant 0 : index
    %c0_508 = arith.constant 0 : index
    %c0_509 = arith.constant 0 : index
    %518 = vector.load %arg6[%c0_507, %c0_508, %c0_509] : memref<4x32x32xf32, #tpu.memory_space<vmem>>, vector<1x32x32xf32>
    %519 = vector.shape_cast %518 : vector<1x32x32xf32> to vector<32x32xf32>
    %cst_510 = arith.constant dense<0.000000e+00> : vector<2x32xf32>
    %520 = tpu.matmul %517, %519, %cst_510 {dimension_numbers = #tpu.dot_dimension_numbers<[1], [0], [0], [1], [0, 0, 1, 1], [], []>} : vector<2x32xf32>, vector<32x32xf32>, vector<2x32xf32> -> vector<2x32xf32>
    %521 = arith.addf %515, %520 : vector<2x32xf32>
    %c0_511 = arith.constant 0 : index
    %c0_512 = arith.constant 0 : index
    %c0_513 = arith.constant 0 : index
    %522 = vector.load %arg7[%c0_511, %c0_512, %c0_513] : memref<4x1x32xf32, #tpu.memory_space<vmem>>, vector<1x1x32xf32>
    %523 = vector.shape_cast %522 : vector<1x1x32xf32> to vector<1x32xf32>
    %524 = vector.broadcast %523 : vector<1x32xf32> to vector<2x32xf32>
    %525 = arith.addf %521, %524 : vector<2x32xf32>
    %526 = math.tanh %525 : vector<2x32xf32>
    %c1_514 = arith.constant 1 : index
    %c0_515 = arith.constant 0 : index
    %c0_516 = arith.constant 0 : index
    %527 = vector.load %arg14[%c1_514, %c0_515, %c0_516] : memref<5x2x32xf32, #tpu.memory_space<vmem>>, vector<1x2x32xf32>
    %528 = vector.shape_cast %527 : vector<1x2x32xf32> to vector<2x32xf32>
    %529 = vector.shape_cast %526 : vector<2x32xf32> to vector<1x2x32xf32>
    tpu.vector_store %arg14[%c1_514, %c0_515, %c0_516], %529 {strides = array<i32>} : memref<5x2x32xf32, #tpu.memory_space<vmem>>, vector<1x2x32xf32>,
    %c1_517 = arith.constant 1 : index
    %c0_518 = arith.constant 0 : index
    %c0_519 = arith.constant 0 : index
    %530 = vector.load %arg5[%c1_517, %c0_518, %c0_519] : memref<4x32x32xf32, #tpu.memory_space<vmem>>, vector<1x32x32xf32>
    %531 = vector.shape_cast %530 : vector<1x32x32xf32> to vector<32x32xf32>
    %cst_520 = arith.constant dense<0.000000e+00> : vector<2x32xf32>
    %532 = tpu.matmul %526, %531, %cst_520 {dimension_numbers = #tpu.dot_dimension_numbers<[1], [0], [0], [1], [0, 0, 1, 1], [], []>} : vector<2x32xf32>, vector<32x32xf32>, vector<2x32xf32> -> vector<2x32xf32>
    %c2_521 = arith.constant 2 : index
    %c0_522 = arith.constant 0 : index
    %c0_523 = arith.constant 0 : index
    %533 = vector.load %arg14[%c2_521, %c0_522, %c0_523] : memref<5x2x32xf32, #tpu.memory_space<vmem>>, vector<1x2x32xf32>
    %534 = vector.shape_cast %533 : vector<1x2x32xf32> to vector<2x32xf32>
    %c1_524 = arith.constant 1 : index
    %c0_525 = arith.constant 0 : index
    %c0_526 = arith.constant 0 : index
    %535 = vector.load %arg6[%c1_524, %c0_525, %c0_526] : memref<4x32x32xf32, #tpu.memory_space<vmem>>, vector<1x32x32xf32>
    %536 = vector.shape_cast %535 : vector<1x32x32xf32> to vector<32x32xf32>
    %cst_527 = arith.constant dense<0.000000e+00> : vector<2x32xf32>
    %537 = tpu.matmul %534, %536, %cst_527 {dimension_numbers = #tpu.dot_dimension_numbers<[1], [0], [0], [1], [0, 0, 1, 1], [], []>} : vector<2x32xf32>, vector<32x32xf32>, vector<2x32xf32> -> vector<2x32xf32>
    %538 = arith.addf %532, %537 : vector<2x32xf32>
    %c1_528 = arith.constant 1 : index
    %c0_529 = arith.constant 0 : index
    %c0_530 = arith.constant 0 : index
    %539 = vector.load %arg7[%c1_528, %c0_529, %c0_530] : memref<4x1x32xf32, #tpu.memory_space<vmem>>, vector<1x1x32xf32>
    %540 = vector.shape_cast %539 : vector<1x1x32xf32> to vector<1x32xf32>
    %541 = vector.broadcast %540 : vector<1x32xf32> to vector<2x32xf32>
    %542 = arith.addf %538, %541 : vector<2x32xf32>
    %543 = math.tanh %542 : vector<2x32xf32>
    %c2_531 = arith.constant 2 : index
    %c0_532 = arith.constant 0 : index
    %c0_533 = arith.constant 0 : index
    %544 = vector.load %arg14[%c2_531, %c0_532, %c0_533] : memref<5x2x32xf32, #tpu.memory_space<vmem>>, vector<1x2x32xf32>
    %545 = vector.shape_cast %544 : vector<1x2x32xf32> to vector<2x32xf32>
    %546 = vector.shape_cast %543 : vector<2x32xf32> to vector<1x2x32xf32>
    tpu.vector_store %arg14[%c2_531, %c0_532, %c0_533], %546 {strides = array<i32>} : memref<5x2x32xf32, #tpu.memory_space<vmem>>, vector<1x2x32xf32>,
    %c2_534 = arith.constant 2 : index
    %c0_535 = arith.constant 0 : index
    %c0_536 = arith.constant 0 : index
    %547 = vector.load %arg5[%c2_534, %c0_535, %c0_536] : memref<4x32x32xf32, #tpu.memory_space<vmem>>, vector<1x32x32xf32>
    %548 = vector.shape_cast %547 : vector<1x32x32xf32> to vector<32x32xf32>
    %cst_537 = arith.constant dense<0.000000e+00> : vector<2x32xf32>
    %549 = tpu.matmul %543, %548, %cst_537 {dimension_numbers = #tpu.dot_dimension_numbers<[1], [0], [0], [1], [0, 0, 1, 1], [], []>} : vector<2x32xf32>, vector<32x32xf32>, vector<2x32xf32> -> vector<2x32xf32>
    %c3_538 = arith.constant 3 : index
    %c0_539 = arith.constant 0 : index
    %c0_540 = arith.constant 0 : index
    %550 = vector.load %arg14[%c3_538, %c0_539, %c0_540] : memref<5x2x32xf32, #tpu.memory_space<vmem>>, vector<1x2x32xf32>
    %551 = vector.shape_cast %550 : vector<1x2x32xf32> to vector<2x32xf32>
    %c2_541 = arith.constant 2 : index
    %c0_542 = arith.constant 0 : index
    %c0_543 = arith.constant 0 : index
    %552 = vector.load %arg6[%c2_541, %c0_542, %c0_543] : memref<4x32x32xf32, #tpu.memory_space<vmem>>, vector<1x32x32xf32>
    %553 = vector.shape_cast %552 : vector<1x32x32xf32> to vector<32x32xf32>
    %cst_544 = arith.constant dense<0.000000e+00> : vector<2x32xf32>
    %554 = tpu.matmul %551, %553, %cst_544 {dimension_numbers = #tpu.dot_dimension_numbers<[1], [0], [0], [1], [0, 0, 1, 1], [], []>} : vector<2x32xf32>, vector<32x32xf32>, vector<2x32xf32> -> vector<2x32xf32>
    %555 = arith.addf %549, %554 : vector<2x32xf32>
    %c2_545 = arith.constant 2 : index
    %c0_546 = arith.constant 0 : index
    %c0_547 = arith.constant 0 : index
    %556 = vector.load %arg7[%c2_545, %c0_546, %c0_547] : memref<4x1x32xf32, #tpu.memory_space<vmem>>, vector<1x1x32xf32>
    %557 = vector.shape_cast %556 : vector<1x1x32xf32> to vector<1x32xf32>
    %558 = vector.broadcast %557 : vector<1x32xf32> to vector<2x32xf32>
    %559 = arith.addf %555, %558 : vector<2x32xf32>
    %560 = math.tanh %559 : vector<2x32xf32>
    %c3_548 = arith.constant 3 : index
    %c0_549 = arith.constant 0 : index
    %c0_550 = arith.constant 0 : index
    %561 = vector.load %arg14[%c3_548, %c0_549, %c0_550] : memref<5x2x32xf32, #tpu.memory_space<vmem>>, vector<1x2x32xf32>
    %562 = vector.shape_cast %561 : vector<1x2x32xf32> to vector<2x32xf32>
    %563 = vector.shape_cast %560 : vector<2x32xf32> to vector<1x2x32xf32>
    tpu.vector_store %arg14[%c3_548, %c0_549, %c0_550], %563 {strides = array<i32>} : memref<5x2x32xf32, #tpu.memory_space<vmem>>, vector<1x2x32xf32>,
    %c3_551 = arith.constant 3 : index
    %c0_552 = arith.constant 0 : index
    %c0_553 = arith.constant 0 : index
    %564 = vector.load %arg5[%c3_551, %c0_552, %c0_553] : memref<4x32x32xf32, #tpu.memory_space<vmem>>, vector<1x32x32xf32>
    %565 = vector.shape_cast %564 : vector<1x32x32xf32> to vector<32x32xf32>
    %cst_554 = arith.constant dense<0.000000e+00> : vector<2x32xf32>
    %566 = tpu.matmul %560, %565, %cst_554 {dimension_numbers = #tpu.dot_dimension_numbers<[1], [0], [0], [1], [0, 0, 1, 1], [], []>} : vector<2x32xf32>, vector<32x32xf32>, vector<2x32xf32> -> vector<2x32xf32>
    %c4_555 = arith.constant 4 : index
    %c0_556 = arith.constant 0 : index
    %c0_557 = arith.constant 0 : index
    %567 = vector.load %arg14[%c4_555, %c0_556, %c0_557] : memref<5x2x32xf32, #tpu.memory_space<vmem>>, vector<1x2x32xf32>
    %568 = vector.shape_cast %567 : vector<1x2x32xf32> to vector<2x32xf32>
    %c3_558 = arith.constant 3 : index
    %c0_559 = arith.constant 0 : index
    %c0_560 = arith.constant 0 : index
    %569 = vector.load %arg6[%c3_558, %c0_559, %c0_560] : memref<4x32x32xf32, #tpu.memory_space<vmem>>, vector<1x32x32xf32>
    %570 = vector.shape_cast %569 : vector<1x32x32xf32> to vector<32x32xf32>
    %cst_561 = arith.constant dense<0.000000e+00> : vector<2x32xf32>
    %571 = tpu.matmul %568, %570, %cst_561 {dimension_numbers = #tpu.dot_dimension_numbers<[1], [0], [0], [1], [0, 0, 1, 1], [], []>} : vector<2x32xf32>, vector<32x32xf32>, vector<2x32xf32> -> vector<2x32xf32>
    %572 = arith.addf %566, %571 : vector<2x32xf32>
    %c3_562 = arith.constant 3 : index
    %c0_563 = arith.constant 0 : index
    %c0_564 = arith.constant 0 : index
    %573 = vector.load %arg7[%c3_562, %c0_563, %c0_564] : memref<4x1x32xf32, #tpu.memory_space<vmem>>, vector<1x1x32xf32>
    %574 = vector.shape_cast %573 : vector<1x1x32xf32> to vector<1x32xf32>
    %575 = vector.broadcast %574 : vector<1x32xf32> to vector<2x32xf32>
    %576 = arith.addf %572, %575 : vector<2x32xf32>
    %577 = math.tanh %576 : vector<2x32xf32>
    %c4_565 = arith.constant 4 : index
    %c0_566 = arith.constant 0 : index
    %c0_567 = arith.constant 0 : index
    %578 = vector.load %arg14[%c4_565, %c0_566, %c0_567] : memref<5x2x32xf32, #tpu.memory_space<vmem>>, vector<1x2x32xf32>
    %579 = vector.shape_cast %578 : vector<1x2x32xf32> to vector<2x32xf32>
    %580 = vector.shape_cast %577 : vector<2x32xf32> to vector<1x2x32xf32>
    tpu.vector_store %arg14[%c4_565, %c0_566, %c0_567], %580 {strides = array<i32>} : memref<5x2x32xf32, #tpu.memory_space<vmem>>, vector<1x2x32xf32>,
    %581 = arith.index_cast %501 : i32 to index
    %c0_568 = arith.constant 0 : index
    %582 = vector.load %arg13[%581, %c0_568] : memref<16x32xf32, #tpu.memory_space<vmem>>, vector<2x32xf32>
    tpu.vector_store %arg13[%581, %c0_568], %577 {strides = array<i32>} : memref<16x32xf32, #tpu.memory_space<vmem>>, vector<2x32xf32>,
    %c7_i32 = arith.constant 7 : i32
    %c2_i32_569 = arith.constant 2 : i32
    %583 = arith.muli %c7_i32, %c2_i32_569 : i32
    %584 = arith.index_cast %583 : i32 to index
    %c0_570 = arith.constant 0 : index
    %585 = vector.load %arg12[%584, %c0_570] : memref<16x32xf32, #tpu.memory_space<vmem>>, vector<2x32xf32>
    %c0_571 = arith.constant 0 : index
    %c0_572 = arith.constant 0 : index
    %c0_573 = arith.constant 0 : index
    %586 = vector.load %arg14[%c0_571, %c0_572, %c0_573] : memref<5x2x32xf32, #tpu.memory_space<vmem>>, vector<1x2x32xf32>
    %587 = vector.shape_cast %586 : vector<1x2x32xf32> to vector<2x32xf32>
    %c0_574 = arith.constant 0 : index
    %c0_575 = arith.constant 0 : index
    %588 = vector.load %arg4[%c0_574, %c0_575] : memref<32x32xf32, #tpu.memory_space<vmem>>, vector<32x32xf32>
    %cst_576 = arith.constant dense<0.000000e+00> : vector<2x32xf32>
    %589 = tpu.matmul %587, %588, %cst_576 {dimension_numbers = #tpu.dot_dimension_numbers<[1], [0], [0], [1], [0, 0, 1, 1], [], []>} : vector<2x32xf32>, vector<32x32xf32>, vector<2x32xf32> -> vector<2x32xf32>
    %590 = arith.addf %585, %589 : vector<2x32xf32>
    %591 = math.tanh %590 : vector<2x32xf32>
    %c0_577 = arith.constant 0 : index
    %c0_578 = arith.constant 0 : index
    %c0_579 = arith.constant 0 : index
    %592 = vector.load %arg14[%c0_577, %c0_578, %c0_579] : memref<5x2x32xf32, #tpu.memory_space<vmem>>, vector<1x2x32xf32>
    %593 = vector.shape_cast %592 : vector<1x2x32xf32> to vector<2x32xf32>
    %594 = vector.shape_cast %591 : vector<2x32xf32> to vector<1x2x32xf32>
    tpu.vector_store %arg14[%c0_577, %c0_578, %c0_579], %594 {strides = array<i32>} : memref<5x2x32xf32, #tpu.memory_space<vmem>>, vector<1x2x32xf32>,
    %c0_580 = arith.constant 0 : index
    %c0_581 = arith.constant 0 : index
    %c0_582 = arith.constant 0 : index
    %595 = vector.load %arg5[%c0_580, %c0_581, %c0_582] : memref<4x32x32xf32, #tpu.memory_space<vmem>>, vector<1x32x32xf32>
    %596 = vector.shape_cast %595 : vector<1x32x32xf32> to vector<32x32xf32>
    %cst_583 = arith.constant dense<0.000000e+00> : vector<2x32xf32>
    %597 = tpu.matmul %591, %596, %cst_583 {dimension_numbers = #tpu.dot_dimension_numbers<[1], [0], [0], [1], [0, 0, 1, 1], [], []>} : vector<2x32xf32>, vector<32x32xf32>, vector<2x32xf32> -> vector<2x32xf32>
    %c1_584 = arith.constant 1 : index
    %c0_585 = arith.constant 0 : index
    %c0_586 = arith.constant 0 : index
    %598 = vector.load %arg14[%c1_584, %c0_585, %c0_586] : memref<5x2x32xf32, #tpu.memory_space<vmem>>, vector<1x2x32xf32>
    %599 = vector.shape_cast %598 : vector<1x2x32xf32> to vector<2x32xf32>
    %c0_587 = arith.constant 0 : index
    %c0_588 = arith.constant 0 : index
    %c0_589 = arith.constant 0 : index
    %600 = vector.load %arg6[%c0_587, %c0_588, %c0_589] : memref<4x32x32xf32, #tpu.memory_space<vmem>>, vector<1x32x32xf32>
    %601 = vector.shape_cast %600 : vector<1x32x32xf32> to vector<32x32xf32>
    %cst_590 = arith.constant dense<0.000000e+00> : vector<2x32xf32>
    %602 = tpu.matmul %599, %601, %cst_590 {dimension_numbers = #tpu.dot_dimension_numbers<[1], [0], [0], [1], [0, 0, 1, 1], [], []>} : vector<2x32xf32>, vector<32x32xf32>, vector<2x32xf32> -> vector<2x32xf32>
    %603 = arith.addf %597, %602 : vector<2x32xf32>
    %c0_591 = arith.constant 0 : index
    %c0_592 = arith.constant 0 : index
    %c0_593 = arith.constant 0 : index
    %604 = vector.load %arg7[%c0_591, %c0_592, %c0_593] : memref<4x1x32xf32, #tpu.memory_space<vmem>>, vector<1x1x32xf32>
    %605 = vector.shape_cast %604 : vector<1x1x32xf32> to vector<1x32xf32>
    %606 = vector.broadcast %605 : vector<1x32xf32> to vector<2x32xf32>
    %607 = arith.addf %603, %606 : vector<2x32xf32>
    %608 = math.tanh %607 : vector<2x32xf32>
    %c1_594 = arith.constant 1 : index
    %c0_595 = arith.constant 0 : index
    %c0_596 = arith.constant 0 : index
    %609 = vector.load %arg14[%c1_594, %c0_595, %c0_596] : memref<5x2x32xf32, #tpu.memory_space<vmem>>, vector<1x2x32xf32>
    %610 = vector.shape_cast %609 : vector<1x2x32xf32> to vector<2x32xf32>
    %611 = vector.shape_cast %608 : vector<2x32xf32> to vector<1x2x32xf32>
    tpu.vector_store %arg14[%c1_594, %c0_595, %c0_596], %611 {strides = array<i32>} : memref<5x2x32xf32, #tpu.memory_space<vmem>>, vector<1x2x32xf32>,
    %c1_597 = arith.constant 1 : index
    %c0_598 = arith.constant 0 : index
    %c0_599 = arith.constant 0 : index
    %612 = vector.load %arg5[%c1_597, %c0_598, %c0_599] : memref<4x32x32xf32, #tpu.memory_space<vmem>>, vector<1x32x32xf32>
    %613 = vector.shape_cast %612 : vector<1x32x32xf32> to vector<32x32xf32>
    %cst_600 = arith.constant dense<0.000000e+00> : vector<2x32xf32>
    %614 = tpu.matmul %608, %613, %cst_600 {dimension_numbers = #tpu.dot_dimension_numbers<[1], [0], [0], [1], [0, 0, 1, 1], [], []>} : vector<2x32xf32>, vector<32x32xf32>, vector<2x32xf32> -> vector<2x32xf32>
    %c2_601 = arith.constant 2 : index
    %c0_602 = arith.constant 0 : index
    %c0_603 = arith.constant 0 : index
    %615 = vector.load %arg14[%c2_601, %c0_602, %c0_603] : memref<5x2x32xf32, #tpu.memory_space<vmem>>, vector<1x2x32xf32>
    %616 = vector.shape_cast %615 : vector<1x2x32xf32> to vector<2x32xf32>
    %c1_604 = arith.constant 1 : index
    %c0_605 = arith.constant 0 : index
    %c0_606 = arith.constant 0 : index
    %617 = vector.load %arg6[%c1_604, %c0_605, %c0_606] : memref<4x32x32xf32, #tpu.memory_space<vmem>>, vector<1x32x32xf32>
    %618 = vector.shape_cast %617 : vector<1x32x32xf32> to vector<32x32xf32>
    %cst_607 = arith.constant dense<0.000000e+00> : vector<2x32xf32>
    %619 = tpu.matmul %616, %618, %cst_607 {dimension_numbers = #tpu.dot_dimension_numbers<[1], [0], [0], [1], [0, 0, 1, 1], [], []>} : vector<2x32xf32>, vector<32x32xf32>, vector<2x32xf32> -> vector<2x32xf32>
    %620 = arith.addf %614, %619 : vector<2x32xf32>
    %c1_608 = arith.constant 1 : index
    %c0_609 = arith.constant 0 : index
    %c0_610 = arith.constant 0 : index
    %621 = vector.load %arg7[%c1_608, %c0_609, %c0_610] : memref<4x1x32xf32, #tpu.memory_space<vmem>>, vector<1x1x32xf32>
    %622 = vector.shape_cast %621 : vector<1x1x32xf32> to vector<1x32xf32>
    %623 = vector.broadcast %622 : vector<1x32xf32> to vector<2x32xf32>
    %624 = arith.addf %620, %623 : vector<2x32xf32>
    %625 = math.tanh %624 : vector<2x32xf32>
    %c2_611 = arith.constant 2 : index
    %c0_612 = arith.constant 0 : index
    %c0_613 = arith.constant 0 : index
    %626 = vector.load %arg14[%c2_611, %c0_612, %c0_613] : memref<5x2x32xf32, #tpu.memory_space<vmem>>, vector<1x2x32xf32>
    %627 = vector.shape_cast %626 : vector<1x2x32xf32> to vector<2x32xf32>
    %628 = vector.shape_cast %625 : vector<2x32xf32> to vector<1x2x32xf32>
    tpu.vector_store %arg14[%c2_611, %c0_612, %c0_613], %628 {strides = array<i32>} : memref<5x2x32xf32, #tpu.memory_space<vmem>>, vector<1x2x32xf32>,
    %c2_614 = arith.constant 2 : index
    %c0_615 = arith.constant 0 : index
    %c0_616 = arith.constant 0 : index
    %629 = vector.load %arg5[%c2_614, %c0_615, %c0_616] : memref<4x32x32xf32, #tpu.memory_space<vmem>>, vector<1x32x32xf32>
    %630 = vector.shape_cast %629 : vector<1x32x32xf32> to vector<32x32xf32>
    %cst_617 = arith.constant dense<0.000000e+00> : vector<2x32xf32>
    %631 = tpu.matmul %625, %630, %cst_617 {dimension_numbers = #tpu.dot_dimension_numbers<[1], [0], [0], [1], [0, 0, 1, 1], [], []>} : vector<2x32xf32>, vector<32x32xf32>, vector<2x32xf32> -> vector<2x32xf32>
    %c3_618 = arith.constant 3 : index
    %c0_619 = arith.constant 0 : index
    %c0_620 = arith.constant 0 : index
    %632 = vector.load %arg14[%c3_618, %c0_619, %c0_620] : memref<5x2x32xf32, #tpu.memory_space<vmem>>, vector<1x2x32xf32>
    %633 = vector.shape_cast %632 : vector<1x2x32xf32> to vector<2x32xf32>
    %c2_621 = arith.constant 2 : index
    %c0_622 = arith.constant 0 : index
    %c0_623 = arith.constant 0 : index
    %634 = vector.load %arg6[%c2_621, %c0_622, %c0_623] : memref<4x32x32xf32, #tpu.memory_space<vmem>>, vector<1x32x32xf32>
    %635 = vector.shape_cast %634 : vector<1x32x32xf32> to vector<32x32xf32>
    %cst_624 = arith.constant dense<0.000000e+00> : vector<2x32xf32>
    %636 = tpu.matmul %633, %635, %cst_624 {dimension_numbers = #tpu.dot_dimension_numbers<[1], [0], [0], [1], [0, 0, 1, 1], [], []>} : vector<2x32xf32>, vector<32x32xf32>, vector<2x32xf32> -> vector<2x32xf32>
    %637 = arith.addf %631, %636 : vector<2x32xf32>
    %c2_625 = arith.constant 2 : index
    %c0_626 = arith.constant 0 : index
    %c0_627 = arith.constant 0 : index
    %638 = vector.load %arg7[%c2_625, %c0_626, %c0_627] : memref<4x1x32xf32, #tpu.memory_space<vmem>>, vector<1x1x32xf32>
    %639 = vector.shape_cast %638 : vector<1x1x32xf32> to vector<1x32xf32>
    %640 = vector.broadcast %639 : vector<1x32xf32> to vector<2x32xf32>
    %641 = arith.addf %637, %640 : vector<2x32xf32>
    %642 = math.tanh %641 : vector<2x32xf32>
    %c3_628 = arith.constant 3 : index
    %c0_629 = arith.constant 0 : index
    %c0_630 = arith.constant 0 : index
    %643 = vector.load %arg14[%c3_628, %c0_629, %c0_630] : memref<5x2x32xf32, #tpu.memory_space<vmem>>, vector<1x2x32xf32>
    %644 = vector.shape_cast %643 : vector<1x2x32xf32> to vector<2x32xf32>
    %645 = vector.shape_cast %642 : vector<2x32xf32> to vector<1x2x32xf32>
    tpu.vector_store %arg14[%c3_628, %c0_629, %c0_630], %645 {strides = array<i32>} : memref<5x2x32xf32, #tpu.memory_space<vmem>>, vector<1x2x32xf32>,
    %c3_631 = arith.constant 3 : index
    %c0_632 = arith.constant 0 : index
    %c0_633 = arith.constant 0 : index
    %646 = vector.load %arg5[%c3_631, %c0_632, %c0_633] : memref<4x32x32xf32, #tpu.memory_space<vmem>>, vector<1x32x32xf32>
    %647 = vector.shape_cast %646 : vector<1x32x32xf32> to vector<32x32xf32>
    %cst_634 = arith.constant dense<0.000000e+00> : vector<2x32xf32>
    %648 = tpu.matmul %642, %647, %cst_634 {dimension_numbers = #tpu.dot_dimension_numbers<[1], [0], [0], [1], [0, 0, 1, 1], [], []>} : vector<2x32xf32>, vector<32x32xf32>, vector<2x32xf32> -> vector<2x32xf32>
    %c4_635 = arith.constant 4 : index
    %c0_636 = arith.constant 0 : index
    %c0_637 = arith.constant 0 : index
    %649 = vector.load %arg14[%c4_635, %c0_636, %c0_637] : memref<5x2x32xf32, #tpu.memory_space<vmem>>, vector<1x2x32xf32>
    %650 = vector.shape_cast %649 : vector<1x2x32xf32> to vector<2x32xf32>
    %c3_638 = arith.constant 3 : index
    %c0_639 = arith.constant 0 : index
    %c0_640 = arith.constant 0 : index
    %651 = vector.load %arg6[%c3_638, %c0_639, %c0_640] : memref<4x32x32xf32, #tpu.memory_space<vmem>>, vector<1x32x32xf32>
    %652 = vector.shape_cast %651 : vector<1x32x32xf32> to vector<32x32xf32>
    %cst_641 = arith.constant dense<0.000000e+00> : vector<2x32xf32>
    %653 = tpu.matmul %650, %652, %cst_641 {dimension_numbers = #tpu.dot_dimension_numbers<[1], [0], [0], [1], [0, 0, 1, 1], [], []>} : vector<2x32xf32>, vector<32x32xf32>, vector<2x32xf32> -> vector<2x32xf32>
    %654 = arith.addf %648, %653 : vector<2x32xf32>
    %c3_642 = arith.constant 3 : index
    %c0_643 = arith.constant 0 : index
    %c0_644 = arith.constant 0 : index
    %655 = vector.load %arg7[%c3_642, %c0_643, %c0_644] : memref<4x1x32xf32, #tpu.memory_space<vmem>>, vector<1x1x32xf32>
    %656 = vector.shape_cast %655 : vector<1x1x32xf32> to vector<1x32xf32>
    %657 = vector.broadcast %656 : vector<1x32xf32> to vector<2x32xf32>
    %658 = arith.addf %654, %657 : vector<2x32xf32>
    %659 = math.tanh %658 : vector<2x32xf32>
    %c4_645 = arith.constant 4 : index
    %c0_646 = arith.constant 0 : index
    %c0_647 = arith.constant 0 : index
    %660 = vector.load %arg14[%c4_645, %c0_646, %c0_647] : memref<5x2x32xf32, #tpu.memory_space<vmem>>, vector<1x2x32xf32>
    %661 = vector.shape_cast %660 : vector<1x2x32xf32> to vector<2x32xf32>
    %662 = vector.shape_cast %659 : vector<2x32xf32> to vector<1x2x32xf32>
    tpu.vector_store %arg14[%c4_645, %c0_646, %c0_647], %662 {strides = array<i32>} : memref<5x2x32xf32, #tpu.memory_space<vmem>>, vector<1x2x32xf32>,
    %663 = arith.index_cast %583 : i32 to index
    %c0_648 = arith.constant 0 : index
    %664 = vector.load %arg13[%663, %c0_648] : memref<16x32xf32, #tpu.memory_space<vmem>>, vector<2x32xf32>
    tpu.vector_store %arg13[%663, %c0_648], %659 {strides = array<i32>} : memref<16x32xf32, #tpu.memory_space<vmem>>, vector<2x32xf32>,
    %c8_i32 = arith.constant 8 : i32
    %c0_649 = arith.constant 0 : index
    %c0_650 = arith.constant 0 : index
    %665 = vector.load %arg13[%c0_649, %c0_650] : memref<16x32xf32, #tpu.memory_space<vmem>>, vector<16x32xf32>
    %c0_651 = arith.constant 0 : index
    %c0_652 = arith.constant 0 : index
    %666 = vector.load %arg8[%c0_651, %c0_652] : memref<32x16xf32, #tpu.memory_space<vmem>>, vector<32x16xf32>
    %cst_653 = arith.constant dense<0.000000e+00> : vector<16x16xf32>
    %667 = tpu.matmul %665, %666, %cst_653 {dimension_numbers = #tpu.dot_dimension_numbers<[1], [0], [0], [1], [0, 0, 1, 1], [], []>} : vector<16x32xf32>, vector<32x16xf32>, vector<16x16xf32> -> vector<16x16xf32>
    %c0_654 = arith.constant 0 : index
    %c0_655 = arith.constant 0 : index
    %668 = vector.load %arg9[%c0_654, %c0_655] : memref<1x16xf32, #tpu.memory_space<vmem>>, vector<1x16xf32>
    %669 = vector.broadcast %668 : vector<1x16xf32> to vector<16x16xf32>
    %670 = arith.addf %667, %669 : vector<16x16xf32>
    %c0_656 = arith.constant 0 : index
    %c0_657 = arith.constant 0 : index
    %671 = vector.load %arg10[%c0_656, %c0_657] : memref<16x16xf32, #tpu.memory_space<vmem>>, vector<16x16xf32>
    tpu.vector_store %arg10[%c0_656, %c0_657], %670 {strides = array<i32>} : memref<16x16xf32, #tpu.memory_space<vmem>>, vector<16x16xf32>,
    %c0_658 = arith.constant 0 : index
    %c0_659 = arith.constant 0 : index
    %c0_660 = arith.constant 0 : index
    %672 = vector.load %arg14[%c0_658, %c0_659, %c0_660] : memref<5x2x32xf32, #tpu.memory_space<vmem>>, vector<5x2x32xf32>
    %c0_661 = arith.constant 0 : index
    %c0_662 = arith.constant 0 : index
    %c0_663 = arith.constant 0 : index
    %673 = vector.load %arg11[%c0_661, %c0_662, %c0_663] : memref<5x2x32xf32, #tpu.memory_space<vmem>>, vector<5x2x32xf32>
    tpu.vector_store %arg11[%c0_661, %c0_662, %c0_663], %672 {strides = array<i32>} : memref<5x2x32xf32, #tpu.memory_space<vmem>>, vector<5x2x32xf32>,
    return
  }
}

</mosaic_0001>

<llo_original>
// kernel: tpu_custom_call.1
$region0: #{tpu_custom_call.1}
  #allocation0 [shape = 'u32[]', space=smem, size = 0x4, offset = 0x4, fixed_abs, tag = 'smem constant byte address 0x4 - core index']
  #allocation1 [shape = 'u32[144,128]{1,0:T(1,128)}', space=vmem, size = 0x12000, scoped, tag = 'internal scratch']
  #allocation2 [shape = 'f32[16,32]{1,0:T(8,128)}', space=vmem, size = 0x2000, scoped, tag = 'scratch operand']
  #allocation3 [shape = 'f32[16,32]{1,0:T(8,128)}', space=vmem, size = 0x2000, scoped, tag = 'scratch operand']
  #allocation4 [shape = 'f32[5,2,32]{2,1,0:T(2,128)}', space=vmem, size = 0x1400, scoped, tag = 'scratch operand']
  %s0 = inlined_call_operand.vmem [shape: f32[16,32], index: 0, kind: input, shape index: {}]
  %s1 = inlined_call_operand.hbm [shape: f32[5,2,32], index: 1, kind: input, shape index: {}]
  %s2 = inlined_call_operand.vmem [shape: f32[32,32], index: 2, kind: input, shape index: {}]
  %s3 = inlined_call_operand.vmem [shape: f32[1,32], index: 3, kind: input, shape index: {}]
  %s4 = inlined_call_operand.hbm [shape: f32[32,32], index: 4, kind: input, shape index: {}]
  %s5 = inlined_call_operand.hbm [shape: f32[4,32,32], index: 5, kind: input, shape index: {}]
  %s6 = inlined_call_operand.hbm [shape: f32[4,32,32], index: 6, kind: input, shape index: {}]
  %s7 = inlined_call_operand.vmem [shape: f32[4,1,32], index: 7, kind: input, shape index: {}]
  %s8 = inlined_call_operand.vmem [shape: f32[32,16], index: 8, kind: input, shape index: {}]
  %s9 = inlined_call_operand.vmem [shape: f32[1,16], index: 9, kind: input, shape index: {}]
  %s10 = inlined_call_operand.hbm [shape: f32[16,16], index: 10, kind: output, shape index: {0}]
  %s11 = inlined_call_operand.hbm [shape: f32[5,2,32], index: 11, kind: output, shape index: {1}]
  %12 = xla_tuple %s10, %s11
  %s13 = sld [smem:[#allocation0]]
  $region74: #{tpu_custom_call.1} parent=0
    _
  %s15 = ssub.s32 1, %s13
  %s16 = scalar_select 0, %s15, %s13
  $region1: #{tpu_custom_call.1} parent=0
    #allocation5 [shape = 'u8[5120]{0}', space=vmem, size = 0x1400, scoped, tag = 'input window, operand 1, single buffered']
    #allocation6 [shape = 's32[1]{0}', space=sflag, size = 0x4, scoped, tag = 'scoped memory for tpu_custom_call.1']
    #allocation7 [shape = 's32[1]{0}', space=sflag, size = 0x4, scoped, tag = 'scoped memory for tpu_custom_call.1']
    #allocation8 [shape = 'u8[16384]{0}', space=vmem, size = 0x4000, scoped, tag = 'input window, operand 4, single buffered']
    #allocation9 [shape = 's32[1]{0}', space=sflag, size = 0x4, scoped, tag = 'scoped memory for tpu_custom_call.1']
    #allocation10 [shape = 'u8[65536]{0}', space=vmem, size = 0x10000, scoped, tag = 'input window, operand 5, single buffered']
    #allocation11 [shape = 'u8[65536]{0}', space=vmem, size = 0x10000, scoped, tag = 'input window, operand 6, single buffered']
    #allocation12 [shape = 's32[1]{0}', space=sflag, size = 0x4, scoped, tag = 'scoped memory for tpu_custom_call.1']
    #allocation13 [shape = 'u8[8192]{0}', space=vmem, size = 0x2000, scoped, tag = 'output window, operand 0, single buffered']
    #allocation14 [shape = 'u8[5120]{0}', space=vmem, size = 0x1400, scoped, tag = 'output window, operand 1, single buffered']
    #allocation15 [shape = 's32[1]{0}', space=sflag, size = 0x4, scoped, tag = 'scoped memory for tpu_custom_call.1']
    %17 = vsyncpa [#allocation6], 0
    %18 = vsyncpa [#allocation9], 0
    %19 = vsyncpa [#allocation12], 0
    %20 = vsyncpa [#allocation7], 0
    %21 = vsyncpa [#allocation15], 0
    // Predicated region
    $region2: #{tpu_custom_call.1} parent=1 // pred_check
      _
    $region3: #{tpu_custom_call.1} parent=1 // pred_check_branch
      %23 = sbr.rel (0) target = $region5
    $region4: #{tpu_custom_call.1} parent=1 // pred_region
      _
    $region5: #{tpu_custom_call.1} parent=1 // pred_fallthru
      _
    // Predicated region
    $region6: #{tpu_custom_call.1} parent=1 // pred_check
      _
    $region7: #{tpu_custom_call.1} parent=1 // pred_check_branch
      %25 = sbr.rel (0) target = $region9
    $region8: #{tpu_custom_call.1} parent=1 // pred_region
      %s27 = ssub.s32 160, 160
      %28 = vsyncadd [#allocation6], %s27
      %s29 = sshll.u32 [#allocation5], 4
      %s30 = int_to_ptr.vmem [resolvable:$true] %s29
      %35 = dma.hbm_to_vmem [thread:$0]  %s1, 160, %s30, [#allocation6], 32, 32, 2
    $region9: #{tpu_custom_call.1} parent=1 // pred_fallthru
      _
    // Predicated region
    $region10: #{tpu_custom_call.1} parent=1 // pred_check
      _
    $region11: #{tpu_custom_call.1} parent=1 // pred_check_branch
      %37 = sbr.rel (0) target = $region13
    $region12: #{tpu_custom_call.1} parent=1 // pred_region
      _
    $region13: #{tpu_custom_call.1} parent=1 // pred_fallthru
      _
    // Predicated region
    $region14: #{tpu_custom_call.1} parent=1 // pred_check
      _
    $region15: #{tpu_custom_call.1} parent=1 // pred_check_branch
      %39 = sbr.rel (0) target = $region17
    $region16: #{tpu_custom_call.1} parent=1 // pred_region
      _
    $region17: #{tpu_custom_call.1} parent=1 // pred_fallthru
      _
    // Predicated region
    $region18: #{tpu_custom_call.1} parent=1 // pred_check
      _
    $region19: #{tpu_custom_call.1} parent=1 // pred_check_branch
      %41 = sbr.rel (0) target = $region21
    $region20: #{tpu_custom_call.1} parent=1 // pred_region
      %s43 = ssub.s32 512, 512
      %44 = vsyncadd [#allocation9], %s43
      %s45 = sshll.u32 [#allocation8], 4
      %s46 = int_to_ptr.vmem [resolvable:$true] %s45
      %51 = dma.hbm_to_vmem [thread:$0]  %s4, 512, %s46, [#allocation9], 128, 128, 8
    $region21: #{tpu_custom_call.1} parent=1 // pred_fallthru
      _
    // Predicated region
    $region22: #{tpu_custom_call.1} parent=1 // pred_check
      _
    $region23: #{tpu_custom_call.1} parent=1 // pred_check_branch
      %53 = sbr.rel (0) target = $region25
    $region24: #{tpu_custom_call.1} parent=1 // pred_region
      %s55 = ssub.s32 2048, 2048
      %56 = vsyncadd [#allocation9], %s55
      %s57 = sshll.u32 [#allocation10], 4
      %s58 = int_to_ptr.vmem [resolvable:$true] %s57
      %63 = dma.hbm_to_vmem [thread:$0]  %s5, 2048, %s58, [#allocation9], 128, 128, 8
    $region25: #{tpu_custom_call.1} parent=1 // pred_fallthru
      _
    // Predicated region
    $region26: #{tpu_custom_call.1} parent=1 // pred_check
      _
    $region27: #{tpu_custom_call.1} parent=1 // pred_check_branch
      %65 = sbr.rel (0) target = $region29
    $region28: #{tpu_custom_call.1} parent=1 // pred_region
      %s67 = ssub.s32 2048, 2048
      %68 = vsyncadd [#allocation12], %s67
      %s69 = sshll.u32 [#allocation11], 4
      %s70 = int_to_ptr.vmem [resolvable:$true] %s69
      %75 = dma.hbm_to_vmem [thread:$0]  %s6, 2048, %s70, [#allocation12], 128, 128, 8
    $region29: #{tpu_custom_call.1} parent=1 // pred_fallthru
      _
    // Predicated region
    $region30: #{tpu_custom_call.1} parent=1 // pred_check
      _
    $region31: #{tpu_custom_call.1} parent=1 // pred_check_branch
      %77 = sbr.rel (0) target = $region33
    $region32: #{tpu_custom_call.1} parent=1 // pred_region
      _
    $region33: #{tpu_custom_call.1} parent=1 // pred_fallthru
      _
    // Predicated region
    $region34: #{tpu_custom_call.1} parent=1 // pred_check
      _
    $region35: #{tpu_custom_call.1} parent=1 // pred_check_branch
      %79 = sbr.rel (0) target = $region37
    $region36: #{tpu_custom_call.1} parent=1 // pred_region
      _
    $region37: #{tpu_custom_call.1} parent=1 // pred_fallthru
      _
    // Predicated region
    $region38: #{tpu_custom_call.1} parent=1 // pred_check
      _
    $region39: #{tpu_custom_call.1} parent=1 // pred_check_branch
      %81 = sbr.rel (0) target = $region41
    $region40: #{tpu_custom_call.1} parent=1 // pred_region
      _
    $region41: #{tpu_custom_call.1} parent=1 // pred_fallthru
      _
    // Predicated region
    $region42: #{tpu_custom_call.1} parent=1 // pred_check
      _
    $region43: #{tpu_custom_call.1} parent=1 // pred_check_branch
      %83 = sbr.rel (0) target = $region45
    $region44: #{tpu_custom_call.1} parent=1 // pred_region
      %84 = dma.done [#allocation6], 160
    $region45: #{tpu_custom_call.1} parent=1 // pred_fallthru
      _
    // Predicated region
    $region46: #{tpu_custom_call.1} parent=1 // pred_check
      _
    $region47: #{tpu_custom_call.1} parent=1 // pred_check_branch
      %86 = sbr.rel (0) target = $region49
    $region48: #{tpu_custom_call.1} parent=1 // pred_region
      %87 = dma.done [#allocation9], 512
    $region49: #{tpu_custom_call.1} parent=1 // pred_fallthru
      _
    // Predicated region
    $region50: #{tpu_custom_call.1} parent=1 // pred_check
      _
    $region51: #{tpu_custom_call.1} parent=1 // pred_check_branch
      %89 = sbr.rel (0) target = $region53
    $region52: #{tpu_custom_call.1} parent=1 // pred_region
      %90 = dma.done [#allocation9], 2048
    $region53: #{tpu_custom_call.1} parent=1 // pred_fallthru
      _
    // Predicated region
    $region54: #{tpu_custom_call.1} parent=1 // pred_check
      _
    $region55: #{tpu_custom_call.1} parent=1 // pred_check_branch
      %92 = sbr.rel (0) target = $region57
    $region56: #{tpu_custom_call.1} parent=1 // pred_region
      %93 = dma.done [#allocation12], 2048
    $region57: #{tpu_custom_call.1} parent=1 // pred_fallthru
      _
    %v94 = vld [vmem:[#allocation5] sm:$0x3]
    %v95 = vld [vmem:[#allocation5 + $0x2] sm:$0x3]
    %v96 = vld [vmem:[#allocation5 + $0x4] sm:$0x3]
    %v97 = vld [vmem:[#allocation5 + $0x6] sm:$0x3]
    %v98 = vld [vmem:[#allocation5 + $0x8] sm:$0x3]
    %vm99 = vcmask 254976
    %100 = vst.msk [vmem:[#allocation4] sm:$0x3] %vm99, %v94
    %101 = vst.msk [vmem:[#allocation4 + $0x2] sm:$0x3] %vm99, %v95
    %102 = vst.msk [vmem:[#allocation4 + $0x4] sm:$0x3] %vm99, %v96
    %103 = vst.msk [vmem:[#allocation4 + $0x6] sm:$0x3] %vm99, %v97
    %104 = vst.msk [vmem:[#allocation4 + $0x8] sm:$0x3] %vm99, %v98
    %v105 = vld [vmem:[%s0] sm:$0xff]
    %v106 = vld [vmem:[%s0 + $0x8] sm:$0xff]
    %v107 = vld [vmem:[%s2] sm:$0xff]
    %v108 = vld [vmem:[%s2 + $0x8] sm:$0xff]
    %v109 = vld [vmem:[%s2 + $0x10] sm:$0xff]
    %v110 = vld [vmem:[%s2 + $0x18] sm:$0xff]
    %v111 = vld [vmem:[%s3] sm:$0x1]
    %v113 = vlaneseq
    %v114 = vshrl.u32 %v113, 7
    %v115 = vsub.s32 0, %v114
    %v116 = vrot.slane %v111, %v115
    %vm118 = vcmask 261120
    %v120 = vsel %vm118, %v105, 0
    %v123 = vsel %vm118, %v106, 0
    %125 = vmatprep.subr.mxu0 0.0
    %126 = vmatpush1.msra.mxu0 %v107
    %127 = vmatprep.subr.mxu0 0.0
    %128 = vmatpush1.msra.mxu0 %v108
    %129 = vmatprep.subr.mxu0 0.0
    %130 = vmatpush1.msra.mxu0 %v109
    %131 = vmatprep.subr.mxu0 0.0
    %132 = vmatpush1.msra.mxu0 %v110
    %133 = vmatprep.subr.mxu0 0.0
    %134 = vmatpush1.msra.mxu0 0.0
    %135 = vmatprep.subr.mxu0 0.0
    %136 = vmatpush1.msra.mxu0 0.0
    %137 = vmatprep.subr.mxu0 0.0
    %138 = vmatpush1.msra.mxu0 0.0
    %139 = vmatprep.subr.mxu0 0.0
    %140 = vmatpush1.msra.mxu0 0.0
    %141 = vmatprep.subr.mxu0 0.0
    %142 = vmatpush1.msra.mxu0 0.0
    %143 = vmatprep.subr.mxu0 0.0
    %144 = vmatpush1.msra.mxu0 0.0
    %145 = vmatprep.subr.mxu0 0.0
    %146 = vmatpush1.msra.mxu0 0.0
    %147 = vmatprep.subr.mxu0 0.0
    %148 = vmatpush1.msra.mxu0 0.0
    %149 = vmatprep.subr.mxu0 0.0
    %150 = vmatpush1.msra.mxu0 0.0
    %151 = vmatprep.subr.mxu0 0.0
    %152 = vmatpush1.msra.mxu0 0.0
    %153 = vmatprep.subr.mxu0 0.0
    %154 = vmatpush1.msra.mxu0 0.0
    %155 = vmatprep.subr.mxu0 0.0
    %156 = vmatpush1.msra.mxu0 0.0
    %157 = vmatprep.subr.mxu0 0.0
    %158 = vmatpush1.msra.mxu0 0.0
    %159 = vmatprep.subr.mxu0 0.0
    %160 = vmatpush1.msra.mxu0 0.0
    %161 = vmatprep.subr.mxu0 0.0
    %162 = vmatpush1.msra.mxu0 0.0
    %163 = vmatprep.subr.mxu0 0.0
    %164 = vmatpush1.msra.mxu0 0.0
    %165 = vmatprep.subr.mxu0 0.0
    %166 = vmatpush1.msra.mxu0 0.0
    %167 = vmatprep.subr.mxu0 0.0
    %168 = vmatpush1.msra.mxu0 0.0
    %169 = vmatprep.subr.mxu0 0.0
    %170 = vmatpush1.msra.mxu0 0.0
    %171 = vmatprep.subr.mxu0 0.0
    %172 = vmatpush1.msra.mxu0 0.0
    %173 = vmatprep.subr.mxu0 0.0
    %174 = vmatpush1.msra.mxu0 0.0
    %175 = vmatprep.subr.mxu0 0.0
    %176 = vmatpush1.msra.mxu0 0.0
    %177 = vmatprep.subr.mxu0 0.0
    %178 = vmatpush1.msra.mxu0 0.0
    %179 = vmatprep.subr.mxu0 0.0
    %180 = vmatpush1.msra.mxu0 0.0
    %181 = vmatprep.subr.mxu0 0.0
    %182 = vmatpush1.msra.mxu0 0.0
    %183 = vmatprep.subr.mxu0 0.0
    %184 = vmatpush1.msra.mxu0 0.0
    %185 = vmatprep.subr.mxu0 0.0
    %186 = vmatpush1.msra.mxu0 0.0
    %187 = vmatprep.subr.mxu0 0.0
    %188 = vmatpush1.msra.mxu0 0.0
    %189 = vmatprep.mubr.f32.mxu0 0.0
    %190 = vmatmul.mubr.f32.gmra.mrb[0].mxu0 %v120
    %v191 = vpop.f32.mrb[0].mxu0
    %v192 = vadd.f32 %v116, %v191
    %v193 = vpop.f32.mrb[0].mxu0
    %194 = vmatprep.mubr.f32.mxu0 0.0
    %195 = vmatmul.mubr.f32.gmra.mrb[0].mxu0 %v123
    %v196 = vpop.f32.mrb[0].mxu0
    %v197 = vadd.f32 %v116, %v196
    %v198 = vpop.f32.mrb[0].mxu0
    %199 = vdwg.mxu0
    %200 = vst.msk [vmem:[#allocation2] sm:$0xff] %vm118, %v192
    %201 = vst.msk [vmem:[#allocation2 + $0x8] sm:$0xff] %vm118, %v197
    %v202 = vld [vmem:[#allocation2] sm:$0x3]
    %v203 = vld [vmem:[#allocation4] sm:$0x3]
    %v204 = vld [vmem:[#allocation8] sm:$0xff]
    %v205 = vld [vmem:[#allocation8 + $0x8] sm:$0xff]
    %v206 = vld [vmem:[#allocation8 + $0x10] sm:$0xff]
    %v207 = vld [vmem:[#allocation8 + $0x18] sm:$0xff]
    %v209 = vsel %vm118, %v203, 0
    %211 = vmatprep.subr.mxu0 0.0
    %212 = vmatpush1.msra.mxu0 %v204
    %213 = vmatprep.subr.mxu0 0.0
    %214 = vmatpush1.msra.mxu0 %v205
    %215 = vmatprep.subr.mxu0 0.0
    %216 = vmatpush1.msra.mxu0 %v206
    %217 = vmatprep.subr.mxu0 0.0
    %218 = vmatpush1.msra.mxu0 %v207
    %219 = vmatprep.subr.mxu0 0.0
    %220 = vmatpush1.msra.mxu0 0.0
    %221 = vmatprep.subr.mxu0 0.0
    %222 = vmatpush1.msra.mxu0 0.0
    %223 = vmatprep.subr.mxu0 0.0
    %224 = vmatpush1.msra.mxu0 0.0
    %225 = vmatprep.subr.mxu0 0.0
    %226 = vmatpush1.msra.mxu0 0.0
    %227 = vmatprep.subr.mxu0 0.0
    %228 = vmatpush1.msra.mxu0 0.0
    %229 = vmatprep.subr.mxu0 0.0
    %230 = vmatpush1.msra.mxu0 0.0
    %231 = vmatprep.subr.mxu0 0.0
    %232 = vmatpush1.msra.mxu0 0.0
    %233 = vmatprep.subr.mxu0 0.0
    %234 = vmatpush1.msra.mxu0 0.0
    %235 = vmatprep.subr.mxu0 0.0
    %236 = vmatpush1.msra.mxu0 0.0
    %237 = vmatprep.subr.mxu0 0.0
    %238 = vmatpush1.msra.mxu0 0.0
    %239 = vmatprep.subr.mxu0 0.0
    %240 = vmatpush1.msra.mxu0 0.0
    %241 = vmatprep.subr.mxu0 0.0
    %242 = vmatpush1.msra.mxu0 0.0
    %243 = vmatprep.subr.mxu0 0.0
    %244 = vmatpush1.msra.mxu0 0.0
    %245 = vmatprep.subr.mxu0 0.0
    %246 = vmatpush1.msra.mxu0 0.0
    %247 = vmatprep.subr.mxu0 0.0
    %248 = vmatpush1.msra.mxu0 0.0
    %249 = vmatprep.subr.mxu0 0.0
    %250 = vmatpush1.msra.mxu0 0.0
    %251 = vmatprep.subr.mxu0 0.0
    %252 = vmatpush1.msra.mxu0 0.0
    %253 = vmatprep.subr.mxu0 0.0
    %254 = vmatpush1.msra.mxu0 0.0
    %255 = vmatprep.subr.mxu0 0.0
    %256 = vmatpush1.msra.mxu0 0.0
    %257 = vmatprep.subr.mxu0 0.0
    %258 = vmatpush1.msra.mxu0 0.0
    %259 = vmatprep.subr.mxu0 0.0
    %260 = vmatpush1.msra.mxu0 0.0
    %261 = vmatprep.subr.mxu0 0.0
    %262 = vmatpush1.msra.mxu0 0.0
    %263 = vmatprep.subr.mxu0 0.0
    %264 = vmatpush1.msra.mxu0 0.0
    %265 = vmatprep.subr.mxu0 0.0
    %266 = vmatpush1.msra.mxu0 0.0
    %267 = vmatprep.subr.mxu0 0.0
    %268 = vmatpush1.msra.mxu0 0.0
    %269 = vmatprep.subr.mxu0 0.0
    %270 = vmatpush1.msra.mxu0 0.0
    %271 = vmatprep.subr.mxu0 0.0
    %272 = vmatpush1.msra.mxu0 0.0
    %273 = vmatprep.subr.mxu0 0.0
    %274 = vmatpush1.msra.mxu0 0.0
    %275 = vmatprep.mubr.f32.mxu0 0.0
    %276 = vmatmul.mubr.f32.gmra.mrb[0].mxu0 %v209
    %v277 = vpop.f32.mrb[0].mxu0
    %v278 = vadd.f32 0.0, %v277
    %v279 = vpop.f32.mrb[0].mxu0
    %280 = vdwg.mxu0
    %v281 = vadd.f32 %v202, %v278
    %v282 = vtanh.pop %v281
    %283 = vst.msk [vmem:[#allocation4] sm:$0x3] %vm99, %v282
    %v284 = vld [vmem:[#allocation10] sm:$0xff]
    %v285 = vld [vmem:[#allocation10 + $0x8] sm:$0xff]
    %v286 = vld [vmem:[#allocation10 + $0x10] sm:$0xff]
    %v287 = vld [vmem:[#allocation10 + $0x18] sm:$0xff]
    %s288 = scalar_lea.vmem [#allocation4], 2
    %v289 = vld [vmem:[%s288] sm:$0x3]
    %v290 = vld [vmem:[#allocation11] sm:$0xff]
    %v291 = vld [vmem:[#allocation11 + $0x8] sm:$0xff]
    %v292 = vld [vmem:[#allocation11 + $0x10] sm:$0xff]
    %v293 = vld [vmem:[#allocation11 + $0x18] sm:$0xff]
    %v295 = vsel %vm118, %v289, 0
    %297 = vmatprep.subr.mxu0 0.0
    %298 = vmatpush1.msra.mxu0 %v290
    %299 = vmatprep.subr.mxu0 0.0
    %300 = vmatpush1.msra.mxu0 %v291
    %301 = vmatprep.subr.mxu0 0.0
    %302 = vmatpush1.msra.mxu0 %v292
    %303 = vmatprep.subr.mxu0 0.0
    %304 = vmatpush1.msra.mxu0 %v293
    %305 = vmatprep.subr.mxu0 0.0
    %306 = vmatpush1.msra.mxu0 0.0
    %307 = vmatprep.subr.mxu0 0.0
    %308 = vmatpush1.msra.mxu0 0.0
    %309 = vmatprep.subr.mxu0 0.0
    %310 = vmatpush1.msra.mxu0 0.0
    %311 = vmatprep.subr.mxu0 0.0
    %312 = vmatpush1.msra.mxu0 0.0
    %313 = vmatprep.subr.mxu0 0.0
    %314 = vmatpush1.msra.mxu0 0.0
    %315 = vmatprep.subr.mxu0 0.0
    %316 = vmatpush1.msra.mxu0 0.0
    %317 = vmatprep.subr.mxu0 0.0
    %318 = vmatpush1.msra.mxu0 0.0
    %319 = vmatprep.subr.mxu0 0.0
    %320 = vmatpush1.msra.mxu0 0.0
    %321 = vmatprep.subr.mxu0 0.0
    %322 = vmatpush1.msra.mxu0 0.0
    %323 = vmatprep.subr.mxu0 0.0
    %324 = vmatpush1.msra.mxu0 0.0
    %325 = vmatprep.subr.mxu0 0.0
    %326 = vmatpush1.msra.mxu0 0.0
    %327 = vmatprep.subr.mxu0 0.0
    %328 = vmatpush1.msra.mxu0 0.0
    %329 = vmatprep.subr.mxu0 0.0
    %330 = vmatpush1.msra.mxu0 0.0
    %331 = vmatprep.subr.mxu0 0.0
    %332 = vmatpush1.msra.mxu0 0.0
    %333 = vmatprep.subr.mxu0 0.0
    %334 = vmatpush1.msra.mxu0 0.0
    %335 = vmatprep.subr.mxu0 0.0
    %336 = vmatpush1.msra.mxu0 0.0
    %337 = vmatprep.subr.mxu0 0.0
    %338 = vmatpush1.msra.mxu0 0.0
    %339 = vmatprep.subr.mxu0 0.0
    %340 = vmatpush1.msra.mxu0 0.0
    %341 = vmatprep.subr.mxu0 0.0
    %342 = vmatpush1.msra.mxu0 0.0
    %343 = vmatprep.subr.mxu0 0.0
    %344 = vmatpush1.msra.mxu0 0.0
    %345 = vmatprep.subr.mxu0 0.0
    %346 = vmatpush1.msra.mxu0 0.0
    %347 = vmatprep.subr.mxu0 0.0
    %348 = vmatpush1.msra.mxu0 0.0
    %349 = vmatprep.subr.mxu0 0.0
    %350 = vmatpush1.msra.mxu0 0.0
    %351 = vmatprep.subr.mxu0 0.0
    %352 = vmatpush1.msra.mxu0 0.0
    %353 = vmatprep.subr.mxu0 0.0
    %354 = vmatpush1.msra.mxu0 0.0
    %355 = vmatprep.subr.mxu0 0.0
    %356 = vmatpush1.msra.mxu0 0.0
    %357 = vmatprep.subr.mxu0 0.0
    %358 = vmatpush1.msra.mxu0 0.0
    %359 = vmatprep.subr.mxu0 0.0
    %360 = vmatpush1.msra.mxu0 0.0
    %361 = vmatprep.mubr.f32.mxu0 0.0
    %362 = vmatmul.mubr.f32.gmra.mrb[0].mxu0 %v295
    %v363 = vpop.f32.mrb[0].mxu0
    %v364 = vadd.f32 0.0, %v363
    %v365 = vpop.f32.mrb[0].mxu0
    %366 = vdwg.mxu0
    %v368 = vsel %vm118, %v282, 0
    %370 = vmatprep.subr.mxu0 0.0
    %371 = vmatpush1.msra.mxu0 %v284
    %372 = vmatprep.subr.mxu0 0.0
    %373 = vmatpush1.msra.mxu0 %v285
    %374 = vmatprep.subr.mxu0 0.0
    %375 = vmatpush1.msra.mxu0 %v286
    %376 = vmatprep.subr.mxu0 0.0
    %377 = vmatpush1.msra.mxu0 %v287
    %378 = vmatprep.subr.mxu0 0.0
    %379 = vmatpush1.msra.mxu0 0.0
    %380 = vmatprep.subr.mxu0 0.0
    %381 = vmatpush1.msra.mxu0 0.0
    %382 = vmatprep.subr.mxu0 0.0
    %383 = vmatpush1.msra.mxu0 0.0
    %384 = vmatprep.subr.mxu0 0.0
    %385 = vmatpush1.msra.mxu0 0.0
    %386 = vmatprep.subr.mxu0 0.0
    %387 = vmatpush1.msra.mxu0 0.0
    %388 = vmatprep.subr.mxu0 0.0
    %389 = vmatpush1.msra.mxu0 0.0
    %390 = vmatprep.subr.mxu0 0.0
    %391 = vmatpush1.msra.mxu0 0.0
    %392 = vmatprep.subr.mxu0 0.0
    %393 = vmatpush1.msra.mxu0 0.0
    %394 = vmatprep.subr.mxu0 0.0
    %395 = vmatpush1.msra.mxu0 0.0
    %396 = vmatprep.subr.mxu0 0.0
    %397 = vmatpush1.msra.mxu0 0.0
    %398 = vmatprep.subr.mxu0 0.0
    %399 = vmatpush1.msra.mxu0 0.0
    %400 = vmatprep.subr.mxu0 0.0
    %401 = vmatpush1.msra.mxu0 0.0
    %402 = vmatprep.subr.mxu0 0.0
    %403 = vmatpush1.msra.mxu0 0.0
    %404 = vmatprep.subr.mxu0 0.0
    %405 = vmatpush1.msra.mxu0 0.0
    %406 = vmatprep.subr.mxu0 0.0
    %407 = vmatpush1.msra.mxu0 0.0
    %408 = vmatprep.subr.mxu0 0.0
    %409 = vmatpush1.msra.mxu0 0.0
    %410 = vmatprep.subr.mxu0 0.0
    %411 = vmatpush1.msra.mxu0 0.0
    %412 = vmatprep.subr.mxu0 0.0
    %413 = vmatpush1.msra.mxu0 0.0
    %414 = vmatprep.subr.mxu0 0.0
    %415 = vmatpush1.msra.mxu0 0.0
    %416 = vmatprep.subr.mxu0 0.0
    %417 = vmatpush1.msra.mxu0 0.0
    %418 = vmatprep.subr.mxu0 0.0
    %419 = vmatpush1.msra.mxu0 0.0
    %420 = vmatprep.subr.mxu0 0.0
    %421 = vmatpush1.msra.mxu0 0.0
    %422 = vmatprep.subr.mxu0 0.0
    %423 = vmatpush1.msra.mxu0 0.0
    %424 = vmatprep.subr.mxu0 0.0
    %425 = vmatpush1.msra.mxu0 0.0
    %426 = vmatprep.subr.mxu0 0.0
    %427 = vmatpush1.msra.mxu0 0.0
    %428 = vmatprep.subr.mxu0 0.0
    %429 = vmatpush1.msra.mxu0 0.0
    %430 = vmatprep.subr.mxu0 0.0
    %431 = vmatpush1.msra.mxu0 0.0
    %432 = vmatprep.subr.mxu0 0.0
    %433 = vmatpush1.msra.mxu0 0.0
    %434 = vmatprep.mubr.f32.mxu0 0.0
    %435 = vmatmul.mubr.f32.gmra.mrb[0].mxu0 %v368
    %v436 = vpop.f32.mrb[0].mxu0
    %v437 = vadd.f32 %v364, %v436
    %v438 = vpop.f32.mrb[0].mxu0
    %439 = vdwg.mxu0
    %v440 = vld [vmem:[%s7] sm:$0x1]
    %v442 = vlaneseq
    %v443 = vshrl.u32 %v442, 7
    %v444 = vsub.s32 0, %v443
    %v445 = vrot.slane %v440, %v444
    %v447 = vadd.f32 %v437, %v445
    %v448 = vtanh.pop %v447
    %449 = vst.msk [vmem:[%s288] sm:$0x3] %vm99, %v448
    %s450 = scalar_lea.vmem [#allocation10], 32
    %v451 = vld [vmem:[%s450] sm:$0xff]
    %v452 = vld [vmem:[%s450 + $0x8] sm:$0xff]
    %v453 = vld [vmem:[%s450 + $0x10] sm:$0xff]
    %v454 = vld [vmem:[%s450 + $0x18] sm:$0xff]
    %s455 = scalar_lea.vmem [#allocation4], 4
    %v456 = vld [vmem:[%s455] sm:$0x3]
    %s457 = scalar_lea.vmem [#allocation11], 32
    %v458 = vld [vmem:[%s457] sm:$0xff]
    %v459 = vld [vmem:[%s457 + $0x8] sm:$0xff]
    %v460 = vld [vmem:[%s457 + $0x10] sm:$0xff]
    %v461 = vld [vmem:[%s457 + $0x18] sm:$0xff]
    %v463 = vsel %vm118, %v456, 0
    %465 = vmatprep.subr.mxu0 0.0
    %466 = vmatpush1.msra.mxu0 %v458
    %467 = vmatprep.subr.mxu0 0.0
    %468 = vmatpush1.msra.mxu0 %v459
    %469 = vmatprep.subr.mxu0 0.0
    %470 = vmatpush1.msra.mxu0 %v460
    %471 = vmatprep.subr.mxu0 0.0
    %472 = vmatpush1.msra.mxu0 %v461
    %473 = vmatprep.subr.mxu0 0.0
    %474 = vmatpush1.msra.mxu0 0.0
    %475 = vmatprep.subr.mxu0 0.0
    %476 = vmatpush1.msra.mxu0 0.0
    %477 = vmatprep.subr.mxu0 0.0
    %478 = vmatpush1.msra.mxu0 0.0
    %479 = vmatprep.subr.mxu0 0.0
    %480 = vmatpush1.msra.mxu0 0.0
    %481 = vmatprep.subr.mxu0 0.0
    %482 = vmatpush1.msra.mxu0 0.0
    %483 = vmatprep.subr.mxu0 0.0
    %484 = vmatpush1.msra.mxu0 0.0
    %485 = vmatprep.subr.mxu0 0.0
    %486 = vmatpush1.msra.mxu0 0.0
    %487 = vmatprep.subr.mxu0 0.0
    %488 = vmatpush1.msra.mxu0 0.0
    %489 = vmatprep.subr.mxu0 0.0
    %490 = vmatpush1.msra.mxu0 0.0
    %491 = vmatprep.subr.mxu0 0.0
    %492 = vmatpush1.msra.mxu0 0.0
    %493 = vmatprep.subr.mxu0 0.0
    %494 = vmatpush1.msra.mxu0 0.0
    %495 = vmatprep.subr.mxu0 0.0
    %496 = vmatpush1.msra.mxu0 0.0
    %497 = vmatprep.subr.mxu0 0.0
    %498 = vmatpush1.msra.mxu0 0.0
    %499 = vmatprep.subr.mxu0 0.0
    %500 = vmatpush1.msra.mxu0 0.0
    %501 = vmatprep.subr.mxu0 0.0
    %502 = vmatpush1.msra.mxu0 0.0
    %503 = vmatprep.subr.mxu0 0.0
    %504 = vmatpush1.msra.mxu0 0.0
    %505 = vmatprep.subr.mxu0 0.0
    %506 = vmatpush1.msra.mxu0 0.0
    %507 = vmatprep.subr.mxu0 0.0
    %508 = vmatpush1.msra.mxu0 0.0
    %509 = vmatprep.subr.mxu0 0.0
    %510 = vmatpush1.msra.mxu0 0.0
    %511 = vmatprep.subr.mxu0 0.0
    %512 = vmatpush1.msra.mxu0 0.0
    %513 = vmatprep.subr.mxu0 0.0
    %514 = vmatpush1.msra.mxu0 0.0
    %515 = vmatprep.subr.mxu0 0.0
    %516 = vmatpush1.msra.mxu0 0.0
    %517 = vmatprep.subr.mxu0 0.0
    %518 = vmatpush1.msra.mxu0 0.0
    %519 = vmatprep.subr.mxu0 0.0
    %520 = vmatpush1.msra.mxu0 0.0
    %521 = vmatprep.subr.mxu0 0.0
    %522 = vmatpush1.msra.mxu0 0.0
    %523 = vmatprep.subr.mxu0 0.0
    %524 = vmatpush1.msra.mxu0 0.0
    %525 = vmatprep.subr.mxu0 0.0
    %526 = vmatpush1.msra.mxu0 0.0
    %527 = vmatprep.subr.mxu0 0.0
    %528 = vmatpush1.msra.mxu0 0.0
    %529 = vmatprep.mubr.f32.mxu0 0.0
    %530 = vmatmul.mubr.f32.gmra.mrb[0].mxu0 %v463
    %v531 = vpop.f32.mrb[0].mxu0
    %v532 = vadd.f32 0.0, %v531
    %v533 = vpop.f32.mrb[0].mxu0
    %534 = vdwg.mxu0
    %v536 = vsel %vm118, %v448, 0
    %538 = vmatprep.subr.mxu0 0.0
    %539 = vmatpush1.msra.mxu0 %v451
    %540 = vmatprep.subr.mxu0 0.0
    %541 = vmatpush1.msra.mxu0 %v452
    %542 = vmatprep.subr.mxu0 0.0
    %543 = vmatpush1.msra.mxu0 %v453
    %544 = vmatprep.subr.mxu0 0.0
    %545 = vmatpush1.msra.mxu0 %v454
    %546 = vmatprep.subr.mxu0 0.0
    %547 = vmatpush1.msra.mxu0 0.0
    %548 = vmatprep.subr.mxu0 0.0
    %549 = vmatpush1.msra.mxu0 0.0
    %550 = vmatprep.subr.mxu0 0.0
    %551 = vmatpush1.msra.mxu0 0.0
    %552 = vmatprep.subr.mxu0 0.0
    %553 = vmatpush1.msra.mxu0 0.0
    %554 = vmatprep.subr.mxu0 0.0
    %555 = vmatpush1.msra.mxu0 0.0
    %556 = vmatprep.subr.mxu0 0.0
    %557 = vmatpush1.msra.mxu0 0.0
    %558 = vmatprep.subr.mxu0 0.0
    %559 = vmatpush1.msra.mxu0 0.0
    %560 = vmatprep.subr.mxu0 0.0
    %561 = vmatpush1.msra.mxu0 0.0
    %562 = vmatprep.subr.mxu0 0.0
    %563 = vmatpush1.msra.mxu0 0.0
    %564 = vmatprep.subr.mxu0 0.0
    %565 = vmatpush1.msra.mxu0 0.0
    %566 = vmatprep.subr.mxu0 0.0
    %567 = vmatpush1.msra.mxu0 0.0
    %568 = vmatprep.subr.mxu0 0.0
    %569 = vmatpush1.msra.mxu0 0.0
    %570 = vmatprep.subr.mxu0 0.0
    %571 = vmatpush1.msra.mxu0 0.0
    %572 = vmatprep.subr.mxu0 0.0
    %573 = vmatpush1.msra.mxu0 0.0
    %574 = vmatprep.subr.mxu0 0.0
    %575 = vmatpush1.msra.mxu0 0.0
    %576 = vmatprep.subr.mxu0 0.0
    %577 = vmatpush1.msra.mxu0 0.0
    %578 = vmatprep.subr.mxu0 0.0
    %579 = vmatpush1.msra.mxu0 0.0
    %580 = vmatprep.subr.mxu0 0.0
    %581 = vmatpush1.msra.mxu0 0.0
    %582 = vmatprep.subr.mxu0 0.0
    %583 = vmatpush1.msra.mxu0 0.0
    %584 = vmatprep.subr.mxu0 0.0
    %585 = vmatpush1.msra.mxu0 0.0
    %586 = vmatprep.subr.mxu0 0.0
    %587 = vmatpush1.msra.mxu0 0.0
    %588 = vmatprep.subr.mxu0 0.0
    %589 = vmatpush1.msra.mxu0 0.0
    %590 = vmatprep.subr.mxu0 0.0
    %591 = vmatpush1.msra.mxu0 0.0
    %592 = vmatprep.subr.mxu0 0.0
    %593 = vmatpush1.msra.mxu0 0.0
    %594 = vmatprep.subr.mxu0 0.0
    %595 = vmatpush1.msra.mxu0 0.0
    %596 = vmatprep.subr.mxu0 0.0
    %597 = vmatpush1.msra.mxu0 0.0
    %598 = vmatprep.subr.mxu0 0.0
    %599 = vmatpush1.msra.mxu0 0.0
    %600 = vmatprep.subr.mxu0 0.0
    %601 = vmatpush1.msra.mxu0 0.0
    %602 = vmatprep.mubr.f32.mxu0 0.0
    %603 = vmatmul.mubr.f32.gmra.mrb[0].mxu0 %v536
    %v604 = vpop.f32.mrb[0].mxu0
    %v605 = vadd.f32 %v532, %v604
    %v606 = vpop.f32.mrb[0].mxu0
    %607 = vdwg.mxu0
    %s608 = scalar_lea.vmem %s7, 1
    %v609 = vld [vmem:[%s608] sm:$0x1]
    %v611 = vlaneseq
    %v612 = vshrl.u32 %v611, 7
    %v613 = vsub.s32 0, %v612
    %v614 = vrot.slane %v609, %v613
    %v616 = vadd.f32 %v605, %v614
    %v617 = vtanh.pop %v616
    %618 = vst.msk [vmem:[%s455] sm:$0x3] %vm99, %v617
    %s619 = scalar_lea.vmem [#allocation10], 64
    %v620 = vld [vmem:[%s619] sm:$0xff]
    %v621 = vld [vmem:[%s619 + $0x8] sm:$0xff]
    %v622 = vld [vmem:[%s619 + $0x10] sm:$0xff]
    %v623 = vld [vmem:[%s619 + $0x18] sm:$0xff]
    %s624 = scalar_lea.vmem [#allocation4], 6
    %v625 = vld [vmem:[%s624] sm:$0x3]
    %s626 = scalar_lea.vmem [#allocation11], 64
    %v627 = vld [vmem:[%s626] sm:$0xff]
    %v628 = vld [vmem:[%s626 + $0x8] sm:$0xff]
    %v629 = vld [vmem:[%s626 + $0x10] sm:$0xff]
    %v630 = vld [vmem:[%s626 + $0x18] sm:$0xff]
    %v632 = vsel %vm118, %v625, 0
    %634 = vmatprep.subr.mxu0 0.0
    %635 = vmatpush1.msra.mxu0 %v627
    %636 = vmatprep.subr.mxu0 0.0
    %637 = vmatpush1.msra.mxu0 %v628
    %638 = vmatprep.subr.mxu0 0.0
    %639 = vmatpush1.msra.mxu0 %v629
    %640 = vmatprep.subr.mxu0 0.0
    %641 = vmatpush1.msra.mxu0 %v630
    %642 = vmatprep.subr.mxu0 0.0
    %643 = vmatpush1.msra.mxu0 0.0
    %644 = vmatprep.subr.mxu0 0.0
    %645 = vmatpush1.msra.mxu0 0.0
    %646 = vmatprep.subr.mxu0 0.0
    %647 = vmatpush1.msra.mxu0 0.0
    %648 = vmatprep.subr.mxu0 0.0
    %649 = vmatpush1.msra.mxu0 0.0
    %650 = vmatprep.subr.mxu0 0.0
    %651 = vmatpush1.msra.mxu0 0.0
    %652 = vmatprep.subr.mxu0 0.0
    %653 = vmatpush1.msra.mxu0 0.0
    %654 = vmatprep.subr.mxu0 0.0
    %655 = vmatpush1.msra.mxu0 0.0
    %656 = vmatprep.subr.mxu0 0.0
    %657 = vmatpush1.msra.mxu0 0.0
    %658 = vmatprep.subr.mxu0 0.0
    %659 = vmatpush1.msra.mxu0 0.0
    %660 = vmatprep.subr.mxu0 0.0
    %661 = vmatpush1.msra.mxu0 0.0
    %662 = vmatprep.subr.mxu0 0.0
    %663 = vmatpush1.msra.mxu0 0.0
    %664 = vmatprep.subr.mxu0 0.0
    %665 = vmatpush1.msra.mxu0 0.0
    %666 = vmatprep.subr.mxu0 0.0
    %667 = vmatpush1.msra.mxu0 0.0
    %668 = vmatprep.subr.mxu0 0.0
    %669 = vmatpush1.msra.mxu0 0.0
    %670 = vmatprep.subr.mxu0 0.0
    %671 = vmatpush1.msra.mxu0 0.0
    %672 = vmatprep.subr.mxu0 0.0
    %673 = vmatpush1.msra.mxu0 0.0
    %674 = vmatprep.subr.mxu0 0.0
    %675 = vmatpush1.msra.mxu0 0.0
    %676 = vmatprep.subr.mxu0 0.0
    %677 = vmatpush1.msra.mxu0 0.0
    %678 = vmatprep.subr.mxu0 0.0
    %679 = vmatpush1.msra.mxu0 0.0
    %680 = vmatprep.subr.mxu0 0.0
    %681 = vmatpush1.msra.mxu0 0.0
    %682 = vmatprep.subr.mxu0 0.0
    %683 = vmatpush1.msra.mxu0 0.0
    %684 = vmatprep.subr.mxu0 0.0
    %685 = vmatpush1.msra.mxu0 0.0
    %686 = vmatprep.subr.mxu0 0.0
    %687 = vmatpush1.msra.mxu0 0.0
    %688 = vmatprep.subr.mxu0 0.0
    %689 = vmatpush1.msra.mxu0 0.0
    %690 = vmatprep.subr.mxu0 0.0
    %691 = vmatpush1.msra.mxu0 0.0
    %692 = vmatprep.subr.mxu0 0.0
    %693 = vmatpush1.msra.mxu0 0.0
    %694 = vmatprep.subr.mxu0 0.0
    %695 = vmatpush1.msra.mxu0 0.0
    %696 = vmatprep.subr.mxu0 0.0
    %697 = vmatpush1.msra.mxu0 0.0
    %698 = vmatprep.mubr.f32.mxu0 0.0
    %699 = vmatmul.mubr.f32.gmra.mrb[0].mxu0 %v632
    %v700 = vpop.f32.mrb[0].mxu0
    %v701 = vadd.f32 0.0, %v700
    %v702 = vpop.f32.mrb[0].mxu0
    %703 = vdwg.mxu0
    %v705 = vsel %vm118, %v617, 0
    %707 = vmatprep.subr.mxu0 0.0
    %708 = vmatpush1.msra.mxu0 %v620
    %709 = vmatprep.subr.mxu0 0.0
    %710 = vmatpush1.msra.mxu0 %v621
    %711 = vmatprep.subr.mxu0 0.0
    %712 = vmatpush1.msra.mxu0 %v622
    %713 = vmatprep.subr.mxu0 0.0
    %714 = vmatpush1.msra.mxu0 %v623
    %715 = vmatprep.subr.mxu0 0.0
    %716 = vmatpush1.msra.mxu0 0.0
    %717 = vmatprep.subr.mxu0 0.0
    %718 = vmatpush1.msra.mxu0 0.0
    %719 = vmatprep.subr.mxu0 0.0
    %720 = vmatpush1.msra.mxu0 0.0
    %721 = vmatprep.subr.mxu0 0.0
    %722 = vmatpush1.msra.mxu0 0.0
    %723 = vmatprep.subr.mxu0 0.0
    %724 = vmatpush1.msra.mxu0 0.0
    %725 = vmatprep.subr.mxu0 0.0
    %726 = vmatpush1.msra.mxu0 0.0
    %727 = vmatprep.subr.mxu0 0.0
    %728 = vmatpush1.msra.mxu0 0.0
    %729 = vmatprep.subr.mxu0 0.0
    %730 = vmatpush1.msra.mxu0 0.0
    %731 = vmatprep.subr.mxu0 0.0
    %732 = vmatpush1.msra.mxu0 0.0
    %733 = vmatprep.subr.mxu0 0.0
    %734 = vmatpush1.msra.mxu0 0.0
    %735 = vmatprep.subr.mxu0 0.0
    %736 = vmatpush1.msra.mxu0 0.0
    %737 = vmatprep.subr.mxu0 0.0
    %738 = vmatpush1.msra.mxu0 0.0
    %739 = vmatprep.subr.mxu0 0.0
    %740 = vmatpush1.msra.mxu0 0.0
    %741 = vmatprep.subr.mxu0 0.0
    %742 = vmatpush1.msra.mxu0 0.0
    %743 = vmatprep.subr.mxu0 0.0
    %744 = vmatpush1.msra.mxu0 0.0
    %745 = vmatprep.subr.mxu0 0.0
    %746 = vmatpush1.msra.mxu0 0.0
    %747 = vmatprep.subr.mxu0 0.0
    %748 = vmatpush1.msra.mxu0 0.0
    %749 = vmatprep.subr.mxu0 0.0
    %750 = vmatpush1.msra.mxu0 0.0
    %751 = vmatprep.subr.mxu0 0.0
    %752 = vmatpush1.msra.mxu0 0.0
    %753 = vmatprep.subr.mxu0 0.0
    %754 = vmatpush1.msra.mxu0 0.0
    %755 = vmatprep.subr.mxu0 0.0
    %756 = vmatpush1.msra.mxu0 0.0
    %757 = vmatprep.subr.mxu0 0.0
    %758 = vmatpush1.msra.mxu0 0.0
    %759 = vmatprep.subr.mxu0 0.0
    %760 = vmatpush1.msra.mxu0 0.0
    %761 = vmatprep.subr.mxu0 0.0
    %762 = vmatpush1.msra.mxu0 0.0
    %763 = vmatprep.subr.mxu0 0.0
    %764 = vmatpush1.msra.mxu0 0.0
    %765 = vmatprep.subr.mxu0 0.0
    %766 = vmatpush1.msra.mxu0 0.0
    %767 = vmatprep.subr.mxu0 0.0
    %768 = vmatpush1.msra.mxu0 0.0
    %769 = vmatprep.subr.mxu0 0.0
    %770 = vmatpush1.msra.mxu0 0.0
    %771 = vmatprep.mubr.f32.mxu0 0.0
    %772 = vmatmul.mubr.f32.gmra.mrb[0].mxu0 %v705
    %v773 = vpop.f32.mrb[0].mxu0
    %v774 = vadd.f32 %v701, %v773
    %v775 = vpop.f32.mrb[0].mxu0
    %776 = vdwg.mxu0
    %s777 = scalar_lea.vmem %s7, 2
    %v778 = vld [vmem:[%s777] sm:$0x1]
    %v780 = vlaneseq
    %v781 = vshrl.u32 %v780, 7
    %v782 = vsub.s32 0, %v781
    %v783 = vrot.slane %v778, %v782
    %v785 = vadd.f32 %v774, %v783
    %v786 = vtanh.pop %v785
    %787 = vst.msk [vmem:[%s624] sm:$0x3] %vm99, %v786
    %s788 = scalar_lea.vmem [#allocation10], 96
    %v789 = vld [vmem:[%s788] sm:$0xff]
    %v790 = vld [vmem:[%s788 + $0x8] sm:$0xff]
    %v791 = vld [vmem:[%s788 + $0x10] sm:$0xff]
    %v792 = vld [vmem:[%s788 + $0x18] sm:$0xff]
    %s793 = scalar_lea.vmem [#allocation4], 8
    %v794 = vld [vmem:[%s793] sm:$0x3]
    %s795 = scalar_lea.vmem [#allocation11], 96
    %v796 = vld [vmem:[%s795] sm:$0xff]
    %v797 = vld [vmem:[%s795 + $0x8] sm:$0xff]
    %v798 = vld [vmem:[%s795 + $0x10] sm:$0xff]
    %v799 = vld [vmem:[%s795 + $0x18] sm:$0xff]
    %v801 = vsel %vm118, %v794, 0
    %803 = vmatprep.subr.mxu0 0.0
    %804 = vmatpush1.msra.mxu0 %v796
    %805 = vmatprep.subr.mxu0 0.0
    %806 = vmatpush1.msra.mxu0 %v797
    %807 = vmatprep.subr.mxu0 0.0
    %808 = vmatpush1.msra.mxu0 %v798
    %809 = vmatprep.subr.mxu0 0.0
    %810 = vmatpush1.msra.mxu0 %v799
    %811 = vmatprep.subr.mxu0 0.0
    %812 = vmatpush1.msra.mxu0 0.0
    %813 = vmatprep.subr.mxu0 0.0
    %814 = vmatpush1.msra.mxu0 0.0
    %815 = vmatprep.subr.mxu0 0.0
    %816 = vmatpush1.msra.mxu0 0.0
    %817 = vmatprep.subr.mxu0 0.0
    %818 = vmatpush1.msra.mxu0 0.0
    %819 = vmatprep.subr.mxu0 0.0
    %820 = vmatpush1.msra.mxu0 0.0
    %821 = vmatprep.subr.mxu0 0.0
    %822 = vmatpush1.msra.mxu0 0.0
    %823 = vmatprep.subr.mxu0 0.0
    %824 = vmatpush1.msra.mxu0 0.0
    %825 = vmatprep.subr.mxu0 0.0
    %826 = vmatpush1.msra.mxu0 0.0
    %827 = vmatprep.subr.mxu0 0.0
    %828 = vmatpush1.msra.mxu0 0.0
    %829 = vmatprep.subr.mxu0 0.0
    %830 = vmatpush1.msra.mxu0 0.0
    %831 = vmatprep.subr.mxu0 0.0
    %832 = vmatpush1.msra.mxu0 0.0
    %833 = vmatprep.subr.mxu0 0.0
    %834 = vmatpush1.msra.mxu0 0.0
    %835 = vmatprep.subr.mxu0 0.0
    %836 = vmatpush1.msra.mxu0 0.0
    %837 = vmatprep.subr.mxu0 0.0
    %838 = vmatpush1.msra.mxu0 0.0
    %839 = vmatprep.subr.mxu0 0.0
    %840 = vmatpush1.msra.mxu0 0.0
    %841 = vmatprep.subr.mxu0 0.0
    %842 = vmatpush1.msra.mxu0 0.0
    %843 = vmatprep.subr.mxu0 0.0
    %844 = vmatpush1.msra.mxu0 0.0
    %845 = vmatprep.subr.mxu0 0.0
    %846 = vmatpush1.msra.mxu0 0.0
    %847 = vmatprep.subr.mxu0 0.0
    %848 = vmatpush1.msra.mxu0 0.0
    %849 = vmatprep.subr.mxu0 0.0
    %850 = vmatpush1.msra.mxu0 0.0
    %851 = vmatprep.subr.mxu0 0.0
    %852 = vmatpush1.msra.mxu0 0.0
    %853 = vmatprep.subr.mxu0 0.0
    %854 = vmatpush1.msra.mxu0 0.0
    %855 = vmatprep.subr.mxu0 0.0
    %856 = vmatpush1.msra.mxu0 0.0
    %857 = vmatprep.subr.mxu0 0.0
    %858 = vmatpush1.msra.mxu0 0.0
    %859 = vmatprep.subr.mxu0 0.0
    %860 = vmatpush1.msra.mxu0 0.0
    %861 = vmatprep.subr.mxu0 0.0
    %862 = vmatpush1.msra.mxu0 0.0
    %863 = vmatprep.subr.mxu0 0.0
    %864 = vmatpush1.msra.mxu0 0.0
    %865 = vmatprep.subr.mxu0 0.0
    %866 = vmatpush1.msra.mxu0 0.0
    %867 = vmatprep.mubr.f32.mxu0 0.0
    %868 = vmatmul.mubr.f32.gmra.mrb[0].mxu0 %v801
    %v869 = vpop.f32.mrb[0].mxu0
    %v870 = vadd.f32 0.0, %v869
    %v871 = vpop.f32.mrb[0].mxu0
    %872 = vdwg.mxu0
    %v874 = vsel %vm118, %v786, 0
    %876 = vmatprep.subr.mxu0 0.0
    %877 = vmatpush1.msra.mxu0 %v789
    %878 = vmatprep.subr.mxu0 0.0
    %879 = vmatpush1.msra.mxu0 %v790
    %880 = vmatprep.subr.mxu0 0.0
    %881 = vmatpush1.msra.mxu0 %v791
    %882 = vmatprep.subr.mxu0 0.0
    %883 = vmatpush1.msra.mxu0 %v792
    %884 = vmatprep.subr.mxu0 0.0
    %885 = vmatpush1.msra.mxu0 0.0
    %886 = vmatprep.subr.mxu0 0.0
    %887 = vmatpush1.msra.mxu0 0.0
    %888 = vmatprep.subr.mxu0 0.0
    %889 = vmatpush1.msra.mxu0 0.0
    %890 = vmatprep.subr.mxu0 0.0
    %891 = vmatpush1.msra.mxu0 0.0
    %892 = vmatprep.subr.mxu0 0.0
    %893 = vmatpush1.msra.mxu0 0.0
    %894 = vmatprep.subr.mxu0 0.0
    %895 = vmatpush1.msra.mxu0 0.0
    %896 = vmatprep.subr.mxu0 0.0
    %897 = vmatpush1.msra.mxu0 0.0
    %898 = vmatprep.subr.mxu0 0.0
    %899 = vmatpush1.msra.mxu0 0.0
    %900 = vmatprep.subr.mxu0 0.0
    %901 = vmatpush1.msra.mxu0 0.0
    %902 = vmatprep.subr.mxu0 0.0
    %903 = vmatpush1.msra.mxu0 0.0
    %904 = vmatprep.subr.mxu0 0.0
    %905 = vmatpush1.msra.mxu0 0.0
    %906 = vmatprep.subr.mxu0 0.0
    %907 = vmatpush1.msra.mxu0 0.0
    %908 = vmatprep.subr.mxu0 0.0
    %909 = vmatpush1.msra.mxu0 0.0
    %910 = vmatprep.subr.mxu0 0.0
    %911 = vmatpush1.msra.mxu0 0.0
    %912 = vmatprep.subr.mxu0 0.0
    %913 = vmatpush1.msra.mxu0 0.0
    %914 = vmatprep.subr.mxu0 0.0
    %915 = vmatpush1.msra.mxu0 0.0
    %916 = vmatprep.subr.mxu0 0.0
    %917 = vmatpush1.msra.mxu0 0.0
    %918 = vmatprep.subr.mxu0 0.0
    %919 = vmatpush1.msra.mxu0 0.0
    %920 = vmatprep.subr.mxu0 0.0
    %921 = vmatpush1.msra.mxu0 0.0
    %922 = vmatprep.subr.mxu0 0.0
    %923 = vmatpush1.msra.mxu0 0.0
    %924 = vmatprep.subr.mxu0 0.0
    %925 = vmatpush1.msra.mxu0 0.0
    %926 = vmatprep.subr.mxu0 0.0
    %927 = vmatpush1.msra.mxu0 0.0
    %928 = vmatprep.subr.mxu0 0.0
    %929 = vmatpush1.msra.mxu0 0.0
    %930 = vmatprep.subr.mxu0 0.0
    %931 = vmatpush1.msra.mxu0 0.0
    %932 = vmatprep.subr.mxu0 0.0
    %933 = vmatpush1.msra.mxu0 0.0
    %934 = vmatprep.subr.mxu0 0.0
    %935 = vmatpush1.msra.mxu0 0.0
    %936 = vmatprep.subr.mxu0 0.0
    %937 = vmatpush1.msra.mxu0 0.0
    %938 = vmatprep.subr.mxu0 0.0
    %939 = vmatpush1.msra.mxu0 0.0
    %940 = vmatprep.mubr.f32.mxu0 0.0
    %941 = vmatmul.mubr.f32.gmra.mrb[0].mxu0 %v874
    %v942 = vpop.f32.mrb[0].mxu0
    %v943 = vadd.f32 %v870, %v942
    %v944 = vpop.f32.mrb[0].mxu0
    %945 = vdwg.mxu0
    %s946 = scalar_lea.vmem %s7, 3
    %v947 = vld [vmem:[%s946] sm:$0x1]
    %v949 = vlaneseq
    %v950 = vshrl.u32 %v949, 7
    %v951 = vsub.s32 0, %v950
    %v952 = vrot.slane %v947, %v951
    %v954 = vadd.f32 %v943, %v952
    %v955 = vtanh.pop %v954
    %956 = vst.msk [vmem:[%s793] sm:$0x3] %vm99, %v955
    %957 = vst.msk [vmem:[#allocation3] sm:$0x3] %vm99, %v955
    %v958 = vld [vmem:[#allocation2 + $0x2] sm:$0x3]
    %v959 = vld [vmem:[#allocation4] sm:$0x3]
    %v960 = vld [vmem:[#allocation8] sm:$0xff]
    %v961 = vld [vmem:[#allocation8 + $0x8] sm:$0xff]
    %v962 = vld [vmem:[#allocation8 + $0x10] sm:$0xff]
    %v963 = vld [vmem:[#allocation8 + $0x18] sm:$0xff]
    %v965 = vsel %vm118, %v959, 0
    %967 = vmatprep.subr.mxu0 0.0
    %968 = vmatpush1.msra.mxu0 %v960
    %969 = vmatprep.subr.mxu0 0.0
    %970 = vmatpush1.msra.mxu0 %v961
    %971 = vmatprep.subr.mxu0 0.0
    %972 = vmatpush1.msra.mxu0 %v962
    %973 = vmatprep.subr.mxu0 0.0
    %974 = vmatpush1.msra.mxu0 %v963
    %975 = vmatprep.subr.mxu0 0.0
    %976 = vmatpush1.msra.mxu0 0.0
    %977 = vmatprep.subr.mxu0 0.0
    %978 = vmatpush1.msra.mxu0 0.0
    %979 = vmatprep.subr.mxu0 0.0
    %980 = vmatpush1.msra.mxu0 0.0
    %981 = vmatprep.subr.mxu0 0.0
    %982 = vmatpush1.msra.mxu0 0.0
    %983 = vmatprep.subr.mxu0 0.0
    %984 = vmatpush1.msra.mxu0 0.0
    %985 = vmatprep.subr.mxu0 0.0
    %986 = vmatpush1.msra.mxu0 0.0
    %987 = vmatprep.subr.mxu0 0.0
    %988 = vmatpush1.msra.mxu0 0.0
    %989 = vmatprep.subr.mxu0 0.0
    %990 = vmatpush1.msra.mxu0 0.0
    %991 = vmatprep.subr.mxu0 0.0
    %992 = vmatpush1.msra.mxu0 0.0
    %993 = vmatprep.subr.mxu0 0.0
    %994 = vmatpush1.msra.mxu0 0.0
    %995 = vmatprep.subr.mxu0 0.0
    %996 = vmatpush1.msra.mxu0 0.0
    %997 = vmatprep.subr.mxu0 0.0
    %998 = vmatpush1.msra.mxu0 0.0
    %999 = vmatprep.subr.mxu0 0.0
    %1000 = vmatpush1.msra.mxu0 0.0
    %1001 = vmatprep.subr.mxu0 0.0
    %1002 = vmatpush1.msra.mxu0 0.0
    %1003 = vmatprep.subr.mxu0 0.0
    %1004 = vmatpush1.msra.mxu0 0.0
    %1005 = vmatprep.subr.mxu0 0.0
    %1006 = vmatpush1.msra.mxu0 0.0
    %1007 = vmatprep.subr.mxu0 0.0
    %1008 = vmatpush1.msra.mxu0 0.0
    %1009 = vmatprep.subr.mxu0 0.0
    %1010 = vmatpush1.msra.mxu0 0.0
    %1011 = vmatprep.subr.mxu0 0.0
    %1012 = vmatpush1.msra.mxu0 0.0
    %1013 = vmatprep.subr.mxu0 0.0
    %1014 = vmatpush1.msra.mxu0 0.0
    %1015 = vmatprep.subr.mxu0 0.0
    %1016 = vmatpush1.msra.mxu0 0.0
    %1017 = vmatprep.subr.mxu0 0.0
    %1018 = vmatpush1.msra.mxu0 0.0
    %1019 = vmatprep.subr.mxu0 0.0
    %1020 = vmatpush1.msra.mxu0 0.0
    %1021 = vmatprep.subr.mxu0 0.0
    %1022 = vmatpush1.msra.mxu0 0.0
    %1023 = vmatprep.subr.mxu0 0.0
    %1024 = vmatpush1.msra.mxu0 0.0
    %1025 = vmatprep.subr.mxu0 0.0
    %1026 = vmatpush1.msra.mxu0 0.0
    %1027 = vmatprep.subr.mxu0 0.0
    %1028 = vmatpush1.msra.mxu0 0.0
    %1029 = vmatprep.subr.mxu0 0.0
    %1030 = vmatpush1.msra.mxu0 0.0
    %1031 = vmatprep.mubr.f32.mxu0 0.0
    %1032 = vmatmul.mubr.f32.gmra.mrb[0].mxu0 %v965
    %v1033 = vpop.f32.mrb[0].mxu0
    %v1034 = vadd.f32 0.0, %v1033
    %v1035 = vpop.f32.mrb[0].mxu0
    %1036 = vdwg.mxu0
    %v1037 = vadd.f32 %v958, %v1034
    %v1038 = vtanh.pop %v1037
    %1039 = vst.msk [vmem:[#allocation4] sm:$0x3] %vm99, %v1038
    %v1040 = vld [vmem:[#allocation10] sm:$0xff]
    %v1041 = vld [vmem:[#allocation10 + $0x8] sm:$0xff]
    %v1042 = vld [vmem:[#allocation10 + $0x10] sm:$0xff]
    %v1043 = vld [vmem:[#allocation10 + $0x18] sm:$0xff]
    %v1044 = vld [vmem:[%s288] sm:$0x3]
    %v1045 = vld [vmem:[#allocation11] sm:$0xff]
    %v1046 = vld [vmem:[#allocation11 + $0x8] sm:$0xff]
    %v1047 = vld [vmem:[#allocation11 + $0x10] sm:$0xff]
    %v1048 = vld [vmem:[#allocation11 + $0x18] sm:$0xff]
    %v1050 = vsel %vm118, %v1044, 0
    %1052 = vmatprep.subr.mxu0 0.0
    %1053 = vmatpush1.msra.mxu0 %v1045
    %1054 = vmatprep.subr.mxu0 0.0
    %1055 = vmatpush1.msra.mxu0 %v1046
    %1056 = vmatprep.subr.mxu0 0.0
    %1057 = vmatpush1.msra.mxu0 %v1047
    %1058 = vmatprep.subr.mxu0 0.0
    %1059 = vmatpush1.msra.mxu0 %v1048
    %1060 = vmatprep.subr.mxu0 0.0
    %1061 = vmatpush1.msra.mxu0 0.0
    %1062 = vmatprep.subr.mxu0 0.0
    %1063 = vmatpush1.msra.mxu0 0.0
    %1064 = vmatprep.subr.mxu0 0.0
    %1065 = vmatpush1.msra.mxu0 0.0
    %1066 = vmatprep.subr.mxu0 0.0
    %1067 = vmatpush1.msra.mxu0 0.0
    %1068 = vmatprep.subr.mxu0 0.0
    %1069 = vmatpush1.msra.mxu0 0.0
    %1070 = vmatprep.subr.mxu0 0.0
    %1071 = vmatpush1.msra.mxu0 0.0
    %1072 = vmatprep.subr.mxu0 0.0
    %1073 = vmatpush1.msra.mxu0 0.0
    %1074 = vmatprep.subr.mxu0 0.0
    %1075 = vmatpush1.msra.mxu0 0.0
    %1076 = vmatprep.subr.mxu0 0.0
    %1077 = vmatpush1.msra.mxu0 0.0
    %1078 = vmatprep.subr.mxu0 0.0
    %1079 = vmatpush1.msra.mxu0 0.0
    %1080 = vmatprep.subr.mxu0 0.0
    %1081 = vmatpush1.msra.mxu0 0.0
    %1082 = vmatprep.subr.mxu0 0.0
    %1083 = vmatpush1.msra.mxu0 0.0
    %1084 = vmatprep.subr.mxu0 0.0
    %1085 = vmatpush1.msra.mxu0 0.0
    %1086 = vmatprep.subr.mxu0 0.0
    %1087 = vmatpush1.msra.mxu0 0.0
    %1088 = vmatprep.subr.mxu0 0.0
    %1089 = vmatpush1.msra.mxu0 0.0
    %1090 = vmatprep.subr.mxu0 0.0
    %1091 = vmatpush1.msra.mxu0 0.0
    %1092 = vmatprep.subr.mxu0 0.0
    %1093 = vmatpush1.msra.mxu0 0.0
    %1094 = vmatprep.subr.mxu0 0.0
    %1095 = vmatpush1.msra.mxu0 0.0
    %1096 = vmatprep.subr.mxu0 0.0
    %1097 = vmatpush1.msra.mxu0 0.0
    %1098 = vmatprep.subr.mxu0 0.0
    %1099 = vmatpush1.msra.mxu0 0.0
    %1100 = vmatprep.subr.mxu0 0.0
    %1101 = vmatpush1.msra.mxu0 0.0
    %1102 = vmatprep.subr.mxu0 0.0
    %1103 = vmatpush1.msra.mxu0 0.0
    %1104 = vmatprep.subr.mxu0 0.0
    %1105 = vmatpush1.msra.mxu0 0.0
    %1106 = vmatprep.subr.mxu0 0.0
    %1107 = vmatpush1.msra.mxu0 0.0
    %1108 = vmatprep.subr.mxu0 0.0
    %1109 = vmatpush1.msra.mxu0 0.0
    %1110 = vmatprep.subr.mxu0 0.0
    %1111 = vmatpush1.msra.mxu0 0.0
    %1112 = vmatprep.subr.mxu0 0.0
    %1113 = vmatpush1.msra.mxu0 0.0
    %1114 = vmatprep.subr.mxu0 0.0
    %1115 = vmatpush1.msra.mxu0 0.0
    %1116 = vmatprep.mubr.f32.mxu0 0.0
    %1117 = vmatmul.mubr.f32.gmra.mrb[0].mxu0 %v1050
    %v1118 = vpop.f32.mrb[0].mxu0
    %v1119 = vadd.f32 0.0, %v1118
    %v1120 = vpop.f32.mrb[0].mxu0
    %1121 = vdwg.mxu0
    %v1123 = vsel %vm118, %v1038, 0
    %1125 = vmatprep.subr.mxu0 0.0
    %1126 = vmatpush1.msra.mxu0 %v1040
    %1127 = vmatprep.subr.mxu0 0.0
    %1128 = vmatpush1.msra.mxu0 %v1041
    %1129 = vmatprep.subr.mxu0 0.0
    %1130 = vmatpush1.msra.mxu0 %v1042
    %1131 = vmatprep.subr.mxu0 0.0
    %1132 = vmatpush1.msra.mxu0 %v1043
    %1133 = vmatprep.subr.mxu0 0.0
    %1134 = vmatpush1.msra.mxu0 0.0
    %1135 = vmatprep.subr.mxu0 0.0
    %1136 = vmatpush1.msra.mxu0 0.0
    %1137 = vmatprep.subr.mxu0 0.0
    %1138 = vmatpush1.msra.mxu0 0.0
    %1139 = vmatprep.subr.mxu0 0.0
    %1140 = vmatpush1.msra.mxu0 0.0
    %1141 = vmatprep.subr.mxu0 0.0
    %1142 = vmatpush1.msra.mxu0 0.0
    %1143 = vmatprep.subr.mxu0 0.0
    %1144 = vmatpush1.msra.mxu0 0.0
    %1145 = vmatprep.subr.mxu0 0.0
    %1146 = vmatpush1.msra.mxu0 0.0
    %1147 = vmatprep.subr.mxu0 0.0
    %1148 = vmatpush1.msra.mxu0 0.0
    %1149 = vmatprep.subr.mxu0 0.0
    %1150 = vmatpush1.msra.mxu0 0.0
    %1151 = vmatprep.subr.mxu0 0.0
    %1152 = vmatpush1.msra.mxu0 0.0
    %1153 = vmatprep.subr.mxu0 0.0
    %1154 = vmatpush1.msra.mxu0 0.0
    %1155 = vmatprep.subr.mxu0 0.0
    %1156 = vmatpush1.msra.mxu0 0.0
    %1157 = vmatprep.subr.mxu0 0.0
    %1158 = vmatpush1.msra.mxu0 0.0
    %1159 = vmatprep.subr.mxu0 0.0
    %1160 = vmatpush1.msra.mxu0 0.0
    %1161 = vmatprep.subr.mxu0 0.0
    %1162 = vmatpush1.msra.mxu0 0.0
    %1163 = vmatprep.subr.mxu0 0.0
    %1164 = vmatpush1.msra.mxu0 0.0
    %1165 = vmatprep.subr.mxu0 0.0
    %1166 = vmatpush1.msra.mxu0 0.0
    %1167 = vmatprep.subr.mxu0 0.0
    %1168 = vmatpush1.msra.mxu0 0.0
    %1169 = vmatprep.subr.mxu0 0.0
    %1170 = vmatpush1.msra.mxu0 0.0
    %1171 = vmatprep.subr.mxu0 0.0
    %1172 = vmatpush1.msra.mxu0 0.0
    %1173 = vmatprep.subr.mxu0 0.0
    %1174 = vmatpush1.msra.mxu0 0.0
    %1175 = vmatprep.subr.mxu0 0.0
    %1176 = vmatpush1.msra.mxu0 0.0
    %1177 = vmatprep.subr.mxu0 0.0
    %1178 = vmatpush1.msra.mxu0 0.0
    %1179 = vmatprep.subr.mxu0 0.0
    %1180 = vmatpush1.msra.mxu0 0.0
    %1181 = vmatprep.subr.mxu0 0.0
    %1182 = vmatpush1.msra.mxu0 0.0
    %1183 = vmatprep.subr.mxu0 0.0
    %1184 = vmatpush1.msra.mxu0 0.0
    %1185 = vmatprep.subr.mxu0 0.0
    %1186 = vmatpush1.msra.mxu0 0.0
    %1187 = vmatprep.subr.mxu0 0.0
    %1188 = vmatpush1.msra.mxu0 0.0
    %1189 = vmatprep.mubr.f32.mxu0 0.0
    %1190 = vmatmul.mubr.f32.gmra.mrb[0].mxu0 %v1123
    %v1191 = vpop.f32.mrb[0].mxu0
    %v1192 = vadd.f32 %v1119, %v1191
    %v1193 = vpop.f32.mrb[0].mxu0
    %1194 = vdwg.mxu0
    %v1195 = vld [vmem:[%s7] sm:$0x1]
    %v1197 = vlaneseq
    %v1198 = vshrl.u32 %v1197, 7
    %v1199 = vsub.s32 0, %v1198
    %v1200 = vrot.slane %v1195, %v1199
    %v1202 = vadd.f32 %v1192, %v1200
    %v1203 = vtanh.pop %v1202
    %1204 = vst.msk [vmem:[%s288] sm:$0x3] %vm99, %v1203
    %v1205 = vld [vmem:[%s450] sm:$0xff]
    %v1206 = vld [vmem:[%s450 + $0x8] sm:$0xff]
    %v1207 = vld [vmem:[%s450 + $0x10] sm:$0xff]
    %v1208 = vld [vmem:[%s450 + $0x18] sm:$0xff]
    %v1209 = vld [vmem:[%s455] sm:$0x3]
    %v1210 = vld [vmem:[%s457] sm:$0xff]
    %v1211 = vld [vmem:[%s457 + $0x8] sm:$0xff]
    %v1212 = vld [vmem:[%s457 + $0x10] sm:$0xff]
    %v1213 = vld [vmem:[%s457 + $0x18] sm:$0xff]
    %v1215 = vsel %vm118, %v1209, 0
    %1217 = vmatprep.subr.mxu0 0.0
    %1218 = vmatpush1.msra.mxu0 %v1210
    %1219 = vmatprep.subr.mxu0 0.0
    %1220 = vmatpush1.msra.mxu0 %v1211
    %1221 = vmatprep.subr.mxu0 0.0
    %1222 = vmatpush1.msra.mxu0 %v1212
    %1223 = vmatprep.subr.mxu0 0.0
    %1224 = vmatpush1.msra.mxu0 %v1213
    %1225 = vmatprep.subr.mxu0 0.0
    %1226 = vmatpush1.msra.mxu0 0.0
    %1227 = vmatprep.subr.mxu0 0.0
    %1228 = vmatpush1.msra.mxu0 0.0
    %1229 = vmatprep.subr.mxu0 0.0
    %1230 = vmatpush1.msra.mxu0 0.0
    %1231 = vmatprep.subr.mxu0 0.0
    %1232 = vmatpush1.msra.mxu0 0.0
    %1233 = vmatprep.subr.mxu0 0.0
    %1234 = vmatpush1.msra.mxu0 0.0
    %1235 = vmatprep.subr.mxu0 0.0
    %1236 = vmatpush1.msra.mxu0 0.0
    %1237 = vmatprep.subr.mxu0 0.0
    %1238 = vmatpush1.msra.mxu0 0.0
    %1239 = vmatprep.subr.mxu0 0.0
    %1240 = vmatpush1.msra.mxu0 0.0
    %1241 = vmatprep.subr.mxu0 0.0
    %1242 = vmatpush1.msra.mxu0 0.0
    %1243 = vmatprep.subr.mxu0 0.0
    %1244 = vmatpush1.msra.mxu0 0.0
    %1245 = vmatprep.subr.mxu0 0.0
    %1246 = vmatpush1.msra.mxu0 0.0
    %1247 = vmatprep.subr.mxu0 0.0
    %1248 = vmatpush1.msra.mxu0 0.0
    %1249 = vmatprep.subr.mxu0 0.0
    %1250 = vmatpush1.msra.mxu0 0.0
    %1251 = vmatprep.subr.mxu0 0.0
    %1252 = vmatpush1.msra.mxu0 0.0
    %1253 = vmatprep.subr.mxu0 0.0
    %1254 = vmatpush1.msra.mxu0 0.0
    %1255 = vmatprep.subr.mxu0 0.0
    %1256 = vmatpush1.msra.mxu0 0.0
    %1257 = vmatprep.subr.mxu0 0.0
    %1258 = vmatpush1.msra.mxu0 0.0
    %1259 = vmatprep.subr.mxu0 0.0
    %1260 = vmatpush1.msra.mxu0 0.0
    %1261 = vmatprep.subr.mxu0 0.0
    %1262 = vmatpush1.msra.mxu0 0.0
    %1263 = vmatprep.subr.mxu0 0.0
    %1264 = vmatpush1.msra.mxu0 0.0
    %1265 = vmatprep.subr.mxu0 0.0
    %1266 = vmatpush1.msra.mxu0 0.0
    %1267 = vmatprep.subr.mxu0 0.0
    %1268 = vmatpush1.msra.mxu0 0.0
    %1269 = vmatprep.subr.mxu0 0.0
    %1270 = vmatpush1.msra.mxu0 0.0
    %1271 = vmatprep.subr.mxu0 0.0
    %1272 = vmatpush1.msra.mxu0 0.0
    %1273 = vmatprep.subr.mxu0 0.0
    %1274 = vmatpush1.msra.mxu0 0.0
    %1275 = vmatprep.subr.mxu0 0.0
    %1276 = vmatpush1.msra.mxu0 0.0
    %1277 = vmatprep.subr.mxu0 0.0
    %1278 = vmatpush1.msra.mxu0 0.0
    %1279 = vmatprep.subr.mxu0 0.0
    %1280 = vmatpush1.msra.mxu0 0.0
    %1281 = vmatprep.mubr.f32.mxu0 0.0
    %1282 = vmatmul.mubr.f32.gmra.mrb[0].mxu0 %v1215
    %v1283 = vpop.f32.mrb[0].mxu0
    %v1284 = vadd.f32 0.0, %v1283
    %v1285 = vpop.f32.mrb[0].mxu0
    %1286 = vdwg.mxu0
    %v1288 = vsel %vm118, %v1203, 0
    %1290 = vmatprep.subr.mxu0 0.0
    %1291 = vmatpush1.msra.mxu0 %v1205
    %1292 = vmatprep.subr.mxu0 0.0
    %1293 = vmatpush1.msra.mxu0 %v1206
    %1294 = vmatprep.subr.mxu0 0.0
    %1295 = vmatpush1.msra.mxu0 %v1207
    %1296 = vmatprep.subr.mxu0 0.0
    %1297 = vmatpush1.msra.mxu0 %v1208
    %1298 = vmatprep.subr.mxu0 0.0
    %1299 = vmatpush1.msra.mxu0 0.0
    %1300 = vmatprep.subr.mxu0 0.0
    %1301 = vmatpush1.msra.mxu0 0.0
    %1302 = vmatprep.subr.mxu0 0.0
    %1303 = vmatpush1.msra.mxu0 0.0
    %1304 = vmatprep.subr.mxu0 0.0
    %1305 = vmatpush1.msra.mxu0 0.0
    %1306 = vmatprep.subr.mxu0 0.0
    %1307 = vmatpush1.msra.mxu0 0.0
    %1308 = vmatprep.subr.mxu0 0.0
    %1309 = vmatpush1.msra.mxu0 0.0
    %1310 = vmatprep.subr.mxu0 0.0
    %1311 = vmatpush1.msra.mxu0 0.0
    %1312 = vmatprep.subr.mxu0 0.0
    %1313 = vmatpush1.msra.mxu0 0.0
    %1314 = vmatprep.subr.mxu0 0.0
    %1315 = vmatpush1.msra.mxu0 0.0
    %1316 = vmatprep.subr.mxu0 0.0
    %1317 = vmatpush1.msra.mxu0 0.0
    %1318 = vmatprep.subr.mxu0 0.0
    %1319 = vmatpush1.msra.mxu0 0.0
    %1320 = vmatprep.subr.mxu0 0.0
    %1321 = vmatpush1.msra.mxu0 0.0
    %1322 = vmatprep.subr.mxu0 0.0
    %1323 = vmatpush1.msra.mxu0 0.0
    %1324 = vmatprep.subr.mxu0 0.0
    %1325 = vmatpush1.msra.mxu0 0.0
    %1326 = vmatprep.subr.mxu0 0.0
    %1327 = vmatpush1.msra.mxu0 0.0
    %1328 = vmatprep.subr.mxu0 0.0
    %1329 = vmatpush1.msra.mxu0 0.0
    %1330 = vmatprep.subr.mxu0 0.0
    %1331 = vmatpush1.msra.mxu0 0.0
    %1332 = vmatprep.subr.mxu0 0.0
    %1333 = vmatpush1.msra.mxu0 0.0
    %1334 = vmatprep.subr.mxu0 0.0
    %1335 = vmatpush1.msra.mxu0 0.0
    %1336 = vmatprep.subr.mxu0 0.0
    %1337 = vmatpush1.msra.mxu0 0.0
    %1338 = vmatprep.subr.mxu0 0.0
    %1339 = vmatpush1.msra.mxu0 0.0
    %1340 = vmatprep.subr.mxu0 0.0
    %1341 = vmatpush1.msra.mxu0 0.0
    %1342 = vmatprep.subr.mxu0 0.0
    %1343 = vmatpush1.msra.mxu0 0.0
    %1344 = vmatprep.subr.mxu0 0.0
    %1345 = vmatpush1.msra.mxu0 0.0
    %1346 = vmatprep.subr.mxu0 0.0
    %1347 = vmatpush1.msra.mxu0 0.0
    %1348 = vmatprep.subr.mxu0 0.0
    %1349 = vmatpush1.msra.mxu0 0.0
    %1350 = vmatprep.subr.mxu0 0.0
    %1351 = vmatpush1.msra.mxu0 0.0
    %1352 = vmatprep.subr.mxu0 0.0
    %1353 = vmatpush1.msra.mxu0 0.0
    %1354 = vmatprep.mubr.f32.mxu0 0.0
    %1355 = vmatmul.mubr.f32.gmra.mrb[0].mxu0 %v1288
    %v1356 = vpop.f32.mrb[0].mxu0
    %v1357 = vadd.f32 %v1284, %v1356
    %v1358 = vpop.f32.mrb[0].mxu0
    %1359 = vdwg.mxu0
    %v1360 = vld [vmem:[%s608] sm:$0x1]
    %v1362 = vlaneseq
    %v1363 = vshrl.u32 %v1362, 7
    %v1364 = vsub.s32 0, %v1363
    %v1365 = vrot.slane %v1360, %v1364
    %v1367 = vadd.f32 %v1357, %v1365
    %v1368 = vtanh.pop %v1367
    %1369 = vst.msk [vmem:[%s455] sm:$0x3] %vm99, %v1368
    %v1370 = vld [vmem:[%s619] sm:$0xff]
    %v1371 = vld [vmem:[%s619 + $0x8] sm:$0xff]
    %v1372 = vld [vmem:[%s619 + $0x10] sm:$0xff]
    %v1373 = vld [vmem:[%s619 + $0x18] sm:$0xff]
    %v1374 = vld [vmem:[%s624] sm:$0x3]
    %v1375 = vld [vmem:[%s626] sm:$0xff]
    %v1376 = vld [vmem:[%s626 + $0x8] sm:$0xff]
    %v1377 = vld [vmem:[%s626 + $0x10] sm:$0xff]
    %v1378 = vld [vmem:[%s626 + $0x18] sm:$0xff]
    %v1380 = vsel %vm118, %v1374, 0
    %1382 = vmatprep.subr.mxu0 0.0
    %1383 = vmatpush1.msra.mxu0 %v1375
    %1384 = vmatprep.subr.mxu0 0.0
    %1385 = vmatpush1.msra.mxu0 %v1376
    %1386 = vmatprep.subr.mxu0 0.0
    %1387 = vmatpush1.msra.mxu0 %v1377
    %1388 = vmatprep.subr.mxu0 0.0
    %1389 = vmatpush1.msra.mxu0 %v1378
    %1390 = vmatprep.subr.mxu0 0.0
    %1391 = vmatpush1.msra.mxu0 0.0
    %1392 = vmatprep.subr.mxu0 0.0
    %1393 = vmatpush1.msra.mxu0 0.0
    %1394 = vmatprep.subr.mxu0 0.0
    %1395 = vmatpush1.msra.mxu0 0.0
    %1396 = vmatprep.subr.mxu0 0.0
    %1397 = vmatpush1.msra.mxu0 0.0
    %1398 = vmatprep.subr.mxu0 0.0
    %1399 = vmatpush1.msra.mxu0 0.0
    %1400 = vmatprep.subr.mxu0 0.0
    %1401 = vmatpush1.msra.mxu0 0.0
    %1402 = vmatprep.subr.mxu0 0.0
    %1403 = vmatpush1.msra.mxu0 0.0
    %1404 = vmatprep.subr.mxu0 0.0
    %1405 = vmatpush1.msra.mxu0 0.0
    %1406 = vmatprep.subr.mxu0 0.0
    %1407 = vmatpush1.msra.mxu0 0.0
    %1408 = vmatprep.subr.mxu0 0.0
    %1409 = vmatpush1.msra.mxu0 0.0
    %1410 = vmatprep.subr.mxu0 0.0
    %1411 = vmatpush1.msra.mxu0 0.0
    %1412 = vmatprep.subr.mxu0 0.0
    %1413 = vmatpush1.msra.mxu0 0.0
    %1414 = vmatprep.subr.mxu0 0.0
    %1415 = vmatpush1.msra.mxu0 0.0
    %1416 = vmatprep.subr.mxu0 0.0
    %1417 = vmatpush1.msra.mxu0 0.0
    %1418 = vmatprep.subr.mxu0 0.0
    %1419 = vmatpush1.msra.mxu0 0.0
    %1420 = vmatprep.subr.mxu0 0.0
    %1421 = vmatpush1.msra.mxu0 0.0
    %1422 = vmatprep.subr.mxu0 0.0
    %1423 = vmatpush1.msra.mxu0 0.0
    %1424 = vmatprep.subr.mxu0 0.0
    %1425 = vmatpush1.msra.mxu0 0.0
    %1426 = vmatprep.subr.mxu0 0.0
    %1427 = vmatpush1.msra.mxu0 0.0
    %1428 = vmatprep.subr.mxu0 0.0
    %1429 = vmatpush1.msra.mxu0 0.0
    %1430 = vmatprep.subr.mxu0 0.0
    %1431 = vmatpush1.msra.mxu0 0.0
    %1432 = vmatprep.subr.mxu0 0.0
    %1433 = vmatpush1.msra.mxu0 0.0
    %1434 = vmatprep.subr.mxu0 0.0
    %1435 = vmatpush1.msra.mxu0 0.0
    %1436 = vmatprep.subr.mxu0 0.0
    %1437 = vmatpush1.msra.mxu0 0.0
    %1438 = vmatprep.subr.mxu0 0.0
    %1439 = vmatpush1.msra.mxu0 0.0
    %1440 = vmatprep.subr.mxu0 0.0
    %1441 = vmatpush1.msra.mxu0 0.0
    %1442 = vmatprep.subr.mxu0 0.0
    %1443 = vmatpush1.msra.mxu0 0.0
    %1444 = vmatprep.subr.mxu0 0.0
    %1445 = vmatpush1.msra.mxu0 0.0
    %1446 = vmatprep.mubr.f32.mxu0 0.0
    %1447 = vmatmul.mubr.f32.gmra.mrb[0].mxu0 %v1380
    %v1448 = vpop.f32.mrb[0].mxu0
    %v1449 = vadd.f32 0.0, %v1448
    %v1450 = vpop.f32.mrb[0].mxu0
    %1451 = vdwg.mxu0
    %v1453 = vsel %vm118, %v1368, 0
    %1455 = vmatprep.subr.mxu0 0.0
    %1456 = vmatpush1.msra.mxu0 %v1370
    %1457 = vmatprep.subr.mxu0 0.0
    %1458 = vmatpush1.msra.mxu0 %v1371
    %1459 = vmatprep.subr.mxu0 0.0
    %1460 = vmatpush1.msra.mxu0 %v1372
    %1461 = vmatprep.subr.mxu0 0.0
    %1462 = vmatpush1.msra.mxu0 %v1373
    %1463 = vmatprep.subr.mxu0 0.0
    %1464 = vmatpush1.msra.mxu0 0.0
    %1465 = vmatprep.subr.mxu0 0.0
    %1466 = vmatpush1.msra.mxu0 0.0
    %1467 = vmatprep.subr.mxu0 0.0
    %1468 = vmatpush1.msra.mxu0 0.0
    %1469 = vmatprep.subr.mxu0 0.0
    %1470 = vmatpush1.msra.mxu0 0.0
    %1471 = vmatprep.subr.mxu0 0.0
    %1472 = vmatpush1.msra.mxu0 0.0
    %1473 = vmatprep.subr.mxu0 0.0
    %1474 = vmatpush1.msra.mxu0 0.0
    %1475 = vmatprep.subr.mxu0 0.0
    %1476 = vmatpush1.msra.mxu0 0.0
    %1477 = vmatprep.subr.mxu0 0.0
    %1478 = vmatpush1.msra.mxu0 0.0
    %1479 = vmatprep.subr.mxu0 0.0
    %1480 = vmatpush1.msra.mxu0 0.0
    %1481 = vmatprep.subr.mxu0 0.0
    %1482 = vmatpush1.msra.mxu0 0.0
    %1483 = vmatprep.subr.mxu0 0.0
    %1484 = vmatpush1.msra.mxu0 0.0
    %1485 = vmatprep.subr.mxu0 0.0
    %1486 = vmatpush1.msra.mxu0 0.0
    %1487 = vmatprep.subr.mxu0 0.0
    %1488 = vmatpush1.msra.mxu0 0.0
    %1489 = vmatprep.subr.mxu0 0.0
    %1490 = vmatpush1.msra.mxu0 0.0
    %1491 = vmatprep.subr.mxu0 0.0
    %1492 = vmatpush1.msra.mxu0 0.0
    %1493 = vmatprep.subr.mxu0 0.0
    %1494 = vmatpush1.msra.mxu0 0.0
    %1495 = vmatprep.subr.mxu0 0.0
    %1496 = vmatpush1.msra.mxu0 0.0
    %1497 = vmatprep.subr.mxu0 0.0
    %1498 = vmatpush1.msra.mxu0 0.0
    %1499 = vmatprep.subr.mxu0 0.0
    %1500 = vmatpush1.msra.mxu0 0.0
    %1501 = vmatprep.subr.mxu0 0.0
    %1502 = vmatpush1.msra.mxu0 0.0
    %1503 = vmatprep.subr.mxu0 0.0
    %1504 = vmatpush1.msra.mxu0 0.0
    %1505 = vmatprep.subr.mxu0 0.0
    %1506 = vmatpush1.msra.mxu0 0.0
    %1507 = vmatprep.subr.mxu0 0.0
    %1508 = vmatpush1.msra.mxu0 0.0
    %1509 = vmatprep.subr.mxu0 0.0
    %1510 = vmatpush1.msra.mxu0 0.0
    %1511 = vmatprep.subr.mxu0 0.0
    %1512 = vmatpush1.msra.mxu0 0.0
    %1513 = vmatprep.subr.mxu0 0.0
    %1514 = vmatpush1.msra.mxu0 0.0
    %1515 = vmatprep.subr.mxu0 0.0
    %1516 = vmatpush1.msra.mxu0 0.0
    %1517 = vmatprep.subr.mxu0 0.0
    %1518 = vmatpush1.msra.mxu0 0.0
    %1519 = vmatprep.mubr.f32.mxu0 0.0
    %1520 = vmatmul.mubr.f32.gmra.mrb[0].mxu0 %v1453
    %v1521 = vpop.f32.mrb[0].mxu0
    %v1522 = vadd.f32 %v1449, %v1521
    %v1523 = vpop.f32.mrb[0].mxu0
    %1524 = vdwg.mxu0
    %v1525 = vld [vmem:[%s777] sm:$0x1]
    %v1527 = vlaneseq
    %v1528 = vshrl.u32 %v1527, 7
    %v1529 = vsub.s32 0, %v1528
    %v1530 = vrot.slane %v1525, %v1529
    %v1532 = vadd.f32 %v1522, %v1530
    %v1533 = vtanh.pop %v1532
    %1534 = vst.msk [vmem:[%s624] sm:$0x3] %vm99, %v1533
    %v1535 = vld [vmem:[%s788] sm:$0xff]
    %v1536 = vld [vmem:[%s788 + $0x8] sm:$0xff]
    %v1537 = vld [vmem:[%s788 + $0x10] sm:$0xff]
    %v1538 = vld [vmem:[%s788 + $0x18] sm:$0xff]
    %v1539 = vld [vmem:[%s793] sm:$0x3]
    %v1540 = vld [vmem:[%s795] sm:$0xff]
    %v1541 = vld [vmem:[%s795 + $0x8] sm:$0xff]
    %v1542 = vld [vmem:[%s795 + $0x10] sm:$0xff]
    %v1543 = vld [vmem:[%s795 + $0x18] sm:$0xff]
    %v1545 = vsel %vm118, %v1539, 0
    %1547 = vmatprep.subr.mxu0 0.0
    %1548 = vmatpush1.msra.mxu0 %v1540
    %1549 = vmatprep.subr.mxu0 0.0
    %1550 = vmatpush1.msra.mxu0 %v1541
    %1551 = vmatprep.subr.mxu0 0.0
    %1552 = vmatpush1.msra.mxu0 %v1542
    %1553 = vmatprep.subr.mxu0 0.0
    %1554 = vmatpush1.msra.mxu0 %v1543
    %1555 = vmatprep.subr.mxu0 0.0
    %1556 = vmatpush1.msra.mxu0 0.0
    %1557 = vmatprep.subr.mxu0 0.0
    %1558 = vmatpush1.msra.mxu0 0.0
    %1559 = vmatprep.subr.mxu0 0.0
    %1560 = vmatpush1.msra.mxu0 0.0
    %1561 = vmatprep.subr.mxu0 0.0
    %1562 = vmatpush1.msra.mxu0 0.0
    %1563 = vmatprep.subr.mxu0 0.0
    %1564 = vmatpush1.msra.mxu0 0.0
    %1565 = vmatprep.subr.mxu0 0.0
    %1566 = vmatpush1.msra.mxu0 0.0
    %1567 = vmatprep.subr.mxu0 0.0
    %1568 = vmatpush1.msra.mxu0 0.0
    %1569 = vmatprep.subr.mxu0 0.0
    %1570 = vmatpush1.msra.mxu0 0.0
    %1571 = vmatprep.subr.mxu0 0.0
    %1572 = vmatpush1.msra.mxu0 0.0
    %1573 = vmatprep.subr.mxu0 0.0
    %1574 = vmatpush1.msra.mxu0 0.0
    %1575 = vmatprep.subr.mxu0 0.0
    %1576 = vmatpush1.msra.mxu0 0.0
    %1577 = vmatprep.subr.mxu0 0.0
    %1578 = vmatpush1.msra.mxu0 0.0
    %1579 = vmatprep.subr.mxu0 0.0
    %1580 = vmatpush1.msra.mxu0 0.0
    %1581 = vmatprep.subr.mxu0 0.0
    %1582 = vmatpush1.msra.mxu0 0.0
    %1583 = vmatprep.subr.mxu0 0.0
    %1584 = vmatpush1.msra.mxu0 0.0
    %1585 = vmatprep.subr.mxu0 0.0
    %1586 = vmatpush1.msra.mxu0 0.0
    %1587 = vmatprep.subr.mxu0 0.0
    %1588 = vmatpush1.msra.mxu0 0.0
    %1589 = vmatprep.subr.mxu0 0.0
    %1590 = vmatpush1.msra.mxu0 0.0
    %1591 = vmatprep.subr.mxu0 0.0
    %1592 = vmatpush1.msra.mxu0 0.0
    %1593 = vmatprep.subr.mxu0 0.0
    %1594 = vmatpush1.msra.mxu0 0.0
    %1595 = vmatprep.subr.mxu0 0.0
    %1596 = vmatpush1.msra.mxu0 0.0
    %1597 = vmatprep.subr.mxu0 0.0
    %1598 = vmatpush1.msra.mxu0 0.0
    %1599 = vmatprep.subr.mxu0 0.0
    %1600 = vmatpush1.msra.mxu0 0.0
    %1601 = vmatprep.subr.mxu0 0.0
    %1602 = vmatpush1.msra.mxu0 0.0
    %1603 = vmatprep.subr.mxu0 0.0
    %1604 = vmatpush1.msra.mxu0 0.0
    %1605 = vmatprep.subr.mxu0 0.0
    %1606 = vmatpush1.msra.mxu0 0.0
    %1607 = vmatprep.subr.mxu0 0.0
    %1608 = vmatpush1.msra.mxu0 0.0
    %1609 = vmatprep.subr.mxu0 0.0
    %1610 = vmatpush1.msra.mxu0 0.0
    %1611 = vmatprep.mubr.f32.mxu0 0.0
    %1612 = vmatmul.mubr.f32.gmra.mrb[0].mxu0 %v1545
    %v1613 = vpop.f32.mrb[0].mxu0
    %v1614 = vadd.f32 0.0, %v1613
    %v1615 = vpop.f32.mrb[0].mxu0
    %1616 = vdwg.mxu0
    %v1618 = vsel %vm118, %v1533, 0
    %1620 = vmatprep.subr.mxu0 0.0
    %1621 = vmatpush1.msra.mxu0 %v1535
    %1622 = vmatprep.subr.mxu0 0.0
    %1623 = vmatpush1.msra.mxu0 %v1536
    %1624 = vmatprep.subr.mxu0 0.0
    %1625 = vmatpush1.msra.mxu0 %v1537
    %1626 = vmatprep.subr.mxu0 0.0
    %1627 = vmatpush1.msra.mxu0 %v1538
    %1628 = vmatprep.subr.mxu0 0.0
    %1629 = vmatpush1.msra.mxu0 0.0
    %1630 = vmatprep.subr.mxu0 0.0
    %1631 = vmatpush1.msra.mxu0 0.0
    %1632 = vmatprep.subr.mxu0 0.0
    %1633 = vmatpush1.msra.mxu0 0.0
    %1634 = vmatprep.subr.mxu0 0.0
    %1635 = vmatpush1.msra.mxu0 0.0
    %1636 = vmatprep.subr.mxu0 0.0
    %1637 = vmatpush1.msra.mxu0 0.0
    %1638 = vmatprep.subr.mxu0 0.0
    %1639 = vmatpush1.msra.mxu0 0.0
    %1640 = vmatprep.subr.mxu0 0.0
    %1641 = vmatpush1.msra.mxu0 0.0
    %1642 = vmatprep.subr.mxu0 0.0
    %1643 = vmatpush1.msra.mxu0 0.0
    %1644 = vmatprep.subr.mxu0 0.0
    %1645 = vmatpush1.msra.mxu0 0.0
    %1646 = vmatprep.subr.mxu0 0.0
    %1647 = vmatpush1.msra.mxu0 0.0
    %1648 = vmatprep.subr.mxu0 0.0
    %1649 = vmatpush1.msra.mxu0 0.0
    %1650 = vmatprep.subr.mxu0 0.0
    %1651 = vmatpush1.msra.mxu0 0.0
    %1652 = vmatprep.subr.mxu0 0.0
    %1653 = vmatpush1.msra.mxu0 0.0
    %1654 = vmatprep.subr.mxu0 0.0
    %1655 = vmatpush1.msra.mxu0 0.0
    %1656 = vmatprep.subr.mxu0 0.0
    %1657 = vmatpush1.msra.mxu0 0.0
    %1658 = vmatprep.subr.mxu0 0.0
    %1659 = vmatpush1.msra.mxu0 0.0
    %1660 = vmatprep.subr.mxu0 0.0
    %1661 = vmatpush1.msra.mxu0 0.0
    %1662 = vmatprep.subr.mxu0 0.0
    %1663 = vmatpush1.msra.mxu0 0.0
    %1664 = vmatprep.subr.mxu0 0.0
    %1665 = vmatpush1.msra.mxu0 0.0
    %1666 = vmatprep.subr.mxu0 0.0
    %1667 = vmatpush1.msra.mxu0 0.0
    %1668 = vmatprep.subr.mxu0 0.0
    %1669 = vmatpush1.msra.mxu0 0.0
    %1670 = vmatprep.subr.mxu0 0.0
    %1671 = vmatpush1.msra.mxu0 0.0
    %1672 = vmatprep.subr.mxu0 0.0
    %1673 = vmatpush1.msra.mxu0 0.0
    %1674 = vmatprep.subr.mxu0 0.0
    %1675 = vmatpush1.msra.mxu0 0.0
    %1676 = vmatprep.subr.mxu0 0.0
    %1677 = vmatpush1.msra.mxu0 0.0
    %1678 = vmatprep.subr.mxu0 0.0
    %1679 = vmatpush1.msra.mxu0 0.0
    %1680 = vmatprep.subr.mxu0 0.0
    %1681 = vmatpush1.msra.mxu0 0.0
    %1682 = vmatprep.subr.mxu0 0.0
    %1683 = vmatpush1.msra.mxu0 0.0
    %1684 = vmatprep.mubr.f32.mxu0 0.0
    %1685 = vmatmul.mubr.f32.gmra.mrb[0].mxu0 %v1618
    %v1686 = vpop.f32.mrb[0].mxu0
    %v1687 = vadd.f32 %v1614, %v1686
    %v1688 = vpop.f32.mrb[0].mxu0
    %1689 = vdwg.mxu0
    %v1690 = vld [vmem:[%s946] sm:$0x1]
    %v1692 = vlaneseq
    %v1693 = vshrl.u32 %v1692, 7
    %v1694 = vsub.s32 0, %v1693
    %v1695 = vrot.slane %v1690, %v1694
    %v1697 = vadd.f32 %v1687, %v1695
    %v1698 = vtanh.pop %v1697
    %1699 = vst.msk [vmem:[%s793] sm:$0x3] %vm99, %v1698
    %1700 = vst.msk [vmem:[#allocation3 + $0x2] sm:$0x3] %vm99, %v1698
    %v1701 = vld [vmem:[#allocation2 + $0x4] sm:$0x3]
    %v1702 = vld [vmem:[#allocation4] sm:$0x3]
    %v1703 = vld [vmem:[#allocation8] sm:$0xff]
    %v1704 = vld [vmem:[#allocation8 + $0x8] sm:$0xff]
    %v1705 = vld [vmem:[#allocation8 + $0x10] sm:$0xff]
    %v1706 = vld [vmem:[#allocation8 + $0x18] sm:$0xff]
    %v1708 = vsel %vm118, %v1702, 0
    %1710 = vmatprep.subr.mxu0 0.0
    %1711 = vmatpush1.msra.mxu0 %v1703
    %1712 = vmatprep.subr.mxu0 0.0
    %1713 = vmatpush1.msra.mxu0 %v1704
    %1714 = vmatprep.subr.mxu0 0.0
    %1715 = vmatpush1.msra.mxu0 %v1705
    %1716 = vmatprep.subr.mxu0 0.0
    %1717 = vmatpush1.msra.mxu0 %v1706
    %1718 = vmatprep.subr.mxu0 0.0
    %1719 = vmatpush1.msra.mxu0 0.0
    %1720 = vmatprep.subr.mxu0 0.0
    %1721 = vmatpush1.msra.mxu0 0.0
    %1722 = vmatprep.subr.mxu0 0.0
    %1723 = vmatpush1.msra.mxu0 0.0
    %1724 = vmatprep.subr.mxu0 0.0
    %1725 = vmatpush1.msra.mxu0 0.0
    %1726 = vmatprep.subr.mxu0 0.0
    %1727 = vmatpush1.msra.mxu0 0.0
    %1728 = vmatprep.subr.mxu0 0.0
    %1729 = vmatpush1.msra.mxu0 0.0
    %1730 = vmatprep.subr.mxu0 0.0
    %1731 = vmatpush1.msra.mxu0 0.0
    %1732 = vmatprep.subr.mxu0 0.0
    %1733 = vmatpush1.msra.mxu0 0.0
    %1734 = vmatprep.subr.mxu0 0.0
    %1735 = vmatpush1.msra.mxu0 0.0
    %1736 = vmatprep.subr.mxu0 0.0
    %1737 = vmatpush1.msra.mxu0 0.0
    %1738 = vmatprep.subr.mxu0 0.0
    %1739 = vmatpush1.msra.mxu0 0.0
    %1740 = vmatprep.subr.mxu0 0.0
    %1741 = vmatpush1.msra.mxu0 0.0
    %1742 = vmatprep.subr.mxu0 0.0
    %1743 = vmatpush1.msra.mxu0 0.0
    %1744 = vmatprep.subr.mxu0 0.0
    %1745 = vmatpush1.msra.mxu0 0.0
    %1746 = vmatprep.subr.mxu0 0.0
    %1747 = vmatpush1.msra.mxu0 0.0
    %1748 = vmatprep.subr.mxu0 0.0
    %1749 = vmatpush1.msra.mxu0 0.0
    %1750 = vmatprep.subr.mxu0 0.0
    %1751 = vmatpush1.msra.mxu0 0.0
    %1752 = vmatprep.subr.mxu0 0.0
    %1753 = vmatpush1.msra.mxu0 0.0
    %1754 = vmatprep.subr.mxu0 0.0
    %1755 = vmatpush1.msra.mxu0 0.0
    %1756 = vmatprep.subr.mxu0 0.0
    %1757 = vmatpush1.msra.mxu0 0.0
    %1758 = vmatprep.subr.mxu0 0.0
    %1759 = vmatpush1.msra.mxu0 0.0
    %1760 = vmatprep.subr.mxu0 0.0
    %1761 = vmatpush1.msra.mxu0 0.0
    %1762 = vmatprep.subr.mxu0 0.0
    %1763 = vmatpush1.msra.mxu0 0.0
    %1764 = vmatprep.subr.mxu0 0.0
    %1765 = vmatpush1.msra.mxu0 0.0
    %1766 = vmatprep.subr.mxu0 0.0
    %1767 = vmatpush1.msra.mxu0 0.0
    %1768 = vmatprep.subr.mxu0 0.0
    %1769 = vmatpush1.msra.mxu0 0.0
    %1770 = vmatprep.subr.mxu0 0.0
    %1771 = vmatpush1.msra.mxu0 0.0
    %1772 = vmatprep.subr.mxu0 0.0
    %1773 = vmatpush1.msra.mxu0 0.0
    %1774 = vmatprep.mubr.f32.mxu0 0.0
    %1775 = vmatmul.mubr.f32.gmra.mrb[0].mxu0 %v1708
    %v1776 = vpop.f32.mrb[0].mxu0
    %v1777 = vadd.f32 0.0, %v1776
    %v1778 = vpop.f32.mrb[0].mxu0
    %1779 = vdwg.mxu0
    %v1780 = vadd.f32 %v1701, %v1777
    %v1781 = vtanh.pop %v1780
    %1782 = vst.msk [vmem:[#allocation4] sm:$0x3] %vm99, %v1781
    %v1783 = vld [vmem:[#allocation10] sm:$0xff]
    %v1784 = vld [vmem:[#allocation10 + $0x8] sm:$0xff]
    %v1785 = vld [vmem:[#allocation10 + $0x10] sm:$0xff]
    %v1786 = vld [vmem:[#allocation10 + $0x18] sm:$0xff]
    %v1787 = vld [vmem:[%s288] sm:$0x3]
    %v1788 = vld [vmem:[#allocation11] sm:$0xff]
    %v1789 = vld [vmem:[#allocation11 + $0x8] sm:$0xff]
    %v1790 = vld [vmem:[#allocation11 + $0x10] sm:$0xff]
    %v1791 = vld [vmem:[#allocation11 + $0x18] sm:$0xff]
    %v1793 = vsel %vm118, %v1787, 0
    %1795 = vmatprep.subr.mxu0 0.0
    %1796 = vmatpush1.msra.mxu0 %v1788
    %1797 = vmatprep.subr.mxu0 0.0
    %1798 = vmatpush1.msra.mxu0 %v1789
    %1799 = vmatprep.subr.mxu0 0.0
    %1800 = vmatpush1.msra.mxu0 %v1790
    %1801 = vmatprep.subr.mxu0 0.0
    %1802 = vmatpush1.msra.mxu0 %v1791
    %1803 = vmatprep.subr.mxu0 0.0
    %1804 = vmatpush1.msra.mxu0 0.0
    %1805 = vmatprep.subr.mxu0 0.0
    %1806 = vmatpush1.msra.mxu0 0.0
    %1807 = vmatprep.subr.mxu0 0.0
    %1808 = vmatpush1.msra.mxu0 0.0
    %1809 = vmatprep.subr.mxu0 0.0
    %1810 = vmatpush1.msra.mxu0 0.0
    %1811 = vmatprep.subr.mxu0 0.0
    %1812 = vmatpush1.msra.mxu0 0.0
    %1813 = vmatprep.subr.mxu0 0.0
    %1814 = vmatpush1.msra.mxu0 0.0
    %1815 = vmatprep.subr.mxu0 0.0
    %1816 = vmatpush1.msra.mxu0 0.0
    %1817 = vmatprep.subr.mxu0 0.0
    %1818 = vmatpush1.msra.mxu0 0.0
    %1819 = vmatprep.subr.mxu0 0.0
    %1820 = vmatpush1.msra.mxu0 0.0
    %1821 = vmatprep.subr.mxu0 0.0
    %1822 = vmatpush1.msra.mxu0 0.0
    %1823 = vmatprep.subr.mxu0 0.0
    %1824 = vmatpush1.msra.mxu0 0.0
    %1825 = vmatprep.subr.mxu0 0.0
    %1826 = vmatpush1.msra.mxu0 0.0
    %1827 = vmatprep.subr.mxu0 0.0
    %1828 = vmatpush1.msra.mxu0 0.0
    %1829 = vmatprep.subr.mxu0 0.0
    %1830 = vmatpush1.msra.mxu0 0.0
    %1831 = vmatprep.subr.mxu0 0.0
    %1832 = vmatpush1.msra.mxu0 0.0
    %1833 = vmatprep.subr.mxu0 0.0
    %1834 = vmatpush1.msra.mxu0 0.0
    %1835 = vmatprep.subr.mxu0 0.0
    %1836 = vmatpush1.msra.mxu0 0.0
    %1837 = vmatprep.subr.mxu0 0.0
    %1838 = vmatpush1.msra.mxu0 0.0
    %1839 = vmatprep.subr.mxu0 0.0
    %1840 = vmatpush1.msra.mxu0 0.0
    %1841 = vmatprep.subr.mxu0 0.0
    %1842 = vmatpush1.msra.mxu0 0.0
    %1843 = vmatprep.subr.mxu0 0.0
    %1844 = vmatpush1.msra.mxu0 0.0
    %1845 = vmatprep.subr.mxu0 0.0
    %1846 = vmatpush1.msra.mxu0 0.0
    %1847 = vmatprep.subr.mxu0 0.0
    %1848 = vmatpush1.msra.mxu0 0.0
    %1849 = vmatprep.subr.mxu0 0.0
    %1850 = vmatpush1.msra.mxu0 0.0
    %1851 = vmatprep.subr.mxu0 0.0
    %1852 = vmatpush1.msra.mxu0 0.0
    %1853 = vmatprep.subr.mxu0 0.0
    %1854 = vmatpush1.msra.mxu0 0.0
    %1855 = vmatprep.subr.mxu0 0.0
    %1856 = vmatpush1.msra.mxu0 0.0
    %1857 = vmatprep.subr.mxu0 0.0
    %1858 = vmatpush1.msra.mxu0 0.0
    %1859 = vmatprep.mubr.f32.mxu0 0.0
    %1860 = vmatmul.mubr.f32.gmra.mrb[0].mxu0 %v1793
    %v1861 = vpop.f32.mrb[0].mxu0
    %v1862 = vadd.f32 0.0, %v1861
    %v1863 = vpop.f32.mrb[0].mxu0
    %1864 = vdwg.mxu0
    %v1866 = vsel %vm118, %v1781, 0
    %1868 = vmatprep.subr.mxu0 0.0
    %1869 = vmatpush1.msra.mxu0 %v1783
    %1870 = vmatprep.subr.mxu0 0.0
    %1871 = vmatpush1.msra.mxu0 %v1784
    %1872 = vmatprep.subr.mxu0 0.0
    %1873 = vmatpush1.msra.mxu0 %v1785
    %1874 = vmatprep.subr.mxu0 0.0
    %1875 = vmatpush1.msra.mxu0 %v1786
    %1876 = vmatprep.subr.mxu0 0.0
    %1877 = vmatpush1.msra.mxu0 0.0
    %1878 = vmatprep.subr.mxu0 0.0
    %1879 = vmatpush1.msra.mxu0 0.0
    %1880 = vmatprep.subr.mxu0 0.0
    %1881 = vmatpush1.msra.mxu0 0.0
    %1882 = vmatprep.subr.mxu0 0.0
    %1883 = vmatpush1.msra.mxu0 0.0
    %1884 = vmatprep.subr.mxu0 0.0
    %1885 = vmatpush1.msra.mxu0 0.0
    %1886 = vmatprep.subr.mxu0 0.0
    %1887 = vmatpush1.msra.mxu0 0.0
    %1888 = vmatprep.subr.mxu0 0.0
    %1889 = vmatpush1.msra.mxu0 0.0
    %1890 = vmatprep.subr.mxu0 0.0
    %1891 = vmatpush1.msra.mxu0 0.0
    %1892 = vmatprep.subr.mxu0 0.0
    %1893 = vmatpush1.msra.mxu0 0.0
    %1894 = vmatprep.subr.mxu0 0.0
    %1895 = vmatpush1.msra.mxu0 0.0
    %1896 = vmatprep.subr.mxu0 0.0
    %1897 = vmatpush1.msra.mxu0 0.0
    %1898 = vmatprep.subr.mxu0 0.0
    %1899 = vmatpush1.msra.mxu0 0.0
    %1900 = vmatprep.subr.mxu0 0.0
    %1901 = vmatpush1.msra.mxu0 0.0
    %1902 = vmatprep.subr.mxu0 0.0
    %1903 = vmatpush1.msra.mxu0 0.0
    %1904 = vmatprep.subr.mxu0 0.0
    %1905 = vmatpush1.msra.mxu0 0.0
    %1906 = vmatprep.subr.mxu0 0.0
    %1907 = vmatpush1.msra.mxu0 0.0
    %1908 = vmatprep.subr.mxu0 0.0
    %1909 = vmatpush1.msra.mxu0 0.0
    %1910 = vmatprep.subr.mxu0 0.0
    %1911 = vmatpush1.msra.mxu0 0.0
    %1912 = vmatprep.subr.mxu0 0.0
    %1913 = vmatpush1.msra.mxu0 0.0
    %1914 = vmatprep.subr.mxu0 0.0
    %1915 = vmatpush1.msra.mxu0 0.0
    %1916 = vmatprep.subr.mxu0 0.0
    %1917 = vmatpush1.msra.mxu0 0.0
    %1918 = vmatprep.subr.mxu0 0.0
    %1919 = vmatpush1.msra.mxu0 0.0
    %1920 = vmatprep.subr.mxu0 0.0
    %1921 = vmatpush1.msra.mxu0 0.0
    %1922 = vmatprep.subr.mxu0 0.0
    %1923 = vmatpush1.msra.mxu0 0.0
    %1924 = vmatprep.subr.mxu0 0.0
    %1925 = vmatpush1.msra.mxu0 0.0
    %1926 = vmatprep.subr.mxu0 0.0
    %1927 = vmatpush1.msra.mxu0 0.0
    %1928 = vmatprep.subr.mxu0 0.0
    %1929 = vmatpush1.msra.mxu0 0.0
    %1930 = vmatprep.subr.mxu0 0.0
    %1931 = vmatpush1.msra.mxu0 0.0
    %1932 = vmatprep.mubr.f32.mxu0 0.0
    %1933 = vmatmul.mubr.f32.gmra.mrb[0].mxu0 %v1866
    %v1934 = vpop.f32.mrb[0].mxu0
    %v1935 = vadd.f32 %v1862, %v1934
    %v1936 = vpop.f32.mrb[0].mxu0
    %1937 = vdwg.mxu0
    %v1938 = vld [vmem:[%s7] sm:$0x1]
    %v1940 = vlaneseq
    %v1941 = vshrl.u32 %v1940, 7
    %v1942 = vsub.s32 0, %v1941
    %v1943 = vrot.slane %v1938, %v1942
    %v1945 = vadd.f32 %v1935, %v1943
    %v1946 = vtanh.pop %v1945
    %1947 = vst.msk [vmem:[%s288] sm:$0x3] %vm99, %v1946
    %v1948 = vld [vmem:[%s450] sm:$0xff]
    %v1949 = vld [vmem:[%s450 + $0x8] sm:$0xff]
    %v1950 = vld [vmem:[%s450 + $0x10] sm:$0xff]
    %v1951 = vld [vmem:[%s450 + $0x18] sm:$0xff]
    %v1952 = vld [vmem:[%s455] sm:$0x3]
    %v1953 = vld [vmem:[%s457] sm:$0xff]
    %v1954 = vld [vmem:[%s457 + $0x8] sm:$0xff]
    %v1955 = vld [vmem:[%s457 + $0x10] sm:$0xff]
    %v1956 = vld [vmem:[%s457 + $0x18] sm:$0xff]
    %v1958 = vsel %vm118, %v1952, 0
    %1960 = vmatprep.subr.mxu0 0.0
    %1961 = vmatpush1.msra.mxu0 %v1953
    %1962 = vmatprep.subr.mxu0 0.0
    %1963 = vmatpush1.msra.mxu0 %v1954
    %1964 = vmatprep.subr.mxu0 0.0
    %1965 = vmatpush1.msra.mxu0 %v1955
    %1966 = vmatprep.subr.mxu0 0.0
    %1967 = vmatpush1.msra.mxu0 %v1956
    %1968 = vmatprep.subr.mxu0 0.0
    %1969 = vmatpush1.msra.mxu0 0.0
    %1970 = vmatprep.subr.mxu0 0.0
    %1971 = vmatpush1.msra.mxu0 0.0
    %1972 = vmatprep.subr.mxu0 0.0
    %1973 = vmatpush1.msra.mxu0 0.0
    %1974 = vmatprep.subr.mxu0 0.0
    %1975 = vmatpush1.msra.mxu0 0.0
    %1976 = vmatprep.subr.mxu0 0.0
    %1977 = vmatpush1.msra.mxu0 0.0
    %1978 = vmatprep.subr.mxu0 0.0
    %1979 = vmatpush1.msra.mxu0 0.0
    %1980 = vmatprep.subr.mxu0 0.0
    %1981 = vmatpush1.msra.mxu0 0.0
    %1982 = vmatprep.subr.mxu0 0.0
    %1983 = vmatpush1.msra.mxu0 0.0
    %1984 = vmatprep.subr.mxu0 0.0
    %1985 = vmatpush1.msra.mxu0 0.0
    %1986 = vmatprep.subr.mxu0 0.0
    %1987 = vmatpush1.msra.mxu0 0.0
    %1988 = vmatprep.subr.mxu0 0.0
    %1989 = vmatpush1.msra.mxu0 0.0
    %1990 = vmatprep.subr.mxu0 0.0
    %1991 = vmatpush1.msra.mxu0 0.0
    %1992 = vmatprep.subr.mxu0 0.0
    %1993 = vmatpush1.msra.mxu0 0.0
    %1994 = vmatprep.subr.mxu0 0.0
    %1995 = vmatpush1.msra.mxu0 0.0
    %1996 = vmatprep.subr.mxu0 0.0
    %1997 = vmatpush1.msra.mxu0 0.0
    %1998 = vmatprep.subr.mxu0 0.0
    %1999 = vmatpush1.msra.mxu0 0.0
    %2000 = vmatprep.subr.mxu0 0.0
    %2001 = vmatpush1.msra.mxu0 0.0
    %2002 = vmatprep.subr.mxu0 0.0
    %2003 = vmatpush1.msra.mxu0 0.0
    %2004 = vmatprep.subr.mxu0 0.0
    %2005 = vmatpush1.msra.mxu0 0.0
    %2006 = vmatprep.subr.mxu0 0.0
    %2007 = vmatpush1.msra.mxu0 0.0
    %2008 = vmatprep.subr.mxu0 0.0
    %2009 = vmatpush1.msra.mxu0 0.0
    %2010 = vmatprep.subr.mxu0 0.0
    %2011 = vmatpush1.msra.mxu0 0.0
    %2012 = vmatprep.subr.mxu0 0.0
    %2013 = vmatpush1.msra.mxu0 0.0
    %2014 = vmatprep.subr.mxu0 0.0
    %2015 = vmatpush1.msra.mxu0 0.0
    %2016 = vmatprep.subr.mxu0 0.0
    %2017 = vmatpush1.msra.mxu0 0.0
    %2018 = vmatprep.subr.mxu0 0.0
    %2019 = vmatpush1.msra.mxu0 0.0
    %2020 = vmatprep.subr.mxu0 0.0
    %2021 = vmatpush1.msra.mxu0 0.0
    %2022 = vmatprep.subr.mxu0 0.0
    %2023 = vmatpush1.msra.mxu0 0.0
    %2024 = vmatprep.mubr.f32.mxu0 0.0
    %2025 = vmatmul.mubr.f32.gmra.mrb[0].mxu0 %v1958
    %v2026 = vpop.f32.mrb[0].mxu0
    %v2027 = vadd.f32 0.0, %v2026
    %v2028 = vpop.f32.mrb[0].mxu0
    %2029 = vdwg.mxu0
    %v2031 = vsel %vm118, %v1946, 0
    %2033 = vmatprep.subr.mxu0 0.0
    %2034 = vmatpush1.msra.mxu0 %v1948
    %2035 = vmatprep.subr.mxu0 0.0
    %2036 = vmatpush1.msra.mxu0 %v1949
    %2037 = vmatprep.subr.mxu0 0.0
    %2038 = vmatpush1.msra.mxu0 %v1950
    %2039 = vmatprep.subr.mxu0 0.0
    %2040 = vmatpush1.msra.mxu0 %v1951
    %2041 = vmatprep.subr.mxu0 0.0
    %2042 = vmatpush1.msra.mxu0 0.0
    %2043 = vmatprep.subr.mxu0 0.0
    %2044 = vmatpush1.msra.mxu0 0.0
    %2045 = vmatprep.subr.mxu0 0.0
    %2046 = vmatpush1.msra.mxu0 0.0
    %2047 = vmatprep.subr.mxu0 0.0
    %2048 = vmatpush1.msra.mxu0 0.0
    %2049 = vmatprep.subr.mxu0 0.0
    %2050 = vmatpush1.msra.mxu0 0.0
    %2051 = vmatprep.subr.mxu0 0.0
    %2052 = vmatpush1.msra.mxu0 0.0
    %2053 = vmatprep.subr.mxu0 0.0
    %2054 = vmatpush1.msra.mxu0 0.0
    %2055 = vmatprep.subr.mxu0 0.0
    %2056 = vmatpush1.msra.mxu0 0.0
    %2057 = vmatprep.subr.mxu0 0.0
    %2058 = vmatpush1.msra.mxu0 0.0
    %2059 = vmatprep.subr.mxu0 0.0
    %2060 = vmatpush1.msra.mxu0 0.0
    %2061 = vmatprep.subr.mxu0 0.0
    %2062 = vmatpush1.msra.mxu0 0.0
    %2063 = vmatprep.subr.mxu0 0.0
    %2064 = vmatpush1.msra.mxu0 0.0
    %2065 = vmatprep.subr.mxu0 0.0
    %2066 = vmatpush1.msra.mxu0 0.0
    %2067 = vmatprep.subr.mxu0 0.0
    %2068 = vmatpush1.msra.mxu0 0.0
    %2069 = vmatprep.subr.mxu0 0.0
    %2070 = vmatpush1.msra.mxu0 0.0
    %2071 = vmatprep.subr.mxu0 0.0
    %2072 = vmatpush1.msra.mxu0 0.0
    %2073 = vmatprep.subr.mxu0 0.0
    %2074 = vmatpush1.msra.mxu0 0.0
    %2075 = vmatprep.subr.mxu0 0.0
    %2076 = vmatpush1.msra.mxu0 0.0
    %2077 = vmatprep.subr.mxu0 0.0
    %2078 = vmatpush1.msra.mxu0 0.0
    %2079 = vmatprep.subr.mxu0 0.0
    %2080 = vmatpush1.msra.mxu0 0.0
    %2081 = vmatprep.subr.mxu0 0.0
    %2082 = vmatpush1.msra.mxu0 0.0
    %2083 = vmatprep.subr.mxu0 0.0
    %2084 = vmatpush1.msra.mxu0 0.0
    %2085 = vmatprep.subr.mxu0 0.0
    %2086 = vmatpush1.msra.mxu0 0.0
    %2087 = vmatprep.subr.mxu0 0.0
    %2088 = vmatpush1.msra.mxu0 0.0
    %2089 = vmatprep.subr.mxu0 0.0
    %2090 = vmatpush1.msra.mxu0 0.0
    %2091 = vmatprep.subr.mxu0 0.0
    %2092 = vmatpush1.msra.mxu0 0.0
    %2093 = vmatprep.subr.mxu0 0.0
    %2094 = vmatpush1.msra.mxu0 0.0
    %2095 = vmatprep.subr.mxu0 0.0
    %2096 = vmatpush1.msra.mxu0 0.0
    %2097 = vmatprep.mubr.f32.mxu0 0.0
    %2098 = vmatmul.mubr.f32.gmra.mrb[0].mxu0 %v2031
    %v2099 = vpop.f32.mrb[0].mxu0
    %v2100 = vadd.f32 %v2027, %v2099
    %v2101 = vpop.f32.mrb[0].mxu0
    %2102 = vdwg.mxu0
    %v2103 = vld [vmem:[%s608] sm:$0x1]
    %v2105 = vlaneseq
    %v2106 = vshrl.u32 %v2105, 7
    %v2107 = vsub.s32 0, %v2106
    %v2108 = vrot.slane %v2103, %v2107
    %v2110 = vadd.f32 %v2100, %v2108
    %v2111 = vtanh.pop %v2110
    %2112 = vst.msk [vmem:[%s455] sm:$0x3] %vm99, %v2111
    %v2113 = vld [vmem:[%s619] sm:$0xff]
    %v2114 = vld [vmem:[%s619 + $0x8] sm:$0xff]
    %v2115 = vld [vmem:[%s619 + $0x10] sm:$0xff]
    %v2116 = vld [vmem:[%s619 + $0x18] sm:$0xff]
    %v2117 = vld [vmem:[%s624] sm:$0x3]
    %v2118 = vld [vmem:[%s626] sm:$0xff]
    %v2119 = vld [vmem:[%s626 + $0x8] sm:$0xff]
    %v2120 = vld [vmem:[%s626 + $0x10] sm:$0xff]
    %v2121 = vld [vmem:[%s626 + $0x18] sm:$0xff]
    %v2123 = vsel %vm118, %v2117, 0
    %2125 = vmatprep.subr.mxu0 0.0
    %2126 = vmatpush1.msra.mxu0 %v2118
    %2127 = vmatprep.subr.mxu0 0.0
    %2128 = vmatpush1.msra.mxu0 %v2119
    %2129 = vmatprep.subr.mxu0 0.0
    %2130 = vmatpush1.msra.mxu0 %v2120
    %2131 = vmatprep.subr.mxu0 0.0
    %2132 = vmatpush1.msra.mxu0 %v2121
    %2133 = vmatprep.subr.mxu0 0.0
    %2134 = vmatpush1.msra.mxu0 0.0
    %2135 = vmatprep.subr.mxu0 0.0
    %2136 = vmatpush1.msra.mxu0 0.0
    %2137 = vmatprep.subr.mxu0 0.0
    %2138 = vmatpush1.msra.mxu0 0.0
    %2139 = vmatprep.subr.mxu0 0.0
    %2140 = vmatpush1.msra.mxu0 0.0
    %2141 = vmatprep.subr.mxu0 0.0
    %2142 = vmatpush1.msra.mxu0 0.0
    %2143 = vmatprep.subr.mxu0 0.0
    %2144 = vmatpush1.msra.mxu0 0.0
    %2145 = vmatprep.subr.mxu0 0.0
    %2146 = vmatpush1.msra.mxu0 0.0
    %2147 = vmatprep.subr.mxu0 0.0
    %2148 = vmatpush1.msra.mxu0 0.0
    %2149 = vmatprep.subr.mxu0 0.0
    %2150 = vmatpush1.msra.mxu0 0.0
    %2151 = vmatprep.subr.mxu0 0.0
    %2152 = vmatpush1.msra.mxu0 0.0
    %2153 = vmatprep.subr.mxu0 0.0
    %2154 = vmatpush1.msra.mxu0 0.0
    %2155 = vmatprep.subr.mxu0 0.0
    %2156 = vmatpush1.msra.mxu0 0.0
    %2157 = vmatprep.subr.mxu0 0.0
    %2158 = vmatpush1.msra.mxu0 0.0
    %2159 = vmatprep.subr.mxu0 0.0
    %2160 = vmatpush1.msra.mxu0 0.0
    %2161 = vmatprep.subr.mxu0 0.0
    %2162 = vmatpush1.msra.mxu0 0.0
    %2163 = vmatprep.subr.mxu0 0.0
    %2164 = vmatpush1.msra.mxu0 0.0
    %2165 = vmatprep.subr.mxu0 0.0
    %2166 = vmatpush1.msra.mxu0 0.0
    %2167 = vmatprep.subr.mxu0 0.0
    %2168 = vmatpush1.msra.mxu0 0.0
    %2169 = vmatprep.subr.mxu0 0.0
    %2170 = vmatpush1.msra.mxu0 0.0
    %2171 = vmatprep.subr.mxu0 0.0
    %2172 = vmatpush1.msra.mxu0 0.0
    %2173 = vmatprep.subr.mxu0 0.0
    %2174 = vmatpush1.msra.mxu0 0.0
    %2175 = vmatprep.subr.mxu0 0.0
    %2176 = vmatpush1.msra.mxu0 0.0
    %2177 = vmatprep.subr.mxu0 0.0
    %2178 = vmatpush1.msra.mxu0 0.0
    %2179 = vmatprep.subr.mxu0 0.0
    %2180 = vmatpush1.msra.mxu0 0.0
    %2181 = vmatprep.subr.mxu0 0.0
    %2182 = vmatpush1.msra.mxu0 0.0
    %2183 = vmatprep.subr.mxu0 0.0
    %2184 = vmatpush1.msra.mxu0 0.0
    %2185 = vmatprep.subr.mxu0 0.0
    %2186 = vmatpush1.msra.mxu0 0.0
    %2187 = vmatprep.subr.mxu0 0.0
    %2188 = vmatpush1.msra.mxu0 0.0
    %2189 = vmatprep.mubr.f32.mxu0 0.0
    %2190 = vmatmul.mubr.f32.gmra.mrb[0].mxu0 %v2123
    %v2191 = vpop.f32.mrb[0].mxu0
    %v2192 = vadd.f32 0.0, %v2191
    %v2193 = vpop.f32.mrb[0].mxu0
    %2194 = vdwg.mxu0
    %v2196 = vsel %vm118, %v2111, 0
    %2198 = vmatprep.subr.mxu0 0.0
    %2199 = vmatpush1.msra.mxu0 %v2113
    %2200 = vmatprep.subr.mxu0 0.0
    %2201 = vmatpush1.msra.mxu0 %v2114
    %2202 = vmatprep.subr.mxu0 0.0
    %2203 = vmatpush1.msra.mxu0 %v2115
    %2204 = vmatprep.subr.mxu0 0.0
    %2205 = vmatpush1.msra.mxu0 %v2116
    %2206 = vmatprep.subr.mxu0 0.0
    %2207 = vmatpush1.msra.mxu0 0.0
    %2208 = vmatprep.subr.mxu0 0.0
    %2209 = vmatpush1.msra.mxu0 0.0
    %2210 = vmatprep.subr.mxu0 0.0
    %2211 = vmatpush1.msra.mxu0 0.0
    %2212 = vmatprep.subr.mxu0 0.0
    %2213 = vmatpush1.msra.mxu0 0.0
    %2214 = vmatprep.subr.mxu0 0.0
    %2215 = vmatpush1.msra.mxu0 0.0
    %2216 = vmatprep.subr.mxu0 0.0
    %2217 = vmatpush1.msra.mxu0 0.0
    %2218 = vmatprep.subr.mxu0 0.0
    %2219 = vmatpush1.msra.mxu0 0.0
    %2220 = vmatprep.subr.mxu0 0.0
    %2221 = vmatpush1.msra.mxu0 0.0
    %2222 = vmatprep.subr.mxu0 0.0
    %2223 = vmatpush1.msra.mxu0 0.0
    %2224 = vmatprep.subr.mxu0 0.0
    %2225 = vmatpush1.msra.mxu0 0.0
    %2226 = vmatprep.subr.mxu0 0.0
    %2227 = vmatpush1.msra.mxu0 0.0
    %2228 = vmatprep.subr.mxu0 0.0
    %2229 = vmatpush1.msra.mxu0 0.0
    %2230 = vmatprep.subr.mxu0 0.0
    %2231 = vmatpush1.msra.mxu0 0.0
    %2232 = vmatprep.subr.mxu0 0.0
    %2233 = vmatpush1.msra.mxu0 0.0
    %2234 = vmatprep.subr.mxu0 0.0
    %2235 = vmatpush1.msra.mxu0 0.0
    %2236 = vmatprep.subr.mxu0 0.0
    %2237 = vmatpush1.msra.mxu0 0.0
    %2238 = vmatprep.subr.mxu0 0.0
    %2239 = vmatpush1.msra.mxu0 0.0
    %2240 = vmatprep.subr.mxu0 0.0
    %2241 = vmatpush1.msra.mxu0 0.0
    %2242 = vmatprep.subr.mxu0 0.0
    %2243 = vmatpush1.msra.mxu0 0.0
    %2244 = vmatprep.subr.mxu0 0.0
    %2245 = vmatpush1.msra.mxu0 0.0
    %2246 = vmatprep.subr.mxu0 0.0
    %2247 = vmatpush1.msra.mxu0 0.0
    %2248 = vmatprep.subr.mxu0 0.0
    %2249 = vmatpush1.msra.mxu0 0.0
    %2250 = vmatprep.subr.mxu0 0.0
    %2251 = vmatpush1.msra.mxu0 0.0
    %2252 = vmatprep.subr.mxu0 0.0
    %2253 = vmatpush1.msra.mxu0 0.0
    %2254 = vmatprep.subr.mxu0 0.0
    %2255 = vmatpush1.msra.mxu0 0.0
    %2256 = vmatprep.subr.mxu0 0.0
    %2257 = vmatpush1.msra.mxu0 0.0
    %2258 = vmatprep.subr.mxu0 0.0
    %2259 = vmatpush1.msra.mxu0 0.0
    %2260 = vmatprep.subr.mxu0 0.0
    %2261 = vmatpush1.msra.mxu0 0.0
    %2262 = vmatprep.mubr.f32.mxu0 0.0
    %2263 = vmatmul.mubr.f32.gmra.mrb[0].mxu0 %v2196
    %v2264 = vpop.f32.mrb[0].mxu0
    %v2265 = vadd.f32 %v2192, %v2264
    %v2266 = vpop.f32.mrb[0].mxu0
    %2267 = vdwg.mxu0
    %v2268 = vld [vmem:[%s777] sm:$0x1]
    %v2270 = vlaneseq
    %v2271 = vshrl.u32 %v2270, 7
    %v2272 = vsub.s32 0, %v2271
    %v2273 = vrot.slane %v2268, %v2272
    %v2275 = vadd.f32 %v2265, %v2273
    %v2276 = vtanh.pop %v2275
    %2277 = vst.msk [vmem:[%s624] sm:$0x3] %vm99, %v2276
    %v2278 = vld [vmem:[%s788] sm:$0xff]
    %v2279 = vld [vmem:[%s788 + $0x8] sm:$0xff]
    %v2280 = vld [vmem:[%s788 + $0x10] sm:$0xff]
    %v2281 = vld [vmem:[%s788 + $0x18] sm:$0xff]
    %v2282 = vld [vmem:[%s793] sm:$0x3]
    %v2283 = vld [vmem:[%s795] sm:$0xff]
    %v2284 = vld [vmem:[%s795 + $0x8] sm:$0xff]
    %v2285 = vld [vmem:[%s795 + $0x10] sm:$0xff]
    %v2286 = vld [vmem:[%s795 + $0x18] sm:$0xff]
    %v2288 = vsel %vm118, %v2282, 0
    %2290 = vmatprep.subr.mxu0 0.0
    %2291 = vmatpush1.msra.mxu0 %v2283
    %2292 = vmatprep.subr.mxu0 0.0
    %2293 = vmatpush1.msra.mxu0 %v2284
    %2294 = vmatprep.subr.mxu0 0.0
    %2295 = vmatpush1.msra.mxu0 %v2285
    %2296 = vmatprep.subr.mxu0 0.0
    %2297 = vmatpush1.msra.mxu0 %v2286
    %2298 = vmatprep.subr.mxu0 0.0
    %2299 = vmatpush1.msra.mxu0 0.0
    %2300 = vmatprep.subr.mxu0 0.0
    %2301 = vmatpush1.msra.mxu0 0.0
    %2302 = vmatprep.subr.mxu0 0.0
    %2303 = vmatpush1.msra.mxu0 0.0
    %2304 = vmatprep.subr.mxu0 0.0
    %2305 = vmatpush1.msra.mxu0 0.0
    %2306 = vmatprep.subr.mxu0 0.0
    %2307 = vmatpush1.msra.mxu0 0.0
    %2308 = vmatprep.subr.mxu0 0.0
    %2309 = vmatpush1.msra.mxu0 0.0
    %2310 = vmatprep.subr.mxu0 0.0
    %2311 = vmatpush1.msra.mxu0 0.0
    %2312 = vmatprep.subr.mxu0 0.0
    %2313 = vmatpush1.msra.mxu0 0.0
    %2314 = vmatprep.subr.mxu0 0.0
    %2315 = vmatpush1.msra.mxu0 0.0
    %2316 = vmatprep.subr.mxu0 0.0
    %2317 = vmatpush1.msra.mxu0 0.0
    %2318 = vmatprep.subr.mxu0 0.0
    %2319 = vmatpush1.msra.mxu0 0.0
    %2320 = vmatprep.subr.mxu0 0.0
    %2321 = vmatpush1.msra.mxu0 0.0
    %2322 = vmatprep.subr.mxu0 0.0
    %2323 = vmatpush1.msra.mxu0 0.0
    %2324 = vmatprep.subr.mxu0 0.0
    %2325 = vmatpush1.msra.mxu0 0.0
    %2326 = vmatprep.subr.mxu0 0.0
    %2327 = vmatpush1.msra.mxu0 0.0
    %2328 = vmatprep.subr.mxu0 0.0
    %2329 = vmatpush1.msra.mxu0 0.0
    %2330 = vmatprep.subr.mxu0 0.0
    %2331 = vmatpush1.msra.mxu0 0.0
    %2332 = vmatprep.subr.mxu0 0.0
    %2333 = vmatpush1.msra.mxu0 0.0
    %2334 = vmatprep.subr.mxu0 0.0
    %2335 = vmatpush1.msra.mxu0 0.0
    %2336 = vmatprep.subr.mxu0 0.0
    %2337 = vmatpush1.msra.mxu0 0.0
    %2338 = vmatprep.subr.mxu0 0.0
    %2339 = vmatpush1.msra.mxu0 0.0
    %2340 = vmatprep.subr.mxu0 0.0
    %2341 = vmatpush1.msra.mxu0 0.0
    %2342 = vmatprep.subr.mxu0 0.0
    %2343 = vmatpush1.msra.mxu0 0.0
    %2344 = vmatprep.subr.mxu0 0.0
    %2345 = vmatpush1.msra.mxu0 0.0
    %2346 = vmatprep.subr.mxu0 0.0
    %2347 = vmatpush1.msra.mxu0 0.0
    %2348 = vmatprep.subr.mxu0 0.0
    %2349 = vmatpush1.msra.mxu0 0.0
    %2350 = vmatprep.subr.mxu0 0.0
    %2351 = vmatpush1.msra.mxu0 0.0
    %2352 = vmatprep.subr.mxu0 0.0
    %2353 = vmatpush1.msra.mxu0 0.0
    %2354 = vmatprep.mubr.f32.mxu0 0.0
    %2355 = vmatmul.mubr.f32.gmra.mrb[0].mxu0 %v2288
    %v2356 = vpop.f32.mrb[0].mxu0
    %v2357 = vadd.f32 0.0, %v2356
    %v2358 = vpop.f32.mrb[0].mxu0
    %2359 = vdwg.mxu0
    %v2361 = vsel %vm118, %v2276, 0
    %2363 = vmatprep.subr.mxu0 0.0
    %2364 = vmatpush1.msra.mxu0 %v2278
    %2365 = vmatprep.subr.mxu0 0.0
    %2366 = vmatpush1.msra.mxu0 %v2279
    %2367 = vmatprep.subr.mxu0 0.0
    %2368 = vmatpush1.msra.mxu0 %v2280
    %2369 = vmatprep.subr.mxu0 0.0
    %2370 = vmatpush1.msra.mxu0 %v2281
    %2371 = vmatprep.subr.mxu0 0.0
    %2372 = vmatpush1.msra.mxu0 0.0
    %2373 = vmatprep.subr.mxu0 0.0
    %2374 = vmatpush1.msra.mxu0 0.0
    %2375 = vmatprep.subr.mxu0 0.0
    %2376 = vmatpush1.msra.mxu0 0.0
    %2377 = vmatprep.subr.mxu0 0.0
    %2378 = vmatpush1.msra.mxu0 0.0
    %2379 = vmatprep.subr.mxu0 0.0
    %2380 = vmatpush1.msra.mxu0 0.0
    %2381 = vmatprep.subr.mxu0 0.0
    %2382 = vmatpush1.msra.mxu0 0.0
    %2383 = vmatprep.subr.mxu0 0.0
    %2384 = vmatpush1.msra.mxu0 0.0
    %2385 = vmatprep.subr.mxu0 0.0
    %2386 = vmatpush1.msra.mxu0 0.0
    %2387 = vmatprep.subr.mxu0 0.0
    %2388 = vmatpush1.msra.mxu0 0.0
    %2389 = vmatprep.subr.mxu0 0.0
    %2390 = vmatpush1.msra.mxu0 0.0
    %2391 = vmatprep.subr.mxu0 0.0
    %2392 = vmatpush1.msra.mxu0 0.0
    %2393 = vmatprep.subr.mxu0 0.0
    %2394 = vmatpush1.msra.mxu0 0.0
    %2395 = vmatprep.subr.mxu0 0.0
    %2396 = vmatpush1.msra.mxu0 0.0
    %2397 = vmatprep.subr.mxu0 0.0
    %2398 = vmatpush1.msra.mxu0 0.0
    %2399 = vmatprep.subr.mxu0 0.0
    %2400 = vmatpush1.msra.mxu0 0.0
    %2401 = vmatprep.subr.mxu0 0.0
    %2402 = vmatpush1.msra.mxu0 0.0
    %2403 = vmatprep.subr.mxu0 0.0
    %2404 = vmatpush1.msra.mxu0 0.0
    %2405 = vmatprep.subr.mxu0 0.0
    %2406 = vmatpush1.msra.mxu0 0.0
    %2407 = vmatprep.subr.mxu0 0.0
    %2408 = vmatpush1.msra.mxu0 0.0
    %2409 = vmatprep.subr.mxu0 0.0
    %2410 = vmatpush1.msra.mxu0 0.0
    %2411 = vmatprep.subr.mxu0 0.0
    %2412 = vmatpush1.msra.mxu0 0.0
    %2413 = vmatprep.subr.mxu0 0.0
    %2414 = vmatpush1.msra.mxu0 0.0
    %2415 = vmatprep.subr.mxu0 0.0
    %2416 = vmatpush1.msra.mxu0 0.0
    %2417 = vmatprep.subr.mxu0 0.0
    %2418 = vmatpush1.msra.mxu0 0.0
    %2419 = vmatprep.subr.mxu0 0.0
    %2420 = vmatpush1.msra.mxu0 0.0
    %2421 = vmatprep.subr.mxu0 0.0
    %2422 = vmatpush1.msra.mxu0 0.0
    %2423 = vmatprep.subr.mxu0 0.0
    %2424 = vmatpush1.msra.mxu0 0.0
    %2425 = vmatprep.subr.mxu0 0.0
    %2426 = vmatpush1.msra.mxu0 0.0
    %2427 = vmatprep.mubr.f32.mxu0 0.0
    %2428 = vmatmul.mubr.f32.gmra.mrb[0].mxu0 %v2361
    %v2429 = vpop.f32.mrb[0].mxu0
    %v2430 = vadd.f32 %v2357, %v2429
    %v2431 = vpop.f32.mrb[0].mxu0
    %2432 = vdwg.mxu0
    %v2433 = vld [vmem:[%s946] sm:$0x1]
    %v2435 = vlaneseq
    %v2436 = vshrl.u32 %v2435, 7
    %v2437 = vsub.s32 0, %v2436
    %v2438 = vrot.slane %v2433, %v2437
    %v2440 = vadd.f32 %v2430, %v2438
    %v2441 = vtanh.pop %v2440
    %2442 = vst.msk [vmem:[%s793] sm:$0x3] %vm99, %v2441
    %2443 = vst.msk [vmem:[#allocation3 + $0x4] sm:$0x3] %vm99, %v2441
    %v2444 = vld [vmem:[#allocation2 + $0x6] sm:$0x3]
    %v2445 = vld [vmem:[#allocation4] sm:$0x3]
    %v2446 = vld [vmem:[#allocation8] sm:$0xff]
    %v2447 = vld [vmem:[#allocation8 + $0x8] sm:$0xff]
    %v2448 = vld [vmem:[#allocation8 + $0x10] sm:$0xff]
    %v2449 = vld [vmem:[#allocation8 + $0x18] sm:$0xff]
    %v2451 = vsel %vm118, %v2445, 0
    %2453 = vmatprep.subr.mxu0 0.0
    %2454 = vmatpush1.msra.mxu0 %v2446
    %2455 = vmatprep.subr.mxu0 0.0
    %2456 = vmatpush1.msra.mxu0 %v2447
    %2457 = vmatprep.subr.mxu0 0.0
    %2458 = vmatpush1.msra.mxu0 %v2448
    %2459 = vmatprep.subr.mxu0 0.0
    %2460 = vmatpush1.msra.mxu0 %v2449
    %2461 = vmatprep.subr.mxu0 0.0
    %2462 = vmatpush1.msra.mxu0 0.0
    %2463 = vmatprep.subr.mxu0 0.0
    %2464 = vmatpush1.msra.mxu0 0.0
    %2465 = vmatprep.subr.mxu0 0.0
    %2466 = vmatpush1.msra.mxu0 0.0
    %2467 = vmatprep.subr.mxu0 0.0
    %2468 = vmatpush1.msra.mxu0 0.0
    %2469 = vmatprep.subr.mxu0 0.0
    %2470 = vmatpush1.msra.mxu0 0.0
    %2471 = vmatprep.subr.mxu0 0.0
    %2472 = vmatpush1.msra.mxu0 0.0
    %2473 = vmatprep.subr.mxu0 0.0
    %2474 = vmatpush1.msra.mxu0 0.0
    %2475 = vmatprep.subr.mxu0 0.0
    %2476 = vmatpush1.msra.mxu0 0.0
    %2477 = vmatprep.subr.mxu0 0.0
    %2478 = vmatpush1.msra.mxu0 0.0
    %2479 = vmatprep.subr.mxu0 0.0
    %2480 = vmatpush1.msra.mxu0 0.0
    %2481 = vmatprep.subr.mxu0 0.0
    %2482 = vmatpush1.msra.mxu0 0.0
    %2483 = vmatprep.subr.mxu0 0.0
    %2484 = vmatpush1.msra.mxu0 0.0
    %2485 = vmatprep.subr.mxu0 0.0
    %2486 = vmatpush1.msra.mxu0 0.0
    %2487 = vmatprep.subr.mxu0 0.0
    %2488 = vmatpush1.msra.mxu0 0.0
    %2489 = vmatprep.subr.mxu0 0.0
    %2490 = vmatpush1.msra.mxu0 0.0
    %2491 = vmatprep.subr.mxu0 0.0
    %2492 = vmatpush1.msra.mxu0 0.0
    %2493 = vmatprep.subr.mxu0 0.0
    %2494 = vmatpush1.msra.mxu0 0.0
    %2495 = vmatprep.subr.mxu0 0.0
    %2496 = vmatpush1.msra.mxu0 0.0
    %2497 = vmatprep.subr.mxu0 0.0
    %2498 = vmatpush1.msra.mxu0 0.0
    %2499 = vmatprep.subr.mxu0 0.0
    %2500 = vmatpush1.msra.mxu0 0.0
    %2501 = vmatprep.subr.mxu0 0.0
    %2502 = vmatpush1.msra.mxu0 0.0
    %2503 = vmatprep.subr.mxu0 0.0
    %2504 = vmatpush1.msra.mxu0 0.0
    %2505 = vmatprep.subr.mxu0 0.0
    %2506 = vmatpush1.msra.mxu0 0.0
    %2507 = vmatprep.subr.mxu0 0.0
    %2508 = vmatpush1.msra.mxu0 0.0
    %2509 = vmatprep.subr.mxu0 0.0
    %2510 = vmatpush1.msra.mxu0 0.0
    %2511 = vmatprep.subr.mxu0 0.0
    %2512 = vmatpush1.msra.mxu0 0.0
    %2513 = vmatprep.subr.mxu0 0.0
    %2514 = vmatpush1.msra.mxu0 0.0
    %2515 = vmatprep.subr.mxu0 0.0
    %2516 = vmatpush1.msra.mxu0 0.0
    %2517 = vmatprep.mubr.f32.mxu0 0.0
    %2518 = vmatmul.mubr.f32.gmra.mrb[0].mxu0 %v2451
    %v2519 = vpop.f32.mrb[0].mxu0
    %v2520 = vadd.f32 0.0, %v2519
    %v2521 = vpop.f32.mrb[0].mxu0
    %2522 = vdwg.mxu0
    %v2523 = vadd.f32 %v2444, %v2520
    %v2524 = vtanh.pop %v2523
    %2525 = vst.msk [vmem:[#allocation4] sm:$0x3] %vm99, %v2524
    %v2526 = vld [vmem:[#allocation10] sm:$0xff]
    %v2527 = vld [vmem:[#allocation10 + $0x8] sm:$0xff]
    %v2528 = vld [vmem:[#allocation10 + $0x10] sm:$0xff]
    %v2529 = vld [vmem:[#allocation10 + $0x18] sm:$0xff]
    %v2530 = vld [vmem:[%s288] sm:$0x3]
    %v2531 = vld [vmem:[#allocation11] sm:$0xff]
    %v2532 = vld [vmem:[#allocation11 + $0x8] sm:$0xff]
    %v2533 = vld [vmem:[#allocation11 + $0x10] sm:$0xff]
    %v2534 = vld [vmem:[#allocation11 + $0x18] sm:$0xff]
    %v2536 = vsel %vm118, %v2530, 0
    %2538 = vmatprep.subr.mxu0 0.0
    %2539 = vmatpush1.msra.mxu0 %v2531
    %2540 = vmatprep.subr.mxu0 0.0
    %2541 = vmatpush1.msra.mxu0 %v2532
    %2542 = vmatprep.subr.mxu0 0.0
    %2543 = vmatpush1.msra.mxu0 %v2533
    %2544 = vmatprep.subr.mxu0 0.0
    %2545 = vmatpush1.msra.mxu0 %v2534
    %2546 = vmatprep.subr.mxu0 0.0
    %2547 = vmatpush1.msra.mxu0 0.0
    %2548 = vmatprep.subr.mxu0 0.0
    %2549 = vmatpush1.msra.mxu0 0.0
    %2550 = vmatprep.subr.mxu0 0.0
    %2551 = vmatpush1.msra.mxu0 0.0
    %2552 = vmatprep.subr.mxu0 0.0
    %2553 = vmatpush1.msra.mxu0 0.0
    %2554 = vmatprep.subr.mxu0 0.0
    %2555 = vmatpush1.msra.mxu0 0.0
    %2556 = vmatprep.subr.mxu0 0.0
    %2557 = vmatpush1.msra.mxu0 0.0
    %2558 = vmatprep.subr.mxu0 0.0
    %2559 = vmatpush1.msra.mxu0 0.0
    %2560 = vmatprep.subr.mxu0 0.0
    %2561 = vmatpush1.msra.mxu0 0.0
    %2562 = vmatprep.subr.mxu0 0.0
    %2563 = vmatpush1.msra.mxu0 0.0
    %2564 = vmatprep.subr.mxu0 0.0
    %2565 = vmatpush1.msra.mxu0 0.0
    %2566 = vmatprep.subr.mxu0 0.0
    %2567 = vmatpush1.msra.mxu0 0.0
    %2568 = vmatprep.subr.mxu0 0.0
    %2569 = vmatpush1.msra.mxu0 0.0
    %2570 = vmatprep.subr.mxu0 0.0
    %2571 = vmatpush1.msra.mxu0 0.0
    %2572 = vmatprep.subr.mxu0 0.0
    %2573 = vmatpush1.msra.mxu0 0.0
    %2574 = vmatprep.subr.mxu0 0.0
    %2575 = vmatpush1.msra.mxu0 0.0
    %2576 = vmatprep.subr.mxu0 0.0
    %2577 = vmatpush1.msra.mxu0 0.0
    %2578 = vmatprep.subr.mxu0 0.0
    %2579 = vmatpush1.msra.mxu0 0.0
    %2580 = vmatprep.subr.mxu0 0.0
    %2581 = vmatpush1.msra.mxu0 0.0
    %2582 = vmatprep.subr.mxu0 0.0
    %2583 = vmatpush1.msra.mxu0 0.0
    %2584 = vmatprep.subr.mxu0 0.0
    %2585 = vmatpush1.msra.mxu0 0.0
    %2586 = vmatprep.subr.mxu0 0.0
    %2587 = vmatpush1.msra.mxu0 0.0
    %2588 = vmatprep.subr.mxu0 0.0
    %2589 = vmatpush1.msra.mxu0 0.0
    %2590 = vmatprep.subr.mxu0 0.0
    %2591 = vmatpush1.msra.mxu0 0.0
    %2592 = vmatprep.subr.mxu0 0.0
    %2593 = vmatpush1.msra.mxu0 0.0
    %2594 = vmatprep.subr.mxu0 0.0
    %2595 = vmatpush1.msra.mxu0 0.0
    %2596 = vmatprep.subr.mxu0 0.0
    %2597 = vmatpush1.msra.mxu0 0.0
    %2598 = vmatprep.subr.mxu0 0.0
    %2599 = vmatpush1.msra.mxu0 0.0
    %2600 = vmatprep.subr.mxu0 0.0
    %2601 = vmatpush1.msra.mxu0 0.0
    %2602 = vmatprep.mubr.f32.mxu0 0.0
    %2603 = vmatmul.mubr.f32.gmra.mrb[0].mxu0 %v2536
    %v2604 = vpop.f32.mrb[0].mxu0
    %v2605 = vadd.f32 0.0, %v2604
    %v2606 = vpop.f32.mrb[0].mxu0
    %2607 = vdwg.mxu0
    %v2609 = vsel %vm118, %v2524, 0
    %2611 = vmatprep.subr.mxu0 0.0
    %2612 = vmatpush1.msra.mxu0 %v2526
    %2613 = vmatprep.subr.mxu0 0.0
    %2614 = vmatpush1.msra.mxu0 %v2527
    %2615 = vmatprep.subr.mxu0 0.0
    %2616 = vmatpush1.msra.mxu0 %v2528
    %2617 = vmatprep.subr.mxu0 0.0
    %2618 = vmatpush1.msra.mxu0 %v2529
    %2619 = vmatprep.subr.mxu0 0.0
    %2620 = vmatpush1.msra.mxu0 0.0
    %2621 = vmatprep.subr.mxu0 0.0
    %2622 = vmatpush1.msra.mxu0 0.0
    %2623 = vmatprep.subr.mxu0 0.0
    %2624 = vmatpush1.msra.mxu0 0.0
    %2625 = vmatprep.subr.mxu0 0.0
    %2626 = vmatpush1.msra.mxu0 0.0
    %2627 = vmatprep.subr.mxu0 0.0
    %2628 = vmatpush1.msra.mxu0 0.0
    %2629 = vmatprep.subr.mxu0 0.0
    %2630 = vmatpush1.msra.mxu0 0.0
    %2631 = vmatprep.subr.mxu0 0.0
    %2632 = vmatpush1.msra.mxu0 0.0
    %2633 = vmatprep.subr.mxu0 0.0
    %2634 = vmatpush1.msra.mxu0 0.0
    %2635 = vmatprep.subr.mxu0 0.0
    %2636 = vmatpush1.msra.mxu0 0.0
    %2637 = vmatprep.subr.mxu0 0.0
    %2638 = vmatpush1.msra.mxu0 0.0
    %2639 = vmatprep.subr.mxu0 0.0
    %2640 = vmatpush1.msra.mxu0 0.0
    %2641 = vmatprep.subr.mxu0 0.0
    %2642 = vmatpush1.msra.mxu0 0.0
    %2643 = vmatprep.subr.mxu0 0.0
    %2644 = vmatpush1.msra.mxu0 0.0
    %2645 = vmatprep.subr.mxu0 0.0
    %2646 = vmatpush1.msra.mxu0 0.0
    %2647 = vmatprep.subr.mxu0 0.0
    %2648 = vmatpush1.msra.mxu0 0.0
    %2649 = vmatprep.subr.mxu0 0.0
    %2650 = vmatpush1.msra.mxu0 0.0
    %2651 = vmatprep.subr.mxu0 0.0
    %2652 = vmatpush1.msra.mxu0 0.0
    %2653 = vmatprep.subr.mxu0 0.0
    %2654 = vmatpush1.msra.mxu0 0.0
    %2655 = vmatprep.subr.mxu0 0.0
    %2656 = vmatpush1.msra.mxu0 0.0
    %2657 = vmatprep.subr.mxu0 0.0
    %2658 = vmatpush1.msra.mxu0 0.0
    %2659 = vmatprep.subr.mxu0 0.0
    %2660 = vmatpush1.msra.mxu0 0.0
    %2661 = vmatprep.subr.mxu0 0.0
    %2662 = vmatpush1.msra.mxu0 0.0
    %2663 = vmatprep.subr.mxu0 0.0
    %2664 = vmatpush1.msra.mxu0 0.0
    %2665 = vmatprep.subr.mxu0 0.0
    %2666 = vmatpush1.msra.mxu0 0.0
    %2667 = vmatprep.subr.mxu0 0.0
    %2668 = vmatpush1.msra.mxu0 0.0
    %2669 = vmatprep.subr.mxu0 0.0
    %2670 = vmatpush1.msra.mxu0 0.0
    %2671 = vmatprep.subr.mxu0 0.0
    %2672 = vmatpush1.msra.mxu0 0.0
    %2673 = vmatprep.subr.mxu0 0.0
    %2674 = vmatpush1.msra.mxu0 0.0
    %2675 = vmatprep.mubr.f32.mxu0 0.0
    %2676 = vmatmul.mubr.f32.gmra.mrb[0].mxu0 %v2609
    %v2677 = vpop.f32.mrb[0].mxu0
    %v2678 = vadd.f32 %v2605, %v2677
    %v2679 = vpop.f32.mrb[0].mxu0
    %2680 = vdwg.mxu0
    %v2681 = vld [vmem:[%s7] sm:$0x1]
    %v2683 = vlaneseq
    %v2684 = vshrl.u32 %v2683, 7
    %v2685 = vsub.s32 0, %v2684
    %v2686 = vrot.slane %v2681, %v2685
    %v2688 = vadd.f32 %v2678, %v2686
    %v2689 = vtanh.pop %v2688
    %2690 = vst.msk [vmem:[%s288] sm:$0x3] %vm99, %v2689
    %v2691 = vld [vmem:[%s450] sm:$0xff]
    %v2692 = vld [vmem:[%s450 + $0x8] sm:$0xff]
    %v2693 = vld [vmem:[%s450 + $0x10] sm:$0xff]
    %v2694 = vld [vmem:[%s450 + $0x18] sm:$0xff]
    %v2695 = vld [vmem:[%s455] sm:$0x3]
    %v2696 = vld [vmem:[%s457] sm:$0xff]
    %v2697 = vld [vmem:[%s457 + $0x8] sm:$0xff]
    %v2698 = vld [vmem:[%s457 + $0x10] sm:$0xff]
    %v2699 = vld [vmem:[%s457 + $0x18] sm:$0xff]
    %v2701 = vsel %vm118, %v2695, 0
    %2703 = vmatprep.subr.mxu0 0.0
    %2704 = vmatpush1.msra.mxu0 %v2696
    %2705 = vmatprep.subr.mxu0 0.0
    %2706 = vmatpush1.msra.mxu0 %v2697
    %2707 = vmatprep.subr.mxu0 0.0
    %2708 = vmatpush1.msra.mxu0 %v2698
    %2709 = vmatprep.subr.mxu0 0.0
    %2710 = vmatpush1.msra.mxu0 %v2699
    %2711 = vmatprep.subr.mxu0 0.0
    %2712 = vmatpush1.msra.mxu0 0.0
    %2713 = vmatprep.subr.mxu0 0.0
    %2714 = vmatpush1.msra.mxu0 0.0
    %2715 = vmatprep.subr.mxu0 0.0
    %2716 = vmatpush1.msra.mxu0 0.0
    %2717 = vmatprep.subr.mxu0 0.0
    %2718 = vmatpush1.msra.mxu0 0.0
    %2719 = vmatprep.subr.mxu0 0.0
    %2720 = vmatpush1.msra.mxu0 0.0
    %2721 = vmatprep.subr.mxu0 0.0
    %2722 = vmatpush1.msra.mxu0 0.0
    %2723 = vmatprep.subr.mxu0 0.0
    %2724 = vmatpush1.msra.mxu0 0.0
    %2725 = vmatprep.subr.mxu0 0.0
    %2726 = vmatpush1.msra.mxu0 0.0
    %2727 = vmatprep.subr.mxu0 0.0
    %2728 = vmatpush1.msra.mxu0 0.0
    %2729 = vmatprep.subr.mxu0 0.0
    %2730 = vmatpush1.msra.mxu0 0.0
    %2731 = vmatprep.subr.mxu0 0.0
    %2732 = vmatpush1.msra.mxu0 0.0
    %2733 = vmatprep.subr.mxu0 0.0
    %2734 = vmatpush1.msra.mxu0 0.0
    %2735 = vmatprep.subr.mxu0 0.0
    %2736 = vmatpush1.msra.mxu0 0.0
    %2737 = vmatprep.subr.mxu0 0.0
    %2738 = vmatpush1.msra.mxu0 0.0
    %2739 = vmatprep.subr.mxu0 0.0
    %2740 = vmatpush1.msra.mxu0 0.0
    %2741 = vmatprep.subr.mxu0 0.0
    %2742 = vmatpush1.msra.mxu0 0.0
    %2743 = vmatprep.subr.mxu0 0.0
    %2744 = vmatpush1.msra.mxu0 0.0
    %2745 = vmatprep.subr.mxu0 0.0
    %2746 = vmatpush1.msra.mxu0 0.0
    %2747 = vmatprep.subr.mxu0 0.0
    %2748 = vmatpush1.msra.mxu0 0.0
    %2749 = vmatprep.subr.mxu0 0.0
    %2750 = vmatpush1.msra.mxu0 0.0
    %2751 = vmatprep.subr.mxu0 0.0
    %2752 = vmatpush1.msra.mxu0 0.0
    %2753 = vmatprep.subr.mxu0 0.0
    %2754 = vmatpush1.msra.mxu0 0.0
    %2755 = vmatprep.subr.mxu0 0.0
    %2756 = vmatpush1.msra.mxu0 0.0
    %2757 = vmatprep.subr.mxu0 0.0
    %2758 = vmatpush1.msra.mxu0 0.0
    %2759 = vmatprep.subr.mxu0 0.0
    %2760 = vmatpush1.msra.mxu0 0.0
    %2761 = vmatprep.subr.mxu0 0.0
    %2762 = vmatpush1.msra.mxu0 0.0
    %2763 = vmatprep.subr.mxu0 0.0
    %2764 = vmatpush1.msra.mxu0 0.0
    %2765 = vmatprep.subr.mxu0 0.0
    %2766 = vmatpush1.msra.mxu0 0.0
    %2767 = vmatprep.mubr.f32.mxu0 0.0
    %2768 = vmatmul.mubr.f32.gmra.mrb[0].mxu0 %v2701
    %v2769 = vpop.f32.mrb[0].mxu0
    %v2770 = vadd.f32 0.0, %v2769
    %v2771 = vpop.f32.mrb[0].mxu0
    %2772 = vdwg.mxu0
    %v2774 = vsel %vm118, %v2689, 0
    %2776 = vmatprep.subr.mxu0 0.0
    %2777 = vmatpush1.msra.mxu0 %v2691
    %2778 = vmatprep.subr.mxu0 0.0
    %2779 = vmatpush1.msra.mxu0 %v2692
    %2780 = vmatprep.subr.mxu0 0.0
    %2781 = vmatpush1.msra.mxu0 %v2693
    %2782 = vmatprep.subr.mxu0 0.0
    %2783 = vmatpush1.msra.mxu0 %v2694
    %2784 = vmatprep.subr.mxu0 0.0
    %2785 = vmatpush1.msra.mxu0 0.0
    %2786 = vmatprep.subr.mxu0 0.0
    %2787 = vmatpush1.msra.mxu0 0.0
    %2788 = vmatprep.subr.mxu0 0.0
    %2789 = vmatpush1.msra.mxu0 0.0
    %2790 = vmatprep.subr.mxu0 0.0
    %2791 = vmatpush1.msra.mxu0 0.0
    %2792 = vmatprep.subr.mxu0 0.0
    %2793 = vmatpush1.msra.mxu0 0.0
    %2794 = vmatprep.subr.mxu0 0.0
    %2795 = vmatpush1.msra.mxu0 0.0
    %2796 = vmatprep.subr.mxu0 0.0
    %2797 = vmatpush1.msra.mxu0 0.0
    %2798 = vmatprep.subr.mxu0 0.0
    %2799 = vmatpush1.msra.mxu0 0.0
    %2800 = vmatprep.subr.mxu0 0.0
    %2801 = vmatpush1.msra.mxu0 0.0
    %2802 = vmatprep.subr.mxu0 0.0
    %2803 = vmatpush1.msra.mxu0 0.0
    %2804 = vmatprep.subr.mxu0 0.0
    %2805 = vmatpush1.msra.mxu0 0.0
    %2806 = vmatprep.subr.mxu0 0.0
    %2807 = vmatpush1.msra.mxu0 0.0
    %2808 = vmatprep.subr.mxu0 0.0
    %2809 = vmatpush1.msra.mxu0 0.0
    %2810 = vmatprep.subr.mxu0 0.0
    %2811 = vmatpush1.msra.mxu0 0.0
    %2812 = vmatprep.subr.mxu0 0.0
    %2813 = vmatpush1.msra.mxu0 0.0
    %2814 = vmatprep.subr.mxu0 0.0
    %2815 = vmatpush1.msra.mxu0 0.0
    %2816 = vmatprep.subr.mxu0 0.0
    %2817 = vmatpush1.msra.mxu0 0.0
    %2818 = vmatprep.subr.mxu0 0.0
    %2819 = vmatpush1.msra.mxu0 0.0
    %2820 = vmatprep.subr.mxu0 0.0
    %2821 = vmatpush1.msra.mxu0 0.0
    %2822 = vmatprep.subr.mxu0 0.0
    %2823 = vmatpush1.msra.mxu0 0.0
    %2824 = vmatprep.subr.mxu0 0.0
    %2825 = vmatpush1.msra.mxu0 0.0
    %2826 = vmatprep.subr.mxu0 0.0
    %2827 = vmatpush1.msra.mxu0 0.0
    %2828 = vmatprep.subr.mxu0 0.0
    %2829 = vmatpush1.msra.mxu0 0.0
    %2830 = vmatprep.subr.mxu0 0.0
    %2831 = vmatpush1.msra.mxu0 0.0
    %2832 = vmatprep.subr.mxu0 0.0
    %2833 = vmatpush1.msra.mxu0 0.0
    %2834 = vmatprep.subr.mxu0 0.0
    %2835 = vmatpush1.msra.mxu0 0.0
    %2836 = vmatprep.subr.mxu0 0.0
    %2837 = vmatpush1.msra.mxu0 0.0
    %2838 = vmatprep.subr.mxu0 0.0
    %2839 = vmatpush1.msra.mxu0 0.0
    %2840 = vmatprep.mubr.f32.mxu0 0.0
    %2841 = vmatmul.mubr.f32.gmra.mrb[0].mxu0 %v2774
    %v2842 = vpop.f32.mrb[0].mxu0
    %v2843 = vadd.f32 %v2770, %v2842
    %v2844 = vpop.f32.mrb[0].mxu0
    %2845 = vdwg.mxu0
    %v2846 = vld [vmem:[%s608] sm:$0x1]
    %v2848 = vlaneseq
    %v2849 = vshrl.u32 %v2848, 7
    %v2850 = vsub.s32 0, %v2849
    %v2851 = vrot.slane %v2846, %v2850
    %v2853 = vadd.f32 %v2843, %v2851
    %v2854 = vtanh.pop %v2853
    %2855 = vst.msk [vmem:[%s455] sm:$0x3] %vm99, %v2854
    %v2856 = vld [vmem:[%s619] sm:$0xff]
    %v2857 = vld [vmem:[%s619 + $0x8] sm:$0xff]
    %v2858 = vld [vmem:[%s619 + $0x10] sm:$0xff]
    %v2859 = vld [vmem:[%s619 + $0x18] sm:$0xff]
    %v2860 = vld [vmem:[%s624] sm:$0x3]
    %v2861 = vld [vmem:[%s626] sm:$0xff]
    %v2862 = vld [vmem:[%s626 + $0x8] sm:$0xff]
    %v2863 = vld [vmem:[%s626 + $0x10] sm:$0xff]
    %v2864 = vld [vmem:[%s626 + $0x18] sm:$0xff]
    %v2866 = vsel %vm118, %v2860, 0
    %2868 = vmatprep.subr.mxu0 0.0
    %2869 = vmatpush1.msra.mxu0 %v2861
    %2870 = vmatprep.subr.mxu0 0.0
    %2871 = vmatpush1.msra.mxu0 %v2862
    %2872 = vmatprep.subr.mxu0 0.0
    %2873 = vmatpush1.msra.mxu0 %v2863
    %2874 = vmatprep.subr.mxu0 0.0
    %2875 = vmatpush1.msra.mxu0 %v2864
    %2876 = vmatprep.subr.mxu0 0.0
    %2877 = vmatpush1.msra.mxu0 0.0
    %2878 = vmatprep.subr.mxu0 0.0
    %2879 = vmatpush1.msra.mxu0 0.0
    %2880 = vmatprep.subr.mxu0 0.0
    %2881 = vmatpush1.msra.mxu0 0.0
    %2882 = vmatprep.subr.mxu0 0.0
    %2883 = vmatpush1.msra.mxu0 0.0
    %2884 = vmatprep.subr.mxu0 0.0
    %2885 = vmatpush1.msra.mxu0 0.0
    %2886 = vmatprep.subr.mxu0 0.0
    %2887 = vmatpush1.msra.mxu0 0.0
    %2888 = vmatprep.subr.mxu0 0.0
    %2889 = vmatpush1.msra.mxu0 0.0
    %2890 = vmatprep.subr.mxu0 0.0
    %2891 = vmatpush1.msra.mxu0 0.0
    %2892 = vmatprep.subr.mxu0 0.0
    %2893 = vmatpush1.msra.mxu0 0.0
    %2894 = vmatprep.subr.mxu0 0.0
    %2895 = vmatpush1.msra.mxu0 0.0
    %2896 = vmatprep.subr.mxu0 0.0
    %2897 = vmatpush1.msra.mxu0 0.0
    %2898 = vmatprep.subr.mxu0 0.0
    %2899 = vmatpush1.msra.mxu0 0.0
    %2900 = vmatprep.subr.mxu0 0.0
    %2901 = vmatpush1.msra.mxu0 0.0
    %2902 = vmatprep.subr.mxu0 0.0
    %2903 = vmatpush1.msra.mxu0 0.0
    %2904 = vmatprep.subr.mxu0 0.0
    %2905 = vmatpush1.msra.mxu0 0.0
    %2906 = vmatprep.subr.mxu0 0.0
    %2907 = vmatpush1.msra.mxu0 0.0
    %2908 = vmatprep.subr.mxu0 0.0
    %2909 = vmatpush1.msra.mxu0 0.0
    %2910 = vmatprep.subr.mxu0 0.0
    %2911 = vmatpush1.msra.mxu0 0.0
    %2912 = vmatprep.subr.mxu0 0.0
    %2913 = vmatpush1.msra.mxu0 0.0
    %2914 = vmatprep.subr.mxu0 0.0
    %2915 = vmatpush1.msra.mxu0 0.0
    %2916 = vmatprep.subr.mxu0 0.0
    %2917 = vmatpush1.msra.mxu0 0.0
    %2918 = vmatprep.subr.mxu0 0.0
    %2919 = vmatpush1.msra.mxu0 0.0
    %2920 = vmatprep.subr.mxu0 0.0
    %2921 = vmatpush1.msra.mxu0 0.0
    %2922 = vmatprep.subr.mxu0 0.0
    %2923 = vmatpush1.msra.mxu0 0.0
    %2924 = vmatprep.subr.mxu0 0.0
    %2925 = vmatpush1.msra.mxu0 0.0
    %2926 = vmatprep.subr.mxu0 0.0
    %2927 = vmatpush1.msra.mxu0 0.0
    %2928 = vmatprep.subr.mxu0 0.0
    %2929 = vmatpush1.msra.mxu0 0.0
    %2930 = vmatprep.subr.mxu0 0.0
    %2931 = vmatpush1.msra.mxu0 0.0
    %2932 = vmatprep.mubr.f32.mxu0 0.0
    %2933 = vmatmul.mubr.f32.gmra.mrb[0].mxu0 %v2866
    %v2934 = vpop.f32.mrb[0].mxu0
    %v2935 = vadd.f32 0.0, %v2934
    %v2936 = vpop.f32.mrb[0].mxu0
    %2937 = vdwg.mxu0
    %v2939 = vsel %vm118, %v2854, 0
    %2941 = vmatprep.subr.mxu0 0.0
    %2942 = vmatpush1.msra.mxu0 %v2856
    %2943 = vmatprep.subr.mxu0 0.0
    %2944 = vmatpush1.msra.mxu0 %v2857
    %2945 = vmatprep.subr.mxu0 0.0
    %2946 = vmatpush1.msra.mxu0 %v2858
    %2947 = vmatprep.subr.mxu0 0.0
    %2948 = vmatpush1.msra.mxu0 %v2859
    %2949 = vmatprep.subr.mxu0 0.0
    %2950 = vmatpush1.msra.mxu0 0.0
    %2951 = vmatprep.subr.mxu0 0.0
    %2952 = vmatpush1.msra.mxu0 0.0
    %2953 = vmatprep.subr.mxu0 0.0
    %2954 = vmatpush1.msra.mxu0 0.0
    %2955 = vmatprep.subr.mxu0 0.0
    %2956 = vmatpush1.msra.mxu0 0.0
    %2957 = vmatprep.subr.mxu0 0.0
    %2958 = vmatpush1.msra.mxu0 0.0
    %2959 = vmatprep.subr.mxu0 0.0
    %2960 = vmatpush1.msra.mxu0 0.0
    %2961 = vmatprep.subr.mxu0 0.0
    %2962 = vmatpush1.msra.mxu0 0.0
    %2963 = vmatprep.subr.mxu0 0.0
    %2964 = vmatpush1.msra.mxu0 0.0
    %2965 = vmatprep.subr.mxu0 0.0
    %2966 = vmatpush1.msra.mxu0 0.0
    %2967 = vmatprep.subr.mxu0 0.0
    %2968 = vmatpush1.msra.mxu0 0.0
    %2969 = vmatprep.subr.mxu0 0.0
    %2970 = vmatpush1.msra.mxu0 0.0
    %2971 = vmatprep.subr.mxu0 0.0
    %2972 = vmatpush1.msra.mxu0 0.0
    %2973 = vmatprep.subr.mxu0 0.0
    %2974 = vmatpush1.msra.mxu0 0.0
    %2975 = vmatprep.subr.mxu0 0.0
    %2976 = vmatpush1.msra.mxu0 0.0
    %2977 = vmatprep.subr.mxu0 0.0
    %2978 = vmatpush1.msra.mxu0 0.0
    %2979 = vmatprep.subr.mxu0 0.0
    %2980 = vmatpush1.msra.mxu0 0.0
    %2981 = vmatprep.subr.mxu0 0.0
    %2982 = vmatpush1.msra.mxu0 0.0
    %2983 = vmatprep.subr.mxu0 0.0
    %2984 = vmatpush1.msra.mxu0 0.0
    %2985 = vmatprep.subr.mxu0 0.0
    %2986 = vmatpush1.msra.mxu0 0.0
    %2987 = vmatprep.subr.mxu0 0.0
    %2988 = vmatpush1.msra.mxu0 0.0
    %2989 = vmatprep.subr.mxu0 0.0
    %2990 = vmatpush1.msra.mxu0 0.0
    %2991 = vmatprep.subr.mxu0 0.0
    %2992 = vmatpush1.msra.mxu0 0.0
    %2993 = vmatprep.subr.mxu0 0.0
    %2994 = vmatpush1.msra.mxu0 0.0
    %2995 = vmatprep.subr.mxu0 0.0
    %2996 = vmatpush1.msra.mxu0 0.0
    %2997 = vmatprep.subr.mxu0 0.0
    %2998 = vmatpush1.msra.mxu0 0.0
    %2999 = vmatprep.subr.mxu0 0.0
    %3000 = vmatpush1.msra.mxu0 0.0
    %3001 = vmatprep.subr.mxu0 0.0
    %3002 = vmatpush1.msra.mxu0 0.0
    %3003 = vmatprep.subr.mxu0 0.0
    %3004 = vmatpush1.msra.mxu0 0.0
    %3005 = vmatprep.mubr.f32.mxu0 0.0
    %3006 = vmatmul.mubr.f32.gmra.mrb[0].mxu0 %v2939
    %v3007 = vpop.f32.mrb[0].mxu0
    %v3008 = vadd.f32 %v2935, %v3007
    %v3009 = vpop.f32.mrb[0].mxu0
    %3010 = vdwg.mxu0
    %v3011 = vld [vmem:[%s777] sm:$0x1]
    %v3013 = vlaneseq
    %v3014 = vshrl.u32 %v3013, 7
    %v3015 = vsub.s32 0, %v3014
    %v3016 = vrot.slane %v3011, %v3015
    %v3018 = vadd.f32 %v3008, %v3016
    %v3019 = vtanh.pop %v3018
    %3020 = vst.msk [vmem:[%s624] sm:$0x3] %vm99, %v3019
    %v3021 = vld [vmem:[%s788] sm:$0xff]
    %v3022 = vld [vmem:[%s788 + $0x8] sm:$0xff]
    %v3023 = vld [vmem:[%s788 + $0x10] sm:$0xff]
    %v3024 = vld [vmem:[%s788 + $0x18] sm:$0xff]
    %v3025 = vld [vmem:[%s793] sm:$0x3]
    %v3026 = vld [vmem:[%s795] sm:$0xff]
    %v3027 = vld [vmem:[%s795 + $0x8] sm:$0xff]
    %v3028 = vld [vmem:[%s795 + $0x10] sm:$0xff]
    %v3029 = vld [vmem:[%s795 + $0x18] sm:$0xff]
    %v3031 = vsel %vm118, %v3025, 0
    %3033 = vmatprep.subr.mxu0 0.0
    %3034 = vmatpush1.msra.mxu0 %v3026
    %3035 = vmatprep.subr.mxu0 0.0
    %3036 = vmatpush1.msra.mxu0 %v3027
    %3037 = vmatprep.subr.mxu0 0.0
    %3038 = vmatpush1.msra.mxu0 %v3028
    %3039 = vmatprep.subr.mxu0 0.0
    %3040 = vmatpush1.msra.mxu0 %v3029
    %3041 = vmatprep.subr.mxu0 0.0
    %3042 = vmatpush1.msra.mxu0 0.0
    %3043 = vmatprep.subr.mxu0 0.0
    %3044 = vmatpush1.msra.mxu0 0.0
    %3045 = vmatprep.subr.mxu0 0.0
    %3046 = vmatpush1.msra.mxu0 0.0
    %3047 = vmatprep.subr.mxu0 0.0
    %3048 = vmatpush1.msra.mxu0 0.0
    %3049 = vmatprep.subr.mxu0 0.0
    %3050 = vmatpush1.msra.mxu0 0.0
    %3051 = vmatprep.subr.mxu0 0.0
    %3052 = vmatpush1.msra.mxu0 0.0
    %3053 = vmatprep.subr.mxu0 0.0
    %3054 = vmatpush1.msra.mxu0 0.0
    %3055 = vmatprep.subr.mxu0 0.0
    %3056 = vmatpush1.msra.mxu0 0.0
    %3057 = vmatprep.subr.mxu0 0.0
    %3058 = vmatpush1.msra.mxu0 0.0
    %3059 = vmatprep.subr.mxu0 0.0
    %3060 = vmatpush1.msra.mxu0 0.0
    %3061 = vmatprep.subr.mxu0 0.0
    %3062 = vmatpush1.msra.mxu0 0.0
    %3063 = vmatprep.subr.mxu0 0.0
    %3064 = vmatpush1.msra.mxu0 0.0
    %3065 = vmatprep.subr.mxu0 0.0
    %3066 = vmatpush1.msra.mxu0 0.0
    %3067 = vmatprep.subr.mxu0 0.0
    %3068 = vmatpush1.msra.mxu0 0.0
    %3069 = vmatprep.subr.mxu0 0.0
    %3070 = vmatpush1.msra.mxu0 0.0
    %3071 = vmatprep.subr.mxu0 0.0
    %3072 = vmatpush1.msra.mxu0 0.0
    %3073 = vmatprep.subr.mxu0 0.0
    %3074 = vmatpush1.msra.mxu0 0.0
    %3075 = vmatprep.subr.mxu0 0.0
    %3076 = vmatpush1.msra.mxu0 0.0
    %3077 = vmatprep.subr.mxu0 0.0
    %3078 = vmatpush1.msra.mxu0 0.0
    %3079 = vmatprep.subr.mxu0 0.0
    %3080 = vmatpush1.msra.mxu0 0.0
    %3081 = vmatprep.subr.mxu0 0.0
    %3082 = vmatpush1.msra.mxu0 0.0
    %3083 = vmatprep.subr.mxu0 0.0
    %3084 = vmatpush1.msra.mxu0 0.0
    %3085 = vmatprep.subr.mxu0 0.0
    %3086 = vmatpush1.msra.mxu0 0.0
    %3087 = vmatprep.subr.mxu0 0.0
    %3088 = vmatpush1.msra.mxu0 0.0
    %3089 = vmatprep.subr.mxu0 0.0
    %3090 = vmatpush1.msra.mxu0 0.0
    %3091 = vmatprep.subr.mxu0 0.0
    %3092 = vmatpush1.msra.mxu0 0.0
    %3093 = vmatprep.subr.mxu0 0.0
    %3094 = vmatpush1.msra.mxu0 0.0
    %3095 = vmatprep.subr.mxu0 0.0
    %3096 = vmatpush1.msra.mxu0 0.0
    %3097 = vmatprep.mubr.f32.mxu0 0.0
    %3098 = vmatmul.mubr.f32.gmra.mrb[0].mxu0 %v3031
    %v3099 = vpop.f32.mrb[0].mxu0
    %v3100 = vadd.f32 0.0, %v3099
    %v3101 = vpop.f32.mrb[0].mxu0
    %3102 = vdwg.mxu0
    %v3104 = vsel %vm118, %v3019, 0
    %3106 = vmatprep.subr.mxu0 0.0
    %3107 = vmatpush1.msra.mxu0 %v3021
    %3108 = vmatprep.subr.mxu0 0.0
    %3109 = vmatpush1.msra.mxu0 %v3022
    %3110 = vmatprep.subr.mxu0 0.0
    %3111 = vmatpush1.msra.mxu0 %v3023
    %3112 = vmatprep.subr.mxu0 0.0
    %3113 = vmatpush1.msra.mxu0 %v3024
    %3114 = vmatprep.subr.mxu0 0.0
    %3115 = vmatpush1.msra.mxu0 0.0
    %3116 = vmatprep.subr.mxu0 0.0
    %3117 = vmatpush1.msra.mxu0 0.0
    %3118 = vmatprep.subr.mxu0 0.0
    %3119 = vmatpush1.msra.mxu0 0.0
    %3120 = vmatprep.subr.mxu0 0.0
    %3121 = vmatpush1.msra.mxu0 0.0
    %3122 = vmatprep.subr.mxu0 0.0
    %3123 = vmatpush1.msra.mxu0 0.0
    %3124 = vmatprep.subr.mxu0 0.0
    %3125 = vmatpush1.msra.mxu0 0.0
    %3126 = vmatprep.subr.mxu0 0.0
    %3127 = vmatpush1.msra.mxu0 0.0
    %3128 = vmatprep.subr.mxu0 0.0
    %3129 = vmatpush1.msra.mxu0 0.0
    %3130 = vmatprep.subr.mxu0 0.0
    %3131 = vmatpush1.msra.mxu0 0.0
    %3132 = vmatprep.subr.mxu0 0.0
    %3133 = vmatpush1.msra.mxu0 0.0
    %3134 = vmatprep.subr.mxu0 0.0
    %3135 = vmatpush1.msra.mxu0 0.0
    %3136 = vmatprep.subr.mxu0 0.0
    %3137 = vmatpush1.msra.mxu0 0.0
    %3138 = vmatprep.subr.mxu0 0.0
    %3139 = vmatpush1.msra.mxu0 0.0
    %3140 = vmatprep.subr.mxu0 0.0
    %3141 = vmatpush1.msra.mxu0 0.0
    %3142 = vmatprep.subr.mxu0 0.0
    %3143 = vmatpush1.msra.mxu0 0.0
    %3144 = vmatprep.subr.mxu0 0.0
    %3145 = vmatpush1.msra.mxu0 0.0
    %3146 = vmatprep.subr.mxu0 0.0
    %3147 = vmatpush1.msra.mxu0 0.0
    %3148 = vmatprep.subr.mxu0 0.0
    %3149 = vmatpush1.msra.mxu0 0.0
    %3150 = vmatprep.subr.mxu0 0.0
    %3151 = vmatpush1.msra.mxu0 0.0
    %3152 = vmatprep.subr.mxu0 0.0
    %3153 = vmatpush1.msra.mxu0 0.0
    %3154 = vmatprep.subr.mxu0 0.0
    %3155 = vmatpush1.msra.mxu0 0.0
    %3156 = vmatprep.subr.mxu0 0.0
    %3157 = vmatpush1.msra.mxu0 0.0
    %3158 = vmatprep.subr.mxu0 0.0
    %3159 = vmatpush1.msra.mxu0 0.0
    %3160 = vmatprep.subr.mxu0 0.0
    %3161 = vmatpush1.msra.mxu0 0.0
    %3162 = vmatprep.subr.mxu0 0.0
    %3163 = vmatpush1.msra.mxu0 0.0
    %3164 = vmatprep.subr.mxu0 0.0
    %3165 = vmatpush1.msra.mxu0 0.0
    %3166 = vmatprep.subr.mxu0 0.0
    %3167 = vmatpush1.msra.mxu0 0.0
    %3168 = vmatprep.subr.mxu0 0.0
    %3169 = vmatpush1.msra.mxu0 0.0
    %3170 = vmatprep.mubr.f32.mxu0 0.0
    %3171 = vmatmul.mubr.f32.gmra.mrb[0].mxu0 %v3104
    %v3172 = vpop.f32.mrb[0].mxu0
    %v3173 = vadd.f32 %v3100, %v3172
    %v3174 = vpop.f32.mrb[0].mxu0
    %3175 = vdwg.mxu0
    %v3176 = vld [vmem:[%s946] sm:$0x1]
    %v3178 = vlaneseq
    %v3179 = vshrl.u32 %v3178, 7
    %v3180 = vsub.s32 0, %v3179
    %v3181 = vrot.slane %v3176, %v3180
    %v3183 = vadd.f32 %v3173, %v3181
    %v3184 = vtanh.pop %v3183
    %3185 = vst.msk [vmem:[%s793] sm:$0x3] %vm99, %v3184
    %3186 = vst.msk [vmem:[#allocation3 + $0x6] sm:$0x3] %vm99, %v3184
    %v3187 = vld [vmem:[#allocation2 + $0x8] sm:$0x3]
    %v3188 = vld [vmem:[#allocation4] sm:$0x3]
    %v3189 = vld [vmem:[#allocation8] sm:$0xff]
    %v3190 = vld [vmem:[#allocation8 + $0x8] sm:$0xff]
    %v3191 = vld [vmem:[#allocation8 + $0x10] sm:$0xff]
    %v3192 = vld [vmem:[#allocation8 + $0x18] sm:$0xff]
    %v3194 = vsel %vm118, %v3188, 0
    %3196 = vmatprep.subr.mxu0 0.0
    %3197 = vmatpush1.msra.mxu0 %v3189
    %3198 = vmatprep.subr.mxu0 0.0
    %3199 = vmatpush1.msra.mxu0 %v3190
    %3200 = vmatprep.subr.mxu0 0.0
    %3201 = vmatpush1.msra.mxu0 %v3191
    %3202 = vmatprep.subr.mxu0 0.0
    %3203 = vmatpush1.msra.mxu0 %v3192
    %3204 = vmatprep.subr.mxu0 0.0
    %3205 = vmatpush1.msra.mxu0 0.0
    %3206 = vmatprep.subr.mxu0 0.0
    %3207 = vmatpush1.msra.mxu0 0.0
    %3208 = vmatprep.subr.mxu0 0.0
    %3209 = vmatpush1.msra.mxu0 0.0
    %3210 = vmatprep.subr.mxu0 0.0
    %3211 = vmatpush1.msra.mxu0 0.0
    %3212 = vmatprep.subr.mxu0 0.0
    %3213 = vmatpush1.msra.mxu0 0.0
    %3214 = vmatprep.subr.mxu0 0.0
    %3215 = vmatpush1.msra.mxu0 0.0
    %3216 = vmatprep.subr.mxu0 0.0
    %3217 = vmatpush1.msra.mxu0 0.0
    %3218 = vmatprep.subr.mxu0 0.0
    %3219 = vmatpush1.msra.mxu0 0.0
    %3220 = vmatprep.subr.mxu0 0.0
    %3221 = vmatpush1.msra.mxu0 0.0
    %3222 = vmatprep.subr.mxu0 0.0
    %3223 = vmatpush1.msra.mxu0 0.0
    %3224 = vmatprep.subr.mxu0 0.0
    %3225 = vmatpush1.msra.mxu0 0.0
    %3226 = vmatprep.subr.mxu0 0.0
    %3227 = vmatpush1.msra.mxu0 0.0
    %3228 = vmatprep.subr.mxu0 0.0
    %3229 = vmatpush1.msra.mxu0 0.0
    %3230 = vmatprep.subr.mxu0 0.0
    %3231 = vmatpush1.msra.mxu0 0.0
    %3232 = vmatprep.subr.mxu0 0.0
    %3233 = vmatpush1.msra.mxu0 0.0
    %3234 = vmatprep.subr.mxu0 0.0
    %3235 = vmatpush1.msra.mxu0 0.0
    %3236 = vmatprep.subr.mxu0 0.0
    %3237 = vmatpush1.msra.mxu0 0.0
    %3238 = vmatprep.subr.mxu0 0.0
    %3239 = vmatpush1.msra.mxu0 0.0
    %3240 = vmatprep.subr.mxu0 0.0
    %3241 = vmatpush1.msra.mxu0 0.0
    %3242 = vmatprep.subr.mxu0 0.0
    %3243 = vmatpush1.msra.mxu0 0.0
    %3244 = vmatprep.subr.mxu0 0.0
    %3245 = vmatpush1.msra.mxu0 0.0
    %3246 = vmatprep.subr.mxu0 0.0
    %3247 = vmatpush1.msra.mxu0 0.0
    %3248 = vmatprep.subr.mxu0 0.0
    %3249 = vmatpush1.msra.mxu0 0.0
    %3250 = vmatprep.subr.mxu0 0.0
    %3251 = vmatpush1.msra.mxu0 0.0
    %3252 = vmatprep.subr.mxu0 0.0
    %3253 = vmatpush1.msra.mxu0 0.0
    %3254 = vmatprep.subr.mxu0 0.0
    %3255 = vmatpush1.msra.mxu0 0.0
    %3256 = vmatprep.subr.mxu0 0.0
    %3257 = vmatpush1.msra.mxu0 0.0
    %3258 = vmatprep.subr.mxu0 0.0
    %3259 = vmatpush1.msra.mxu0 0.0
    %3260 = vmatprep.mubr.f32.mxu0 0.0
    %3261 = vmatmul.mubr.f32.gmra.mrb[0].mxu0 %v3194
    %v3262 = vpop.f32.mrb[0].mxu0
    %v3263 = vadd.f32 0.0, %v3262
    %v3264 = vpop.f32.mrb[0].mxu0
    %3265 = vdwg.mxu0
    %v3266 = vadd.f32 %v3187, %v3263
    %v3267 = vtanh.pop %v3266
    %3268 = vst.msk [vmem:[#allocation4] sm:$0x3] %vm99, %v3267
    %v3269 = vld [vmem:[#allocation10] sm:$0xff]
    %v3270 = vld [vmem:[#allocation10 + $0x8] sm:$0xff]
    %v3271 = vld [vmem:[#allocation10 + $0x10] sm:$0xff]
    %v3272 = vld [vmem:[#allocation10 + $0x18] sm:$0xff]
    %v3273 = vld [vmem:[%s288] sm:$0x3]
    %v3274 = vld [vmem:[#allocation11] sm:$0xff]
    %v3275 = vld [vmem:[#allocation11 + $0x8] sm:$0xff]
    %v3276 = vld [vmem:[#allocation11 + $0x10] sm:$0xff]
    %v3277 = vld [vmem:[#allocation11 + $0x18] sm:$0xff]
    %v3279 = vsel %vm118, %v3273, 0
    %3281 = vmatprep.subr.mxu0 0.0
    %3282 = vmatpush1.msra.mxu0 %v3274
    %3283 = vmatprep.subr.mxu0 0.0
    %3284 = vmatpush1.msra.mxu0 %v3275
    %3285 = vmatprep.subr.mxu0 0.0
    %3286 = vmatpush1.msra.mxu0 %v3276
    %3287 = vmatprep.subr.mxu0 0.0
    %3288 = vmatpush1.msra.mxu0 %v3277
    %3289 = vmatprep.subr.mxu0 0.0
    %3290 = vmatpush1.msra.mxu0 0.0
    %3291 = vmatprep.subr.mxu0 0.0
    %3292 = vmatpush1.msra.mxu0 0.0
    %3293 = vmatprep.subr.mxu0 0.0
    %3294 = vmatpush1.msra.mxu0 0.0
    %3295 = vmatprep.subr.mxu0 0.0
    %3296 = vmatpush1.msra.mxu0 0.0
    %3297 = vmatprep.subr.mxu0 0.0
    %3298 = vmatpush1.msra.mxu0 0.0
    %3299 = vmatprep.subr.mxu0 0.0
    %3300 = vmatpush1.msra.mxu0 0.0
    %3301 = vmatprep.subr.mxu0 0.0
    %3302 = vmatpush1.msra.mxu0 0.0
    %3303 = vmatprep.subr.mxu0 0.0
    %3304 = vmatpush1.msra.mxu0 0.0
    %3305 = vmatprep.subr.mxu0 0.0
    %3306 = vmatpush1.msra.mxu0 0.0
    %3307 = vmatprep.subr.mxu0 0.0
    %3308 = vmatpush1.msra.mxu0 0.0
    %3309 = vmatprep.subr.mxu0 0.0
    %3310 = vmatpush1.msra.mxu0 0.0
    %3311 = vmatprep.subr.mxu0 0.0
    %3312 = vmatpush1.msra.mxu0 0.0
    %3313 = vmatprep.subr.mxu0 0.0
    %3314 = vmatpush1.msra.mxu0 0.0
    %3315 = vmatprep.subr.mxu0 0.0
    %3316 = vmatpush1.msra.mxu0 0.0
    %3317 = vmatprep.subr.mxu0 0.0
    %3318 = vmatpush1.msra.mxu0 0.0
    %3319 = vmatprep.subr.mxu0 0.0
    %3320 = vmatpush1.msra.mxu0 0.0
    %3321 = vmatprep.subr.mxu0 0.0
    %3322 = vmatpush1.msra.mxu0 0.0
    %3323 = vmatprep.subr.mxu0 0.0
    %3324 = vmatpush1.msra.mxu0 0.0
    %3325 = vmatprep.subr.mxu0 0.0
    %3326 = vmatpush1.msra.mxu0 0.0
    %3327 = vmatprep.subr.mxu0 0.0
    %3328 = vmatpush1.msra.mxu0 0.0
    %3329 = vmatprep.subr.mxu0 0.0
    %3330 = vmatpush1.msra.mxu0 0.0
    %3331 = vmatprep.subr.mxu0 0.0
    %3332 = vmatpush1.msra.mxu0 0.0
    %3333 = vmatprep.subr.mxu0 0.0
    %3334 = vmatpush1.msra.mxu0 0.0
    %3335 = vmatprep.subr.mxu0 0.0
    %3336 = vmatpush1.msra.mxu0 0.0
    %3337 = vmatprep.subr.mxu0 0.0
    %3338 = vmatpush1.msra.mxu0 0.0
    %3339 = vmatprep.subr.mxu0 0.0
    %3340 = vmatpush1.msra.mxu0 0.0
    %3341 = vmatprep.subr.mxu0 0.0
    %3342 = vmatpush1.msra.mxu0 0.0
    %3343 = vmatprep.subr.mxu0 0.0
    %3344 = vmatpush1.msra.mxu0 0.0
    %3345 = vmatprep.mubr.f32.mxu0 0.0
    %3346 = vmatmul.mubr.f32.gmra.mrb[0].mxu0 %v3279
    %v3347 = vpop.f32.mrb[0].mxu0
    %v3348 = vadd.f32 0.0, %v3347
    %v3349 = vpop.f32.mrb[0].mxu0
    %3350 = vdwg.mxu0
    %v3352 = vsel %vm118, %v3267, 0
    %3354 = vmatprep.subr.mxu0 0.0
    %3355 = vmatpush1.msra.mxu0 %v3269
    %3356 = vmatprep.subr.mxu0 0.0
    %3357 = vmatpush1.msra.mxu0 %v3270
    %3358 = vmatprep.subr.mxu0 0.0
    %3359 = vmatpush1.msra.mxu0 %v3271
    %3360 = vmatprep.subr.mxu0 0.0
    %3361 = vmatpush1.msra.mxu0 %v3272
    %3362 = vmatprep.subr.mxu0 0.0
    %3363 = vmatpush1.msra.mxu0 0.0
    %3364 = vmatprep.subr.mxu0 0.0
    %3365 = vmatpush1.msra.mxu0 0.0
    %3366 = vmatprep.subr.mxu0 0.0
    %3367 = vmatpush1.msra.mxu0 0.0
    %3368 = vmatprep.subr.mxu0 0.0
    %3369 = vmatpush1.msra.mxu0 0.0
    %3370 = vmatprep.subr.mxu0 0.0
    %3371 = vmatpush1.msra.mxu0 0.0
    %3372 = vmatprep.subr.mxu0 0.0
    %3373 = vmatpush1.msra.mxu0 0.0
    %3374 = vmatprep.subr.mxu0 0.0
    %3375 = vmatpush1.msra.mxu0 0.0
    %3376 = vmatprep.subr.mxu0 0.0
    %3377 = vmatpush1.msra.mxu0 0.0
    %3378 = vmatprep.subr.mxu0 0.0
    %3379 = vmatpush1.msra.mxu0 0.0
    %3380 = vmatprep.subr.mxu0 0.0
    %3381 = vmatpush1.msra.mxu0 0.0
    %3382 = vmatprep.subr.mxu0 0.0
    %3383 = vmatpush1.msra.mxu0 0.0
    %3384 = vmatprep.subr.mxu0 0.0
    %3385 = vmatpush1.msra.mxu0 0.0
    %3386 = vmatprep.subr.mxu0 0.0
    %3387 = vmatpush1.msra.mxu0 0.0
    %3388 = vmatprep.subr.mxu0 0.0
    %3389 = vmatpush1.msra.mxu0 0.0
    %3390 = vmatprep.subr.mxu0 0.0
    %3391 = vmatpush1.msra.mxu0 0.0
    %3392 = vmatprep.subr.mxu0 0.0
    %3393 = vmatpush1.msra.mxu0 0.0
    %3394 = vmatprep.subr.mxu0 0.0
    %3395 = vmatpush1.msra.mxu0 0.0
    %3396 = vmatprep.subr.mxu0 0.0
    %3397 = vmatpush1.msra.mxu0 0.0
    %3398 = vmatprep.subr.mxu0 0.0
    %3399 = vmatpush1.msra.mxu0 0.0
    %3400 = vmatprep.subr.mxu0 0.0
    %3401 = vmatpush1.msra.mxu0 0.0
    %3402 = vmatprep.subr.mxu0 0.0
    %3403 = vmatpush1.msra.mxu0 0.0
    %3404 = vmatprep.subr.mxu0 0.0
    %3405 = vmatpush1.msra.mxu0 0.0
    %3406 = vmatprep.subr.mxu0 0.0
    %3407 = vmatpush1.msra.mxu0 0.0
    %3408 = vmatprep.subr.mxu0 0.0
    %3409 = vmatpush1.msra.mxu0 0.0
    %3410 = vmatprep.subr.mxu0 0.0
    %3411 = vmatpush1.msra.mxu0 0.0
    %3412 = vmatprep.subr.mxu0 0.0
    %3413 = vmatpush1.msra.mxu0 0.0
    %3414 = vmatprep.subr.mxu0 0.0
    %3415 = vmatpush1.msra.mxu0 0.0
    %3416 = vmatprep.subr.mxu0 0.0
    %3417 = vmatpush1.msra.mxu0 0.0
    %3418 = vmatprep.mubr.f32.mxu0 0.0
    %3419 = vmatmul.mubr.f32.gmra.mrb[0].mxu0 %v3352
    %v3420 = vpop.f32.mrb[0].mxu0
    %v3421 = vadd.f32 %v3348, %v3420
    %v3422 = vpop.f32.mrb[0].mxu0
    %3423 = vdwg.mxu0
    %v3424 = vld [vmem:[%s7] sm:$0x1]
    %v3426 = vlaneseq
    %v3427 = vshrl.u32 %v3426, 7
    %v3428 = vsub.s32 0, %v3427
    %v3429 = vrot.slane %v3424, %v3428
    %v3431 = vadd.f32 %v3421, %v3429
    %v3432 = vtanh.pop %v3431
    %3433 = vst.msk [vmem:[%s288] sm:$0x3] %vm99, %v3432
    %v3434 = vld [vmem:[%s450] sm:$0xff]
    %v3435 = vld [vmem:[%s450 + $0x8] sm:$0xff]
    %v3436 = vld [vmem:[%s450 + $0x10] sm:$0xff]
    %v3437 = vld [vmem:[%s450 + $0x18] sm:$0xff]
    %v3438 = vld [vmem:[%s455] sm:$0x3]
    %v3439 = vld [vmem:[%s457] sm:$0xff]
    %v3440 = vld [vmem:[%s457 + $0x8] sm:$0xff]
    %v3441 = vld [vmem:[%s457 + $0x10] sm:$0xff]
    %v3442 = vld [vmem:[%s457 + $0x18] sm:$0xff]
    %v3444 = vsel %vm118, %v3438, 0
    %3446 = vmatprep.subr.mxu0 0.0
    %3447 = vmatpush1.msra.mxu0 %v3439
    %3448 = vmatprep.subr.mxu0 0.0
    %3449 = vmatpush1.msra.mxu0 %v3440
    %3450 = vmatprep.subr.mxu0 0.0
    %3451 = vmatpush1.msra.mxu0 %v3441
    %3452 = vmatprep.subr.mxu0 0.0
    %3453 = vmatpush1.msra.mxu0 %v3442
    %3454 = vmatprep.subr.mxu0 0.0
    %3455 = vmatpush1.msra.mxu0 0.0
    %3456 = vmatprep.subr.mxu0 0.0
    %3457 = vmatpush1.msra.mxu0 0.0
    %3458 = vmatprep.subr.mxu0 0.0
    %3459 = vmatpush1.msra.mxu0 0.0
    %3460 = vmatprep.subr.mxu0 0.0
    %3461 = vmatpush1.msra.mxu0 0.0
    %3462 = vmatprep.subr.mxu0 0.0
    %3463 = vmatpush1.msra.mxu0 0.0
    %3464 = vmatprep.subr.mxu0 0.0
    %3465 = vmatpush1.msra.mxu0 0.0
    %3466 = vmatprep.subr.mxu0 0.0
    %3467 = vmatpush1.msra.mxu0 0.0
    %3468 = vmatprep.subr.mxu0 0.0
    %3469 = vmatpush1.msra.mxu0 0.0
    %3470 = vmatprep.subr.mxu0 0.0
    %3471 = vmatpush1.msra.mxu0 0.0
    %3472 = vmatprep.subr.mxu0 0.0
    %3473 = vmatpush1.msra.mxu0 0.0
    %3474 = vmatprep.subr.mxu0 0.0
    %3475 = vmatpush1.msra.mxu0 0.0
    %3476 = vmatprep.subr.mxu0 0.0
    %3477 = vmatpush1.msra.mxu0 0.0
    %3478 = vmatprep.subr.mxu0 0.0
    %3479 = vmatpush1.msra.mxu0 0.0
    %3480 = vmatprep.subr.mxu0 0.0
    %3481 = vmatpush1.msra.mxu0 0.0
    %3482 = vmatprep.subr.mxu0 0.0
    %3483 = vmatpush1.msra.mxu0 0.0
    %3484 = vmatprep.subr.mxu0 0.0
    %3485 = vmatpush1.msra.mxu0 0.0
    %3486 = vmatprep.subr.mxu0 0.0
    %3487 = vmatpush1.msra.mxu0 0.0
    %3488 = vmatprep.subr.mxu0 0.0
    %3489 = vmatpush1.msra.mxu0 0.0
    %3490 = vmatprep.subr.mxu0 0.0
    %3491 = vmatpush1.msra.mxu0 0.0
    %3492 = vmatprep.subr.mxu0 0.0
    %3493 = vmatpush1.msra.mxu0 0.0
    %3494 = vmatprep.subr.mxu0 0.0
    %3495 = vmatpush1.msra.mxu0 0.0
    %3496 = vmatprep.subr.mxu0 0.0
    %3497 = vmatpush1.msra.mxu0 0.0
    %3498 = vmatprep.subr.mxu0 0.0
    %3499 = vmatpush1.msra.mxu0 0.0
    %3500 = vmatprep.subr.mxu0 0.0
    %3501 = vmatpush1.msra.mxu0 0.0
    %3502 = vmatprep.subr.mxu0 0.0
    %3503 = vmatpush1.msra.mxu0 0.0
    %3504 = vmatprep.subr.mxu0 0.0
    %3505 = vmatpush1.msra.mxu0 0.0
    %3506 = vmatprep.subr.mxu0 0.0
    %3507 = vmatpush1.msra.mxu0 0.0
    %3508 = vmatprep.subr.mxu0 0.0
    %3509 = vmatpush1.msra.mxu0 0.0
    %3510 = vmatprep.mubr.f32.mxu0 0.0
    %3511 = vmatmul.mubr.f32.gmra.mrb[0].mxu0 %v3444
    %v3512 = vpop.f32.mrb[0].mxu0
    %v3513 = vadd.f32 0.0, %v3512
    %v3514 = vpop.f32.mrb[0].mxu0
    %3515 = vdwg.mxu0
    %v3517 = vsel %vm118, %v3432, 0
    %3519 = vmatprep.subr.mxu0 0.0
    %3520 = vmatpush1.msra.mxu0 %v3434
    %3521 = vmatprep.subr.mxu0 0.0
    %3522 = vmatpush1.msra.mxu0 %v3435
    %3523 = vmatprep.subr.mxu0 0.0
    %3524 = vmatpush1.msra.mxu0 %v3436
    %3525 = vmatprep.subr.mxu0 0.0
    %3526 = vmatpush1.msra.mxu0 %v3437
    %3527 = vmatprep.subr.mxu0 0.0
    %3528 = vmatpush1.msra.mxu0 0.0
    %3529 = vmatprep.subr.mxu0 0.0
    %3530 = vmatpush1.msra.mxu0 0.0
    %3531 = vmatprep.subr.mxu0 0.0
    %3532 = vmatpush1.msra.mxu0 0.0
    %3533 = vmatprep.subr.mxu0 0.0
    %3534 = vmatpush1.msra.mxu0 0.0
    %3535 = vmatprep.subr.mxu0 0.0
    %3536 = vmatpush1.msra.mxu0 0.0
    %3537 = vmatprep.subr.mxu0 0.0
    %3538 = vmatpush1.msra.mxu0 0.0
    %3539 = vmatprep.subr.mxu0 0.0
    %3540 = vmatpush1.msra.mxu0 0.0
    %3541 = vmatprep.subr.mxu0 0.0
    %3542 = vmatpush1.msra.mxu0 0.0
    %3543 = vmatprep.subr.mxu0 0.0
    %3544 = vmatpush1.msra.mxu0 0.0
    %3545 = vmatprep.subr.mxu0 0.0
    %3546 = vmatpush1.msra.mxu0 0.0
    %3547 = vmatprep.subr.mxu0 0.0
    %3548 = vmatpush1.msra.mxu0 0.0
    %3549 = vmatprep.subr.mxu0 0.0
    %3550 = vmatpush1.msra.mxu0 0.0
    %3551 = vmatprep.subr.mxu0 0.0
    %3552 = vmatpush1.msra.mxu0 0.0
    %3553 = vmatprep.subr.mxu0 0.0
    %3554 = vmatpush1.msra.mxu0 0.0
    %3555 = vmatprep.subr.mxu0 0.0
    %3556 = vmatpush1.msra.mxu0 0.0
    %3557 = vmatprep.subr.mxu0 0.0
    %3558 = vmatpush1.msra.mxu0 0.0
    %3559 = vmatprep.subr.mxu0 0.0
    %3560 = vmatpush1.msra.mxu0 0.0
    %3561 = vmatprep.subr.mxu0 0.0
    %3562 = vmatpush1.msra.mxu0 0.0
    %3563 = vmatprep.subr.mxu0 0.0
    %3564 = vmatpush1.msra.mxu0 0.0
    %3565 = vmatprep.subr.mxu0 0.0
    %3566 = vmatpush1.msra.mxu0 0.0
    %3567 = vmatprep.subr.mxu0 0.0
    %3568 = vmatpush1.msra.mxu0 0.0
    %3569 = vmatprep.subr.mxu0 0.0
    %3570 = vmatpush1.msra.mxu0 0.0
    %3571 = vmatprep.subr.mxu0 0.0
    %3572 = vmatpush1.msra.mxu0 0.0
    %3573 = vmatprep.subr.mxu0 0.0
    %3574 = vmatpush1.msra.mxu0 0.0
    %3575 = vmatprep.subr.mxu0 0.0
    %3576 = vmatpush1.msra.mxu0 0.0
    %3577 = vmatprep.subr.mxu0 0.0
    %3578 = vmatpush1.msra.mxu0 0.0
    %3579 = vmatprep.subr.mxu0 0.0
    %3580 = vmatpush1.msra.mxu0 0.0
    %3581 = vmatprep.subr.mxu0 0.0
    %3582 = vmatpush1.msra.mxu0 0.0
    %3583 = vmatprep.mubr.f32.mxu0 0.0
    %3584 = vmatmul.mubr.f32.gmra.mrb[0].mxu0 %v3517
    %v3585 = vpop.f32.mrb[0].mxu0
    %v3586 = vadd.f32 %v3513, %v3585
    %v3587 = vpop.f32.mrb[0].mxu0
    %3588 = vdwg.mxu0
    %v3589 = vld [vmem:[%s608] sm:$0x1]
    %v3591 = vlaneseq
    %v3592 = vshrl.u32 %v3591, 7
    %v3593 = vsub.s32 0, %v3592
    %v3594 = vrot.slane %v3589, %v3593
    %v3596 = vadd.f32 %v3586, %v3594
    %v3597 = vtanh.pop %v3596
    %3598 = vst.msk [vmem:[%s455] sm:$0x3] %vm99, %v3597
    %v3599 = vld [vmem:[%s619] sm:$0xff]
    %v3600 = vld [vmem:[%s619 + $0x8] sm:$0xff]
    %v3601 = vld [vmem:[%s619 + $0x10] sm:$0xff]
    %v3602 = vld [vmem:[%s619 + $0x18] sm:$0xff]
    %v3603 = vld [vmem:[%s624] sm:$0x3]
    %v3604 = vld [vmem:[%s626] sm:$0xff]
    %v3605 = vld [vmem:[%s626 + $0x8] sm:$0xff]
    %v3606 = vld [vmem:[%s626 + $0x10] sm:$0xff]
    %v3607 = vld [vmem:[%s626 + $0x18] sm:$0xff]
    %v3609 = vsel %vm118, %v3603, 0
    %3611 = vmatprep.subr.mxu0 0.0
    %3612 = vmatpush1.msra.mxu0 %v3604
    %3613 = vmatprep.subr.mxu0 0.0
    %3614 = vmatpush1.msra.mxu0 %v3605
    %3615 = vmatprep.subr.mxu0 0.0
    %3616 = vmatpush1.msra.mxu0 %v3606
    %3617 = vmatprep.subr.mxu0 0.0
    %3618 = vmatpush1.msra.mxu0 %v3607
    %3619 = vmatprep.subr.mxu0 0.0
    %3620 = vmatpush1.msra.mxu0 0.0
    %3621 = vmatprep.subr.mxu0 0.0
    %3622 = vmatpush1.msra.mxu0 0.0
    %3623 = vmatprep.subr.mxu0 0.0
    %3624 = vmatpush1.msra.mxu0 0.0
    %3625 = vmatprep.subr.mxu0 0.0
    %3626 = vmatpush1.msra.mxu0 0.0
    %3627 = vmatprep.subr.mxu0 0.0
    %3628 = vmatpush1.msra.mxu0 0.0
    %3629 = vmatprep.subr.mxu0 0.0
    %3630 = vmatpush1.msra.mxu0 0.0
    %3631 = vmatprep.subr.mxu0 0.0
    %3632 = vmatpush1.msra.mxu0 0.0
    %3633 = vmatprep.subr.mxu0 0.0
    %3634 = vmatpush1.msra.mxu0 0.0
    %3635 = vmatprep.subr.mxu0 0.0
    %3636 = vmatpush1.msra.mxu0 0.0
    %3637 = vmatprep.subr.mxu0 0.0
    %3638 = vmatpush1.msra.mxu0 0.0
    %3639 = vmatprep.subr.mxu0 0.0
    %3640 = vmatpush1.msra.mxu0 0.0
    %3641 = vmatprep.subr.mxu0 0.0
    %3642 = vmatpush1.msra.mxu0 0.0
    %3643 = vmatprep.subr.mxu0 0.0
    %3644 = vmatpush1.msra.mxu0 0.0
    %3645 = vmatprep.subr.mxu0 0.0
    %3646 = vmatpush1.msra.mxu0 0.0
    %3647 = vmatprep.subr.mxu0 0.0
    %3648 = vmatpush1.msra.mxu0 0.0
    %3649 = vmatprep.subr.mxu0 0.0
    %3650 = vmatpush1.msra.mxu0 0.0
    %3651 = vmatprep.subr.mxu0 0.0
    %3652 = vmatpush1.msra.mxu0 0.0
    %3653 = vmatprep.subr.mxu0 0.0
    %3654 = vmatpush1.msra.mxu0 0.0
    %3655 = vmatprep.subr.mxu0 0.0
    %3656 = vmatpush1.msra.mxu0 0.0
    %3657 = vmatprep.subr.mxu0 0.0
    %3658 = vmatpush1.msra.mxu0 0.0
    %3659 = vmatprep.subr.mxu0 0.0
    %3660 = vmatpush1.msra.mxu0 0.0
    %3661 = vmatprep.subr.mxu0 0.0
    %3662 = vmatpush1.msra.mxu0 0.0
    %3663 = vmatprep.subr.mxu0 0.0
    %3664 = vmatpush1.msra.mxu0 0.0
    %3665 = vmatprep.subr.mxu0 0.0
    %3666 = vmatpush1.msra.mxu0 0.0
    %3667 = vmatprep.subr.mxu0 0.0
    %3668 = vmatpush1.msra.mxu0 0.0
    %3669 = vmatprep.subr.mxu0 0.0
    %3670 = vmatpush1.msra.mxu0 0.0
    %3671 = vmatprep.subr.mxu0 0.0
    %3672 = vmatpush1.msra.mxu0 0.0
    %3673 = vmatprep.subr.mxu0 0.0
    %3674 = vmatpush1.msra.mxu0 0.0
    %3675 = vmatprep.mubr.f32.mxu0 0.0
    %3676 = vmatmul.mubr.f32.gmra.mrb[0].mxu0 %v3609
    %v3677 = vpop.f32.mrb[0].mxu0
    %v3678 = vadd.f32 0.0, %v3677
    %v3679 = vpop.f32.mrb[0].mxu0
    %3680 = vdwg.mxu0
    %v3682 = vsel %vm118, %v3597, 0
    %3684 = vmatprep.subr.mxu0 0.0
    %3685 = vmatpush1.msra.mxu0 %v3599
    %3686 = vmatprep.subr.mxu0 0.0
    %3687 = vmatpush1.msra.mxu0 %v3600
    %3688 = vmatprep.subr.mxu0 0.0
    %3689 = vmatpush1.msra.mxu0 %v3601
    %3690 = vmatprep.subr.mxu0 0.0
    %3691 = vmatpush1.msra.mxu0 %v3602
    %3692 = vmatprep.subr.mxu0 0.0
    %3693 = vmatpush1.msra.mxu0 0.0
    %3694 = vmatprep.subr.mxu0 0.0
    %3695 = vmatpush1.msra.mxu0 0.0
    %3696 = vmatprep.subr.mxu0 0.0
    %3697 = vmatpush1.msra.mxu0 0.0
    %3698 = vmatprep.subr.mxu0 0.0
    %3699 = vmatpush1.msra.mxu0 0.0
    %3700 = vmatprep.subr.mxu0 0.0
    %3701 = vmatpush1.msra.mxu0 0.0
    %3702 = vmatprep.subr.mxu0 0.0
    %3703 = vmatpush1.msra.mxu0 0.0
    %3704 = vmatprep.subr.mxu0 0.0
    %3705 = vmatpush1.msra.mxu0 0.0
    %3706 = vmatprep.subr.mxu0 0.0
    %3707 = vmatpush1.msra.mxu0 0.0
    %3708 = vmatprep.subr.mxu0 0.0
    %3709 = vmatpush1.msra.mxu0 0.0
    %3710 = vmatprep.subr.mxu0 0.0
    %3711 = vmatpush1.msra.mxu0 0.0
    %3712 = vmatprep.subr.mxu0 0.0
    %3713 = vmatpush1.msra.mxu0 0.0
    %3714 = vmatprep.subr.mxu0 0.0
    %3715 = vmatpush1.msra.mxu0 0.0
    %3716 = vmatprep.subr.mxu0 0.0
    %3717 = vmatpush1.msra.mxu0 0.0
    %3718 = vmatprep.subr.mxu0 0.0
    %3719 = vmatpush1.msra.mxu0 0.0
    %3720 = vmatprep.subr.mxu0 0.0
    %3721 = vmatpush1.msra.mxu0 0.0
    %3722 = vmatprep.subr.mxu0 0.0
    %3723 = vmatpush1.msra.mxu0 0.0
    %3724 = vmatprep.subr.mxu0 0.0
    %3725 = vmatpush1.msra.mxu0 0.0
    %3726 = vmatprep.subr.mxu0 0.0
    %3727 = vmatpush1.msra.mxu0 0.0
    %3728 = vmatprep.subr.mxu0 0.0
    %3729 = vmatpush1.msra.mxu0 0.0
    %3730 = vmatprep.subr.mxu0 0.0
    %3731 = vmatpush1.msra.mxu0 0.0
    %3732 = vmatprep.subr.mxu0 0.0
    %3733 = vmatpush1.msra.mxu0 0.0
    %3734 = vmatprep.subr.mxu0 0.0
    %3735 = vmatpush1.msra.mxu0 0.0
    %3736 = vmatprep.subr.mxu0 0.0
    %3737 = vmatpush1.msra.mxu0 0.0
    %3738 = vmatprep.subr.mxu0 0.0
    %3739 = vmatpush1.msra.mxu0 0.0
    %3740 = vmatprep.subr.mxu0 0.0
    %3741 = vmatpush1.msra.mxu0 0.0
    %3742 = vmatprep.subr.mxu0 0.0
    %3743 = vmatpush1.msra.mxu0 0.0
    %3744 = vmatprep.subr.mxu0 0.0
    %3745 = vmatpush1.msra.mxu0 0.0
    %3746 = vmatprep.subr.mxu0 0.0
    %3747 = vmatpush1.msra.mxu0 0.0
    %3748 = vmatprep.mubr.f32.mxu0 0.0
    %3749 = vmatmul.mubr.f32.gmra.mrb[0].mxu0 %v3682
    %v3750 = vpop.f32.mrb[0].mxu0
    %v3751 = vadd.f32 %v3678, %v3750
    %v3752 = vpop.f32.mrb[0].mxu0
    %3753 = vdwg.mxu0
    %v3754 = vld [vmem:[%s777] sm:$0x1]
    %v3756 = vlaneseq
    %v3757 = vshrl.u32 %v3756, 7
    %v3758 = vsub.s32 0, %v3757
    %v3759 = vrot.slane %v3754, %v3758
    %v3761 = vadd.f32 %v3751, %v3759
    %v3762 = vtanh.pop %v3761
    %3763 = vst.msk [vmem:[%s624] sm:$0x3] %vm99, %v3762
    %v3764 = vld [vmem:[%s788] sm:$0xff]
    %v3765 = vld [vmem:[%s788 + $0x8] sm:$0xff]
    %v3766 = vld [vmem:[%s788 + $0x10] sm:$0xff]
    %v3767 = vld [vmem:[%s788 + $0x18] sm:$0xff]
    %v3768 = vld [vmem:[%s793] sm:$0x3]
    %v3769 = vld [vmem:[%s795] sm:$0xff]
    %v3770 = vld [vmem:[%s795 + $0x8] sm:$0xff]
    %v3771 = vld [vmem:[%s795 + $0x10] sm:$0xff]
    %v3772 = vld [vmem:[%s795 + $0x18] sm:$0xff]
    %v3774 = vsel %vm118, %v3768, 0
    %3776 = vmatprep.subr.mxu0 0.0
    %3777 = vmatpush1.msra.mxu0 %v3769
    %3778 = vmatprep.subr.mxu0 0.0
    %3779 = vmatpush1.msra.mxu0 %v3770
    %3780 = vmatprep.subr.mxu0 0.0
    %3781 = vmatpush1.msra.mxu0 %v3771
    %3782 = vmatprep.subr.mxu0 0.0
    %3783 = vmatpush1.msra.mxu0 %v3772
    %3784 = vmatprep.subr.mxu0 0.0
    %3785 = vmatpush1.msra.mxu0 0.0
    %3786 = vmatprep.subr.mxu0 0.0
    %3787 = vmatpush1.msra.mxu0 0.0
    %3788 = vmatprep.subr.mxu0 0.0
    %3789 = vmatpush1.msra.mxu0 0.0
    %3790 = vmatprep.subr.mxu0 0.0
    %3791 = vmatpush1.msra.mxu0 0.0
    %3792 = vmatprep.subr.mxu0 0.0
    %3793 = vmatpush1.msra.mxu0 0.0
    %3794 = vmatprep.subr.mxu0 0.0
    %3795 = vmatpush1.msra.mxu0 0.0
    %3796 = vmatprep.subr.mxu0 0.0
    %3797 = vmatpush1.msra.mxu0 0.0
    %3798 = vmatprep.subr.mxu0 0.0
    %3799 = vmatpush1.msra.mxu0 0.0
    %3800 = vmatprep.subr.mxu0 0.0
    %3801 = vmatpush1.msra.mxu0 0.0
    %3802 = vmatprep.subr.mxu0 0.0
    %3803 = vmatpush1.msra.mxu0 0.0
    %3804 = vmatprep.subr.mxu0 0.0
    %3805 = vmatpush1.msra.mxu0 0.0
    %3806 = vmatprep.subr.mxu0 0.0
    %3807 = vmatpush1.msra.mxu0 0.0
    %3808 = vmatprep.subr.mxu0 0.0
    %3809 = vmatpush1.msra.mxu0 0.0
    %3810 = vmatprep.subr.mxu0 0.0
    %3811 = vmatpush1.msra.mxu0 0.0
    %3812 = vmatprep.subr.mxu0 0.0
    %3813 = vmatpush1.msra.mxu0 0.0
    %3814 = vmatprep.subr.mxu0 0.0
    %3815 = vmatpush1.msra.mxu0 0.0
    %3816 = vmatprep.subr.mxu0 0.0
    %3817 = vmatpush1.msra.mxu0 0.0
    %3818 = vmatprep.subr.mxu0 0.0
    %3819 = vmatpush1.msra.mxu0 0.0
    %3820 = vmatprep.subr.mxu0 0.0
    %3821 = vmatpush1.msra.mxu0 0.0
    %3822 = vmatprep.subr.mxu0 0.0
    %3823 = vmatpush1.msra.mxu0 0.0
    %3824 = vmatprep.subr.mxu0 0.0
    %3825 = vmatpush1.msra.mxu0 0.0
    %3826 = vmatprep.subr.mxu0 0.0
    %3827 = vmatpush1.msra.mxu0 0.0
    %3828 = vmatprep.subr.mxu0 0.0
    %3829 = vmatpush1.msra.mxu0 0.0
    %3830 = vmatprep.subr.mxu0 0.0
    %3831 = vmatpush1.msra.mxu0 0.0
    %3832 = vmatprep.subr.mxu0 0.0
    %3833 = vmatpush1.msra.mxu0 0.0
    %3834 = vmatprep.subr.mxu0 0.0
    %3835 = vmatpush1.msra.mxu0 0.0
    %3836 = vmatprep.subr.mxu0 0.0
    %3837 = vmatpush1.msra.mxu0 0.0
    %3838 = vmatprep.subr.mxu0 0.0
    %3839 = vmatpush1.msra.mxu0 0.0
    %3840 = vmatprep.mubr.f32.mxu0 0.0
    %3841 = vmatmul.mubr.f32.gmra.mrb[0].mxu0 %v3774
    %v3842 = vpop.f32.mrb[0].mxu0
    %v3843 = vadd.f32 0.0, %v3842
    %v3844 = vpop.f32.mrb[0].mxu0
    %3845 = vdwg.mxu0
    %v3847 = vsel %vm118, %v3762, 0
    %3849 = vmatprep.subr.mxu0 0.0
    %3850 = vmatpush1.msra.mxu0 %v3764
    %3851 = vmatprep.subr.mxu0 0.0
    %3852 = vmatpush1.msra.mxu0 %v3765
    %3853 = vmatprep.subr.mxu0 0.0
    %3854 = vmatpush1.msra.mxu0 %v3766
    %3855 = vmatprep.subr.mxu0 0.0
    %3856 = vmatpush1.msra.mxu0 %v3767
    %3857 = vmatprep.subr.mxu0 0.0
    %3858 = vmatpush1.msra.mxu0 0.0
    %3859 = vmatprep.subr.mxu0 0.0
    %3860 = vmatpush1.msra.mxu0 0.0
    %3861 = vmatprep.subr.mxu0 0.0
    %3862 = vmatpush1.msra.mxu0 0.0
    %3863 = vmatprep.subr.mxu0 0.0
    %3864 = vmatpush1.msra.mxu0 0.0
    %3865 = vmatprep.subr.mxu0 0.0
    %3866 = vmatpush1.msra.mxu0 0.0
    %3867 = vmatprep.subr.mxu0 0.0
    %3868 = vmatpush1.msra.mxu0 0.0
    %3869 = vmatprep.subr.mxu0 0.0
    %3870 = vmatpush1.msra.mxu0 0.0
    %3871 = vmatprep.subr.mxu0 0.0
    %3872 = vmatpush1.msra.mxu0 0.0
    %3873 = vmatprep.subr.mxu0 0.0
    %3874 = vmatpush1.msra.mxu0 0.0
    %3875 = vmatprep.subr.mxu0 0.0
    %3876 = vmatpush1.msra.mxu0 0.0
    %3877 = vmatprep.subr.mxu0 0.0
    %3878 = vmatpush1.msra.mxu0 0.0
    %3879 = vmatprep.subr.mxu0 0.0
    %3880 = vmatpush1.msra.mxu0 0.0
    %3881 = vmatprep.subr.mxu0 0.0
    %3882 = vmatpush1.msra.mxu0 0.0
    %3883 = vmatprep.subr.mxu0 0.0
    %3884 = vmatpush1.msra.mxu0 0.0
    %3885 = vmatprep.subr.mxu0 0.0
    %3886 = vmatpush1.msra.mxu0 0.0
    %3887 = vmatprep.subr.mxu0 0.0
    %3888 = vmatpush1.msra.mxu0 0.0
    %3889 = vmatprep.subr.mxu0 0.0
    %3890 = vmatpush1.msra.mxu0 0.0
    %3891 = vmatprep.subr.mxu0 0.0
    %3892 = vmatpush1.msra.mxu0 0.0
    %3893 = vmatprep.subr.mxu0 0.0
    %3894 = vmatpush1.msra.mxu0 0.0
    %3895 = vmatprep.subr.mxu0 0.0
    %3896 = vmatpush1.msra.mxu0 0.0
    %3897 = vmatprep.subr.mxu0 0.0
    %3898 = vmatpush1.msra.mxu0 0.0
    %3899 = vmatprep.subr.mxu0 0.0
    %3900 = vmatpush1.msra.mxu0 0.0
    %3901 = vmatprep.subr.mxu0 0.0
    %3902 = vmatpush1.msra.mxu0 0.0
    %3903 = vmatprep.subr.mxu0 0.0
    %3904 = vmatpush1.msra.mxu0 0.0
    %3905 = vmatprep.subr.mxu0 0.0
    %3906 = vmatpush1.msra.mxu0 0.0
    %3907 = vmatprep.subr.mxu0 0.0
    %3908 = vmatpush1.msra.mxu0 0.0
    %3909 = vmatprep.subr.mxu0 0.0
    %3910 = vmatpush1.msra.mxu0 0.0
    %3911 = vmatprep.subr.mxu0 0.0
    %3912 = vmatpush1.msra.mxu0 0.0
    %3913 = vmatprep.mubr.f32.mxu0 0.0
    %3914 = vmatmul.mubr.f32.gmra.mrb[0].mxu0 %v3847
    %v3915 = vpop.f32.mrb[0].mxu0
    %v3916 = vadd.f32 %v3843, %v3915
    %v3917 = vpop.f32.mrb[0].mxu0
    %3918 = vdwg.mxu0
    %v3919 = vld [vmem:[%s946] sm:$0x1]
    %v3921 = vlaneseq
    %v3922 = vshrl.u32 %v3921, 7
    %v3923 = vsub.s32 0, %v3922
    %v3924 = vrot.slane %v3919, %v3923
    %v3926 = vadd.f32 %v3916, %v3924
    %v3927 = vtanh.pop %v3926
    %3928 = vst.msk [vmem:[%s793] sm:$0x3] %vm99, %v3927
    %3929 = vst.msk [vmem:[#allocation3 + $0x8] sm:$0x3] %vm99, %v3927
    %v3930 = vld [vmem:[#allocation2 + $0xa] sm:$0x3]
    %v3931 = vld [vmem:[#allocation4] sm:$0x3]
    %v3932 = vld [vmem:[#allocation8] sm:$0xff]
    %v3933 = vld [vmem:[#allocation8 + $0x8] sm:$0xff]
    %v3934 = vld [vmem:[#allocation8 + $0x10] sm:$0xff]
    %v3935 = vld [vmem:[#allocation8 + $0x18] sm:$0xff]
    %v3937 = vsel %vm118, %v3931, 0
    %3939 = vmatprep.subr.mxu0 0.0
    %3940 = vmatpush1.msra.mxu0 %v3932
    %3941 = vmatprep.subr.mxu0 0.0
    %3942 = vmatpush1.msra.mxu0 %v3933
    %3943 = vmatprep.subr.mxu0 0.0
    %3944 = vmatpush1.msra.mxu0 %v3934
    %3945 = vmatprep.subr.mxu0 0.0
    %3946 = vmatpush1.msra.mxu0 %v3935
    %3947 = vmatprep.subr.mxu0 0.0
    %3948 = vmatpush1.msra.mxu0 0.0
    %3949 = vmatprep.subr.mxu0 0.0
    %3950 = vmatpush1.msra.mxu0 0.0
    %3951 = vmatprep.subr.mxu0 0.0
    %3952 = vmatpush1.msra.mxu0 0.0
    %3953 = vmatprep.subr.mxu0 0.0
    %3954 = vmatpush1.msra.mxu0 0.0
    %3955 = vmatprep.subr.mxu0 0.0
    %3956 = vmatpush1.msra.mxu0 0.0
    %3957 = vmatprep.subr.mxu0 0.0
    %3958 = vmatpush1.msra.mxu0 0.0
    %3959 = vmatprep.subr.mxu0 0.0
    %3960 = vmatpush1.msra.mxu0 0.0
    %3961 = vmatprep.subr.mxu0 0.0
    %3962 = vmatpush1.msra.mxu0 0.0
    %3963 = vmatprep.subr.mxu0 0.0
    %3964 = vmatpush1.msra.mxu0 0.0
    %3965 = vmatprep.subr.mxu0 0.0
    %3966 = vmatpush1.msra.mxu0 0.0
    %3967 = vmatprep.subr.mxu0 0.0
    %3968 = vmatpush1.msra.mxu0 0.0
    %3969 = vmatprep.subr.mxu0 0.0
    %3970 = vmatpush1.msra.mxu0 0.0
    %3971 = vmatprep.subr.mxu0 0.0
    %3972 = vmatpush1.msra.mxu0 0.0
    %3973 = vmatprep.subr.mxu0 0.0
    %3974 = vmatpush1.msra.mxu0 0.0
    %3975 = vmatprep.subr.mxu0 0.0
    %3976 = vmatpush1.msra.mxu0 0.0
    %3977 = vmatprep.subr.mxu0 0.0
    %3978 = vmatpush1.msra.mxu0 0.0
    %3979 = vmatprep.subr.mxu0 0.0
    %3980 = vmatpush1.msra.mxu0 0.0
    %3981 = vmatprep.subr.mxu0 0.0
    %3982 = vmatpush1.msra.mxu0 0.0
    %3983 = vmatprep.subr.mxu0 0.0
    %3984 = vmatpush1.msra.mxu0 0.0
    %3985 = vmatprep.subr.mxu0 0.0
    %3986 = vmatpush1.msra.mxu0 0.0
    %3987 = vmatprep.subr.mxu0 0.0
    %3988 = vmatpush1.msra.mxu0 0.0
    %3989 = vmatprep.subr.mxu0 0.0
    %3990 = vmatpush1.msra.mxu0 0.0
    %3991 = vmatprep.subr.mxu0 0.0
    %3992 = vmatpush1.msra.mxu0 0.0
    %3993 = vmatprep.subr.mxu0 0.0
    %3994 = vmatpush1.msra.mxu0 0.0
    %3995 = vmatprep.subr.mxu0 0.0
    %3996 = vmatpush1.msra.mxu0 0.0
    %3997 = vmatprep.subr.mxu0 0.0
    %3998 = vmatpush1.msra.mxu0 0.0
    %3999 = vmatprep.subr.mxu0 0.0
    %4000 = vmatpush1.msra.mxu0 0.0
    %4001 = vmatprep.subr.mxu0 0.0
    %4002 = vmatpush1.msra.mxu0 0.0
    %4003 = vmatprep.mubr.f32.mxu0 0.0
    %4004 = vmatmul.mubr.f32.gmra.mrb[0].mxu0 %v3937
    %v4005 = vpop.f32.mrb[0].mxu0
    %v4006 = vadd.f32 0.0, %v4005
    %v4007 = vpop.f32.mrb[0].mxu0
    %4008 = vdwg.mxu0
    %v4009 = vadd.f32 %v3930, %v4006
    %v4010 = vtanh.pop %v4009
    %4011 = vst.msk [vmem:[#allocation4] sm:$0x3] %vm99, %v4010
    %v4012 = vld [vmem:[#allocation10] sm:$0xff]
    %v4013 = vld [vmem:[#allocation10 + $0x8] sm:$0xff]
    %v4014 = vld [vmem:[#allocation10 + $0x10] sm:$0xff]
    %v4015 = vld [vmem:[#allocation10 + $0x18] sm:$0xff]
    %v4016 = vld [vmem:[%s288] sm:$0x3]
    %v4017 = vld [vmem:[#allocation11] sm:$0xff]
    %v4018 = vld [vmem:[#allocation11 + $0x8] sm:$0xff]
    %v4019 = vld [vmem:[#allocation11 + $0x10] sm:$0xff]
    %v4020 = vld [vmem:[#allocation11 + $0x18] sm:$0xff]
    %v4022 = vsel %vm118, %v4016, 0
    %4024 = vmatprep.subr.mxu0 0.0
    %4025 = vmatpush1.msra.mxu0 %v4017
    %4026 = vmatprep.subr.mxu0 0.0
    %4027 = vmatpush1.msra.mxu0 %v4018
    %4028 = vmatprep.subr.mxu0 0.0
    %4029 = vmatpush1.msra.mxu0 %v4019
    %4030 = vmatprep.subr.mxu0 0.0
    %4031 = vmatpush1.msra.mxu0 %v4020
    %4032 = vmatprep.subr.mxu0 0.0
    %4033 = vmatpush1.msra.mxu0 0.0
    %4034 = vmatprep.subr.mxu0 0.0
    %4035 = vmatpush1.msra.mxu0 0.0
    %4036 = vmatprep.subr.mxu0 0.0
    %4037 = vmatpush1.msra.mxu0 0.0
    %4038 = vmatprep.subr.mxu0 0.0
    %4039 = vmatpush1.msra.mxu0 0.0
    %4040 = vmatprep.subr.mxu0 0.0
    %4041 = vmatpush1.msra.mxu0 0.0
    %4042 = vmatprep.subr.mxu0 0.0
    %4043 = vmatpush1.msra.mxu0 0.0
    %4044 = vmatprep.subr.mxu0 0.0
    %4045 = vmatpush1.msra.mxu0 0.0
    %4046 = vmatprep.subr.mxu0 0.0
    %4047 = vmatpush1.msra.mxu0 0.0
    %4048 = vmatprep.subr.mxu0 0.0
    %4049 = vmatpush1.msra.mxu0 0.0
    %4050 = vmatprep.subr.mxu0 0.0
    %4051 = vmatpush1.msra.mxu0 0.0
    %4052 = vmatprep.subr.mxu0 0.0
    %4053 = vmatpush1.msra.mxu0 0.0
    %4054 = vmatprep.subr.mxu0 0.0
    %4055 = vmatpush1.msra.mxu0 0.0
    %4056 = vmatprep.subr.mxu0 0.0
    %4057 = vmatpush1.msra.mxu0 0.0
    %4058 = vmatprep.subr.mxu0 0.0
    %4059 = vmatpush1.msra.mxu0 0.0
    %4060 = vmatprep.subr.mxu0 0.0
    %4061 = vmatpush1.msra.mxu0 0.0
    %4062 = vmatprep.subr.mxu0 0.0
    %4063 = vmatpush1.msra.mxu0 0.0
    %4064 = vmatprep.subr.mxu0 0.0
    %4065 = vmatpush1.msra.mxu0 0.0
    %4066 = vmatprep.subr.mxu0 0.0
    %4067 = vmatpush1.msra.mxu0 0.0
    %4068 = vmatprep.subr.mxu0 0.0
    %4069 = vmatpush1.msra.mxu0 0.0
    %4070 = vmatprep.subr.mxu0 0.0
    %4071 = vmatpush1.msra.mxu0 0.0
    %4072 = vmatprep.subr.mxu0 0.0
    %4073 = vmatpush1.msra.mxu0 0.0
    %4074 = vmatprep.subr.mxu0 0.0
    %4075 = vmatpush1.msra.mxu0 0.0
    %4076 = vmatprep.subr.mxu0 0.0
    %4077 = vmatpush1.msra.mxu0 0.0
    %4078 = vmatprep.subr.mxu0 0.0
    %4079 = vmatpush1.msra.mxu0 0.0
    %4080 = vmatprep.subr.mxu0 0.0
    %4081 = vmatpush1.msra.mxu0 0.0
    %4082 = vmatprep.subr.mxu0 0.0
    %4083 = vmatpush1.msra.mxu0 0.0
    %4084 = vmatprep.subr.mxu0 0.0
    %4085 = vmatpush1.msra.mxu0 0.0
    %4086 = vmatprep.subr.mxu0 0.0
    %4087 = vmatpush1.msra.mxu0 0.0
    %4088 = vmatprep.mubr.f32.mxu0 0.0
    %4089 = vmatmul.mubr.f32.gmra.mrb[0].mxu0 %v4022
    %v4090 = vpop.f32.mrb[0].mxu0
    %v4091 = vadd.f32 0.0, %v4090
    %v4092 = vpop.f32.mrb[0].mxu0
    %4093 = vdwg.mxu0
    %v4095 = vsel %vm118, %v4010, 0
    %4097 = vmatprep.subr.mxu0 0.0
    %4098 = vmatpush1.msra.mxu0 %v4012
    %4099 = vmatprep.subr.mxu0 0.0
    %4100 = vmatpush1.msra.mxu0 %v4013
    %4101 = vmatprep.subr.mxu0 0.0
    %4102 = vmatpush1.msra.mxu0 %v4014
    %4103 = vmatprep.subr.mxu0 0.0
    %4104 = vmatpush1.msra.mxu0 %v4015
    %4105 = vmatprep.subr.mxu0 0.0
    %4106 = vmatpush1.msra.mxu0 0.0
    %4107 = vmatprep.subr.mxu0 0.0
    %4108 = vmatpush1.msra.mxu0 0.0
    %4109 = vmatprep.subr.mxu0 0.0
    %4110 = vmatpush1.msra.mxu0 0.0
    %4111 = vmatprep.subr.mxu0 0.0
    %4112 = vmatpush1.msra.mxu0 0.0
    %4113 = vmatprep.subr.mxu0 0.0
    %4114 = vmatpush1.msra.mxu0 0.0
    %4115 = vmatprep.subr.mxu0 0.0
    %4116 = vmatpush1.msra.mxu0 0.0
    %4117 = vmatprep.subr.mxu0 0.0
    %4118 = vmatpush1.msra.mxu0 0.0
    %4119 = vmatprep.subr.mxu0 0.0
    %4120 = vmatpush1.msra.mxu0 0.0
    %4121 = vmatprep.subr.mxu0 0.0
    %4122 = vmatpush1.msra.mxu0 0.0
    %4123 = vmatprep.subr.mxu0 0.0
    %4124 = vmatpush1.msra.mxu0 0.0
    %4125 = vmatprep.subr.mxu0 0.0
    %4126 = vmatpush1.msra.mxu0 0.0
    %4127 = vmatprep.subr.mxu0 0.0
    %4128 = vmatpush1.msra.mxu0 0.0
    %4129 = vmatprep.subr.mxu0 0.0
    %4130 = vmatpush1.msra.mxu0 0.0
    %4131 = vmatprep.subr.mxu0 0.0
    %4132 = vmatpush1.msra.mxu0 0.0
    %4133 = vmatprep.subr.mxu0 0.0
    %4134 = vmatpush1.msra.mxu0 0.0
    %4135 = vmatprep.subr.mxu0 0.0
    %4136 = vmatpush1.msra.mxu0 0.0
    %4137 = vmatprep.subr.mxu0 0.0
    %4138 = vmatpush1.msra.mxu0 0.0
    %4139 = vmatprep.subr.mxu0 0.0
    %4140 = vmatpush1.msra.mxu0 0.0
    %4141 = vmatprep.subr.mxu0 0.0
    %4142 = vmatpush1.msra.mxu0 0.0
    %4143 = vmatprep.subr.mxu0 0.0
    %4144 = vmatpush1.msra.mxu0 0.0
    %4145 = vmatprep.subr.mxu0 0.0
    %4146 = vmatpush1.msra.mxu0 0.0
    %4147 = vmatprep.subr.mxu0 0.0
    %4148 = vmatpush1.msra.mxu0 0.0
    %4149 = vmatprep.subr.mxu0 0.0
    %4150 = vmatpush1.msra.mxu0 0.0
    %4151 = vmatprep.subr.mxu0 0.0
    %4152 = vmatpush1.msra.mxu0 0.0
    %4153 = vmatprep.subr.mxu0 0.0
    %4154 = vmatpush1.msra.mxu0 0.0
    %4155 = vmatprep.subr.mxu0 0.0
    %4156 = vmatpush1.msra.mxu0 0.0
    %4157 = vmatprep.subr.mxu0 0.0
    %4158 = vmatpush1.msra.mxu0 0.0
    %4159 = vmatprep.subr.mxu0 0.0
    %4160 = vmatpush1.msra.mxu0 0.0
    %4161 = vmatprep.mubr.f32.mxu0 0.0
    %4162 = vmatmul.mubr.f32.gmra.mrb[0].mxu0 %v4095
    %v4163 = vpop.f32.mrb[0].mxu0
    %v4164 = vadd.f32 %v4091, %v4163
    %v4165 = vpop.f32.mrb[0].mxu0
    %4166 = vdwg.mxu0
    %v4167 = vld [vmem:[%s7] sm:$0x1]
    %v4169 = vlaneseq
    %v4170 = vshrl.u32 %v4169, 7
    %v4171 = vsub.s32 0, %v4170
    %v4172 = vrot.slane %v4167, %v4171
    %v4174 = vadd.f32 %v4164, %v4172
    %v4175 = vtanh.pop %v4174
    %4176 = vst.msk [vmem:[%s288] sm:$0x3] %vm99, %v4175
    %v4177 = vld [vmem:[%s450] sm:$0xff]
    %v4178 = vld [vmem:[%s450 + $0x8] sm:$0xff]
    %v4179 = vld [vmem:[%s450 + $0x10] sm:$0xff]
    %v4180 = vld [vmem:[%s450 + $0x18] sm:$0xff]
    %v4181 = vld [vmem:[%s455] sm:$0x3]
    %v4182 = vld [vmem:[%s457] sm:$0xff]
    %v4183 = vld [vmem:[%s457 + $0x8] sm:$0xff]
    %v4184 = vld [vmem:[%s457 + $0x10] sm:$0xff]
    %v4185 = vld [vmem:[%s457 + $0x18] sm:$0xff]
    %v4187 = vsel %vm118, %v4181, 0
    %4189 = vmatprep.subr.mxu0 0.0
    %4190 = vmatpush1.msra.mxu0 %v4182
    %4191 = vmatprep.subr.mxu0 0.0
    %4192 = vmatpush1.msra.mxu0 %v4183
    %4193 = vmatprep.subr.mxu0 0.0
    %4194 = vmatpush1.msra.mxu0 %v4184
    %4195 = vmatprep.subr.mxu0 0.0
    %4196 = vmatpush1.msra.mxu0 %v4185
    %4197 = vmatprep.subr.mxu0 0.0
    %4198 = vmatpush1.msra.mxu0 0.0
    %4199 = vmatprep.subr.mxu0 0.0
    %4200 = vmatpush1.msra.mxu0 0.0
    %4201 = vmatprep.subr.mxu0 0.0
    %4202 = vmatpush1.msra.mxu0 0.0
    %4203 = vmatprep.subr.mxu0 0.0
    %4204 = vmatpush1.msra.mxu0 0.0
    %4205 = vmatprep.subr.mxu0 0.0
    %4206 = vmatpush1.msra.mxu0 0.0
    %4207 = vmatprep.subr.mxu0 0.0
    %4208 = vmatpush1.msra.mxu0 0.0
    %4209 = vmatprep.subr.mxu0 0.0
    %4210 = vmatpush1.msra.mxu0 0.0
    %4211 = vmatprep.subr.mxu0 0.0
    %4212 = vmatpush1.msra.mxu0 0.0
    %4213 = vmatprep.subr.mxu0 0.0
    %4214 = vmatpush1.msra.mxu0 0.0
    %4215 = vmatprep.subr.mxu0 0.0
    %4216 = vmatpush1.msra.mxu0 0.0
    %4217 = vmatprep.subr.mxu0 0.0
    %4218 = vmatpush1.msra.mxu0 0.0
    %4219 = vmatprep.subr.mxu0 0.0
    %4220 = vmatpush1.msra.mxu0 0.0
    %4221 = vmatprep.subr.mxu0 0.0
    %4222 = vmatpush1.msra.mxu0 0.0
    %4223 = vmatprep.subr.mxu0 0.0
    %4224 = vmatpush1.msra.mxu0 0.0
    %4225 = vmatprep.subr.mxu0 0.0
    %4226 = vmatpush1.msra.mxu0 0.0
    %4227 = vmatprep.subr.mxu0 0.0
    %4228 = vmatpush1.msra.mxu0 0.0
    %4229 = vmatprep.subr.mxu0 0.0
    %4230 = vmatpush1.msra.mxu0 0.0
    %4231 = vmatprep.subr.mxu0 0.0
    %4232 = vmatpush1.msra.mxu0 0.0
    %4233 = vmatprep.subr.mxu0 0.0
    %4234 = vmatpush1.msra.mxu0 0.0
    %4235 = vmatprep.subr.mxu0 0.0
    %4236 = vmatpush1.msra.mxu0 0.0
    %4237 = vmatprep.subr.mxu0 0.0
    %4238 = vmatpush1.msra.mxu0 0.0
    %4239 = vmatprep.subr.mxu0 0.0
    %4240 = vmatpush1.msra.mxu0 0.0
    %4241 = vmatprep.subr.mxu0 0.0
    %4242 = vmatpush1.msra.mxu0 0.0
    %4243 = vmatprep.subr.mxu0 0.0
    %4244 = vmatpush1.msra.mxu0 0.0
    %4245 = vmatprep.subr.mxu0 0.0
    %4246 = vmatpush1.msra.mxu0 0.0
    %4247 = vmatprep.subr.mxu0 0.0
    %4248 = vmatpush1.msra.mxu0 0.0
    %4249 = vmatprep.subr.mxu0 0.0
    %4250 = vmatpush1.msra.mxu0 0.0
    %4251 = vmatprep.subr.mxu0 0.0
    %4252 = vmatpush1.msra.mxu0 0.0
    %4253 = vmatprep.mubr.f32.mxu0 0.0
    %4254 = vmatmul.mubr.f32.gmra.mrb[0].mxu0 %v4187
    %v4255 = vpop.f32.mrb[0].mxu0
    %v4256 = vadd.f32 0.0, %v4255
    %v4257 = vpop.f32.mrb[0].mxu0
    %4258 = vdwg.mxu0
    %v4260 = vsel %vm118, %v4175, 0
    %4262 = vmatprep.subr.mxu0 0.0
    %4263 = vmatpush1.msra.mxu0 %v4177
    %4264 = vmatprep.subr.mxu0 0.0
    %4265 = vmatpush1.msra.mxu0 %v4178
    %4266 = vmatprep.subr.mxu0 0.0
    %4267 = vmatpush1.msra.mxu0 %v4179
    %4268 = vmatprep.subr.mxu0 0.0
    %4269 = vmatpush1.msra.mxu0 %v4180
    %4270 = vmatprep.subr.mxu0 0.0
    %4271 = vmatpush1.msra.mxu0 0.0
    %4272 = vmatprep.subr.mxu0 0.0
    %4273 = vmatpush1.msra.mxu0 0.0
    %4274 = vmatprep.subr.mxu0 0.0
    %4275 = vmatpush1.msra.mxu0 0.0
    %4276 = vmatprep.subr.mxu0 0.0
    %4277 = vmatpush1.msra.mxu0 0.0
    %4278 = vmatprep.subr.mxu0 0.0
    %4279 = vmatpush1.msra.mxu0 0.0
    %4280 = vmatprep.subr.mxu0 0.0
    %4281 = vmatpush1.msra.mxu0 0.0
    %4282 = vmatprep.subr.mxu0 0.0
    %4283 = vmatpush1.msra.mxu0 0.0
    %4284 = vmatprep.subr.mxu0 0.0
    %4285 = vmatpush1.msra.mxu0 0.0
    %4286 = vmatprep.subr.mxu0 0.0
    %4287 = vmatpush1.msra.mxu0 0.0
    %4288 = vmatprep.subr.mxu0 0.0
    %4289 = vmatpush1.msra.mxu0 0.0
    %4290 = vmatprep.subr.mxu0 0.0
    %4291 = vmatpush1.msra.mxu0 0.0
    %4292 = vmatprep.subr.mxu0 0.0
    %4293 = vmatpush1.msra.mxu0 0.0
    %4294 = vmatprep.subr.mxu0 0.0
    %4295 = vmatpush1.msra.mxu0 0.0
    %4296 = vmatprep.subr.mxu0 0.0
    %4297 = vmatpush1.msra.mxu0 0.0
    %4298 = vmatprep.subr.mxu0 0.0
    %4299 = vmatpush1.msra.mxu0 0.0
    %4300 = vmatprep.subr.mxu0 0.0
    %4301 = vmatpush1.msra.mxu0 0.0
    %4302 = vmatprep.subr.mxu0 0.0
    %4303 = vmatpush1.msra.mxu0 0.0
    %4304 = vmatprep.subr.mxu0 0.0
    %4305 = vmatpush1.msra.mxu0 0.0
    %4306 = vmatprep.subr.mxu0 0.0
    %4307 = vmatpush1.msra.mxu0 0.0
    %4308 = vmatprep.subr.mxu0 0.0
    %4309 = vmatpush1.msra.mxu0 0.0
    %4310 = vmatprep.subr.mxu0 0.0
    %4311 = vmatpush1.msra.mxu0 0.0
    %4312 = vmatprep.subr.mxu0 0.0
    %4313 = vmatpush1.msra.mxu0 0.0
    %4314 = vmatprep.subr.mxu0 0.0
    %4315 = vmatpush1.msra.mxu0 0.0
    %4316 = vmatprep.subr.mxu0 0.0
    %4317 = vmatpush1.msra.mxu0 0.0
    %4318 = vmatprep.subr.mxu0 0.0
    %4319 = vmatpush1.msra.mxu0 0.0
    %4320 = vmatprep.subr.mxu0 0.0
    %4321 = vmatpush1.msra.mxu0 0.0
    %4322 = vmatprep.subr.mxu0 0.0
    %4323 = vmatpush1.msra.mxu0 0.0
    %4324 = vmatprep.subr.mxu0 0.0
    %4325 = vmatpush1.msra.mxu0 0.0
    %4326 = vmatprep.mubr.f32.mxu0 0.0
    %4327 = vmatmul.mubr.f32.gmra.mrb[0].mxu0 %v4260
    %v4328 = vpop.f32.mrb[0].mxu0
    %v4329 = vadd.f32 %v4256, %v4328
    %v4330 = vpop.f32.mrb[0].mxu0
    %4331 = vdwg.mxu0
    %v4332 = vld [vmem:[%s608] sm:$0x1]
    %v4334 = vlaneseq
    %v4335 = vshrl.u32 %v4334, 7
    %v4336 = vsub.s32 0, %v4335
    %v4337 = vrot.slane %v4332, %v4336
    %v4339 = vadd.f32 %v4329, %v4337
    %v4340 = vtanh.pop %v4339
    %4341 = vst.msk [vmem:[%s455] sm:$0x3] %vm99, %v4340
    %v4342 = vld [vmem:[%s619] sm:$0xff]
    %v4343 = vld [vmem:[%s619 + $0x8] sm:$0xff]
    %v4344 = vld [vmem:[%s619 + $0x10] sm:$0xff]
    %v4345 = vld [vmem:[%s619 + $0x18] sm:$0xff]
    %v4346 = vld [vmem:[%s624] sm:$0x3]
    %v4347 = vld [vmem:[%s626] sm:$0xff]
    %v4348 = vld [vmem:[%s626 + $0x8] sm:$0xff]
    %v4349 = vld [vmem:[%s626 + $0x10] sm:$0xff]
    %v4350 = vld [vmem:[%s626 + $0x18] sm:$0xff]
    %v4352 = vsel %vm118, %v4346, 0
    %4354 = vmatprep.subr.mxu0 0.0
    %4355 = vmatpush1.msra.mxu0 %v4347
    %4356 = vmatprep.subr.mxu0 0.0
    %4357 = vmatpush1.msra.mxu0 %v4348
    %4358 = vmatprep.subr.mxu0 0.0
    %4359 = vmatpush1.msra.mxu0 %v4349
    %4360 = vmatprep.subr.mxu0 0.0
    %4361 = vmatpush1.msra.mxu0 %v4350
    %4362 = vmatprep.subr.mxu0 0.0
    %4363 = vmatpush1.msra.mxu0 0.0
    %4364 = vmatprep.subr.mxu0 0.0
    %4365 = vmatpush1.msra.mxu0 0.0
    %4366 = vmatprep.subr.mxu0 0.0
    %4367 = vmatpush1.msra.mxu0 0.0
    %4368 = vmatprep.subr.mxu0 0.0
    %4369 = vmatpush1.msra.mxu0 0.0
    %4370 = vmatprep.subr.mxu0 0.0
    %4371 = vmatpush1.msra.mxu0 0.0
    %4372 = vmatprep.subr.mxu0 0.0
    %4373 = vmatpush1.msra.mxu0 0.0
    %4374 = vmatprep.subr.mxu0 0.0
    %4375 = vmatpush1.msra.mxu0 0.0
    %4376 = vmatprep.subr.mxu0 0.0
    %4377 = vmatpush1.msra.mxu0 0.0
    %4378 = vmatprep.subr.mxu0 0.0
    %4379 = vmatpush1.msra.mxu0 0.0
    %4380 = vmatprep.subr.mxu0 0.0
    %4381 = vmatpush1.msra.mxu0 0.0
    %4382 = vmatprep.subr.mxu0 0.0
    %4383 = vmatpush1.msra.mxu0 0.0
    %4384 = vmatprep.subr.mxu0 0.0
    %4385 = vmatpush1.msra.mxu0 0.0
    %4386 = vmatprep.subr.mxu0 0.0
    %4387 = vmatpush1.msra.mxu0 0.0
    %4388 = vmatprep.subr.mxu0 0.0
    %4389 = vmatpush1.msra.mxu0 0.0
    %4390 = vmatprep.subr.mxu0 0.0
    %4391 = vmatpush1.msra.mxu0 0.0
    %4392 = vmatprep.subr.mxu0 0.0
    %4393 = vmatpush1.msra.mxu0 0.0
    %4394 = vmatprep.subr.mxu0 0.0
    %4395 = vmatpush1.msra.mxu0 0.0
    %4396 = vmatprep.subr.mxu0 0.0
    %4397 = vmatpush1.msra.mxu0 0.0
    %4398 = vmatprep.subr.mxu0 0.0
    %4399 = vmatpush1.msra.mxu0 0.0
    %4400 = vmatprep.subr.mxu0 0.0
    %4401 = vmatpush1.msra.mxu0 0.0
    %4402 = vmatprep.subr.mxu0 0.0
    %4403 = vmatpush1.msra.mxu0 0.0
    %4404 = vmatprep.subr.mxu0 0.0
    %4405 = vmatpush1.msra.mxu0 0.0
    %4406 = vmatprep.subr.mxu0 0.0
    %4407 = vmatpush1.msra.mxu0 0.0
    %4408 = vmatprep.subr.mxu0 0.0
    %4409 = vmatpush1.msra.mxu0 0.0
    %4410 = vmatprep.subr.mxu0 0.0
    %4411 = vmatpush1.msra.mxu0 0.0
    %4412 = vmatprep.subr.mxu0 0.0
    %4413 = vmatpush1.msra.mxu0 0.0
    %4414 = vmatprep.subr.mxu0 0.0
    %4415 = vmatpush1.msra.mxu0 0.0
    %4416 = vmatprep.subr.mxu0 0.0
    %4417 = vmatpush1.msra.mxu0 0.0
    %4418 = vmatprep.mubr.f32.mxu0 0.0
    %4419 = vmatmul.mubr.f32.gmra.mrb[0].mxu0 %v4352
    %v4420 = vpop.f32.mrb[0].mxu0
    %v4421 = vadd.f32 0.0, %v4420
    %v4422 = vpop.f32.mrb[0].mxu0
    %4423 = vdwg.mxu0
    %v4425 = vsel %vm118, %v4340, 0
    %4427 = vmatprep.subr.mxu0 0.0
    %4428 = vmatpush1.msra.mxu0 %v4342
    %4429 = vmatprep.subr.mxu0 0.0
    %4430 = vmatpush1.msra.mxu0 %v4343
    %4431 = vmatprep.subr.mxu0 0.0
    %4432 = vmatpush1.msra.mxu0 %v4344
    %4433 = vmatprep.subr.mxu0 0.0
    %4434 = vmatpush1.msra.mxu0 %v4345
    %4435 = vmatprep.subr.mxu0 0.0
    %4436 = vmatpush1.msra.mxu0 0.0
    %4437 = vmatprep.subr.mxu0 0.0
    %4438 = vmatpush1.msra.mxu0 0.0
    %4439 = vmatprep.subr.mxu0 0.0
    %4440 = vmatpush1.msra.mxu0 0.0
    %4441 = vmatprep.subr.mxu0 0.0
    %4442 = vmatpush1.msra.mxu0 0.0
    %4443 = vmatprep.subr.mxu0 0.0
    %4444 = vmatpush1.msra.mxu0 0.0
    %4445 = vmatprep.subr.mxu0 0.0
    %4446 = vmatpush1.msra.mxu0 0.0
    %4447 = vmatprep.subr.mxu0 0.0
    %4448 = vmatpush1.msra.mxu0 0.0
    %4449 = vmatprep.subr.mxu0 0.0
    %4450 = vmatpush1.msra.mxu0 0.0
    %4451 = vmatprep.subr.mxu0 0.0
    %4452 = vmatpush1.msra.mxu0 0.0
    %4453 = vmatprep.subr.mxu0 0.0
    %4454 = vmatpush1.msra.mxu0 0.0
    %4455 = vmatprep.subr.mxu0 0.0
    %4456 = vmatpush1.msra.mxu0 0.0
    %4457 = vmatprep.subr.mxu0 0.0
    %4458 = vmatpush1.msra.mxu0 0.0
    %4459 = vmatprep.subr.mxu0 0.0
    %4460 = vmatpush1.msra.mxu0 0.0
    %4461 = vmatprep.subr.mxu0 0.0
    %4462 = vmatpush1.msra.mxu0 0.0
    %4463 = vmatprep.subr.mxu0 0.0
    %4464 = vmatpush1.msra.mxu0 0.0
    %4465 = vmatprep.subr.mxu0 0.0
    %4466 = vmatpush1.msra.mxu0 0.0
    %4467 = vmatprep.subr.mxu0 0.0
    %4468 = vmatpush1.msra.mxu0 0.0
    %4469 = vmatprep.subr.mxu0 0.0
    %4470 = vmatpush1.msra.mxu0 0.0
    %4471 = vmatprep.subr.mxu0 0.0
    %4472 = vmatpush1.msra.mxu0 0.0
    %4473 = vmatprep.subr.mxu0 0.0
    %4474 = vmatpush1.msra.mxu0 0.0
    %4475 = vmatprep.subr.mxu0 0.0
    %4476 = vmatpush1.msra.mxu0 0.0
    %4477 = vmatprep.subr.mxu0 0.0
    %4478 = vmatpush1.msra.mxu0 0.0
    %4479 = vmatprep.subr.mxu0 0.0
    %4480 = vmatpush1.msra.mxu0 0.0
    %4481 = vmatprep.subr.mxu0 0.0
    %4482 = vmatpush1.msra.mxu0 0.0
    %4483 = vmatprep.subr.mxu0 0.0
    %4484 = vmatpush1.msra.mxu0 0.0
    %4485 = vmatprep.subr.mxu0 0.0
    %4486 = vmatpush1.msra.mxu0 0.0
    %4487 = vmatprep.subr.mxu0 0.0
    %4488 = vmatpush1.msra.mxu0 0.0
    %4489 = vmatprep.subr.mxu0 0.0
    %4490 = vmatpush1.msra.mxu0 0.0
    %4491 = vmatprep.mubr.f32.mxu0 0.0
    %4492 = vmatmul.mubr.f32.gmra.mrb[0].mxu0 %v4425
    %v4493 = vpop.f32.mrb[0].mxu0
    %v4494 = vadd.f32 %v4421, %v4493
    %v4495 = vpop.f32.mrb[0].mxu0
    %4496 = vdwg.mxu0
    %v4497 = vld [vmem:[%s777] sm:$0x1]
    %v4499 = vlaneseq
    %v4500 = vshrl.u32 %v4499, 7
    %v4501 = vsub.s32 0, %v4500
    %v4502 = vrot.slane %v4497, %v4501
    %v4504 = vadd.f32 %v4494, %v4502
    %v4505 = vtanh.pop %v4504
    %4506 = vst.msk [vmem:[%s624] sm:$0x3] %vm99, %v4505
    %v4507 = vld [vmem:[%s788] sm:$0xff]
    %v4508 = vld [vmem:[%s788 + $0x8] sm:$0xff]
    %v4509 = vld [vmem:[%s788 + $0x10] sm:$0xff]
    %v4510 = vld [vmem:[%s788 + $0x18] sm:$0xff]
    %v4511 = vld [vmem:[%s793] sm:$0x3]
    %v4512 = vld [vmem:[%s795] sm:$0xff]
    %v4513 = vld [vmem:[%s795 + $0x8] sm:$0xff]
    %v4514 = vld [vmem:[%s795 + $0x10] sm:$0xff]
    %v4515 = vld [vmem:[%s795 + $0x18] sm:$0xff]
    %v4517 = vsel %vm118, %v4511, 0
    %4519 = vmatprep.subr.mxu0 0.0
    %4520 = vmatpush1.msra.mxu0 %v4512
    %4521 = vmatprep.subr.mxu0 0.0
    %4522 = vmatpush1.msra.mxu0 %v4513
    %4523 = vmatprep.subr.mxu0 0.0
    %4524 = vmatpush1.msra.mxu0 %v4514
    %4525 = vmatprep.subr.mxu0 0.0
    %4526 = vmatpush1.msra.mxu0 %v4515
    %4527 = vmatprep.subr.mxu0 0.0
    %4528 = vmatpush1.msra.mxu0 0.0
    %4529 = vmatprep.subr.mxu0 0.0
    %4530 = vmatpush1.msra.mxu0 0.0
    %4531 = vmatprep.subr.mxu0 0.0
    %4532 = vmatpush1.msra.mxu0 0.0
    %4533 = vmatprep.subr.mxu0 0.0
    %4534 = vmatpush1.msra.mxu0 0.0
    %4535 = vmatprep.subr.mxu0 0.0
    %4536 = vmatpush1.msra.mxu0 0.0
    %4537 = vmatprep.subr.mxu0 0.0
    %4538 = vmatpush1.msra.mxu0 0.0
    %4539 = vmatprep.subr.mxu0 0.0
    %4540 = vmatpush1.msra.mxu0 0.0
    %4541 = vmatprep.subr.mxu0 0.0
    %4542 = vmatpush1.msra.mxu0 0.0
    %4543 = vmatprep.subr.mxu0 0.0
    %4544 = vmatpush1.msra.mxu0 0.0
    %4545 = vmatprep.subr.mxu0 0.0
    %4546 = vmatpush1.msra.mxu0 0.0
    %4547 = vmatprep.subr.mxu0 0.0
    %4548 = vmatpush1.msra.mxu0 0.0
    %4549 = vmatprep.subr.mxu0 0.0
    %4550 = vmatpush1.msra.mxu0 0.0
    %4551 = vmatprep.subr.mxu0 0.0
    %4552 = vmatpush1.msra.mxu0 0.0
    %4553 = vmatprep.subr.mxu0 0.0
    %4554 = vmatpush1.msra.mxu0 0.0
    %4555 = vmatprep.subr.mxu0 0.0
    %4556 = vmatpush1.msra.mxu0 0.0
    %4557 = vmatprep.subr.mxu0 0.0
    %4558 = vmatpush1.msra.mxu0 0.0
    %4559 = vmatprep.subr.mxu0 0.0
    %4560 = vmatpush1.msra.mxu0 0.0
    %4561 = vmatprep.subr.mxu0 0.0
    %4562 = vmatpush1.msra.mxu0 0.0
    %4563 = vmatprep.subr.mxu0 0.0
    %4564 = vmatpush1.msra.mxu0 0.0
    %4565 = vmatprep.subr.mxu0 0.0
    %4566 = vmatpush1.msra.mxu0 0.0
    %4567 = vmatprep.subr.mxu0 0.0
    %4568 = vmatpush1.msra.mxu0 0.0
    %4569 = vmatprep.subr.mxu0 0.0
    %4570 = vmatpush1.msra.mxu0 0.0
    %4571 = vmatprep.subr.mxu0 0.0
    %4572 = vmatpush1.msra.mxu0 0.0
    %4573 = vmatprep.subr.mxu0 0.0
    %4574 = vmatpush1.msra.mxu0 0.0
    %4575 = vmatprep.subr.mxu0 0.0
    %4576 = vmatpush1.msra.mxu0 0.0
    %4577 = vmatprep.subr.mxu0 0.0
    %4578 = vmatpush1.msra.mxu0 0.0
    %4579 = vmatprep.subr.mxu0 0.0
    %4580 = vmatpush1.msra.mxu0 0.0
    %4581 = vmatprep.subr.mxu0 0.0
    %4582 = vmatpush1.msra.mxu0 0.0
    %4583 = vmatprep.mubr.f32.mxu0 0.0
    %4584 = vmatmul.mubr.f32.gmra.mrb[0].mxu0 %v4517
    %v4585 = vpop.f32.mrb[0].mxu0
    %v4586 = vadd.f32 0.0, %v4585
    %v4587 = vpop.f32.mrb[0].mxu0
    %4588 = vdwg.mxu0
    %v4590 = vsel %vm118, %v4505, 0
    %4592 = vmatprep.subr.mxu0 0.0
    %4593 = vmatpush1.msra.mxu0 %v4507
    %4594 = vmatprep.subr.mxu0 0.0
    %4595 = vmatpush1.msra.mxu0 %v4508
    %4596 = vmatprep.subr.mxu0 0.0
    %4597 = vmatpush1.msra.mxu0 %v4509
    %4598 = vmatprep.subr.mxu0 0.0
    %4599 = vmatpush1.msra.mxu0 %v4510
    %4600 = vmatprep.subr.mxu0 0.0
    %4601 = vmatpush1.msra.mxu0 0.0
    %4602 = vmatprep.subr.mxu0 0.0
    %4603 = vmatpush1.msra.mxu0 0.0
    %4604 = vmatprep.subr.mxu0 0.0
    %4605 = vmatpush1.msra.mxu0 0.0
    %4606 = vmatprep.subr.mxu0 0.0
    %4607 = vmatpush1.msra.mxu0 0.0
    %4608 = vmatprep.subr.mxu0 0.0
    %4609 = vmatpush1.msra.mxu0 0.0
    %4610 = vmatprep.subr.mxu0 0.0
    %4611 = vmatpush1.msra.mxu0 0.0
    %4612 = vmatprep.subr.mxu0 0.0
    %4613 = vmatpush1.msra.mxu0 0.0
    %4614 = vmatprep.subr.mxu0 0.0
    %4615 = vmatpush1.msra.mxu0 0.0
    %4616 = vmatprep.subr.mxu0 0.0
    %4617 = vmatpush1.msra.mxu0 0.0
    %4618 = vmatprep.subr.mxu0 0.0
    %4619 = vmatpush1.msra.mxu0 0.0
    %4620 = vmatprep.subr.mxu0 0.0
    %4621 = vmatpush1.msra.mxu0 0.0
    %4622 = vmatprep.subr.mxu0 0.0
    %4623 = vmatpush1.msra.mxu0 0.0
    %4624 = vmatprep.subr.mxu0 0.0
    %4625 = vmatpush1.msra.mxu0 0.0
    %4626 = vmatprep.subr.mxu0 0.0
    %4627 = vmatpush1.msra.mxu0 0.0
    %4628 = vmatprep.subr.mxu0 0.0
    %4629 = vmatpush1.msra.mxu0 0.0
    %4630 = vmatprep.subr.mxu0 0.0
    %4631 = vmatpush1.msra.mxu0 0.0
    %4632 = vmatprep.subr.mxu0 0.0
    %4633 = vmatpush1.msra.mxu0 0.0
    %4634 = vmatprep.subr.mxu0 0.0
    %4635 = vmatpush1.msra.mxu0 0.0
    %4636 = vmatprep.subr.mxu0 0.0
    %4637 = vmatpush1.msra.mxu0 0.0
    %4638 = vmatprep.subr.mxu0 0.0
    %4639 = vmatpush1.msra.mxu0 0.0
    %4640 = vmatprep.subr.mxu0 0.0
    %4641 = vmatpush1.msra.mxu0 0.0
    %4642 = vmatprep.subr.mxu0 0.0
    %4643 = vmatpush1.msra.mxu0 0.0
    %4644 = vmatprep.subr.mxu0 0.0
    %4645 = vmatpush1.msra.mxu0 0.0
    %4646 = vmatprep.subr.mxu0 0.0
    %4647 = vmatpush1.msra.mxu0 0.0
    %4648 = vmatprep.subr.mxu0 0.0
    %4649 = vmatpush1.msra.mxu0 0.0
    %4650 = vmatprep.subr.mxu0 0.0
    %4651 = vmatpush1.msra.mxu0 0.0
    %4652 = vmatprep.subr.mxu0 0.0
    %4653 = vmatpush1.msra.mxu0 0.0
    %4654 = vmatprep.subr.mxu0 0.0
    %4655 = vmatpush1.msra.mxu0 0.0
    %4656 = vmatprep.mubr.f32.mxu0 0.0
    %4657 = vmatmul.mubr.f32.gmra.mrb[0].mxu0 %v4590
    %v4658 = vpop.f32.mrb[0].mxu0
    %v4659 = vadd.f32 %v4586, %v4658
    %v4660 = vpop.f32.mrb[0].mxu0
    %4661 = vdwg.mxu0
    %v4662 = vld [vmem:[%s946] sm:$0x1]
    %v4664 = vlaneseq
    %v4665 = vshrl.u32 %v4664, 7
    %v4666 = vsub.s32 0, %v4665
    %v4667 = vrot.slane %v4662, %v4666
    %v4669 = vadd.f32 %v4659, %v4667
    %v4670 = vtanh.pop %v4669
    %4671 = vst.msk [vmem:[%s793] sm:$0x3] %vm99, %v4670
    %4672 = vst.msk [vmem:[#allocation3 + $0xa] sm:$0x3] %vm99, %v4670
    %v4673 = vld [vmem:[#allocation2 + $0xc] sm:$0x3]
    %v4674 = vld [vmem:[#allocation4] sm:$0x3]
    %v4675 = vld [vmem:[#allocation8] sm:$0xff]
    %v4676 = vld [vmem:[#allocation8 + $0x8] sm:$0xff]
    %v4677 = vld [vmem:[#allocation8 + $0x10] sm:$0xff]
    %v4678 = vld [vmem:[#allocation8 + $0x18] sm:$0xff]
    %v4680 = vsel %vm118, %v4674, 0
    %4682 = vmatprep.subr.mxu0 0.0
    %4683 = vmatpush1.msra.mxu0 %v4675
    %4684 = vmatprep.subr.mxu0 0.0
    %4685 = vmatpush1.msra.mxu0 %v4676
    %4686 = vmatprep.subr.mxu0 0.0
    %4687 = vmatpush1.msra.mxu0 %v4677
    %4688 = vmatprep.subr.mxu0 0.0
    %4689 = vmatpush1.msra.mxu0 %v4678
    %4690 = vmatprep.subr.mxu0 0.0
    %4691 = vmatpush1.msra.mxu0 0.0
    %4692 = vmatprep.subr.mxu0 0.0
    %4693 = vmatpush1.msra.mxu0 0.0
    %4694 = vmatprep.subr.mxu0 0.0
    %4695 = vmatpush1.msra.mxu0 0.0
    %4696 = vmatprep.subr.mxu0 0.0
    %4697 = vmatpush1.msra.mxu0 0.0
    %4698 = vmatprep.subr.mxu0 0.0
    %4699 = vmatpush1.msra.mxu0 0.0
    %4700 = vmatprep.subr.mxu0 0.0
    %4701 = vmatpush1.msra.mxu0 0.0
    %4702 = vmatprep.subr.mxu0 0.0
    %4703 = vmatpush1.msra.mxu0 0.0
    %4704 = vmatprep.subr.mxu0 0.0
    %4705 = vmatpush1.msra.mxu0 0.0
    %4706 = vmatprep.subr.mxu0 0.0
    %4707 = vmatpush1.msra.mxu0 0.0
    %4708 = vmatprep.subr.mxu0 0.0
    %4709 = vmatpush1.msra.mxu0 0.0
    %4710 = vmatprep.subr.mxu0 0.0
    %4711 = vmatpush1.msra.mxu0 0.0
    %4712 = vmatprep.subr.mxu0 0.0
    %4713 = vmatpush1.msra.mxu0 0.0
    %4714 = vmatprep.subr.mxu0 0.0
    %4715 = vmatpush1.msra.mxu0 0.0
    %4716 = vmatprep.subr.mxu0 0.0
    %4717 = vmatpush1.msra.mxu0 0.0
    %4718 = vmatprep.subr.mxu0 0.0
    %4719 = vmatpush1.msra.mxu0 0.0
    %4720 = vmatprep.subr.mxu0 0.0
    %4721 = vmatpush1.msra.mxu0 0.0
    %4722 = vmatprep.subr.mxu0 0.0
    %4723 = vmatpush1.msra.mxu0 0.0
    %4724 = vmatprep.subr.mxu0 0.0
    %4725 = vmatpush1.msra.mxu0 0.0
    %4726 = vmatprep.subr.mxu0 0.0
    %4727 = vmatpush1.msra.mxu0 0.0
    %4728 = vmatprep.subr.mxu0 0.0
    %4729 = vmatpush1.msra.mxu0 0.0
    %4730 = vmatprep.subr.mxu0 0.0
    %4731 = vmatpush1.msra.mxu0 0.0
    %4732 = vmatprep.subr.mxu0 0.0
    %4733 = vmatpush1.msra.mxu0 0.0
    %4734 = vmatprep.subr.mxu0 0.0
    %4735 = vmatpush1.msra.mxu0 0.0
    %4736 = vmatprep.subr.mxu0 0.0
    %4737 = vmatpush1.msra.mxu0 0.0
    %4738 = vmatprep.subr.mxu0 0.0
    %4739 = vmatpush1.msra.mxu0 0.0
    %4740 = vmatprep.subr.mxu0 0.0
    %4741 = vmatpush1.msra.mxu0 0.0
    %4742 = vmatprep.subr.mxu0 0.0
    %4743 = vmatpush1.msra.mxu0 0.0
    %4744 = vmatprep.subr.mxu0 0.0
    %4745 = vmatpush1.msra.mxu0 0.0
    %4746 = vmatprep.mubr.f32.mxu0 0.0
    %4747 = vmatmul.mubr.f32.gmra.mrb[0].mxu0 %v4680
    %v4748 = vpop.f32.mrb[0].mxu0
    %v4749 = vadd.f32 0.0, %v4748
    %v4750 = vpop.f32.mrb[0].mxu0
    %4751 = vdwg.mxu0
    %v4752 = vadd.f32 %v4673, %v4749
    %v4753 = vtanh.pop %v4752
    %4754 = vst.msk [vmem:[#allocation4] sm:$0x3] %vm99, %v4753
    %v4755 = vld [vmem:[#allocation10] sm:$0xff]
    %v4756 = vld [vmem:[#allocation10 + $0x8] sm:$0xff]
    %v4757 = vld [vmem:[#allocation10 + $0x10] sm:$0xff]
    %v4758 = vld [vmem:[#allocation10 + $0x18] sm:$0xff]
    %v4759 = vld [vmem:[%s288] sm:$0x3]
    %v4760 = vld [vmem:[#allocation11] sm:$0xff]
    %v4761 = vld [vmem:[#allocation11 + $0x8] sm:$0xff]
    %v4762 = vld [vmem:[#allocation11 + $0x10] sm:$0xff]
    %v4763 = vld [vmem:[#allocation11 + $0x18] sm:$0xff]
    %v4765 = vsel %vm118, %v4759, 0
    %4767 = vmatprep.subr.mxu0 0.0
    %4768 = vmatpush1.msra.mxu0 %v4760
    %4769 = vmatprep.subr.mxu0 0.0
    %4770 = vmatpush1.msra.mxu0 %v4761
    %4771 = vmatprep.subr.mxu0 0.0
    %4772 = vmatpush1.msra.mxu0 %v4762
    %4773 = vmatprep.subr.mxu0 0.0
    %4774 = vmatpush1.msra.mxu0 %v4763
    %4775 = vmatprep.subr.mxu0 0.0
    %4776 = vmatpush1.msra.mxu0 0.0
    %4777 = vmatprep.subr.mxu0 0.0
    %4778 = vmatpush1.msra.mxu0 0.0
    %4779 = vmatprep.subr.mxu0 0.0
    %4780 = vmatpush1.msra.mxu0 0.0
    %4781 = vmatprep.subr.mxu0 0.0
    %4782 = vmatpush1.msra.mxu0 0.0
    %4783 = vmatprep.subr.mxu0 0.0
    %4784 = vmatpush1.msra.mxu0 0.0
    %4785 = vmatprep.subr.mxu0 0.0
    %4786 = vmatpush1.msra.mxu0 0.0
    %4787 = vmatprep.subr.mxu0 0.0
    %4788 = vmatpush1.msra.mxu0 0.0
    %4789 = vmatprep.subr.mxu0 0.0
    %4790 = vmatpush1.msra.mxu0 0.0
    %4791 = vmatprep.subr.mxu0 0.0
    %4792 = vmatpush1.msra.mxu0 0.0
    %4793 = vmatprep.subr.mxu0 0.0
    %4794 = vmatpush1.msra.mxu0 0.0
    %4795 = vmatprep.subr.mxu0 0.0
    %4796 = vmatpush1.msra.mxu0 0.0
    %4797 = vmatprep.subr.mxu0 0.0
    %4798 = vmatpush1.msra.mxu0 0.0
    %4799 = vmatprep.subr.mxu0 0.0
    %4800 = vmatpush1.msra.mxu0 0.0
    %4801 = vmatprep.subr.mxu0 0.0
    %4802 = vmatpush1.msra.mxu0 0.0
    %4803 = vmatprep.subr.mxu0 0.0
    %4804 = vmatpush1.msra.mxu0 0.0
    %4805 = vmatprep.subr.mxu0 0.0
    %4806 = vmatpush1.msra.mxu0 0.0
    %4807 = vmatprep.subr.mxu0 0.0
    %4808 = vmatpush1.msra.mxu0 0.0
    %4809 = vmatprep.subr.mxu0 0.0
    %4810 = vmatpush1.msra.mxu0 0.0
    %4811 = vmatprep.subr.mxu0 0.0
    %4812 = vmatpush1.msra.mxu0 0.0
    %4813 = vmatprep.subr.mxu0 0.0
    %4814 = vmatpush1.msra.mxu0 0.0
    %4815 = vmatprep.subr.mxu0 0.0
    %4816 = vmatpush1.msra.mxu0 0.0
    %4817 = vmatprep.subr.mxu0 0.0
    %4818 = vmatpush1.msra.mxu0 0.0
    %4819 = vmatprep.subr.mxu0 0.0
    %4820 = vmatpush1.msra.mxu0 0.0
    %4821 = vmatprep.subr.mxu0 0.0
    %4822 = vmatpush1.msra.mxu0 0.0
    %4823 = vmatprep.subr.mxu0 0.0
    %4824 = vmatpush1.msra.mxu0 0.0
    %4825 = vmatprep.subr.mxu0 0.0
    %4826 = vmatpush1.msra.mxu0 0.0
    %4827 = vmatprep.subr.mxu0 0.0
    %4828 = vmatpush1.msra.mxu0 0.0
    %4829 = vmatprep.subr.mxu0 0.0
    %4830 = vmatpush1.msra.mxu0 0.0
    %4831 = vmatprep.mubr.f32.mxu0 0.0
    %4832 = vmatmul.mubr.f32.gmra.mrb[0].mxu0 %v4765
    %v4833 = vpop.f32.mrb[0].mxu0
    %v4834 = vadd.f32 0.0, %v4833
    %v4835 = vpop.f32.mrb[0].mxu0
    %4836 = vdwg.mxu0
    %v4838 = vsel %vm118, %v4753, 0
    %4840 = vmatprep.subr.mxu0 0.0
    %4841 = vmatpush1.msra.mxu0 %v4755
    %4842 = vmatprep.subr.mxu0 0.0
    %4843 = vmatpush1.msra.mxu0 %v4756
    %4844 = vmatprep.subr.mxu0 0.0
    %4845 = vmatpush1.msra.mxu0 %v4757
    %4846 = vmatprep.subr.mxu0 0.0
    %4847 = vmatpush1.msra.mxu0 %v4758
    %4848 = vmatprep.subr.mxu0 0.0
    %4849 = vmatpush1.msra.mxu0 0.0
    %4850 = vmatprep.subr.mxu0 0.0
    %4851 = vmatpush1.msra.mxu0 0.0
    %4852 = vmatprep.subr.mxu0 0.0
    %4853 = vmatpush1.msra.mxu0 0.0
    %4854 = vmatprep.subr.mxu0 0.0
    %4855 = vmatpush1.msra.mxu0 0.0
    %4856 = vmatprep.subr.mxu0 0.0
    %4857 = vmatpush1.msra.mxu0 0.0
    %4858 = vmatprep.subr.mxu0 0.0
    %4859 = vmatpush1.msra.mxu0 0.0
    %4860 = vmatprep.subr.mxu0 0.0
    %4861 = vmatpush1.msra.mxu0 0.0
    %4862 = vmatprep.subr.mxu0 0.0
    %4863 = vmatpush1.msra.mxu0 0.0
    %4864 = vmatprep.subr.mxu0 0.0
    %4865 = vmatpush1.msra.mxu0 0.0
    %4866 = vmatprep.subr.mxu0 0.0
    %4867 = vmatpush1.msra.mxu0 0.0
    %4868 = vmatprep.subr.mxu0 0.0
    %4869 = vmatpush1.msra.mxu0 0.0
    %4870 = vmatprep.subr.mxu0 0.0
    %4871 = vmatpush1.msra.mxu0 0.0
    %4872 = vmatprep.subr.mxu0 0.0
    %4873 = vmatpush1.msra.mxu0 0.0
    %4874 = vmatprep.subr.mxu0 0.0
    %4875 = vmatpush1.msra.mxu0 0.0
    %4876 = vmatprep.subr.mxu0 0.0
    %4877 = vmatpush1.msra.mxu0 0.0
    %4878 = vmatprep.subr.mxu0 0.0
    %4879 = vmatpush1.msra.mxu0 0.0
    %4880 = vmatprep.subr.mxu0 0.0
    %4881 = vmatpush1.msra.mxu0 0.0
    %4882 = vmatprep.subr.mxu0 0.0
    %4883 = vmatpush1.msra.mxu0 0.0
    %4884 = vmatprep.subr.mxu0 0.0
    %4885 = vmatpush1.msra.mxu0 0.0
    %4886 = vmatprep.subr.mxu0 0.0
    %4887 = vmatpush1.msra.mxu0 0.0
    %4888 = vmatprep.subr.mxu0 0.0
    %4889 = vmatpush1.msra.mxu0 0.0
    %4890 = vmatprep.subr.mxu0 0.0
    %4891 = vmatpush1.msra.mxu0 0.0
    %4892 = vmatprep.subr.mxu0 0.0
    %4893 = vmatpush1.msra.mxu0 0.0
    %4894 = vmatprep.subr.mxu0 0.0
    %4895 = vmatpush1.msra.mxu0 0.0
    %4896 = vmatprep.subr.mxu0 0.0
    %4897 = vmatpush1.msra.mxu0 0.0
    %4898 = vmatprep.subr.mxu0 0.0
    %4899 = vmatpush1.msra.mxu0 0.0
    %4900 = vmatprep.subr.mxu0 0.0
    %4901 = vmatpush1.msra.mxu0 0.0
    %4902 = vmatprep.subr.mxu0 0.0
    %4903 = vmatpush1.msra.mxu0 0.0
    %4904 = vmatprep.mubr.f32.mxu0 0.0
    %4905 = vmatmul.mubr.f32.gmra.mrb[0].mxu0 %v4838
    %v4906 = vpop.f32.mrb[0].mxu0
    %v4907 = vadd.f32 %v4834, %v4906
    %v4908 = vpop.f32.mrb[0].mxu0
    %4909 = vdwg.mxu0
    %v4910 = vld [vmem:[%s7] sm:$0x1]
    %v4912 = vlaneseq
    %v4913 = vshrl.u32 %v4912, 7
    %v4914 = vsub.s32 0, %v4913
    %v4915 = vrot.slane %v4910, %v4914
    %v4917 = vadd.f32 %v4907, %v4915
    %v4918 = vtanh.pop %v4917
    %4919 = vst.msk [vmem:[%s288] sm:$0x3] %vm99, %v4918
    %v4920 = vld [vmem:[%s450] sm:$0xff]
    %v4921 = vld [vmem:[%s450 + $0x8] sm:$0xff]
    %v4922 = vld [vmem:[%s450 + $0x10] sm:$0xff]
    %v4923 = vld [vmem:[%s450 + $0x18] sm:$0xff]
    %v4924 = vld [vmem:[%s455] sm:$0x3]
    %v4925 = vld [vmem:[%s457] sm:$0xff]
    %v4926 = vld [vmem:[%s457 + $0x8] sm:$0xff]
    %v4927 = vld [vmem:[%s457 + $0x10] sm:$0xff]
    %v4928 = vld [vmem:[%s457 + $0x18] sm:$0xff]
    %v4930 = vsel %vm118, %v4924, 0
    %4932 = vmatprep.subr.mxu0 0.0
    %4933 = vmatpush1.msra.mxu0 %v4925
    %4934 = vmatprep.subr.mxu0 0.0
    %4935 = vmatpush1.msra.mxu0 %v4926
    %4936 = vmatprep.subr.mxu0 0.0
    %4937 = vmatpush1.msra.mxu0 %v4927
    %4938 = vmatprep.subr.mxu0 0.0
    %4939 = vmatpush1.msra.mxu0 %v4928
    %4940 = vmatprep.subr.mxu0 0.0
    %4941 = vmatpush1.msra.mxu0 0.0
    %4942 = vmatprep.subr.mxu0 0.0
    %4943 = vmatpush1.msra.mxu0 0.0
    %4944 = vmatprep.subr.mxu0 0.0
    %4945 = vmatpush1.msra.mxu0 0.0
    %4946 = vmatprep.subr.mxu0 0.0
    %4947 = vmatpush1.msra.mxu0 0.0
    %4948 = vmatprep.subr.mxu0 0.0
    %4949 = vmatpush1.msra.mxu0 0.0
    %4950 = vmatprep.subr.mxu0 0.0
    %4951 = vmatpush1.msra.mxu0 0.0
    %4952 = vmatprep.subr.mxu0 0.0
    %4953 = vmatpush1.msra.mxu0 0.0
    %4954 = vmatprep.subr.mxu0 0.0
    %4955 = vmatpush1.msra.mxu0 0.0
    %4956 = vmatprep.subr.mxu0 0.0
    %4957 = vmatpush1.msra.mxu0 0.0
    %4958 = vmatprep.subr.mxu0 0.0
    %4959 = vmatpush1.msra.mxu0 0.0
    %4960 = vmatprep.subr.mxu0 0.0
    %4961 = vmatpush1.msra.mxu0 0.0
    %4962 = vmatprep.subr.mxu0 0.0
    %4963 = vmatpush1.msra.mxu0 0.0
    %4964 = vmatprep.subr.mxu0 0.0
    %4965 = vmatpush1.msra.mxu0 0.0
    %4966 = vmatprep.subr.mxu0 0.0
    %4967 = vmatpush1.msra.mxu0 0.0
    %4968 = vmatprep.subr.mxu0 0.0
    %4969 = vmatpush1.msra.mxu0 0.0
    %4970 = vmatprep.subr.mxu0 0.0
    %4971 = vmatpush1.msra.mxu0 0.0
    %4972 = vmatprep.subr.mxu0 0.0
    %4973 = vmatpush1.msra.mxu0 0.0
    %4974 = vmatprep.subr.mxu0 0.0
    %4975 = vmatpush1.msra.mxu0 0.0
    %4976 = vmatprep.subr.mxu0 0.0
    %4977 = vmatpush1.msra.mxu0 0.0
    %4978 = vmatprep.subr.mxu0 0.0
    %4979 = vmatpush1.msra.mxu0 0.0
    %4980 = vmatprep.subr.mxu0 0.0
    %4981 = vmatpush1.msra.mxu0 0.0
    %4982 = vmatprep.subr.mxu0 0.0
    %4983 = vmatpush1.msra.mxu0 0.0
    %4984 = vmatprep.subr.mxu0 0.0
    %4985 = vmatpush1.msra.mxu0 0.0
    %4986 = vmatprep.subr.mxu0 0.0
    %4987 = vmatpush1.msra.mxu0 0.0
    %4988 = vmatprep.subr.mxu0 0.0
    %4989 = vmatpush1.msra.mxu0 0.0
    %4990 = vmatprep.subr.mxu0 0.0
    %4991 = vmatpush1.msra.mxu0 0.0
    %4992 = vmatprep.subr.mxu0 0.0
    %4993 = vmatpush1.msra.mxu0 0.0
    %4994 = vmatprep.subr.mxu0 0.0
    %4995 = vmatpush1.msra.mxu0 0.0
    %4996 = vmatprep.mubr.f32.mxu0 0.0
    %4997 = vmatmul.mubr.f32.gmra.mrb[0].mxu0 %v4930
    %v4998 = vpop.f32.mrb[0].mxu0
    %v4999 = vadd.f32 0.0, %v4998
    %v5000 = vpop.f32.mrb[0].mxu0
    %5001 = vdwg.mxu0
    %v5003 = vsel %vm118, %v4918, 0
    %5005 = vmatprep.subr.mxu0 0.0
    %5006 = vmatpush1.msra.mxu0 %v4920
    %5007 = vmatprep.subr.mxu0 0.0
    %5008 = vmatpush1.msra.mxu0 %v4921
    %5009 = vmatprep.subr.mxu0 0.0
    %5010 = vmatpush1.msra.mxu0 %v4922
    %5011 = vmatprep.subr.mxu0 0.0
    %5012 = vmatpush1.msra.mxu0 %v4923
    %5013 = vmatprep.subr.mxu0 0.0
    %5014 = vmatpush1.msra.mxu0 0.0
    %5015 = vmatprep.subr.mxu0 0.0
    %5016 = vmatpush1.msra.mxu0 0.0
    %5017 = vmatprep.subr.mxu0 0.0
    %5018 = vmatpush1.msra.mxu0 0.0
    %5019 = vmatprep.subr.mxu0 0.0
    %5020 = vmatpush1.msra.mxu0 0.0
    %5021 = vmatprep.subr.mxu0 0.0
    %5022 = vmatpush1.msra.mxu0 0.0
    %5023 = vmatprep.subr.mxu0 0.0
    %5024 = vmatpush1.msra.mxu0 0.0
    %5025 = vmatprep.subr.mxu0 0.0
    %5026 = vmatpush1.msra.mxu0 0.0
    %5027 = vmatprep.subr.mxu0 0.0
    %5028 = vmatpush1.msra.mxu0 0.0
    %5029 = vmatprep.subr.mxu0 0.0
    %5030 = vmatpush1.msra.mxu0 0.0
    %5031 = vmatprep.subr.mxu0 0.0
    %5032 = vmatpush1.msra.mxu0 0.0
    %5033 = vmatprep.subr.mxu0 0.0
    %5034 = vmatpush1.msra.mxu0 0.0
    %5035 = vmatprep.subr.mxu0 0.0
    %5036 = vmatpush1.msra.mxu0 0.0
    %5037 = vmatprep.subr.mxu0 0.0
    %5038 = vmatpush1.msra.mxu0 0.0
    %5039 = vmatprep.subr.mxu0 0.0
    %5040 = vmatpush1.msra.mxu0 0.0
    %5041 = vmatprep.subr.mxu0 0.0
    %5042 = vmatpush1.msra.mxu0 0.0
    %5043 = vmatprep.subr.mxu0 0.0
    %5044 = vmatpush1.msra.mxu0 0.0
    %5045 = vmatprep.subr.mxu0 0.0
    %5046 = vmatpush1.msra.mxu0 0.0
    %5047 = vmatprep.subr.mxu0 0.0
    %5048 = vmatpush1.msra.mxu0 0.0
    %5049 = vmatprep.subr.mxu0 0.0
    %5050 = vmatpush1.msra.mxu0 0.0
    %5051 = vmatprep.subr.mxu0 0.0
    %5052 = vmatpush1.msra.mxu0 0.0
    %5053 = vmatprep.subr.mxu0 0.0
    %5054 = vmatpush1.msra.mxu0 0.0
    %5055 = vmatprep.subr.mxu0 0.0
    %5056 = vmatpush1.msra.mxu0 0.0
    %5057 = vmatprep.subr.mxu0 0.0
    %5058 = vmatpush1.msra.mxu0 0.0
    %5059 = vmatprep.subr.mxu0 0.0
    %5060 = vmatpush1.msra.mxu0 0.0
    %5061 = vmatprep.subr.mxu0 0.0
    %5062 = vmatpush1.msra.mxu0 0.0
    %5063 = vmatprep.subr.mxu0 0.0
    %5064 = vmatpush1.msra.mxu0 0.0
    %5065 = vmatprep.subr.mxu0 0.0
    %5066 = vmatpush1.msra.mxu0 0.0
    %5067 = vmatprep.subr.mxu0 0.0
    %5068 = vmatpush1.msra.mxu0 0.0
    %5069 = vmatprep.mubr.f32.mxu0 0.0
    %5070 = vmatmul.mubr.f32.gmra.mrb[0].mxu0 %v5003
    %v5071 = vpop.f32.mrb[0].mxu0
    %v5072 = vadd.f32 %v4999, %v5071
    %v5073 = vpop.f32.mrb[0].mxu0
    %5074 = vdwg.mxu0
    %v5075 = vld [vmem:[%s608] sm:$0x1]
    %v5077 = vlaneseq
    %v5078 = vshrl.u32 %v5077, 7
    %v5079 = vsub.s32 0, %v5078
    %v5080 = vrot.slane %v5075, %v5079
    %v5082 = vadd.f32 %v5072, %v5080
    %v5083 = vtanh.pop %v5082
    %5084 = vst.msk [vmem:[%s455] sm:$0x3] %vm99, %v5083
    %v5085 = vld [vmem:[%s619] sm:$0xff]
    %v5086 = vld [vmem:[%s619 + $0x8] sm:$0xff]
    %v5087 = vld [vmem:[%s619 + $0x10] sm:$0xff]
    %v5088 = vld [vmem:[%s619 + $0x18] sm:$0xff]
    %v5089 = vld [vmem:[%s624] sm:$0x3]
    %v5090 = vld [vmem:[%s626] sm:$0xff]
    %v5091 = vld [vmem:[%s626 + $0x8] sm:$0xff]
    %v5092 = vld [vmem:[%s626 + $0x10] sm:$0xff]
    %v5093 = vld [vmem:[%s626 + $0x18] sm:$0xff]
    %v5095 = vsel %vm118, %v5089, 0
    %5097 = vmatprep.subr.mxu0 0.0
    %5098 = vmatpush1.msra.mxu0 %v5090
    %5099 = vmatprep.subr.mxu0 0.0
    %5100 = vmatpush1.msra.mxu0 %v5091
    %5101 = vmatprep.subr.mxu0 0.0
    %5102 = vmatpush1.msra.mxu0 %v5092
    %5103 = vmatprep.subr.mxu0 0.0
    %5104 = vmatpush1.msra.mxu0 %v5093
    %5105 = vmatprep.subr.mxu0 0.0
    %5106 = vmatpush1.msra.mxu0 0.0
    %5107 = vmatprep.subr.mxu0 0.0
    %5108 = vmatpush1.msra.mxu0 0.0
    %5109 = vmatprep.subr.mxu0 0.0
    %5110 = vmatpush1.msra.mxu0 0.0
    %5111 = vmatprep.subr.mxu0 0.0
    %5112 = vmatpush1.msra.mxu0 0.0
    %5113 = vmatprep.subr.mxu0 0.0
    %5114 = vmatpush1.msra.mxu0 0.0
    %5115 = vmatprep.subr.mxu0 0.0
    %5116 = vmatpush1.msra.mxu0 0.0
    %5117 = vmatprep.subr.mxu0 0.0
    %5118 = vmatpush1.msra.mxu0 0.0
    %5119 = vmatprep.subr.mxu0 0.0
    %5120 = vmatpush1.msra.mxu0 0.0
    %5121 = vmatprep.subr.mxu0 0.0
    %5122 = vmatpush1.msra.mxu0 0.0
    %5123 = vmatprep.subr.mxu0 0.0
    %5124 = vmatpush1.msra.mxu0 0.0
    %5125 = vmatprep.subr.mxu0 0.0
    %5126 = vmatpush1.msra.mxu0 0.0
    %5127 = vmatprep.subr.mxu0 0.0
    %5128 = vmatpush1.msra.mxu0 0.0
    %5129 = vmatprep.subr.mxu0 0.0
    %5130 = vmatpush1.msra.mxu0 0.0
    %5131 = vmatprep.subr.mxu0 0.0
    %5132 = vmatpush1.msra.mxu0 0.0
    %5133 = vmatprep.subr.mxu0 0.0
    %5134 = vmatpush1.msra.mxu0 0.0
    %5135 = vmatprep.subr.mxu0 0.0
    %5136 = vmatpush1.msra.mxu0 0.0
    %5137 = vmatprep.subr.mxu0 0.0
    %5138 = vmatpush1.msra.mxu0 0.0
    %5139 = vmatprep.subr.mxu0 0.0
    %5140 = vmatpush1.msra.mxu0 0.0
    %5141 = vmatprep.subr.mxu0 0.0
    %5142 = vmatpush1.msra.mxu0 0.0
    %5143 = vmatprep.subr.mxu0 0.0
    %5144 = vmatpush1.msra.mxu0 0.0
    %5145 = vmatprep.subr.mxu0 0.0
    %5146 = vmatpush1.msra.mxu0 0.0
    %5147 = vmatprep.subr.mxu0 0.0
    %5148 = vmatpush1.msra.mxu0 0.0
    %5149 = vmatprep.subr.mxu0 0.0
    %5150 = vmatpush1.msra.mxu0 0.0
    %5151 = vmatprep.subr.mxu0 0.0
    %5152 = vmatpush1.msra.mxu0 0.0
    %5153 = vmatprep.subr.mxu0 0.0
    %5154 = vmatpush1.msra.mxu0 0.0
    %5155 = vmatprep.subr.mxu0 0.0
    %5156 = vmatpush1.msra.mxu0 0.0
    %5157 = vmatprep.subr.mxu0 0.0
    %5158 = vmatpush1.msra.mxu0 0.0
    %5159 = vmatprep.subr.mxu0 0.0
    %5160 = vmatpush1.msra.mxu0 0.0
    %5161 = vmatprep.mubr.f32.mxu0 0.0
    %5162 = vmatmul.mubr.f32.gmra.mrb[0].mxu0 %v5095
    %v5163 = vpop.f32.mrb[0].mxu0
    %v5164 = vadd.f32 0.0, %v5163
    %v5165 = vpop.f32.mrb[0].mxu0
    %5166 = vdwg.mxu0
    %v5168 = vsel %vm118, %v5083, 0
    %5170 = vmatprep.subr.mxu0 0.0
    %5171 = vmatpush1.msra.mxu0 %v5085
    %5172 = vmatprep.subr.mxu0 0.0
    %5173 = vmatpush1.msra.mxu0 %v5086
    %5174 = vmatprep.subr.mxu0 0.0
    %5175 = vmatpush1.msra.mxu0 %v5087
    %5176 = vmatprep.subr.mxu0 0.0
    %5177 = vmatpush1.msra.mxu0 %v5088
    %5178 = vmatprep.subr.mxu0 0.0
    %5179 = vmatpush1.msra.mxu0 0.0
    %5180 = vmatprep.subr.mxu0 0.0
    %5181 = vmatpush1.msra.mxu0 0.0
    %5182 = vmatprep.subr.mxu0 0.0
    %5183 = vmatpush1.msra.mxu0 0.0
    %5184 = vmatprep.subr.mxu0 0.0
    %5185 = vmatpush1.msra.mxu0 0.0
    %5186 = vmatprep.subr.mxu0 0.0
    %5187 = vmatpush1.msra.mxu0 0.0
    %5188 = vmatprep.subr.mxu0 0.0
    %5189 = vmatpush1.msra.mxu0 0.0
    %5190 = vmatprep.subr.mxu0 0.0
    %5191 = vmatpush1.msra.mxu0 0.0
    %5192 = vmatprep.subr.mxu0 0.0
    %5193 = vmatpush1.msra.mxu0 0.0
    %5194 = vmatprep.subr.mxu0 0.0
    %5195 = vmatpush1.msra.mxu0 0.0
    %5196 = vmatprep.subr.mxu0 0.0
    %5197 = vmatpush1.msra.mxu0 0.0
    %5198 = vmatprep.subr.mxu0 0.0
    %5199 = vmatpush1.msra.mxu0 0.0
    %5200 = vmatprep.subr.mxu0 0.0
    %5201 = vmatpush1.msra.mxu0 0.0
    %5202 = vmatprep.subr.mxu0 0.0
    %5203 = vmatpush1.msra.mxu0 0.0
    %5204 = vmatprep.subr.mxu0 0.0
    %5205 = vmatpush1.msra.mxu0 0.0
    %5206 = vmatprep.subr.mxu0 0.0
    %5207 = vmatpush1.msra.mxu0 0.0
    %5208 = vmatprep.subr.mxu0 0.0
    %5209 = vmatpush1.msra.mxu0 0.0
    %5210 = vmatprep.subr.mxu0 0.0
    %5211 = vmatpush1.msra.mxu0 0.0
    %5212 = vmatprep.subr.mxu0 0.0
    %5213 = vmatpush1.msra.mxu0 0.0
    %5214 = vmatprep.subr.mxu0 0.0
    %5215 = vmatpush1.msra.mxu0 0.0
    %5216 = vmatprep.subr.mxu0 0.0
    %5217 = vmatpush1.msra.mxu0 0.0
    %5218 = vmatprep.subr.mxu0 0.0
    %5219 = vmatpush1.msra.mxu0 0.0
    %5220 = vmatprep.subr.mxu0 0.0
    %5221 = vmatpush1.msra.mxu0 0.0
    %5222 = vmatprep.subr.mxu0 0.0
    %5223 = vmatpush1.msra.mxu0 0.0
    %5224 = vmatprep.subr.mxu0 0.0
    %5225 = vmatpush1.msra.mxu0 0.0
    %5226 = vmatprep.subr.mxu0 0.0
    %5227 = vmatpush1.msra.mxu0 0.0
    %5228 = vmatprep.subr.mxu0 0.0
    %5229 = vmatpush1.msra.mxu0 0.0
    %5230 = vmatprep.subr.mxu0 0.0
    %5231 = vmatpush1.msra.mxu0 0.0
    %5232 = vmatprep.subr.mxu0 0.0
    %5233 = vmatpush1.msra.mxu0 0.0
    %5234 = vmatprep.mubr.f32.mxu0 0.0
    %5235 = vmatmul.mubr.f32.gmra.mrb[0].mxu0 %v5168
    %v5236 = vpop.f32.mrb[0].mxu0
    %v5237 = vadd.f32 %v5164, %v5236
    %v5238 = vpop.f32.mrb[0].mxu0
    %5239 = vdwg.mxu0
    %v5240 = vld [vmem:[%s777] sm:$0x1]
    %v5242 = vlaneseq
    %v5243 = vshrl.u32 %v5242, 7
    %v5244 = vsub.s32 0, %v5243
    %v5245 = vrot.slane %v5240, %v5244
    %v5247 = vadd.f32 %v5237, %v5245
    %v5248 = vtanh.pop %v5247
    %5249 = vst.msk [vmem:[%s624] sm:$0x3] %vm99, %v5248
    %v5250 = vld [vmem:[%s788] sm:$0xff]
    %v5251 = vld [vmem:[%s788 + $0x8] sm:$0xff]
    %v5252 = vld [vmem:[%s788 + $0x10] sm:$0xff]
    %v5253 = vld [vmem:[%s788 + $0x18] sm:$0xff]
    %v5254 = vld [vmem:[%s793] sm:$0x3]
    %v5255 = vld [vmem:[%s795] sm:$0xff]
    %v5256 = vld [vmem:[%s795 + $0x8] sm:$0xff]
    %v5257 = vld [vmem:[%s795 + $0x10] sm:$0xff]
    %v5258 = vld [vmem:[%s795 + $0x18] sm:$0xff]
    %v5260 = vsel %vm118, %v5254, 0
    %5262 = vmatprep.subr.mxu0 0.0
    %5263 = vmatpush1.msra.mxu0 %v5255
    %5264 = vmatprep.subr.mxu0 0.0
    %5265 = vmatpush1.msra.mxu0 %v5256
    %5266 = vmatprep.subr.mxu0 0.0
    %5267 = vmatpush1.msra.mxu0 %v5257
    %5268 = vmatprep.subr.mxu0 0.0
    %5269 = vmatpush1.msra.mxu0 %v5258
    %5270 = vmatprep.subr.mxu0 0.0
    %5271 = vmatpush1.msra.mxu0 0.0
    %5272 = vmatprep.subr.mxu0 0.0
    %5273 = vmatpush1.msra.mxu0 0.0
    %5274 = vmatprep.subr.mxu0 0.0
    %5275 = vmatpush1.msra.mxu0 0.0
    %5276 = vmatprep.subr.mxu0 0.0
    %5277 = vmatpush1.msra.mxu0 0.0
    %5278 = vmatprep.subr.mxu0 0.0
    %5279 = vmatpush1.msra.mxu0 0.0
    %5280 = vmatprep.subr.mxu0 0.0
    %5281 = vmatpush1.msra.mxu0 0.0
    %5282 = vmatprep.subr.mxu0 0.0
    %5283 = vmatpush1.msra.mxu0 0.0
    %5284 = vmatprep.subr.mxu0 0.0
    %5285 = vmatpush1.msra.mxu0 0.0
    %5286 = vmatprep.subr.mxu0 0.0
    %5287 = vmatpush1.msra.mxu0 0.0
    %5288 = vmatprep.subr.mxu0 0.0
    %5289 = vmatpush1.msra.mxu0 0.0
    %5290 = vmatprep.subr.mxu0 0.0
    %5291 = vmatpush1.msra.mxu0 0.0
    %5292 = vmatprep.subr.mxu0 0.0
    %5293 = vmatpush1.msra.mxu0 0.0
    %5294 = vmatprep.subr.mxu0 0.0
    %5295 = vmatpush1.msra.mxu0 0.0
    %5296 = vmatprep.subr.mxu0 0.0
    %5297 = vmatpush1.msra.mxu0 0.0
    %5298 = vmatprep.subr.mxu0 0.0
    %5299 = vmatpush1.msra.mxu0 0.0
    %5300 = vmatprep.subr.mxu0 0.0
    %5301 = vmatpush1.msra.mxu0 0.0
    %5302 = vmatprep.subr.mxu0 0.0
    %5303 = vmatpush1.msra.mxu0 0.0
    %5304 = vmatprep.subr.mxu0 0.0
    %5305 = vmatpush1.msra.mxu0 0.0
    %5306 = vmatprep.subr.mxu0 0.0
    %5307 = vmatpush1.msra.mxu0 0.0
    %5308 = vmatprep.subr.mxu0 0.0
    %5309 = vmatpush1.msra.mxu0 0.0
    %5310 = vmatprep.subr.mxu0 0.0
    %5311 = vmatpush1.msra.mxu0 0.0
    %5312 = vmatprep.subr.mxu0 0.0
    %5313 = vmatpush1.msra.mxu0 0.0
    %5314 = vmatprep.subr.mxu0 0.0
    %5315 = vmatpush1.msra.mxu0 0.0
    %5316 = vmatprep.subr.mxu0 0.0
    %5317 = vmatpush1.msra.mxu0 0.0
    %5318 = vmatprep.subr.mxu0 0.0
    %5319 = vmatpush1.msra.mxu0 0.0
    %5320 = vmatprep.subr.mxu0 0.0
    %5321 = vmatpush1.msra.mxu0 0.0
    %5322 = vmatprep.subr.mxu0 0.0
    %5323 = vmatpush1.msra.mxu0 0.0
    %5324 = vmatprep.subr.mxu0 0.0
    %5325 = vmatpush1.msra.mxu0 0.0
    %5326 = vmatprep.mubr.f32.mxu0 0.0
    %5327 = vmatmul.mubr.f32.gmra.mrb[0].mxu0 %v5260
    %v5328 = vpop.f32.mrb[0].mxu0
    %v5329 = vadd.f32 0.0, %v5328
    %v5330 = vpop.f32.mrb[0].mxu0
    %5331 = vdwg.mxu0
    %v5333 = vsel %vm118, %v5248, 0
    %5335 = vmatprep.subr.mxu0 0.0
    %5336 = vmatpush1.msra.mxu0 %v5250
    %5337 = vmatprep.subr.mxu0 0.0
    %5338 = vmatpush1.msra.mxu0 %v5251
    %5339 = vmatprep.subr.mxu0 0.0
    %5340 = vmatpush1.msra.mxu0 %v5252
    %5341 = vmatprep.subr.mxu0 0.0
    %5342 = vmatpush1.msra.mxu0 %v5253
    %5343 = vmatprep.subr.mxu0 0.0
    %5344 = vmatpush1.msra.mxu0 0.0
    %5345 = vmatprep.subr.mxu0 0.0
    %5346 = vmatpush1.msra.mxu0 0.0
    %5347 = vmatprep.subr.mxu0 0.0
    %5348 = vmatpush1.msra.mxu0 0.0
    %5349 = vmatprep.subr.mxu0 0.0
    %5350 = vmatpush1.msra.mxu0 0.0
    %5351 = vmatprep.subr.mxu0 0.0
    %5352 = vmatpush1.msra.mxu0 0.0
    %5353 = vmatprep.subr.mxu0 0.0
    %5354 = vmatpush1.msra.mxu0 0.0
    %5355 = vmatprep.subr.mxu0 0.0
    %5356 = vmatpush1.msra.mxu0 0.0
    %5357 = vmatprep.subr.mxu0 0.0
    %5358 = vmatpush1.msra.mxu0 0.0
    %5359 = vmatprep.subr.mxu0 0.0
    %5360 = vmatpush1.msra.mxu0 0.0
    %5361 = vmatprep.subr.mxu0 0.0
    %5362 = vmatpush1.msra.mxu0 0.0
    %5363 = vmatprep.subr.mxu0 0.0
    %5364 = vmatpush1.msra.mxu0 0.0
    %5365 = vmatprep.subr.mxu0 0.0
    %5366 = vmatpush1.msra.mxu0 0.0
    %5367 = vmatprep.subr.mxu0 0.0
    %5368 = vmatpush1.msra.mxu0 0.0
    %5369 = vmatprep.subr.mxu0 0.0
    %5370 = vmatpush1.msra.mxu0 0.0
    %5371 = vmatprep.subr.mxu0 0.0
    %5372 = vmatpush1.msra.mxu0 0.0
    %5373 = vmatprep.subr.mxu0 0.0
    %5374 = vmatpush1.msra.mxu0 0.0
    %5375 = vmatprep.subr.mxu0 0.0
    %5376 = vmatpush1.msra.mxu0 0.0
    %5377 = vmatprep.subr.mxu0 0.0
    %5378 = vmatpush1.msra.mxu0 0.0
    %5379 = vmatprep.subr.mxu0 0.0
    %5380 = vmatpush1.msra.mxu0 0.0
    %5381 = vmatprep.subr.mxu0 0.0
    %5382 = vmatpush1.msra.mxu0 0.0
    %5383 = vmatprep.subr.mxu0 0.0
    %5384 = vmatpush1.msra.mxu0 0.0
    %5385 = vmatprep.subr.mxu0 0.0
    %5386 = vmatpush1.msra.mxu0 0.0
    %5387 = vmatprep.subr.mxu0 0.0
    %5388 = vmatpush1.msra.mxu0 0.0
    %5389 = vmatprep.subr.mxu0 0.0
    %5390 = vmatpush1.msra.mxu0 0.0
    %5391 = vmatprep.subr.mxu0 0.0
    %5392 = vmatpush1.msra.mxu0 0.0
    %5393 = vmatprep.subr.mxu0 0.0
    %5394 = vmatpush1.msra.mxu0 0.0
    %5395 = vmatprep.subr.mxu0 0.0
    %5396 = vmatpush1.msra.mxu0 0.0
    %5397 = vmatprep.subr.mxu0 0.0
    %5398 = vmatpush1.msra.mxu0 0.0
    %5399 = vmatprep.mubr.f32.mxu0 0.0
    %5400 = vmatmul.mubr.f32.gmra.mrb[0].mxu0 %v5333
    %v5401 = vpop.f32.mrb[0].mxu0
    %v5402 = vadd.f32 %v5329, %v5401
    %v5403 = vpop.f32.mrb[0].mxu0
    %5404 = vdwg.mxu0
    %v5405 = vld [vmem:[%s946] sm:$0x1]
    %v5407 = vlaneseq
    %v5408 = vshrl.u32 %v5407, 7
    %v5409 = vsub.s32 0, %v5408
    %v5410 = vrot.slane %v5405, %v5409
    %v5412 = vadd.f32 %v5402, %v5410
    %v5413 = vtanh.pop %v5412
    %5414 = vst.msk [vmem:[%s793] sm:$0x3] %vm99, %v5413
    %5415 = vst.msk [vmem:[#allocation3 + $0xc] sm:$0x3] %vm99, %v5413
    %v5416 = vld [vmem:[#allocation2 + $0xe] sm:$0x3]
    %v5417 = vld [vmem:[#allocation4] sm:$0x3]
    %v5418 = vld [vmem:[#allocation8] sm:$0xff]
    %v5419 = vld [vmem:[#allocation8 + $0x8] sm:$0xff]
    %v5420 = vld [vmem:[#allocation8 + $0x10] sm:$0xff]
    %v5421 = vld [vmem:[#allocation8 + $0x18] sm:$0xff]
    %v5423 = vsel %vm118, %v5417, 0
    %5425 = vmatprep.subr.mxu0 0.0
    %5426 = vmatpush1.msra.mxu0 %v5418
    %5427 = vmatprep.subr.mxu0 0.0
    %5428 = vmatpush1.msra.mxu0 %v5419
    %5429 = vmatprep.subr.mxu0 0.0
    %5430 = vmatpush1.msra.mxu0 %v5420
    %5431 = vmatprep.subr.mxu0 0.0
    %5432 = vmatpush1.msra.mxu0 %v5421
    %5433 = vmatprep.subr.mxu0 0.0
    %5434 = vmatpush1.msra.mxu0 0.0
    %5435 = vmatprep.subr.mxu0 0.0
    %5436 = vmatpush1.msra.mxu0 0.0
    %5437 = vmatprep.subr.mxu0 0.0
    %5438 = vmatpush1.msra.mxu0 0.0
    %5439 = vmatprep.subr.mxu0 0.0
    %5440 = vmatpush1.msra.mxu0 0.0
    %5441 = vmatprep.subr.mxu0 0.0
    %5442 = vmatpush1.msra.mxu0 0.0
    %5443 = vmatprep.subr.mxu0 0.0
    %5444 = vmatpush1.msra.mxu0 0.0
    %5445 = vmatprep.subr.mxu0 0.0
    %5446 = vmatpush1.msra.mxu0 0.0
    %5447 = vmatprep.subr.mxu0 0.0
    %5448 = vmatpush1.msra.mxu0 0.0
    %5449 = vmatprep.subr.mxu0 0.0
    %5450 = vmatpush1.msra.mxu0 0.0
    %5451 = vmatprep.subr.mxu0 0.0
    %5452 = vmatpush1.msra.mxu0 0.0
    %5453 = vmatprep.subr.mxu0 0.0
    %5454 = vmatpush1.msra.mxu0 0.0
    %5455 = vmatprep.subr.mxu0 0.0
    %5456 = vmatpush1.msra.mxu0 0.0
    %5457 = vmatprep.subr.mxu0 0.0
    %5458 = vmatpush1.msra.mxu0 0.0
    %5459 = vmatprep.subr.mxu0 0.0
    %5460 = vmatpush1.msra.mxu0 0.0
    %5461 = vmatprep.subr.mxu0 0.0
    %5462 = vmatpush1.msra.mxu0 0.0
    %5463 = vmatprep.subr.mxu0 0.0
    %5464 = vmatpush1.msra.mxu0 0.0
    %5465 = vmatprep.subr.mxu0 0.0
    %5466 = vmatpush1.msra.mxu0 0.0
    %5467 = vmatprep.subr.mxu0 0.0
    %5468 = vmatpush1.msra.mxu0 0.0
    %5469 = vmatprep.subr.mxu0 0.0
    %5470 = vmatpush1.msra.mxu0 0.0
    %5471 = vmatprep.subr.mxu0 0.0
    %5472 = vmatpush1.msra.mxu0 0.0
    %5473 = vmatprep.subr.mxu0 0.0
    %5474 = vmatpush1.msra.mxu0 0.0
    %5475 = vmatprep.subr.mxu0 0.0
    %5476 = vmatpush1.msra.mxu0 0.0
    %5477 = vmatprep.subr.mxu0 0.0
    %5478 = vmatpush1.msra.mxu0 0.0
    %5479 = vmatprep.subr.mxu0 0.0
    %5480 = vmatpush1.msra.mxu0 0.0
    %5481 = vmatprep.subr.mxu0 0.0
    %5482 = vmatpush1.msra.mxu0 0.0
    %5483 = vmatprep.subr.mxu0 0.0
    %5484 = vmatpush1.msra.mxu0 0.0
    %5485 = vmatprep.subr.mxu0 0.0
    %5486 = vmatpush1.msra.mxu0 0.0
    %5487 = vmatprep.subr.mxu0 0.0
    %5488 = vmatpush1.msra.mxu0 0.0
    %5489 = vmatprep.mubr.f32.mxu0 0.0
    %5490 = vmatmul.mubr.f32.gmra.mrb[0].mxu0 %v5423
    %v5491 = vpop.f32.mrb[0].mxu0
    %v5492 = vadd.f32 0.0, %v5491
    %v5493 = vpop.f32.mrb[0].mxu0
    %5494 = vdwg.mxu0
    %v5495 = vadd.f32 %v5416, %v5492
    %v5496 = vtanh.pop %v5495
    %5497 = vst.msk [vmem:[#allocation4] sm:$0x3] %vm99, %v5496
    %v5498 = vld [vmem:[#allocation10] sm:$0xff]
    %v5499 = vld [vmem:[#allocation10 + $0x8] sm:$0xff]
    %v5500 = vld [vmem:[#allocation10 + $0x10] sm:$0xff]
    %v5501 = vld [vmem:[#allocation10 + $0x18] sm:$0xff]
    %v5502 = vld [vmem:[%s288] sm:$0x3]
    %v5503 = vld [vmem:[#allocation11] sm:$0xff]
    %v5504 = vld [vmem:[#allocation11 + $0x8] sm:$0xff]
    %v5505 = vld [vmem:[#allocation11 + $0x10] sm:$0xff]
    %v5506 = vld [vmem:[#allocation11 + $0x18] sm:$0xff]
    %v5508 = vsel %vm118, %v5502, 0
    %5510 = vmatprep.subr.mxu0 0.0
    %5511 = vmatpush1.msra.mxu0 %v5503
    %5512 = vmatprep.subr.mxu0 0.0
    %5513 = vmatpush1.msra.mxu0 %v5504
    %5514 = vmatprep.subr.mxu0 0.0
    %5515 = vmatpush1.msra.mxu0 %v5505
    %5516 = vmatprep.subr.mxu0 0.0
    %5517 = vmatpush1.msra.mxu0 %v5506
    %5518 = vmatprep.subr.mxu0 0.0
    %5519 = vmatpush1.msra.mxu0 0.0
    %5520 = vmatprep.subr.mxu0 0.0
    %5521 = vmatpush1.msra.mxu0 0.0
    %5522 = vmatprep.subr.mxu0 0.0
    %5523 = vmatpush1.msra.mxu0 0.0
    %5524 = vmatprep.subr.mxu0 0.0
    %5525 = vmatpush1.msra.mxu0 0.0
    %5526 = vmatprep.subr.mxu0 0.0
    %5527 = vmatpush1.msra.mxu0 0.0
    %5528 = vmatprep.subr.mxu0 0.0
    %5529 = vmatpush1.msra.mxu0 0.0
    %5530 = vmatprep.subr.mxu0 0.0
    %5531 = vmatpush1.msra.mxu0 0.0
    %5532 = vmatprep.subr.mxu0 0.0
    %5533 = vmatpush1.msra.mxu0 0.0
    %5534 = vmatprep.subr.mxu0 0.0
    %5535 = vmatpush1.msra.mxu0 0.0
    %5536 = vmatprep.subr.mxu0 0.0
    %5537 = vmatpush1.msra.mxu0 0.0
    %5538 = vmatprep.subr.mxu0 0.0
    %5539 = vmatpush1.msra.mxu0 0.0
    %5540 = vmatprep.subr.mxu0 0.0
    %5541 = vmatpush1.msra.mxu0 0.0
    %5542 = vmatprep.subr.mxu0 0.0
    %5543 = vmatpush1.msra.mxu0 0.0
    %5544 = vmatprep.subr.mxu0 0.0
    %5545 = vmatpush1.msra.mxu0 0.0
    %5546 = vmatprep.subr.mxu0 0.0
    %5547 = vmatpush1.msra.mxu0 0.0
    %5548 = vmatprep.subr.mxu0 0.0
    %5549 = vmatpush1.msra.mxu0 0.0
    %5550 = vmatprep.subr.mxu0 0.0
    %5551 = vmatpush1.msra.mxu0 0.0
    %5552 = vmatprep.subr.mxu0 0.0
    %5553 = vmatpush1.msra.mxu0 0.0
    %5554 = vmatprep.subr.mxu0 0.0
    %5555 = vmatpush1.msra.mxu0 0.0
    %5556 = vmatprep.subr.mxu0 0.0
    %5557 = vmatpush1.msra.mxu0 0.0
    %5558 = vmatprep.subr.mxu0 0.0
    %5559 = vmatpush1.msra.mxu0 0.0
    %5560 = vmatprep.subr.mxu0 0.0
    %5561 = vmatpush1.msra.mxu0 0.0
    %5562 = vmatprep.subr.mxu0 0.0
    %5563 = vmatpush1.msra.mxu0 0.0
    %5564 = vmatprep.subr.mxu0 0.0
    %5565 = vmatpush1.msra.mxu0 0.0
    %5566 = vmatprep.subr.mxu0 0.0
    %5567 = vmatpush1.msra.mxu0 0.0
    %5568 = vmatprep.subr.mxu0 0.0
    %5569 = vmatpush1.msra.mxu0 0.0
    %5570 = vmatprep.subr.mxu0 0.0
    %5571 = vmatpush1.msra.mxu0 0.0
    %5572 = vmatprep.subr.mxu0 0.0
    %5573 = vmatpush1.msra.mxu0 0.0
    %5574 = vmatprep.mubr.f32.mxu0 0.0
    %5575 = vmatmul.mubr.f32.gmra.mrb[0].mxu0 %v5508
    %v5576 = vpop.f32.mrb[0].mxu0
    %v5577 = vadd.f32 0.0, %v5576
    %v5578 = vpop.f32.mrb[0].mxu0
    %5579 = vdwg.mxu0
    %v5581 = vsel %vm118, %v5496, 0
    %5583 = vmatprep.subr.mxu0 0.0
    %5584 = vmatpush1.msra.mxu0 %v5498
    %5585 = vmatprep.subr.mxu0 0.0
    %5586 = vmatpush1.msra.mxu0 %v5499
    %5587 = vmatprep.subr.mxu0 0.0
    %5588 = vmatpush1.msra.mxu0 %v5500
    %5589 = vmatprep.subr.mxu0 0.0
    %5590 = vmatpush1.msra.mxu0 %v5501
    %5591 = vmatprep.subr.mxu0 0.0
    %5592 = vmatpush1.msra.mxu0 0.0
    %5593 = vmatprep.subr.mxu0 0.0
    %5594 = vmatpush1.msra.mxu0 0.0
    %5595 = vmatprep.subr.mxu0 0.0
    %5596 = vmatpush1.msra.mxu0 0.0
    %5597 = vmatprep.subr.mxu0 0.0
    %5598 = vmatpush1.msra.mxu0 0.0
    %5599 = vmatprep.subr.mxu0 0.0
    %5600 = vmatpush1.msra.mxu0 0.0
    %5601 = vmatprep.subr.mxu0 0.0
    %5602 = vmatpush1.msra.mxu0 0.0
    %5603 = vmatprep.subr.mxu0 0.0
    %5604 = vmatpush1.msra.mxu0 0.0
    %5605 = vmatprep.subr.mxu0 0.0
    %5606 = vmatpush1.msra.mxu0 0.0
    %5607 = vmatprep.subr.mxu0 0.0
    %5608 = vmatpush1.msra.mxu0 0.0
    %5609 = vmatprep.subr.mxu0 0.0
    %5610 = vmatpush1.msra.mxu0 0.0
    %5611 = vmatprep.subr.mxu0 0.0
    %5612 = vmatpush1.msra.mxu0 0.0
    %5613 = vmatprep.subr.mxu0 0.0
    %5614 = vmatpush1.msra.mxu0 0.0
    %5615 = vmatprep.subr.mxu0 0.0
    %5616 = vmatpush1.msra.mxu0 0.0
    %5617 = vmatprep.subr.mxu0 0.0
    %5618 = vmatpush1.msra.mxu0 0.0
    %5619 = vmatprep.subr.mxu0 0.0
    %5620 = vmatpush1.msra.mxu0 0.0
    %5621 = vmatprep.subr.mxu0 0.0
    %5622 = vmatpush1.msra.mxu0 0.0
    %5623 = vmatprep.subr.mxu0 0.0
    %5624 = vmatpush1.msra.mxu0 0.0
    %5625 = vmatprep.subr.mxu0 0.0
    %5626 = vmatpush1.msra.mxu0 0.0
    %5627 = vmatprep.subr.mxu0 0.0
    %5628 = vmatpush1.msra.mxu0 0.0
    %5629 = vmatprep.subr.mxu0 0.0
    %5630 = vmatpush1.msra.mxu0 0.0
    %5631 = vmatprep.subr.mxu0 0.0
    %5632 = vmatpush1.msra.mxu0 0.0
    %5633 = vmatprep.subr.mxu0 0.0
    %5634 = vmatpush1.msra.mxu0 0.0
    %5635 = vmatprep.subr.mxu0 0.0
    %5636 = vmatpush1.msra.mxu0 0.0
    %5637 = vmatprep.subr.mxu0 0.0
    %5638 = vmatpush1.msra.mxu0 0.0
    %5639 = vmatprep.subr.mxu0 0.0
    %5640 = vmatpush1.msra.mxu0 0.0
    %5641 = vmatprep.subr.mxu0 0.0
    %5642 = vmatpush1.msra.mxu0 0.0
    %5643 = vmatprep.subr.mxu0 0.0
    %5644 = vmatpush1.msra.mxu0 0.0
    %5645 = vmatprep.subr.mxu0 0.0
    %5646 = vmatpush1.msra.mxu0 0.0
    %5647 = vmatprep.mubr.f32.mxu0 0.0
    %5648 = vmatmul.mubr.f32.gmra.mrb[0].mxu0 %v5581
    %v5649 = vpop.f32.mrb[0].mxu0
    %v5650 = vadd.f32 %v5577, %v5649
    %v5651 = vpop.f32.mrb[0].mxu0
    %5652 = vdwg.mxu0
    %v5653 = vld [vmem:[%s7] sm:$0x1]
    %v5655 = vlaneseq
    %v5656 = vshrl.u32 %v5655, 7
    %v5657 = vsub.s32 0, %v5656
    %v5658 = vrot.slane %v5653, %v5657
    %v5660 = vadd.f32 %v5650, %v5658
    %v5661 = vtanh.pop %v5660
    %5662 = vst.msk [vmem:[%s288] sm:$0x3] %vm99, %v5661
    %v5663 = vld [vmem:[%s450] sm:$0xff]
    %v5664 = vld [vmem:[%s450 + $0x8] sm:$0xff]
    %v5665 = vld [vmem:[%s450 + $0x10] sm:$0xff]
    %v5666 = vld [vmem:[%s450 + $0x18] sm:$0xff]
    %v5667 = vld [vmem:[%s455] sm:$0x3]
    %v5668 = vld [vmem:[%s457] sm:$0xff]
    %v5669 = vld [vmem:[%s457 + $0x8] sm:$0xff]
    %v5670 = vld [vmem:[%s457 + $0x10] sm:$0xff]
    %v5671 = vld [vmem:[%s457 + $0x18] sm:$0xff]
    %v5673 = vsel %vm118, %v5667, 0
    %5675 = vmatprep.subr.mxu0 0.0
    %5676 = vmatpush1.msra.mxu0 %v5668
    %5677 = vmatprep.subr.mxu0 0.0
    %5678 = vmatpush1.msra.mxu0 %v5669
    %5679 = vmatprep.subr.mxu0 0.0
    %5680 = vmatpush1.msra.mxu0 %v5670
    %5681 = vmatprep.subr.mxu0 0.0
    %5682 = vmatpush1.msra.mxu0 %v5671
    %5683 = vmatprep.subr.mxu0 0.0
    %5684 = vmatpush1.msra.mxu0 0.0
    %5685 = vmatprep.subr.mxu0 0.0
    %5686 = vmatpush1.msra.mxu0 0.0
    %5687 = vmatprep.subr.mxu0 0.0
    %5688 = vmatpush1.msra.mxu0 0.0
    %5689 = vmatprep.subr.mxu0 0.0
    %5690 = vmatpush1.msra.mxu0 0.0
    %5691 = vmatprep.subr.mxu0 0.0
    %5692 = vmatpush1.msra.mxu0 0.0
    %5693 = vmatprep.subr.mxu0 0.0
    %5694 = vmatpush1.msra.mxu0 0.0
    %5695 = vmatprep.subr.mxu0 0.0
    %5696 = vmatpush1.msra.mxu0 0.0
    %5697 = vmatprep.subr.mxu0 0.0
    %5698 = vmatpush1.msra.mxu0 0.0
    %5699 = vmatprep.subr.mxu0 0.0
    %5700 = vmatpush1.msra.mxu0 0.0
    %5701 = vmatprep.subr.mxu0 0.0
    %5702 = vmatpush1.msra.mxu0 0.0
    %5703 = vmatprep.subr.mxu0 0.0
    %5704 = vmatpush1.msra.mxu0 0.0
    %5705 = vmatprep.subr.mxu0 0.0
    %5706 = vmatpush1.msra.mxu0 0.0
    %5707 = vmatprep.subr.mxu0 0.0
    %5708 = vmatpush1.msra.mxu0 0.0
    %5709 = vmatprep.subr.mxu0 0.0
    %5710 = vmatpush1.msra.mxu0 0.0
    %5711 = vmatprep.subr.mxu0 0.0
    %5712 = vmatpush1.msra.mxu0 0.0
    %5713 = vmatprep.subr.mxu0 0.0
    %5714 = vmatpush1.msra.mxu0 0.0
    %5715 = vmatprep.subr.mxu0 0.0
    %5716 = vmatpush1.msra.mxu0 0.0
    %5717 = vmatprep.subr.mxu0 0.0
    %5718 = vmatpush1.msra.mxu0 0.0
    %5719 = vmatprep.subr.mxu0 0.0
    %5720 = vmatpush1.msra.mxu0 0.0
    %5721 = vmatprep.subr.mxu0 0.0
    %5722 = vmatpush1.msra.mxu0 0.0
    %5723 = vmatprep.subr.mxu0 0.0
    %5724 = vmatpush1.msra.mxu0 0.0
    %5725 = vmatprep.subr.mxu0 0.0
    %5726 = vmatpush1.msra.mxu0 0.0
    %5727 = vmatprep.subr.mxu0 0.0
    %5728 = vmatpush1.msra.mxu0 0.0
    %5729 = vmatprep.subr.mxu0 0.0
    %5730 = vmatpush1.msra.mxu0 0.0
    %5731 = vmatprep.subr.mxu0 0.0
    %5732 = vmatpush1.msra.mxu0 0.0
    %5733 = vmatprep.subr.mxu0 0.0
    %5734 = vmatpush1.msra.mxu0 0.0
    %5735 = vmatprep.subr.mxu0 0.0
    %5736 = vmatpush1.msra.mxu0 0.0
    %5737 = vmatprep.subr.mxu0 0.0
    %5738 = vmatpush1.msra.mxu0 0.0
    %5739 = vmatprep.mubr.f32.mxu0 0.0
    %5740 = vmatmul.mubr.f32.gmra.mrb[0].mxu0 %v5673
    %v5741 = vpop.f32.mrb[0].mxu0
    %v5742 = vadd.f32 0.0, %v5741
    %v5743 = vpop.f32.mrb[0].mxu0
    %5744 = vdwg.mxu0
    %v5746 = vsel %vm118, %v5661, 0
    %5748 = vmatprep.subr.mxu0 0.0
    %5749 = vmatpush1.msra.mxu0 %v5663
    %5750 = vmatprep.subr.mxu0 0.0
    %5751 = vmatpush1.msra.mxu0 %v5664
    %5752 = vmatprep.subr.mxu0 0.0
    %5753 = vmatpush1.msra.mxu0 %v5665
    %5754 = vmatprep.subr.mxu0 0.0
    %5755 = vmatpush1.msra.mxu0 %v5666
    %5756 = vmatprep.subr.mxu0 0.0
    %5757 = vmatpush1.msra.mxu0 0.0
    %5758 = vmatprep.subr.mxu0 0.0
    %5759 = vmatpush1.msra.mxu0 0.0
    %5760 = vmatprep.subr.mxu0 0.0
    %5761 = vmatpush1.msra.mxu0 0.0
    %5762 = vmatprep.subr.mxu0 0.0
    %5763 = vmatpush1.msra.mxu0 0.0
    %5764 = vmatprep.subr.mxu0 0.0
    %5765 = vmatpush1.msra.mxu0 0.0
    %5766 = vmatprep.subr.mxu0 0.0
    %5767 = vmatpush1.msra.mxu0 0.0
    %5768 = vmatprep.subr.mxu0 0.0
    %5769 = vmatpush1.msra.mxu0 0.0
    %5770 = vmatprep.subr.mxu0 0.0
    %5771 = vmatpush1.msra.mxu0 0.0
    %5772 = vmatprep.subr.mxu0 0.0
    %5773 = vmatpush1.msra.mxu0 0.0
    %5774 = vmatprep.subr.mxu0 0.0
    %5775 = vmatpush1.msra.mxu0 0.0
    %5776 = vmatprep.subr.mxu0 0.0
    %5777 = vmatpush1.msra.mxu0 0.0
    %5778 = vmatprep.subr.mxu0 0.0
    %5779 = vmatpush1.msra.mxu0 0.0
    %5780 = vmatprep.subr.mxu0 0.0
    %5781 = vmatpush1.msra.mxu0 0.0
    %5782 = vmatprep.subr.mxu0 0.0
    %5783 = vmatpush1.msra.mxu0 0.0
    %5784 = vmatprep.subr.mxu0 0.0
    %5785 = vmatpush1.msra.mxu0 0.0
    %5786 = vmatprep.subr.mxu0 0.0
    %5787 = vmatpush1.msra.mxu0 0.0
    %5788 = vmatprep.subr.mxu0 0.0
    %5789 = vmatpush1.msra.mxu0 0.0
    %5790 = vmatprep.subr.mxu0 0.0
    %5791 = vmatpush1.msra.mxu0 0.0
    %5792 = vmatprep.subr.mxu0 0.0
    %5793 = vmatpush1.msra.mxu0 0.0
    %5794 = vmatprep.subr.mxu0 0.0
    %5795 = vmatpush1.msra.mxu0 0.0
    %5796 = vmatprep.subr.mxu0 0.0
    %5797 = vmatpush1.msra.mxu0 0.0
    %5798 = vmatprep.subr.mxu0 0.0
    %5799 = vmatpush1.msra.mxu0 0.0
    %5800 = vmatprep.subr.mxu0 0.0
    %5801 = vmatpush1.msra.mxu0 0.0
    %5802 = vmatprep.subr.mxu0 0.0
    %5803 = vmatpush1.msra.mxu0 0.0
    %5804 = vmatprep.subr.mxu0 0.0
    %5805 = vmatpush1.msra.mxu0 0.0
    %5806 = vmatprep.subr.mxu0 0.0
    %5807 = vmatpush1.msra.mxu0 0.0
    %5808 = vmatprep.subr.mxu0 0.0
    %5809 = vmatpush1.msra.mxu0 0.0
    %5810 = vmatprep.subr.mxu0 0.0
    %5811 = vmatpush1.msra.mxu0 0.0
    %5812 = vmatprep.mubr.f32.mxu0 0.0
    %5813 = vmatmul.mubr.f32.gmra.mrb[0].mxu0 %v5746
    %v5814 = vpop.f32.mrb[0].mxu0
    %v5815 = vadd.f32 %v5742, %v5814
    %v5816 = vpop.f32.mrb[0].mxu0
    %5817 = vdwg.mxu0
    %v5818 = vld [vmem:[%s608] sm:$0x1]
    %v5820 = vlaneseq
    %v5821 = vshrl.u32 %v5820, 7
    %v5822 = vsub.s32 0, %v5821
    %v5823 = vrot.slane %v5818, %v5822
    %v5825 = vadd.f32 %v5815, %v5823
    %v5826 = vtanh.pop %v5825
    %5827 = vst.msk [vmem:[%s455] sm:$0x3] %vm99, %v5826
    %v5828 = vld [vmem:[%s619] sm:$0xff]
    %v5829 = vld [vmem:[%s619 + $0x8] sm:$0xff]
    %v5830 = vld [vmem:[%s619 + $0x10] sm:$0xff]
    %v5831 = vld [vmem:[%s619 + $0x18] sm:$0xff]
    %v5832 = vld [vmem:[%s624] sm:$0x3]
    %v5833 = vld [vmem:[%s626] sm:$0xff]
    %v5834 = vld [vmem:[%s626 + $0x8] sm:$0xff]
    %v5835 = vld [vmem:[%s626 + $0x10] sm:$0xff]
    %v5836 = vld [vmem:[%s626 + $0x18] sm:$0xff]
    %v5838 = vsel %vm118, %v5832, 0
    %5840 = vmatprep.subr.mxu0 0.0
    %5841 = vmatpush1.msra.mxu0 %v5833
    %5842 = vmatprep.subr.mxu0 0.0
    %5843 = vmatpush1.msra.mxu0 %v5834
    %5844 = vmatprep.subr.mxu0 0.0
    %5845 = vmatpush1.msra.mxu0 %v5835
    %5846 = vmatprep.subr.mxu0 0.0
    %5847 = vmatpush1.msra.mxu0 %v5836
    %5848 = vmatprep.subr.mxu0 0.0
    %5849 = vmatpush1.msra.mxu0 0.0
    %5850 = vmatprep.subr.mxu0 0.0
    %5851 = vmatpush1.msra.mxu0 0.0
    %5852 = vmatprep.subr.mxu0 0.0
    %5853 = vmatpush1.msra.mxu0 0.0
    %5854 = vmatprep.subr.mxu0 0.0
    %5855 = vmatpush1.msra.mxu0 0.0
    %5856 = vmatprep.subr.mxu0 0.0
    %5857 = vmatpush1.msra.mxu0 0.0
    %5858 = vmatprep.subr.mxu0 0.0
    %5859 = vmatpush1.msra.mxu0 0.0
    %5860 = vmatprep.subr.mxu0 0.0
    %5861 = vmatpush1.msra.mxu0 0.0
    %5862 = vmatprep.subr.mxu0 0.0
    %5863 = vmatpush1.msra.mxu0 0.0
    %5864 = vmatprep.subr.mxu0 0.0
    %5865 = vmatpush1.msra.mxu0 0.0
    %5866 = vmatprep.subr.mxu0 0.0
    %5867 = vmatpush1.msra.mxu0 0.0
    %5868 = vmatprep.subr.mxu0 0.0
    %5869 = vmatpush1.msra.mxu0 0.0
    %5870 = vmatprep.subr.mxu0 0.0
    %5871 = vmatpush1.msra.mxu0 0.0
    %5872 = vmatprep.subr.mxu0 0.0
    %5873 = vmatpush1.msra.mxu0 0.0
    %5874 = vmatprep.subr.mxu0 0.0
    %5875 = vmatpush1.msra.mxu0 0.0
    %5876 = vmatprep.subr.mxu0 0.0
    %5877 = vmatpush1.msra.mxu0 0.0
    %5878 = vmatprep.subr.mxu0 0.0
    %5879 = vmatpush1.msra.mxu0 0.0
    %5880 = vmatprep.subr.mxu0 0.0
    %5881 = vmatpush1.msra.mxu0 0.0
    %5882 = vmatprep.subr.mxu0 0.0
    %5883 = vmatpush1.msra.mxu0 0.0
    %5884 = vmatprep.subr.mxu0 0.0
    %5885 = vmatpush1.msra.mxu0 0.0
    %5886 = vmatprep.subr.mxu0 0.0
    %5887 = vmatpush1.msra.mxu0 0.0
    %5888 = vmatprep.subr.mxu0 0.0
    %5889 = vmatpush1.msra.mxu0 0.0
    %5890 = vmatprep.subr.mxu0 0.0
    %5891 = vmatpush1.msra.mxu0 0.0
    %5892 = vmatprep.subr.mxu0 0.0
    %5893 = vmatpush1.msra.mxu0 0.0
    %5894 = vmatprep.subr.mxu0 0.0
    %5895 = vmatpush1.msra.mxu0 0.0
    %5896 = vmatprep.subr.mxu0 0.0
    %5897 = vmatpush1.msra.mxu0 0.0
    %5898 = vmatprep.subr.mxu0 0.0
    %5899 = vmatpush1.msra.mxu0 0.0
    %5900 = vmatprep.subr.mxu0 0.0
    %5901 = vmatpush1.msra.mxu0 0.0
    %5902 = vmatprep.subr.mxu0 0.0
    %5903 = vmatpush1.msra.mxu0 0.0
    %5904 = vmatprep.mubr.f32.mxu0 0.0
    %5905 = vmatmul.mubr.f32.gmra.mrb[0].mxu0 %v5838
    %v5906 = vpop.f32.mrb[0].mxu0
    %v5907 = vadd.f32 0.0, %v5906
    %v5908 = vpop.f32.mrb[0].mxu0
    %5909 = vdwg.mxu0
    %v5911 = vsel %vm118, %v5826, 0
    %5913 = vmatprep.subr.mxu0 0.0
    %5914 = vmatpush1.msra.mxu0 %v5828
    %5915 = vmatprep.subr.mxu0 0.0
    %5916 = vmatpush1.msra.mxu0 %v5829
    %5917 = vmatprep.subr.mxu0 0.0
    %5918 = vmatpush1.msra.mxu0 %v5830
    %5919 = vmatprep.subr.mxu0 0.0
    %5920 = vmatpush1.msra.mxu0 %v5831
    %5921 = vmatprep.subr.mxu0 0.0
    %5922 = vmatpush1.msra.mxu0 0.0
    %5923 = vmatprep.subr.mxu0 0.0
    %5924 = vmatpush1.msra.mxu0 0.0
    %5925 = vmatprep.subr.mxu0 0.0
    %5926 = vmatpush1.msra.mxu0 0.0
    %5927 = vmatprep.subr.mxu0 0.0
    %5928 = vmatpush1.msra.mxu0 0.0
    %5929 = vmatprep.subr.mxu0 0.0
    %5930 = vmatpush1.msra.mxu0 0.0
    %5931 = vmatprep.subr.mxu0 0.0
    %5932 = vmatpush1.msra.mxu0 0.0
    %5933 = vmatprep.subr.mxu0 0.0
    %5934 = vmatpush1.msra.mxu0 0.0
    %5935 = vmatprep.subr.mxu0 0.0
    %5936 = vmatpush1.msra.mxu0 0.0
    %5937 = vmatprep.subr.mxu0 0.0
    %5938 = vmatpush1.msra.mxu0 0.0
    %5939 = vmatprep.subr.mxu0 0.0
    %5940 = vmatpush1.msra.mxu0 0.0
    %5941 = vmatprep.subr.mxu0 0.0
    %5942 = vmatpush1.msra.mxu0 0.0
    %5943 = vmatprep.subr.mxu0 0.0
    %5944 = vmatpush1.msra.mxu0 0.0
    %5945 = vmatprep.subr.mxu0 0.0
    %5946 = vmatpush1.msra.mxu0 0.0
    %5947 = vmatprep.subr.mxu0 0.0
    %5948 = vmatpush1.msra.mxu0 0.0
    %5949 = vmatprep.subr.mxu0 0.0
    %5950 = vmatpush1.msra.mxu0 0.0
    %5951 = vmatprep.subr.mxu0 0.0
    %5952 = vmatpush1.msra.mxu0 0.0
    %5953 = vmatprep.subr.mxu0 0.0
    %5954 = vmatpush1.msra.mxu0 0.0
    %5955 = vmatprep.subr.mxu0 0.0
    %5956 = vmatpush1.msra.mxu0 0.0
    %5957 = vmatprep.subr.mxu0 0.0
    %5958 = vmatpush1.msra.mxu0 0.0
    %5959 = vmatprep.subr.mxu0 0.0
    %5960 = vmatpush1.msra.mxu0 0.0
    %5961 = vmatprep.subr.mxu0 0.0
    %5962 = vmatpush1.msra.mxu0 0.0
    %5963 = vmatprep.subr.mxu0 0.0
    %5964 = vmatpush1.msra.mxu0 0.0
    %5965 = vmatprep.subr.mxu0 0.0
    %5966 = vmatpush1.msra.mxu0 0.0
    %5967 = vmatprep.subr.mxu0 0.0
    %5968 = vmatpush1.msra.mxu0 0.0
    %5969 = vmatprep.subr.mxu0 0.0
    %5970 = vmatpush1.msra.mxu0 0.0
    %5971 = vmatprep.subr.mxu0 0.0
    %5972 = vmatpush1.msra.mxu0 0.0
    %5973 = vmatprep.subr.mxu0 0.0
    %5974 = vmatpush1.msra.mxu0 0.0
    %5975 = vmatprep.subr.mxu0 0.0
    %5976 = vmatpush1.msra.mxu0 0.0
    %5977 = vmatprep.mubr.f32.mxu0 0.0
    %5978 = vmatmul.mubr.f32.gmra.mrb[0].mxu0 %v5911
    %v5979 = vpop.f32.mrb[0].mxu0
    %v5980 = vadd.f32 %v5907, %v5979
    %v5981 = vpop.f32.mrb[0].mxu0
    %5982 = vdwg.mxu0
    %v5983 = vld [vmem:[%s777] sm:$0x1]
    %v5985 = vlaneseq
    %v5986 = vshrl.u32 %v5985, 7
    %v5987 = vsub.s32 0, %v5986
    %v5988 = vrot.slane %v5983, %v5987
    %v5990 = vadd.f32 %v5980, %v5988
    %v5991 = vtanh.pop %v5990
    %5992 = vst.msk [vmem:[%s624] sm:$0x3] %vm99, %v5991
    %v5993 = vld [vmem:[%s788] sm:$0xff]
    %v5994 = vld [vmem:[%s788 + $0x8] sm:$0xff]
    %v5995 = vld [vmem:[%s788 + $0x10] sm:$0xff]
    %v5996 = vld [vmem:[%s788 + $0x18] sm:$0xff]
    %v5997 = vld [vmem:[%s793] sm:$0x3]
    %v5998 = vld [vmem:[%s795] sm:$0xff]
    %v5999 = vld [vmem:[%s795 + $0x8] sm:$0xff]
    %v6000 = vld [vmem:[%s795 + $0x10] sm:$0xff]
    %v6001 = vld [vmem:[%s795 + $0x18] sm:$0xff]
    %v6003 = vsel %vm118, %v5997, 0
    %6005 = vmatprep.subr.mxu0 0.0
    %6006 = vmatpush1.msra.mxu0 %v5998
    %6007 = vmatprep.subr.mxu0 0.0
    %6008 = vmatpush1.msra.mxu0 %v5999
    %6009 = vmatprep.subr.mxu0 0.0
    %6010 = vmatpush1.msra.mxu0 %v6000
    %6011 = vmatprep.subr.mxu0 0.0
    %6012 = vmatpush1.msra.mxu0 %v6001
    %6013 = vmatprep.subr.mxu0 0.0
    %6014 = vmatpush1.msra.mxu0 0.0
    %6015 = vmatprep.subr.mxu0 0.0
    %6016 = vmatpush1.msra.mxu0 0.0
    %6017 = vmatprep.subr.mxu0 0.0
    %6018 = vmatpush1.msra.mxu0 0.0
    %6019 = vmatprep.subr.mxu0 0.0
    %6020 = vmatpush1.msra.mxu0 0.0
    %6021 = vmatprep.subr.mxu0 0.0
    %6022 = vmatpush1.msra.mxu0 0.0
    %6023 = vmatprep.subr.mxu0 0.0
    %6024 = vmatpush1.msra.mxu0 0.0
    %6025 = vmatprep.subr.mxu0 0.0
    %6026 = vmatpush1.msra.mxu0 0.0
    %6027 = vmatprep.subr.mxu0 0.0
    %6028 = vmatpush1.msra.mxu0 0.0
    %6029 = vmatprep.subr.mxu0 0.0
    %6030 = vmatpush1.msra.mxu0 0.0
    %6031 = vmatprep.subr.mxu0 0.0
    %6032 = vmatpush1.msra.mxu0 0.0
    %6033 = vmatprep.subr.mxu0 0.0
    %6034 = vmatpush1.msra.mxu0 0.0
    %6035 = vmatprep.subr.mxu0 0.0
    %6036 = vmatpush1.msra.mxu0 0.0
    %6037 = vmatprep.subr.mxu0 0.0
    %6038 = vmatpush1.msra.mxu0 0.0
    %6039 = vmatprep.subr.mxu0 0.0
    %6040 = vmatpush1.msra.mxu0 0.0
    %6041 = vmatprep.subr.mxu0 0.0
    %6042 = vmatpush1.msra.mxu0 0.0
    %6043 = vmatprep.subr.mxu0 0.0
    %6044 = vmatpush1.msra.mxu0 0.0
    %6045 = vmatprep.subr.mxu0 0.0
    %6046 = vmatpush1.msra.mxu0 0.0
    %6047 = vmatprep.subr.mxu0 0.0
    %6048 = vmatpush1.msra.mxu0 0.0
    %6049 = vmatprep.subr.mxu0 0.0
    %6050 = vmatpush1.msra.mxu0 0.0
    %6051 = vmatprep.subr.mxu0 0.0
    %6052 = vmatpush1.msra.mxu0 0.0
    %6053 = vmatprep.subr.mxu0 0.0
    %6054 = vmatpush1.msra.mxu0 0.0
    %6055 = vmatprep.subr.mxu0 0.0
    %6056 = vmatpush1.msra.mxu0 0.0
    %6057 = vmatprep.subr.mxu0 0.0
    %6058 = vmatpush1.msra.mxu0 0.0
    %6059 = vmatprep.subr.mxu0 0.0
    %6060 = vmatpush1.msra.mxu0 0.0
    %6061 = vmatprep.subr.mxu0 0.0
    %6062 = vmatpush1.msra.mxu0 0.0
    %6063 = vmatprep.subr.mxu0 0.0
    %6064 = vmatpush1.msra.mxu0 0.0
    %6065 = vmatprep.subr.mxu0 0.0
    %6066 = vmatpush1.msra.mxu0 0.0
    %6067 = vmatprep.subr.mxu0 0.0
    %6068 = vmatpush1.msra.mxu0 0.0
    %6069 = vmatprep.mubr.f32.mxu0 0.0
    %6070 = vmatmul.mubr.f32.gmra.mrb[0].mxu0 %v6003
    %v6071 = vpop.f32.mrb[0].mxu0
    %v6072 = vadd.f32 0.0, %v6071
    %v6073 = vpop.f32.mrb[0].mxu0
    %6074 = vdwg.mxu0
    %v6076 = vsel %vm118, %v5991, 0
    %6078 = vmatprep.subr.mxu0 0.0
    %6079 = vmatpush1.msra.mxu0 %v5993
    %6080 = vmatprep.subr.mxu0 0.0
    %6081 = vmatpush1.msra.mxu0 %v5994
    %6082 = vmatprep.subr.mxu0 0.0
    %6083 = vmatpush1.msra.mxu0 %v5995
    %6084 = vmatprep.subr.mxu0 0.0
    %6085 = vmatpush1.msra.mxu0 %v5996
    %6086 = vmatprep.subr.mxu0 0.0
    %6087 = vmatpush1.msra.mxu0 0.0
    %6088 = vmatprep.subr.mxu0 0.0
    %6089 = vmatpush1.msra.mxu0 0.0
    %6090 = vmatprep.subr.mxu0 0.0
    %6091 = vmatpush1.msra.mxu0 0.0
    %6092 = vmatprep.subr.mxu0 0.0
    %6093 = vmatpush1.msra.mxu0 0.0
    %6094 = vmatprep.subr.mxu0 0.0
    %6095 = vmatpush1.msra.mxu0 0.0
    %6096 = vmatprep.subr.mxu0 0.0
    %6097 = vmatpush1.msra.mxu0 0.0
    %6098 = vmatprep.subr.mxu0 0.0
    %6099 = vmatpush1.msra.mxu0 0.0
    %6100 = vmatprep.subr.mxu0 0.0
    %6101 = vmatpush1.msra.mxu0 0.0
    %6102 = vmatprep.subr.mxu0 0.0
    %6103 = vmatpush1.msra.mxu0 0.0
    %6104 = vmatprep.subr.mxu0 0.0
    %6105 = vmatpush1.msra.mxu0 0.0
    %6106 = vmatprep.subr.mxu0 0.0
    %6107 = vmatpush1.msra.mxu0 0.0
    %6108 = vmatprep.subr.mxu0 0.0
    %6109 = vmatpush1.msra.mxu0 0.0
    %6110 = vmatprep.subr.mxu0 0.0
    %6111 = vmatpush1.msra.mxu0 0.0
    %6112 = vmatprep.subr.mxu0 0.0
    %6113 = vmatpush1.msra.mxu0 0.0
    %6114 = vmatprep.subr.mxu0 0.0
    %6115 = vmatpush1.msra.mxu0 0.0
    %6116 = vmatprep.subr.mxu0 0.0
    %6117 = vmatpush1.msra.mxu0 0.0
    %6118 = vmatprep.subr.mxu0 0.0
    %6119 = vmatpush1.msra.mxu0 0.0
    %6120 = vmatprep.subr.mxu0 0.0
    %6121 = vmatpush1.msra.mxu0 0.0
    %6122 = vmatprep.subr.mxu0 0.0
    %6123 = vmatpush1.msra.mxu0 0.0
    %6124 = vmatprep.subr.mxu0 0.0
    %6125 = vmatpush1.msra.mxu0 0.0
    %6126 = vmatprep.subr.mxu0 0.0
    %6127 = vmatpush1.msra.mxu0 0.0
    %6128 = vmatprep.subr.mxu0 0.0
    %6129 = vmatpush1.msra.mxu0 0.0
    %6130 = vmatprep.subr.mxu0 0.0
    %6131 = vmatpush1.msra.mxu0 0.0
    %6132 = vmatprep.subr.mxu0 0.0
    %6133 = vmatpush1.msra.mxu0 0.0
    %6134 = vmatprep.subr.mxu0 0.0
    %6135 = vmatpush1.msra.mxu0 0.0
    %6136 = vmatprep.subr.mxu0 0.0
    %6137 = vmatpush1.msra.mxu0 0.0
    %6138 = vmatprep.subr.mxu0 0.0
    %6139 = vmatpush1.msra.mxu0 0.0
    %6140 = vmatprep.subr.mxu0 0.0
    %6141 = vmatpush1.msra.mxu0 0.0
    %6142 = vmatprep.mubr.f32.mxu0 0.0
    %6143 = vmatmul.mubr.f32.gmra.mrb[0].mxu0 %v6076
    %v6144 = vpop.f32.mrb[0].mxu0
    %v6145 = vadd.f32 %v6072, %v6144
    %v6146 = vpop.f32.mrb[0].mxu0
    %6147 = vdwg.mxu0
    %v6148 = vld [vmem:[%s946] sm:$0x1]
    %v6150 = vlaneseq
    %v6151 = vshrl.u32 %v6150, 7
    %v6152 = vsub.s32 0, %v6151
    %v6153 = vrot.slane %v6148, %v6152
    %v6155 = vadd.f32 %v6145, %v6153
    %v6156 = vtanh.pop %v6155
    %6157 = vst.msk [vmem:[%s793] sm:$0x3] %vm99, %v6156
    %6158 = vst.msk [vmem:[#allocation3 + $0xe] sm:$0x3] %vm99, %v6156
    %v6159 = vld [vmem:[#allocation3] sm:$0xff]
    %v6160 = vld [vmem:[#allocation3 + $0x8] sm:$0xff]
    %v6161 = vld [vmem:[%s8] sm:$0xff]
    %v6162 = vld [vmem:[%s8 + $0x8] sm:$0xff]
    %v6163 = vld [vmem:[%s8 + $0x10] sm:$0xff]
    %v6164 = vld [vmem:[%s8 + $0x18] sm:$0xff]
    %v6165 = vld [vmem:[%s9] sm:$0x1]
    %v6167 = vlaneseq
    %v6168 = vshrl.u32 %v6167, 7
    %v6169 = vsub.s32 0, %v6168
    %v6170 = vrot.slane %v6165, %v6169
    %v6173 = vsel %vm118, %v6159, 0
    %v6176 = vsel %vm118, %v6160, 0
    %6178 = vmatprep.subr.mxu0 0.0
    %6179 = vmatpush1.msra.mxu0 %v6161
    %6180 = vmatprep.subr.mxu0 0.0
    %6181 = vmatpush1.msra.mxu0 %v6162
    %6182 = vmatprep.subr.mxu0 0.0
    %6183 = vmatpush1.msra.mxu0 %v6163
    %6184 = vmatprep.subr.mxu0 0.0
    %6185 = vmatpush1.msra.mxu0 %v6164
    %6186 = vmatprep.subr.mxu0 0.0
    %6187 = vmatpush1.msra.mxu0 0.0
    %6188 = vmatprep.subr.mxu0 0.0
    %6189 = vmatpush1.msra.mxu0 0.0
    %6190 = vmatprep.subr.mxu0 0.0
    %6191 = vmatpush1.msra.mxu0 0.0
    %6192 = vmatprep.subr.mxu0 0.0
    %6193 = vmatpush1.msra.mxu0 0.0
    %6194 = vmatprep.subr.mxu0 0.0
    %6195 = vmatpush1.msra.mxu0 0.0
    %6196 = vmatprep.subr.mxu0 0.0
    %6197 = vmatpush1.msra.mxu0 0.0
    %6198 = vmatprep.subr.mxu0 0.0
    %6199 = vmatpush1.msra.mxu0 0.0
    %6200 = vmatprep.subr.mxu0 0.0
    %6201 = vmatpush1.msra.mxu0 0.0
    %6202 = vmatprep.subr.mxu0 0.0
    %6203 = vmatpush1.msra.mxu0 0.0
    %6204 = vmatprep.subr.mxu0 0.0
    %6205 = vmatpush1.msra.mxu0 0.0
    %6206 = vmatprep.subr.mxu0 0.0
    %6207 = vmatpush1.msra.mxu0 0.0
    %6208 = vmatprep.subr.mxu0 0.0
    %6209 = vmatpush1.msra.mxu0 0.0
    %6210 = vmatprep.subr.mxu0 0.0
    %6211 = vmatpush1.msra.mxu0 0.0
    %6212 = vmatprep.subr.mxu0 0.0
    %6213 = vmatpush1.msra.mxu0 0.0
    %6214 = vmatprep.subr.mxu0 0.0
    %6215 = vmatpush1.msra.mxu0 0.0
    %6216 = vmatprep.subr.mxu0 0.0
    %6217 = vmatpush1.msra.mxu0 0.0
    %6218 = vmatprep.subr.mxu0 0.0
    %6219 = vmatpush1.msra.mxu0 0.0
    %6220 = vmatprep.subr.mxu0 0.0
    %6221 = vmatpush1.msra.mxu0 0.0
    %6222 = vmatprep.subr.mxu0 0.0
    %6223 = vmatpush1.msra.mxu0 0.0
    %6224 = vmatprep.subr.mxu0 0.0
    %6225 = vmatpush1.msra.mxu0 0.0
    %6226 = vmatprep.subr.mxu0 0.0
    %6227 = vmatpush1.msra.mxu0 0.0
    %6228 = vmatprep.subr.mxu0 0.0
    %6229 = vmatpush1.msra.mxu0 0.0
    %6230 = vmatprep.subr.mxu0 0.0
    %6231 = vmatpush1.msra.mxu0 0.0
    %6232 = vmatprep.subr.mxu0 0.0
    %6233 = vmatpush1.msra.mxu0 0.0
    %6234 = vmatprep.subr.mxu0 0.0
    %6235 = vmatpush1.msra.mxu0 0.0
    %6236 = vmatprep.subr.mxu0 0.0
    %6237 = vmatpush1.msra.mxu0 0.0
    %6238 = vmatprep.subr.mxu0 0.0
    %6239 = vmatpush1.msra.mxu0 0.0
    %6240 = vmatprep.subr.mxu0 0.0
    %6241 = vmatpush1.msra.mxu0 0.0
    %6242 = vmatprep.mubr.f32.mxu0 0.0
    %6243 = vmatmul.mubr.f32.gmra.mrb[0].mxu0 %v6173
    %v6244 = vpop.f32.mrb[0].mxu0
    %v6245 = vadd.f32 %v6170, %v6244
    %v6246 = vpop.f32.mrb[0].mxu0
    %6247 = vmatprep.mubr.f32.mxu0 0.0
    %6248 = vmatmul.mubr.f32.gmra.mrb[0].mxu0 %v6176
    %v6249 = vpop.f32.mrb[0].mxu0
    %v6250 = vadd.f32 %v6170, %v6249
    %v6251 = vpop.f32.mrb[0].mxu0
    %6252 = vdwg.mxu0
    %vm6253 = vcmask 130048
    %6254 = vst.msk [vmem:[#allocation13] sm:$0xff] %vm6253, %v6245
    %6255 = vst.msk [vmem:[#allocation13 + $0x8] sm:$0xff] %vm6253, %v6250
    %v6256 = vld [vmem:[#allocation4] sm:$0x3]
    %v6257 = vld [vmem:[#allocation4 + $0x2] sm:$0x3]
    %v6258 = vld [vmem:[#allocation4 + $0x4] sm:$0x3]
    %v6259 = vld [vmem:[#allocation4 + $0x6] sm:$0x3]
    %v6260 = vld [vmem:[#allocation4 + $0x8] sm:$0x3]
    %6261 = vst.msk [vmem:[#allocation14] sm:$0x3] %vm99, %v6256
    %6262 = vst.msk [vmem:[#allocation14 + $0x2] sm:$0x3] %vm99, %v6257
    %6263 = vst.msk [vmem:[#allocation14 + $0x4] sm:$0x3] %vm99, %v6258
    %6264 = vst.msk [vmem:[#allocation14 + $0x6] sm:$0x3] %vm99, %v6259
    %6265 = vst.msk [vmem:[#allocation14 + $0x8] sm:$0x3] %vm99, %v6260
    // Predicated region
    $region58: #{tpu_custom_call.1} parent=1 // pred_check
      _
    $region59: #{tpu_custom_call.1} parent=1 // pred_check_branch
      %6267 = sbr.rel (0) target = $region61
    $region60: #{tpu_custom_call.1} parent=1 // pred_region
      %s6269 = ssub.s32 256, 256
      %6270 = vsyncadd [#allocation7], %s6269
      %s6271 = sshll.u32 [#allocation13], 4
      %s6272 = int_to_ptr.vmem [resolvable:$true] %s6271
      %6277 = dma.vmem_to_hbm [thread:$0]  %s6272, 256, %s10, [#allocation7], 128, 128, 8
    $region61: #{tpu_custom_call.1} parent=1 // pred_fallthru
      _
    // Predicated region
    $region62: #{tpu_custom_call.1} parent=1 // pred_check
      _
    $region63: #{tpu_custom_call.1} parent=1 // pred_check_branch
      %6279 = sbr.rel (0) target = $region65
    $region64: #{tpu_custom_call.1} parent=1 // pred_region
      %s6281 = ssub.s32 160, 160
      %6282 = vsyncadd [#allocation15], %s6281
      %s6283 = sshll.u32 [#allocation14], 4
      %s6284 = int_to_ptr.vmem [resolvable:$true] %s6283
      %6289 = dma.vmem_to_hbm [thread:$0]  %s6284, 160, %s11, [#allocation15], 32, 32, 2
    $region65: #{tpu_custom_call.1} parent=1 // pred_fallthru
      _
    // Predicated region
    $region66: #{tpu_custom_call.1} parent=1 // pred_check
      _
    $region67: #{tpu_custom_call.1} parent=1 // pred_check_branch
      %6291 = sbr.rel (0) target = $region69
    $region68: #{tpu_custom_call.1} parent=1 // pred_region
      %6292 = dma.done [#allocation7], 256
    $region69: #{tpu_custom_call.1} parent=1 // pred_fallthru
      _
    // Predicated region
    $region70: #{tpu_custom_call.1} parent=1 // pred_check
      _
    $region71: #{tpu_custom_call.1} parent=1 // pred_check_branch
      %6294 = sbr.rel (0) target = $region73
    $region72: #{tpu_custom_call.1} parent=1 // pred_region
      %6295 = dma.done [#allocation15], 160
    $region73: #{tpu_custom_call.1} parent=1 // pred_fallthru
      _
    %6296 = vsyncpa [#allocation6], 1
    %6297 = vsyncpa [#allocation9], 1
    %6298 = vsyncpa [#allocation12], 1
    %6299 = vsyncpa [#allocation7], 1
    %6300 = vsyncpa [#allocation15], 1

</llo_original>
